<compile_context>
chip_gen: v5e
topology: v5e:2x2
jax: 0.10.0
libtpu: 0.0.40
codegen_flags: <defaults>
</compile_context>

<pallas_src>
import functools

import jax
import jax.numpy as jnp
from jax import lax
from jax.experimental import pallas as pl
from jax.experimental.pallas import tpu as pltpu

EPS = 1e-5
LANES = 128


def _round_up(x, m):
    return (x + m - 1) // m * m


# --------------------------- MaxPool3d(2) kernel ---------------------------

def _maxpool_kernel(x_ref, o_ref):
    # x_ref: (2, H2, 2, W2, 2*C)  -- two consecutive depth slices (pre-reshaped view)
    a = jnp.maximum(x_ref[0], x_ref[1])                   # pool over the D pair
    a = jnp.maximum(a[:, 0], a[:, 1])                      # pool over the H pair
    c = o_ref.shape[-1]
    o_ref[0] = jnp.maximum(a[..., :c], a[..., c:])         # pool over the W pair


def maxpool3d_2x(x):
    # x: (N, D, H, W, C) f32, D/H/W even
    N, D, H, W, C = x.shape
    assert D % 2 == 0 and H % 2 == 0 and W % 2 == 0
    D2, H2, W2 = D // 2, H // 2, W // 2
    # pure (free) view: (N*D, H2, 2, W2, 2*C); last lane dim packs (w parity, c)
    xr = x.reshape(N * D, H2, 2, W2, 2 * C)
    out = pl.pallas_call(
        _maxpool_kernel,
        out_shape=jax.ShapeDtypeStruct((N * D2, H2, W2, C), x.dtype),
        grid=(N * D2,),
        in_specs=[pl.BlockSpec((2, H2, 2, W2, 2 * C), lambda i: (i, 0, 0, 0, 0))],
        out_specs=pl.BlockSpec((1, H2, W2, C), lambda i: (i, 0, 0, 0)),
        compiler_params=pltpu.CompilerParams(
            dimension_semantics=("parallel",)),
    )(xr)
    return out.reshape(N, D2, H2, W2, C)


# ------------- fused conv3x3x3 (+ prev-BN affine/ReLU) + bias + BN stats -------------

def _conv_bn_kernel(x0_ref, x1_ref, x2_ref, w_ref, b_ref, s_ref, t_ref, m_ref,
                    y_ref, stat_ref, *, pre_act, depth):
    # x*_ref : (1, 1, H+2, W+2, Cin)   three depth taps of the zero-padded input
    # w_ref  : (3, 3, 3, Cin, Cop)     conv weights, bf16, Cout zero-padded to Cop
    # b_ref  : (1, Cop)                conv bias (padded)
    # s_ref/t_ref : (1, Cin)           previous conv's BN scale/shift (pre_act only)
    # m_ref  : (H+2, W+2, 1)           1 inside, 0 on the spatial zero-pad border
    # y_ref  : (1, 1, H, W, Cop)       raw conv output (pre-BN)
    # stat_ref: (1, 1, 2, Cop)         per-block [sum, sum_sq] over the H*W positions
    d = pl.program_id(1)
    _, _, H, W, Cop = y_ref.shape
    Cin = x0_ref.shape[-1]

    acc = jnp.zeros((H * W, Cop), jnp.float32)
    taps = (x0_ref, x1_ref, x2_ref)
    for kd in range(3):
        a = taps[kd][0, 0]                                   # (H+2, W+2, Cin) f32
        if pre_act:
            # previous conv's BN affine + ReLU folded into this conv's input load
            a = jnp.maximum(a * s_ref[...] + t_ref[...], 0.0)
            # zero the spatial zero-pad border (affine(0) != 0 in general)
            a = a * m_ref[...]
            # zero depth taps that fall into the depth zero-padding
            pd = d + kd
            keep = jnp.where(jnp.logical_and(pd >= 1, pd <= depth), 1.0, 0.0)
            a = a * keep
        a = a.astype(jnp.bfloat16)                            # MXU-native dtype
        for kh in range(3):
            for kw in range(3):
                win = a[kh:kh + H, kw:kw + W, :]              # (H, W, Cin)
                acc = acc + jnp.dot(win.reshape(H * W, Cin),
                                    w_ref[kd, kh, kw],
                                    preferred_element_type=jnp.float32)
    y = acc + b_ref[...]                                      # (H*W, Cop)
    y_ref[...] = y.reshape(1, 1, H, W, Cop)
    s = jnp.sum(y, axis=0, keepdims=True)
    q = jnp.sum(y * y, axis=0, keepdims=True)
    stat_ref[0, 0] = jnp.concatenate([s, q], axis=0)


def conv3x3x3_bn(x, w_p, b_p, scale_in, shift_in, *, pre_act):
    # x: (N, D, H, W, Cin) f32; w_p: (3,3,3,Cin,Cop) bf16; b_p: (1, Cop) f32
    N, D, H, W, Cin = x.shape
    Cop = w_p.shape[-1]
    xp = jnp.pad(x, ((0, 0), (1, 1), (1, 1), (1, 1), (0, 0)))
    Hp2, Wp2 = H + 2, W + 2

    # spatial validity mask (1 inside, 0 on the zero-padded H/W border)
    row = jnp.arange(Hp2)[:, None, None]
    col = jnp.arange(Wp2)[None, :, None]
    mask = ((row >= 1) & (row <= H) & (col >= 1) & (col <= W)).astype(jnp.float32)

    if scale_in is None:
        scale_in = jnp.ones((1, Cin), jnp.float32)
        shift_in = jnp.zeros((1, Cin), jnp.float32)

    def tap_spec(kd):
        return pl.BlockSpec((1, 1, Hp2, Wp2, Cin),
                            lambda n, d, kd=kd: (n, d + kd, 0, 0, 0))

    kernel = functools.partial(_conv_bn_kernel, pre_act=pre_act, depth=D)
    y, stats = pl.pallas_call(
        kernel,
        out_shape=(jax.ShapeDtypeStruct((N, D, H, W, Cop), jnp.float32),
                   jax.ShapeDtypeStruct((N, D, 2, Cop), jnp.float32)),
        grid=(N, D),
        in_specs=[
            tap_spec(0), tap_spec(1), tap_spec(2),
            pl.BlockSpec((3, 3, 3, Cin, Cop), lambda n, d: (0, 0, 0, 0, 0)),
            pl.BlockSpec((1, Cop), lambda n, d: (0, 0)),
            pl.BlockSpec((1, Cin), lambda n, d: (0, 0)),
            pl.BlockSpec((1, Cin), lambda n, d: (0, 0)),
            pl.BlockSpec((Hp2, Wp2, 1), lambda n, d: (0, 0, 0)),
        ],
        out_specs=(pl.BlockSpec((1, 1, H, W, Cop), lambda n, d: (n, d, 0, 0, 0)),
                   pl.BlockSpec((1, 1, 2, Cop), lambda n, d: (n, d, 0, 0))),
        compiler_params=pltpu.CompilerParams(
            dimension_semantics=("parallel", "parallel"),
            vmem_limit_bytes=32 * 1024 * 1024),
    )(xp, xp, xp, w_p, b_p, scale_in, shift_in, mask)
    return y, stats


def bn_scale_shift(stats, gamma_p, beta_p, count):
    # stats: (N, D, 2, Cop) partial [sum, sum_sq]; tiny reduction done in XLA.
    s = jnp.sum(stats[:, :, 0, :], axis=(0, 1))
    q = jnp.sum(stats[:, :, 1, :], axis=(0, 1))
    mean = s / count
    var = jnp.maximum(q / count - mean * mean, 0.0)   # biased var; clamp vs cancellation
    scale = gamma_p * lax.rsqrt(var + EPS)
    shift = beta_p - mean * scale
    return scale.reshape(1, -1), shift.reshape(1, -1)


# ----------------------- final BN affine + ReLU (lane-dense) -----------------------

def _affine_relu_kernel(y_ref, s_ref, t_ref, o_ref):
    o_ref[...] = jnp.maximum(y_ref[...] * s_ref[...] + t_ref[...], 0.0)


def affine_relu(y2d, scale, shift, tm=512):
    M, C = y2d.shape
    tm = min(tm, M)
    return pl.pallas_call(
        _affine_relu_kernel,
        out_shape=jax.ShapeDtypeStruct((M, C), jnp.float32),
        grid=(pl.cdiv(M, tm),),
        in_specs=[pl.BlockSpec((tm, C), lambda i: (i, 0)),
                  pl.BlockSpec((1, C), lambda i: (0, 0)),
                  pl.BlockSpec((1, C), lambda i: (0, 0))],
        out_specs=pl.BlockSpec((tm, C), lambda i: (i, 0)),
        compiler_params=pltpu.CompilerParams(
            dimension_semantics=("parallel",)),
    )(y2d, scale, shift)


# ------------------------------- wrapper glue -------------------------------

def _pad_conv_params(w, b, gamma, beta, cin_pad, cout_pad):
    kd, kh, kw, cin, cout = w.shape
    w_p = jnp.zeros((kd, kh, kw, cin_pad, cout_pad), jnp.float32)
    w_p = w_p.at[:, :, :, :cin, :cout].set(w)
    b_p = jnp.zeros((1, cout_pad), jnp.float32).at[0, :cout].set(b)
    g_p = jnp.ones((cout_pad,), jnp.float32).at[:cout].set(gamma)
    be_p = jnp.zeros((cout_pad,), jnp.float32).at[:cout].set(beta)
    return w_p.astype(jnp.bfloat16), b_p, g_p, be_p


def encoder_forward(x_ncdhw, params):
    # PyTorch-convention input (N, C, D, H, W) -> channels-last for the kernels.
    x = jnp.transpose(x_ncdhw, (0, 2, 3, 4, 1)).astype(jnp.float32)

    # Encoder.pooling = MaxPool3d(kernel_size=2)
    xpool = maxpool3d_2x(x)
    N, D, H, W, Cin = xpool.shape

    cout1 = params['w1'].shape[-1]
    cout2 = params['w2'].shape[-1]
    cop1 = _round_up(cout1, LANES)
    cop2 = _round_up(cout2, LANES)

    w1, b1, g1, be1 = _pad_conv_params(params['w1'], params['b1'],
                                       params['g1'], params['be1'],
                                       cin_pad=Cin, cout_pad=cop1)
    w2, b2, g2, be2 = _pad_conv_params(params['w2'], params['b2'],
                                       params['g2'], params['be2'],
                                       cin_pad=cop1, cout_pad=cop2)

    count = N * D * H * W

    # SingleConv1: conv + bias + BN batch-stats in a single fused pass.
    y1, st1 = conv3x3x3_bn(xpool, w1, b1, None, None, pre_act=False)
    scale1, shift1 = bn_scale_shift(st1, g1, be1, count)

    # SingleConv2: conv1's BN-affine + ReLU folded into conv2's input load.
    y2, st2 = conv3x3x3_bn(y1, w2, b2, scale1, shift1, pre_act=True)
    scale2, shift2 = bn_scale_shift(st2, g2, be2, count)

    # Final BN-affine + ReLU (lane-dense big blocks), drop channel padding.
    out = affine_relu(y2.reshape(N * D * H * W, cop2), scale2, shift2)
    out = out.reshape(N, D, H, W, cop2)[..., :cout2]
    return jnp.transpose(out, (0, 4, 1, 2, 3))          # back to NCDHW


# --------------------------- pure-JAX reference ---------------------------

def _single_conv_ref(x, w, b, gamma, beta):
    y = lax.conv_general_dilated(
        x, w, window_strides=(1, 1, 1), padding='SAME',
        dimension_numbers=('NDHWC', 'DHWIO', 'NDHWC'),
        precision=lax.Precision.HIGHEST) + b
    mean = jnp.mean(y, axis=(0, 1, 2, 3))
    var = jnp.var(y, axis=(0, 1, 2, 3))
    return jax.nn.relu(gamma * (y - mean) * lax.rsqrt(var + EPS) + beta)


def encoder_ref(x_ncdhw, p):
    x = jnp.transpose(x_ncdhw, (0, 2, 3, 4, 1))
    N, D, H, W, C = x.shape
    xpool = x.reshape(N, D // 2, 2, H // 2, 2, W // 2, 2, C).max(axis=(2, 4, 6))
    h1 = _single_conv_ref(xpool, p['w1'], p['b1'], p['g1'], p['be1'])
    h2 = _single_conv_ref(h1, p['w2'], p['b2'], p['g2'], p['be2'])
    return jnp.transpose(h2, (0, 4, 1, 2, 3))


# ----------------------------------- main -----------------------------------

if __name__ == "__main__":
    key = jax.random.PRNGKey(0)
    N, Cin, Cout, D, H, W = 2, 4, 8, 16, 16, 16
    ks = jax.random.split(key, 9)

    def bf16_round(a):
        # keep test inputs bf16-representable so the bf16-MXU kernel can be
        # checked tightly against the f32 HIGHEST reference
        return a.astype(jnp.bfloat16).astype(jnp.float32)

    x = bf16_round(jax.random.normal(ks[0], (N, Cin, D, H, W), jnp.float32))

    c1out = Cout if Cout >= Cin else Cin   # DoubleConv(encoder=True) channel rule
    params = {
        'w1': bf16_round(0.1 * jax.random.normal(ks[1], (3, 3, 3, Cin, c1out), jnp.float32)),
        'b1': 0.1 * jax.random.normal(ks[2], (c1out,), jnp.float32),
        'g1': 1.0 + 0.1 * jax.random.normal(ks[3], (c1out,), jnp.float32),
        'be1': 0.1 * jax.random.normal(ks[4], (c1out,), jnp.float32),
        'w2': bf16_round(0.1 * jax.random.normal(ks[5], (3, 3, 3, c1out, Cout), jnp.float32)),
        'b2': 0.1 * jax.random.normal(ks[6], (Cout,), jnp.float32),
        'g2': 1.0 + 0.1 * jax.random.normal(ks[7], (Cout,), jnp.float32),
        'be2': 0.1 * jax.random.normal(ks[8], (Cout,), jnp.float32),
    }

    out = jax.block_until_ready(jax.jit(encoder_forward)(x, params))
    assert out.shape == (N, Cout, D // 2, H // 2, W // 2), out.shape

    ref = jax.block_until_ready(encoder_ref(x, params))
    max_err = float(jnp.max(jnp.abs(out - ref)))
    if not bool(jnp.allclose(out, ref, atol=2e-2, rtol=2e-2)):
        raise AssertionError(f"Pallas vs reference mismatch, max abs err = {max_err}")

    print("KERNEL_OK")
</pallas_src>

<mosaic_0001>
module attributes {stable_mosaic.version = 11 : i64} {
  func.func @_maxpool_kernel(%arg0: i32, %arg1: memref<2x8x2x8x8xf32, #tpu.memory_space<vmem>>, %arg2: memref<1x8x8x4xf32, #tpu.memory_space<vmem>>) attributes {dimension_semantics = [#tpu.dimension_semantics<parallel>], iteration_bounds = array<i64: 16>, scalar_prefetch = 0 : i64, scratch_operands = 0 : i64, tpu.core_type = #tpu.core_type<tc>, window_params = [{transform_indices = @transform_0, window_bounds = array<i64: 2, 8, 2, 8, 8>}, {transform_indices = @transform_1, window_bounds = array<i64: 1, 8, 8, 4>}]} {
    %c0 = arith.constant 0 : index
    %c0_0 = arith.constant 0 : index
    %c0_1 = arith.constant 0 : index
    %c0_2 = arith.constant 0 : index
    %c0_3 = arith.constant 0 : index
    %0 = vector.load %arg1[%c0, %c0_0, %c0_1, %c0_2, %c0_3] : memref<2x8x2x8x8xf32, #tpu.memory_space<vmem>>, vector<1x8x2x8x8xf32>
    %1 = vector.shape_cast %0 : vector<1x8x2x8x8xf32> to vector<8x2x8x8xf32>
    %c1 = arith.constant 1 : index
    %c0_4 = arith.constant 0 : index
    %c0_5 = arith.constant 0 : index
    %c0_6 = arith.constant 0 : index
    %c0_7 = arith.constant 0 : index
    %2 = vector.load %arg1[%c1, %c0_4, %c0_5, %c0_6, %c0_7] : memref<2x8x2x8x8xf32, #tpu.memory_space<vmem>>, vector<1x8x2x8x8xf32>
    %3 = vector.shape_cast %2 : vector<1x8x2x8x8xf32> to vector<8x2x8x8xf32>
    %4 = arith.maximumf %1, %3 : vector<8x2x8x8xf32>
    %5 = vector.extract_strided_slice %4 {offsets = [0, 0, 0, 0], sizes = [8, 1, 8, 8], strides = [1, 1, 1, 1]} : vector<8x2x8x8xf32> to vector<8x1x8x8xf32>
    %6 = vector.shape_cast %5 : vector<8x1x8x8xf32> to vector<8x8x8xf32>
    %7 = vector.extract_strided_slice %4 {offsets = [0, 1, 0, 0], sizes = [8, 1, 8, 8], strides = [1, 1, 1, 1]} : vector<8x2x8x8xf32> to vector<8x1x8x8xf32>
    %8 = vector.shape_cast %7 : vector<8x1x8x8xf32> to vector<8x8x8xf32>
    %9 = arith.maximumf %6, %8 : vector<8x8x8xf32>
    %10 = vector.extract_strided_slice %9 {offsets = [0, 0, 0], sizes = [8, 8, 4], strides = [1, 1, 1]} : vector<8x8x8xf32> to vector<8x8x4xf32>
    %11 = vector.extract_strided_slice %9 {offsets = [0, 0, 4], sizes = [8, 8, 4], strides = [1, 1, 1]} : vector<8x8x8xf32> to vector<8x8x4xf32>
    %12 = arith.maximumf %10, %11 : vector<8x8x4xf32>
    %c0_8 = arith.constant 0 : index
    %c0_9 = arith.constant 0 : index
    %c0_10 = arith.constant 0 : index
    %c0_11 = arith.constant 0 : index
    %13 = vector.load %arg2[%c0_8, %c0_9, %c0_10, %c0_11] : memref<1x8x8x4xf32, #tpu.memory_space<vmem>>, vector<1x8x8x4xf32>
    %14 = vector.shape_cast %13 : vector<1x8x8x4xf32> to vector<8x8x4xf32>
    %15 = vector.shape_cast %12 : vector<8x8x4xf32> to vector<1x8x8x4xf32>
    tpu.vector_store %arg2[%c0_8, %c0_9, %c0_10, %c0_11], %15 {strides = array<i32>} : memref<1x8x8x4xf32, #tpu.memory_space<vmem>>, vector<1x8x8x4xf32>,
    return
  }
  func.func @transform_0(%arg0: i32) -> (i32, i32, i32, i32, i32) {
    %c0_i32 = arith.constant 0 : i32
    %c0_i32_0 = arith.constant 0 : i32
    %c0_i32_1 = arith.constant 0 : i32
    %c0_i32_2 = arith.constant 0 : i32
    %c0_i32_3 = arith.constant 0 : i32
    return %arg0, %c0_i32, %c0_i32_0, %c0_i32_1, %c0_i32_2 : i32, i32, i32, i32, i32
  }
  func.func @transform_1(%arg0: i32) -> (i32, i32, i32, i32) {
    %c0_i32 = arith.constant 0 : i32
    %c0_i32_0 = arith.constant 0 : i32
    %c0_i32_1 = arith.constant 0 : i32
    %c0_i32_2 = arith.constant 0 : i32
    return %arg0, %c0_i32, %c0_i32_0, %c0_i32_1 : i32, i32, i32, i32
  }
}

module attributes {stable_mosaic.version = 11 : i64} {
  func.func @_conv_bn_kernel(%arg0: i32, %arg1: i32, %arg2: memref<1x1x10x10x4xf32, #tpu.memory_space<vmem>>, %arg3: memref<1x1x10x10x4xf32, #tpu.memory_space<vmem>>, %arg4: memref<1x1x10x10x4xf32, #tpu.memory_space<vmem>>, %arg5: memref<3x3x3x4x128xbf16, #tpu.memory_space<vmem>>, %arg6: memref<1x128xf32, #tpu.memory_space<vmem>>, %arg7: memref<1x4xf32, #tpu.memory_space<vmem>>, %arg8: memref<1x4xf32, #tpu.memory_space<vmem>>, %arg9: memref<10x10x1xf32, #tpu.memory_space<vmem>>, %arg10: memref<1x1x8x8x128xf32, #tpu.memory_space<vmem>>, %arg11: memref<1x1x2x128xf32, #tpu.memory_space<vmem>>) attributes {dimension_semantics = [#tpu.dimension_semantics<parallel>, #tpu.dimension_semantics<parallel>], iteration_bounds = array<i64: 2, 8>, scalar_prefetch = 0 : i64, scratch_operands = 0 : i64, tpu.core_type = #tpu.core_type<tc>, window_params = [{transform_indices = @transform_0, window_bounds = array<i64: 1, 1, 10, 10, 4>}, {transform_indices = @transform_1, window_bounds = array<i64: 1, 1, 10, 10, 4>}, {transform_indices = @transform_2, window_bounds = array<i64: 1, 1, 10, 10, 4>}, {pipeline_mode = #tpu.pipeline_mode<synchronous>, transform_indices = @transform_3, window_bounds = array<i64: 3, 3, 3, 4, 128>}, {pipeline_mode = #tpu.pipeline_mode<synchronous>, transform_indices = @transform_4, window_bounds = array<i64: 1, 128>}, {pipeline_mode = #tpu.pipeline_mode<synchronous>, transform_indices = @transform_5, window_bounds = array<i64: 1, 4>}, {pipeline_mode = #tpu.pipeline_mode<synchronous>, transform_indices = @transform_6, window_bounds = array<i64: 1, 4>}, {pipeline_mode = #tpu.pipeline_mode<synchronous>, transform_indices = @transform_7, window_bounds = array<i64: 10, 10, 1>}, {transform_indices = @transform_8, window_bounds = array<i64: 1, 1, 8, 8, 128>}, {transform_indices = @transform_9, window_bounds = array<i64: 1, 1, 2, 128>}]} {
    %cst = arith.constant 0.000000e+00 : f32
    %0 = vector.broadcast %cst : f32 to vector<64x128xf32>
    %c0 = arith.constant 0 : index
    %c0_0 = arith.constant 0 : index
    %c0_1 = arith.constant 0 : index
    %c0_2 = arith.constant 0 : index
    %c0_3 = arith.constant 0 : index
    %1 = vector.load %arg2[%c0, %c0_0, %c0_1, %c0_2, %c0_3] : memref<1x1x10x10x4xf32, #tpu.memory_space<vmem>>, vector<1x1x10x10x4xf32>
    %2 = vector.shape_cast %1 : vector<1x1x10x10x4xf32> to vector<10x10x4xf32>
    %3 = arith.truncf %2 : vector<10x10x4xf32> to vector<10x10x4xbf16>
    %4 = vector.extract_strided_slice %3 {offsets = [0, 0, 0], sizes = [8, 8, 4], strides = [1, 1, 1]} : vector<10x10x4xbf16> to vector<8x8x4xbf16>
    %5 = vector.shape_cast %4 : vector<8x8x4xbf16> to vector<64x4xbf16>
    %c0_4 = arith.constant 0 : index
    %c0_5 = arith.constant 0 : index
    %c0_6 = arith.constant 0 : index
    %c0_7 = arith.constant 0 : index
    %c0_8 = arith.constant 0 : index
    %6 = vector.load %arg5[%c0_4, %c0_5, %c0_6, %c0_7, %c0_8] : memref<3x3x3x4x128xbf16, #tpu.memory_space<vmem>>, vector<1x1x1x4x128xbf16>
    %7 = vector.shape_cast %6 : vector<1x1x1x4x128xbf16> to vector<4x128xbf16>
    %cst_9 = arith.constant dense<0.000000e+00> : vector<64x128xf32>
    %8 = tpu.matmul %5, %7, %cst_9 {dimension_numbers = #tpu.dot_dimension_numbers<[1], [0], [0], [1], [0, 0, 1, 1], [], []>} : vector<64x4xbf16>, vector<4x128xbf16>, vector<64x128xf32> -> vector<64x128xf32>
    %9 = arith.addf %0, %8 : vector<64x128xf32>
    %10 = vector.extract_strided_slice %3 {offsets = [0, 1, 0], sizes = [8, 8, 4], strides = [1, 1, 1]} : vector<10x10x4xbf16> to vector<8x8x4xbf16>
    %11 = vector.shape_cast %10 : vector<8x8x4xbf16> to vector<64x4xbf16>
    %c0_10 = arith.constant 0 : index
    %c0_11 = arith.constant 0 : index
    %c1 = arith.constant 1 : index
    %c0_12 = arith.constant 0 : index
    %c0_13 = arith.constant 0 : index
    %12 = vector.load %arg5[%c0_10, %c0_11, %c1, %c0_12, %c0_13] : memref<3x3x3x4x128xbf16, #tpu.memory_space<vmem>>, vector<1x1x1x4x128xbf16>
    %13 = vector.shape_cast %12 : vector<1x1x1x4x128xbf16> to vector<4x128xbf16>
    %cst_14 = arith.constant dense<0.000000e+00> : vector<64x128xf32>
    %14 = tpu.matmul %11, %13, %cst_14 {dimension_numbers = #tpu.dot_dimension_numbers<[1], [0], [0], [1], [0, 0, 1, 1], [], []>} : vector<64x4xbf16>, vector<4x128xbf16>, vector<64x128xf32> -> vector<64x128xf32>
    %15 = arith.addf %9, %14 : vector<64x128xf32>
    %16 = vector.extract_strided_slice %3 {offsets = [0, 2, 0], sizes = [8, 8, 4], strides = [1, 1, 1]} : vector<10x10x4xbf16> to vector<8x8x4xbf16>
    %17 = vector.shape_cast %16 : vector<8x8x4xbf16> to vector<64x4xbf16>
    %c0_15 = arith.constant 0 : index
    %c0_16 = arith.constant 0 : index
    %c2 = arith.constant 2 : index
    %c0_17 = arith.constant 0 : index
    %c0_18 = arith.constant 0 : index
    %18 = vector.load %arg5[%c0_15, %c0_16, %c2, %c0_17, %c0_18] : memref<3x3x3x4x128xbf16, #tpu.memory_space<vmem>>, vector<1x1x1x4x128xbf16>
    %19 = vector.shape_cast %18 : vector<1x1x1x4x128xbf16> to vector<4x128xbf16>
    %cst_19 = arith.constant dense<0.000000e+00> : vector<64x128xf32>
    %20 = tpu.matmul %17, %19, %cst_19 {dimension_numbers = #tpu.dot_dimension_numbers<[1], [0], [0], [1], [0, 0, 1, 1], [], []>} : vector<64x4xbf16>, vector<4x128xbf16>, vector<64x128xf32> -> vector<64x128xf32>
    %21 = arith.addf %15, %20 : vector<64x128xf32>
    %22 = vector.extract_strided_slice %3 {offsets = [1, 0, 0], sizes = [8, 8, 4], strides = [1, 1, 1]} : vector<10x10x4xbf16> to vector<8x8x4xbf16>
    %23 = vector.shape_cast %22 : vector<8x8x4xbf16> to vector<64x4xbf16>
    %c0_20 = arith.constant 0 : index
    %c1_21 = arith.constant 1 : index
    %c0_22 = arith.constant 0 : index
    %c0_23 = arith.constant 0 : index
    %c0_24 = arith.constant 0 : index
    %24 = vector.load %arg5[%c0_20, %c1_21, %c0_22, %c0_23, %c0_24] : memref<3x3x3x4x128xbf16, #tpu.memory_space<vmem>>, vector<1x1x1x4x128xbf16>
    %25 = vector.shape_cast %24 : vector<1x1x1x4x128xbf16> to vector<4x128xbf16>
    %cst_25 = arith.constant dense<0.000000e+00> : vector<64x128xf32>
    %26 = tpu.matmul %23, %25, %cst_25 {dimension_numbers = #tpu.dot_dimension_numbers<[1], [0], [0], [1], [0, 0, 1, 1], [], []>} : vector<64x4xbf16>, vector<4x128xbf16>, vector<64x128xf32> -> vector<64x128xf32>
    %27 = arith.addf %21, %26 : vector<64x128xf32>
    %28 = vector.extract_strided_slice %3 {offsets = [1, 1, 0], sizes = [8, 8, 4], strides = [1, 1, 1]} : vector<10x10x4xbf16> to vector<8x8x4xbf16>
    %29 = vector.shape_cast %28 : vector<8x8x4xbf16> to vector<64x4xbf16>
    %c0_26 = arith.constant 0 : index
    %c1_27 = arith.constant 1 : index
    %c1_28 = arith.constant 1 : index
    %c0_29 = arith.constant 0 : index
    %c0_30 = arith.constant 0 : index
    %30 = vector.load %arg5[%c0_26, %c1_27, %c1_28, %c0_29, %c0_30] : memref<3x3x3x4x128xbf16, #tpu.memory_space<vmem>>, vector<1x1x1x4x128xbf16>
    %31 = vector.shape_cast %30 : vector<1x1x1x4x128xbf16> to vector<4x128xbf16>
    %cst_31 = arith.constant dense<0.000000e+00> : vector<64x128xf32>
    %32 = tpu.matmul %29, %31, %cst_31 {dimension_numbers = #tpu.dot_dimension_numbers<[1], [0], [0], [1], [0, 0, 1, 1], [], []>} : vector<64x4xbf16>, vector<4x128xbf16>, vector<64x128xf32> -> vector<64x128xf32>
    %33 = arith.addf %27, %32 : vector<64x128xf32>
    %34 = vector.extract_strided_slice %3 {offsets = [1, 2, 0], sizes = [8, 8, 4], strides = [1, 1, 1]} : vector<10x10x4xbf16> to vector<8x8x4xbf16>
    %35 = vector.shape_cast %34 : vector<8x8x4xbf16> to vector<64x4xbf16>
    %c0_32 = arith.constant 0 : index
    %c1_33 = arith.constant 1 : index
    %c2_34 = arith.constant 2 : index
    %c0_35 = arith.constant 0 : index
    %c0_36 = arith.constant 0 : index
    %36 = vector.load %arg5[%c0_32, %c1_33, %c2_34, %c0_35, %c0_36] : memref<3x3x3x4x128xbf16, #tpu.memory_space<vmem>>, vector<1x1x1x4x128xbf16>
    %37 = vector.shape_cast %36 : vector<1x1x1x4x128xbf16> to vector<4x128xbf16>
    %cst_37 = arith.constant dense<0.000000e+00> : vector<64x128xf32>
    %38 = tpu.matmul %35, %37, %cst_37 {dimension_numbers = #tpu.dot_dimension_numbers<[1], [0], [0], [1], [0, 0, 1, 1], [], []>} : vector<64x4xbf16>, vector<4x128xbf16>, vector<64x128xf32> -> vector<64x128xf32>
    %39 = arith.addf %33, %38 : vector<64x128xf32>
    %40 = vector.extract_strided_slice %3 {offsets = [2, 0, 0], sizes = [8, 8, 4], strides = [1, 1, 1]} : vector<10x10x4xbf16> to vector<8x8x4xbf16>
    %41 = vector.shape_cast %40 : vector<8x8x4xbf16> to vector<64x4xbf16>
    %c0_38 = arith.constant 0 : index
    %c2_39 = arith.constant 2 : index
    %c0_40 = arith.constant 0 : index
    %c0_41 = arith.constant 0 : index
    %c0_42 = arith.constant 0 : index
    %42 = vector.load %arg5[%c0_38, %c2_39, %c0_40, %c0_41, %c0_42] : memref<3x3x3x4x128xbf16, #tpu.memory_space<vmem>>, vector<1x1x1x4x128xbf16>
    %43 = vector.shape_cast %42 : vector<1x1x1x4x128xbf16> to vector<4x128xbf16>
    %cst_43 = arith.constant dense<0.000000e+00> : vector<64x128xf32>
    %44 = tpu.matmul %41, %43, %cst_43 {dimension_numbers = #tpu.dot_dimension_numbers<[1], [0], [0], [1], [0, 0, 1, 1], [], []>} : vector<64x4xbf16>, vector<4x128xbf16>, vector<64x128xf32> -> vector<64x128xf32>
    %45 = arith.addf %39, %44 : vector<64x128xf32>
    %46 = vector.extract_strided_slice %3 {offsets = [2, 1, 0], sizes = [8, 8, 4], strides = [1, 1, 1]} : vector<10x10x4xbf16> to vector<8x8x4xbf16>
    %47 = vector.shape_cast %46 : vector<8x8x4xbf16> to vector<64x4xbf16>
    %c0_44 = arith.constant 0 : index
    %c2_45 = arith.constant 2 : index
    %c1_46 = arith.constant 1 : index
    %c0_47 = arith.constant 0 : index
    %c0_48 = arith.constant 0 : index
    %48 = vector.load %arg5[%c0_44, %c2_45, %c1_46, %c0_47, %c0_48] : memref<3x3x3x4x128xbf16, #tpu.memory_space<vmem>>, vector<1x1x1x4x128xbf16>
    %49 = vector.shape_cast %48 : vector<1x1x1x4x128xbf16> to vector<4x128xbf16>
    %cst_49 = arith.constant dense<0.000000e+00> : vector<64x128xf32>
    %50 = tpu.matmul %47, %49, %cst_49 {dimension_numbers = #tpu.dot_dimension_numbers<[1], [0], [0], [1], [0, 0, 1, 1], [], []>} : vector<64x4xbf16>, vector<4x128xbf16>, vector<64x128xf32> -> vector<64x128xf32>
    %51 = arith.addf %45, %50 : vector<64x128xf32>
    %52 = vector.extract_strided_slice %3 {offsets = [2, 2, 0], sizes = [8, 8, 4], strides = [1, 1, 1]} : vector<10x10x4xbf16> to vector<8x8x4xbf16>
    %53 = vector.shape_cast %52 : vector<8x8x4xbf16> to vector<64x4xbf16>
    %c0_50 = arith.constant 0 : index
    %c2_51 = arith.constant 2 : index
    %c2_52 = arith.constant 2 : index
    %c0_53 = arith.constant 0 : index
    %c0_54 = arith.constant 0 : index
    %54 = vector.load %arg5[%c0_50, %c2_51, %c2_52, %c0_53, %c0_54] : memref<3x3x3x4x128xbf16, #tpu.memory_space<vmem>>, vector<1x1x1x4x128xbf16>
    %55 = vector.shape_cast %54 : vector<1x1x1x4x128xbf16> to vector<4x128xbf16>
    %cst_55 = arith.constant dense<0.000000e+00> : vector<64x128xf32>
    %56 = tpu.matmul %53, %55, %cst_55 {dimension_numbers = #tpu.dot_dimension_numbers<[1], [0], [0], [1], [0, 0, 1, 1], [], []>} : vector<64x4xbf16>, vector<4x128xbf16>, vector<64x128xf32> -> vector<64x128xf32>
    %57 = arith.addf %51, %56 : vector<64x128xf32>
    %c0_56 = arith.constant 0 : index
    %c0_57 = arith.constant 0 : index
    %c0_58 = arith.constant 0 : index
    %c0_59 = arith.constant 0 : index
    %c0_60 = arith.constant 0 : index
    %58 = vector.load %arg3[%c0_56, %c0_57, %c0_58, %c0_59, %c0_60] : memref<1x1x10x10x4xf32, #tpu.memory_space<vmem>>, vector<1x1x10x10x4xf32>
    %59 = vector.shape_cast %58 : vector<1x1x10x10x4xf32> to vector<10x10x4xf32>
    %60 = arith.truncf %59 : vector<10x10x4xf32> to vector<10x10x4xbf16>
    %61 = vector.extract_strided_slice %60 {offsets = [0, 0, 0], sizes = [8, 8, 4], strides = [1, 1, 1]} : vector<10x10x4xbf16> to vector<8x8x4xbf16>
    %62 = vector.shape_cast %61 : vector<8x8x4xbf16> to vector<64x4xbf16>
    %c1_61 = arith.constant 1 : index
    %c0_62 = arith.constant 0 : index
    %c0_63 = arith.constant 0 : index
    %c0_64 = arith.constant 0 : index
    %c0_65 = arith.constant 0 : index
    %63 = vector.load %arg5[%c1_61, %c0_62, %c0_63, %c0_64, %c0_65] : memref<3x3x3x4x128xbf16, #tpu.memory_space<vmem>>, vector<1x1x1x4x128xbf16>
    %64 = vector.shape_cast %63 : vector<1x1x1x4x128xbf16> to vector<4x128xbf16>
    %cst_66 = arith.constant dense<0.000000e+00> : vector<64x128xf32>
    %65 = tpu.matmul %62, %64, %cst_66 {dimension_numbers = #tpu.dot_dimension_numbers<[1], [0], [0], [1], [0, 0, 1, 1], [], []>} : vector<64x4xbf16>, vector<4x128xbf16>, vector<64x128xf32> -> vector<64x128xf32>
    %66 = arith.addf %57, %65 : vector<64x128xf32>
    %67 = vector.extract_strided_slice %60 {offsets = [0, 1, 0], sizes = [8, 8, 4], strides = [1, 1, 1]} : vector<10x10x4xbf16> to vector<8x8x4xbf16>
    %68 = vector.shape_cast %67 : vector<8x8x4xbf16> to vector<64x4xbf16>
    %c1_67 = arith.constant 1 : index
    %c0_68 = arith.constant 0 : index
    %c1_69 = arith.constant 1 : index
    %c0_70 = arith.constant 0 : index
    %c0_71 = arith.constant 0 : index
    %69 = vector.load %arg5[%c1_67, %c0_68, %c1_69, %c0_70, %c0_71] : memref<3x3x3x4x128xbf16, #tpu.memory_space<vmem>>, vector<1x1x1x4x128xbf16>
    %70 = vector.shape_cast %69 : vector<1x1x1x4x128xbf16> to vector<4x128xbf16>
    %cst_72 = arith.constant dense<0.000000e+00> : vector<64x128xf32>
    %71 = tpu.matmul %68, %70, %cst_72 {dimension_numbers = #tpu.dot_dimension_numbers<[1], [0], [0], [1], [0, 0, 1, 1], [], []>} : vector<64x4xbf16>, vector<4x128xbf16>, vector<64x128xf32> -> vector<64x128xf32>
    %72 = arith.addf %66, %71 : vector<64x128xf32>
    %73 = vector.extract_strided_slice %60 {offsets = [0, 2, 0], sizes = [8, 8, 4], strides = [1, 1, 1]} : vector<10x10x4xbf16> to vector<8x8x4xbf16>
    %74 = vector.shape_cast %73 : vector<8x8x4xbf16> to vector<64x4xbf16>
    %c1_73 = arith.constant 1 : index
    %c0_74 = arith.constant 0 : index
    %c2_75 = arith.constant 2 : index
    %c0_76 = arith.constant 0 : index
    %c0_77 = arith.constant 0 : index
    %75 = vector.load %arg5[%c1_73, %c0_74, %c2_75, %c0_76, %c0_77] : memref<3x3x3x4x128xbf16, #tpu.memory_space<vmem>>, vector<1x1x1x4x128xbf16>
    %76 = vector.shape_cast %75 : vector<1x1x1x4x128xbf16> to vector<4x128xbf16>
    %cst_78 = arith.constant dense<0.000000e+00> : vector<64x128xf32>
    %77 = tpu.matmul %74, %76, %cst_78 {dimension_numbers = #tpu.dot_dimension_numbers<[1], [0], [0], [1], [0, 0, 1, 1], [], []>} : vector<64x4xbf16>, vector<4x128xbf16>, vector<64x128xf32> -> vector<64x128xf32>
    %78 = arith.addf %72, %77 : vector<64x128xf32>
    %79 = vector.extract_strided_slice %60 {offsets = [1, 0, 0], sizes = [8, 8, 4], strides = [1, 1, 1]} : vector<10x10x4xbf16> to vector<8x8x4xbf16>
    %80 = vector.shape_cast %79 : vector<8x8x4xbf16> to vector<64x4xbf16>
    %c1_79 = arith.constant 1 : index
    %c1_80 = arith.constant 1 : index
    %c0_81 = arith.constant 0 : index
    %c0_82 = arith.constant 0 : index
    %c0_83 = arith.constant 0 : index
    %81 = vector.load %arg5[%c1_79, %c1_80, %c0_81, %c0_82, %c0_83] : memref<3x3x3x4x128xbf16, #tpu.memory_space<vmem>>, vector<1x1x1x4x128xbf16>
    %82 = vector.shape_cast %81 : vector<1x1x1x4x128xbf16> to vector<4x128xbf16>
    %cst_84 = arith.constant dense<0.000000e+00> : vector<64x128xf32>
    %83 = tpu.matmul %80, %82, %cst_84 {dimension_numbers = #tpu.dot_dimension_numbers<[1], [0], [0], [1], [0, 0, 1, 1], [], []>} : vector<64x4xbf16>, vector<4x128xbf16>, vector<64x128xf32> -> vector<64x128xf32>
    %84 = arith.addf %78, %83 : vector<64x128xf32>
    %85 = vector.extract_strided_slice %60 {offsets = [1, 1, 0], sizes = [8, 8, 4], strides = [1, 1, 1]} : vector<10x10x4xbf16> to vector<8x8x4xbf16>
    %86 = vector.shape_cast %85 : vector<8x8x4xbf16> to vector<64x4xbf16>
    %c1_85 = arith.constant 1 : index
    %c1_86 = arith.constant 1 : index
    %c1_87 = arith.constant 1 : index
    %c0_88 = arith.constant 0 : index
    %c0_89 = arith.constant 0 : index
    %87 = vector.load %arg5[%c1_85, %c1_86, %c1_87, %c0_88, %c0_89] : memref<3x3x3x4x128xbf16, #tpu.memory_space<vmem>>, vector<1x1x1x4x128xbf16>
    %88 = vector.shape_cast %87 : vector<1x1x1x4x128xbf16> to vector<4x128xbf16>
    %cst_90 = arith.constant dense<0.000000e+00> : vector<64x128xf32>
    %89 = tpu.matmul %86, %88, %cst_90 {dimension_numbers = #tpu.dot_dimension_numbers<[1], [0], [0], [1], [0, 0, 1, 1], [], []>} : vector<64x4xbf16>, vector<4x128xbf16>, vector<64x128xf32> -> vector<64x128xf32>
    %90 = arith.addf %84, %89 : vector<64x128xf32>
    %91 = vector.extract_strided_slice %60 {offsets = [1, 2, 0], sizes = [8, 8, 4], strides = [1, 1, 1]} : vector<10x10x4xbf16> to vector<8x8x4xbf16>
    %92 = vector.shape_cast %91 : vector<8x8x4xbf16> to vector<64x4xbf16>
    %c1_91 = arith.constant 1 : index
    %c1_92 = arith.constant 1 : index
    %c2_93 = arith.constant 2 : index
    %c0_94 = arith.constant 0 : index
    %c0_95 = arith.constant 0 : index
    %93 = vector.load %arg5[%c1_91, %c1_92, %c2_93, %c0_94, %c0_95] : memref<3x3x3x4x128xbf16, #tpu.memory_space<vmem>>, vector<1x1x1x4x128xbf16>
    %94 = vector.shape_cast %93 : vector<1x1x1x4x128xbf16> to vector<4x128xbf16>
    %cst_96 = arith.constant dense<0.000000e+00> : vector<64x128xf32>
    %95 = tpu.matmul %92, %94, %cst_96 {dimension_numbers = #tpu.dot_dimension_numbers<[1], [0], [0], [1], [0, 0, 1, 1], [], []>} : vector<64x4xbf16>, vector<4x128xbf16>, vector<64x128xf32> -> vector<64x128xf32>
    %96 = arith.addf %90, %95 : vector<64x128xf32>
    %97 = vector.extract_strided_slice %60 {offsets = [2, 0, 0], sizes = [8, 8, 4], strides = [1, 1, 1]} : vector<10x10x4xbf16> to vector<8x8x4xbf16>
    %98 = vector.shape_cast %97 : vector<8x8x4xbf16> to vector<64x4xbf16>
    %c1_97 = arith.constant 1 : index
    %c2_98 = arith.constant 2 : index
    %c0_99 = arith.constant 0 : index
    %c0_100 = arith.constant 0 : index
    %c0_101 = arith.constant 0 : index
    %99 = vector.load %arg5[%c1_97, %c2_98, %c0_99, %c0_100, %c0_101] : memref<3x3x3x4x128xbf16, #tpu.memory_space<vmem>>, vector<1x1x1x4x128xbf16>
    %100 = vector.shape_cast %99 : vector<1x1x1x4x128xbf16> to vector<4x128xbf16>
    %cst_102 = arith.constant dense<0.000000e+00> : vector<64x128xf32>
    %101 = tpu.matmul %98, %100, %cst_102 {dimension_numbers = #tpu.dot_dimension_numbers<[1], [0], [0], [1], [0, 0, 1, 1], [], []>} : vector<64x4xbf16>, vector<4x128xbf16>, vector<64x128xf32> -> vector<64x128xf32>
    %102 = arith.addf %96, %101 : vector<64x128xf32>
    %103 = vector.extract_strided_slice %60 {offsets = [2, 1, 0], sizes = [8, 8, 4], strides = [1, 1, 1]} : vector<10x10x4xbf16> to vector<8x8x4xbf16>
    %104 = vector.shape_cast %103 : vector<8x8x4xbf16> to vector<64x4xbf16>
    %c1_103 = arith.constant 1 : index
    %c2_104 = arith.constant 2 : index
    %c1_105 = arith.constant 1 : index
    %c0_106 = arith.constant 0 : index
    %c0_107 = arith.constant 0 : index
    %105 = vector.load %arg5[%c1_103, %c2_104, %c1_105, %c0_106, %c0_107] : memref<3x3x3x4x128xbf16, #tpu.memory_space<vmem>>, vector<1x1x1x4x128xbf16>
    %106 = vector.shape_cast %105 : vector<1x1x1x4x128xbf16> to vector<4x128xbf16>
    %cst_108 = arith.constant dense<0.000000e+00> : vector<64x128xf32>
    %107 = tpu.matmul %104, %106, %cst_108 {dimension_numbers = #tpu.dot_dimension_numbers<[1], [0], [0], [1], [0, 0, 1, 1], [], []>} : vector<64x4xbf16>, vector<4x128xbf16>, vector<64x128xf32> -> vector<64x128xf32>
    %108 = arith.addf %102, %107 : vector<64x128xf32>
    %109 = vector.extract_strided_slice %60 {offsets = [2, 2, 0], sizes = [8, 8, 4], strides = [1, 1, 1]} : vector<10x10x4xbf16> to vector<8x8x4xbf16>
    %110 = vector.shape_cast %109 : vector<8x8x4xbf16> to vector<64x4xbf16>
    %c1_109 = arith.constant 1 : index
    %c2_110 = arith.constant 2 : index
    %c2_111 = arith.constant 2 : index
    %c0_112 = arith.constant 0 : index
    %c0_113 = arith.constant 0 : index
    %111 = vector.load %arg5[%c1_109, %c2_110, %c2_111, %c0_112, %c0_113] : memref<3x3x3x4x128xbf16, #tpu.memory_space<vmem>>, vector<1x1x1x4x128xbf16>
    %112 = vector.shape_cast %111 : vector<1x1x1x4x128xbf16> to vector<4x128xbf16>
    %cst_114 = arith.constant dense<0.000000e+00> : vector<64x128xf32>
    %113 = tpu.matmul %110, %112, %cst_114 {dimension_numbers = #tpu.dot_dimension_numbers<[1], [0], [0], [1], [0, 0, 1, 1], [], []>} : vector<64x4xbf16>, vector<4x128xbf16>, vector<64x128xf32> -> vector<64x128xf32>
    %114 = arith.addf %108, %113 : vector<64x128xf32>
    %c0_115 = arith.constant 0 : index
    %c0_116 = arith.constant 0 : index
    %c0_117 = arith.constant 0 : index
    %c0_118 = arith.constant 0 : index
    %c0_119 = arith.constant 0 : index
    %115 = vector.load %arg4[%c0_115, %c0_116, %c0_117, %c0_118, %c0_119] : memref<1x1x10x10x4xf32, #tpu.memory_space<vmem>>, vector<1x1x10x10x4xf32>
    %116 = vector.shape_cast %115 : vector<1x1x10x10x4xf32> to vector<10x10x4xf32>
    %117 = arith.truncf %116 : vector<10x10x4xf32> to vector<10x10x4xbf16>
    %118 = vector.extract_strided_slice %117 {offsets = [0, 0, 0], sizes = [8, 8, 4], strides = [1, 1, 1]} : vector<10x10x4xbf16> to vector<8x8x4xbf16>
    %119 = vector.shape_cast %118 : vector<8x8x4xbf16> to vector<64x4xbf16>
    %c2_120 = arith.constant 2 : index
    %c0_121 = arith.constant 0 : index
    %c0_122 = arith.constant 0 : index
    %c0_123 = arith.constant 0 : index
    %c0_124 = arith.constant 0 : index
    %120 = vector.load %arg5[%c2_120, %c0_121, %c0_122, %c0_123, %c0_124] : memref<3x3x3x4x128xbf16, #tpu.memory_space<vmem>>, vector<1x1x1x4x128xbf16>
    %121 = vector.shape_cast %120 : vector<1x1x1x4x128xbf16> to vector<4x128xbf16>
    %cst_125 = arith.constant dense<0.000000e+00> : vector<64x128xf32>
    %122 = tpu.matmul %119, %121, %cst_125 {dimension_numbers = #tpu.dot_dimension_numbers<[1], [0], [0], [1], [0, 0, 1, 1], [], []>} : vector<64x4xbf16>, vector<4x128xbf16>, vector<64x128xf32> -> vector<64x128xf32>
    %123 = arith.addf %114, %122 : vector<64x128xf32>
    %124 = vector.extract_strided_slice %117 {offsets = [0, 1, 0], sizes = [8, 8, 4], strides = [1, 1, 1]} : vector<10x10x4xbf16> to vector<8x8x4xbf16>
    %125 = vector.shape_cast %124 : vector<8x8x4xbf16> to vector<64x4xbf16>
    %c2_126 = arith.constant 2 : index
    %c0_127 = arith.constant 0 : index
    %c1_128 = arith.constant 1 : index
    %c0_129 = arith.constant 0 : index
    %c0_130 = arith.constant 0 : index
    %126 = vector.load %arg5[%c2_126, %c0_127, %c1_128, %c0_129, %c0_130] : memref<3x3x3x4x128xbf16, #tpu.memory_space<vmem>>, vector<1x1x1x4x128xbf16>
    %127 = vector.shape_cast %126 : vector<1x1x1x4x128xbf16> to vector<4x128xbf16>
    %cst_131 = arith.constant dense<0.000000e+00> : vector<64x128xf32>
    %128 = tpu.matmul %125, %127, %cst_131 {dimension_numbers = #tpu.dot_dimension_numbers<[1], [0], [0], [1], [0, 0, 1, 1], [], []>} : vector<64x4xbf16>, vector<4x128xbf16>, vector<64x128xf32> -> vector<64x128xf32>
    %129 = arith.addf %123, %128 : vector<64x128xf32>
    %130 = vector.extract_strided_slice %117 {offsets = [0, 2, 0], sizes = [8, 8, 4], strides = [1, 1, 1]} : vector<10x10x4xbf16> to vector<8x8x4xbf16>
    %131 = vector.shape_cast %130 : vector<8x8x4xbf16> to vector<64x4xbf16>
    %c2_132 = arith.constant 2 : index
    %c0_133 = arith.constant 0 : index
    %c2_134 = arith.constant 2 : index
    %c0_135 = arith.constant 0 : index
    %c0_136 = arith.constant 0 : index
    %132 = vector.load %arg5[%c2_132, %c0_133, %c2_134, %c0_135, %c0_136] : memref<3x3x3x4x128xbf16, #tpu.memory_space<vmem>>, vector<1x1x1x4x128xbf16>
    %133 = vector.shape_cast %132 : vector<1x1x1x4x128xbf16> to vector<4x128xbf16>
    %cst_137 = arith.constant dense<0.000000e+00> : vector<64x128xf32>
    %134 = tpu.matmul %131, %133, %cst_137 {dimension_numbers = #tpu.dot_dimension_numbers<[1], [0], [0], [1], [0, 0, 1, 1], [], []>} : vector<64x4xbf16>, vector<4x128xbf16>, vector<64x128xf32> -> vector<64x128xf32>
    %135 = arith.addf %129, %134 : vector<64x128xf32>
    %136 = vector.extract_strided_slice %117 {offsets = [1, 0, 0], sizes = [8, 8, 4], strides = [1, 1, 1]} : vector<10x10x4xbf16> to vector<8x8x4xbf16>
    %137 = vector.shape_cast %136 : vector<8x8x4xbf16> to vector<64x4xbf16>
    %c2_138 = arith.constant 2 : index
    %c1_139 = arith.constant 1 : index
    %c0_140 = arith.constant 0 : index
    %c0_141 = arith.constant 0 : index
    %c0_142 = arith.constant 0 : index
    %138 = vector.load %arg5[%c2_138, %c1_139, %c0_140, %c0_141, %c0_142] : memref<3x3x3x4x128xbf16, #tpu.memory_space<vmem>>, vector<1x1x1x4x128xbf16>
    %139 = vector.shape_cast %138 : vector<1x1x1x4x128xbf16> to vector<4x128xbf16>
    %cst_143 = arith.constant dense<0.000000e+00> : vector<64x128xf32>
    %140 = tpu.matmul %137, %139, %cst_143 {dimension_numbers = #tpu.dot_dimension_numbers<[1], [0], [0], [1], [0, 0, 1, 1], [], []>} : vector<64x4xbf16>, vector<4x128xbf16>, vector<64x128xf32> -> vector<64x128xf32>
    %141 = arith.addf %135, %140 : vector<64x128xf32>
    %142 = vector.extract_strided_slice %117 {offsets = [1, 1, 0], sizes = [8, 8, 4], strides = [1, 1, 1]} : vector<10x10x4xbf16> to vector<8x8x4xbf16>
    %143 = vector.shape_cast %142 : vector<8x8x4xbf16> to vector<64x4xbf16>
    %c2_144 = arith.constant 2 : index
    %c1_145 = arith.constant 1 : index
    %c1_146 = arith.constant 1 : index
    %c0_147 = arith.constant 0 : index
    %c0_148 = arith.constant 0 : index
    %144 = vector.load %arg5[%c2_144, %c1_145, %c1_146, %c0_147, %c0_148] : memref<3x3x3x4x128xbf16, #tpu.memory_space<vmem>>, vector<1x1x1x4x128xbf16>
    %145 = vector.shape_cast %144 : vector<1x1x1x4x128xbf16> to vector<4x128xbf16>
    %cst_149 = arith.constant dense<0.000000e+00> : vector<64x128xf32>
    %146 = tpu.matmul %143, %145, %cst_149 {dimension_numbers = #tpu.dot_dimension_numbers<[1], [0], [0], [1], [0, 0, 1, 1], [], []>} : vector<64x4xbf16>, vector<4x128xbf16>, vector<64x128xf32> -> vector<64x128xf32>
    %147 = arith.addf %141, %146 : vector<64x128xf32>
    %148 = vector.extract_strided_slice %117 {offsets = [1, 2, 0], sizes = [8, 8, 4], strides = [1, 1, 1]} : vector<10x10x4xbf16> to vector<8x8x4xbf16>
    %149 = vector.shape_cast %148 : vector<8x8x4xbf16> to vector<64x4xbf16>
    %c2_150 = arith.constant 2 : index
    %c1_151 = arith.constant 1 : index
    %c2_152 = arith.constant 2 : index
    %c0_153 = arith.constant 0 : index
    %c0_154 = arith.constant 0 : index
    %150 = vector.load %arg5[%c2_150, %c1_151, %c2_152, %c0_153, %c0_154] : memref<3x3x3x4x128xbf16, #tpu.memory_space<vmem>>, vector<1x1x1x4x128xbf16>
    %151 = vector.shape_cast %150 : vector<1x1x1x4x128xbf16> to vector<4x128xbf16>
    %cst_155 = arith.constant dense<0.000000e+00> : vector<64x128xf32>
    %152 = tpu.matmul %149, %151, %cst_155 {dimension_numbers = #tpu.dot_dimension_numbers<[1], [0], [0], [1], [0, 0, 1, 1], [], []>} : vector<64x4xbf16>, vector<4x128xbf16>, vector<64x128xf32> -> vector<64x128xf32>
    %153 = arith.addf %147, %152 : vector<64x128xf32>
    %154 = vector.extract_strided_slice %117 {offsets = [2, 0, 0], sizes = [8, 8, 4], strides = [1, 1, 1]} : vector<10x10x4xbf16> to vector<8x8x4xbf16>
    %155 = vector.shape_cast %154 : vector<8x8x4xbf16> to vector<64x4xbf16>
    %c2_156 = arith.constant 2 : index
    %c2_157 = arith.constant 2 : index
    %c0_158 = arith.constant 0 : index
    %c0_159 = arith.constant 0 : index
    %c0_160 = arith.constant 0 : index
    %156 = vector.load %arg5[%c2_156, %c2_157, %c0_158, %c0_159, %c0_160] : memref<3x3x3x4x128xbf16, #tpu.memory_space<vmem>>, vector<1x1x1x4x128xbf16>
    %157 = vector.shape_cast %156 : vector<1x1x1x4x128xbf16> to vector<4x128xbf16>
    %cst_161 = arith.constant dense<0.000000e+00> : vector<64x128xf32>
    %158 = tpu.matmul %155, %157, %cst_161 {dimension_numbers = #tpu.dot_dimension_numbers<[1], [0], [0], [1], [0, 0, 1, 1], [], []>} : vector<64x4xbf16>, vector<4x128xbf16>, vector<64x128xf32> -> vector<64x128xf32>
    %159 = arith.addf %153, %158 : vector<64x128xf32>
    %160 = vector.extract_strided_slice %117 {offsets = [2, 1, 0], sizes = [8, 8, 4], strides = [1, 1, 1]} : vector<10x10x4xbf16> to vector<8x8x4xbf16>
    %161 = vector.shape_cast %160 : vector<8x8x4xbf16> to vector<64x4xbf16>
    %c2_162 = arith.constant 2 : index
    %c2_163 = arith.constant 2 : index
    %c1_164 = arith.constant 1 : index
    %c0_165 = arith.constant 0 : index
    %c0_166 = arith.constant 0 : index
    %162 = vector.load %arg5[%c2_162, %c2_163, %c1_164, %c0_165, %c0_166] : memref<3x3x3x4x128xbf16, #tpu.memory_space<vmem>>, vector<1x1x1x4x128xbf16>
    %163 = vector.shape_cast %162 : vector<1x1x1x4x128xbf16> to vector<4x128xbf16>
    %cst_167 = arith.constant dense<0.000000e+00> : vector<64x128xf32>
    %164 = tpu.matmul %161, %163, %cst_167 {dimension_numbers = #tpu.dot_dimension_numbers<[1], [0], [0], [1], [0, 0, 1, 1], [], []>} : vector<64x4xbf16>, vector<4x128xbf16>, vector<64x128xf32> -> vector<64x128xf32>
    %165 = arith.addf %159, %164 : vector<64x128xf32>
    %166 = vector.extract_strided_slice %117 {offsets = [2, 2, 0], sizes = [8, 8, 4], strides = [1, 1, 1]} : vector<10x10x4xbf16> to vector<8x8x4xbf16>
    %167 = vector.shape_cast %166 : vector<8x8x4xbf16> to vector<64x4xbf16>
    %c2_168 = arith.constant 2 : index
    %c2_169 = arith.constant 2 : index
    %c2_170 = arith.constant 2 : index
    %c0_171 = arith.constant 0 : index
    %c0_172 = arith.constant 0 : index
    %168 = vector.load %arg5[%c2_168, %c2_169, %c2_170, %c0_171, %c0_172] : memref<3x3x3x4x128xbf16, #tpu.memory_space<vmem>>, vector<1x1x1x4x128xbf16>
    %169 = vector.shape_cast %168 : vector<1x1x1x4x128xbf16> to vector<4x128xbf16>
    %cst_173 = arith.constant dense<0.000000e+00> : vector<64x128xf32>
    %170 = tpu.matmul %167, %169, %cst_173 {dimension_numbers = #tpu.dot_dimension_numbers<[1], [0], [0], [1], [0, 0, 1, 1], [], []>} : vector<64x4xbf16>, vector<4x128xbf16>, vector<64x128xf32> -> vector<64x128xf32>
    %171 = arith.addf %165, %170 : vector<64x128xf32>
    %c0_174 = arith.constant 0 : index
    %c0_175 = arith.constant 0 : index
    %172 = vector.load %arg6[%c0_174, %c0_175] : memref<1x128xf32, #tpu.memory_space<vmem>>, vector<1x128xf32>
    %173 = vector.broadcast %172 : vector<1x128xf32> to vector<64x128xf32>
    %174 = arith.addf %171, %173 : vector<64x128xf32>
    %175 = vector.shape_cast %174 : vector<64x128xf32> to vector<1x1x8x8x128xf32>
    %c0_176 = arith.constant 0 : index
    %c0_177 = arith.constant 0 : index
    %c0_178 = arith.constant 0 : index
    %c0_179 = arith.constant 0 : index
    %c0_180 = arith.constant 0 : index
    %176 = vector.load %arg10[%c0_176, %c0_177, %c0_178, %c0_179, %c0_180] : memref<1x1x8x8x128xf32, #tpu.memory_space<vmem>>, vector<1x1x8x8x128xf32>
    tpu.vector_store %arg10[%c0_176, %c0_177, %c0_178, %c0_179, %c0_180], %175 {strides = array<i32>} : memref<1x1x8x8x128xf32, #tpu.memory_space<vmem>>, vector<1x1x8x8x128xf32>,
    %cst_181 = arith.constant dense<0.000000e+00> : vector<128xf32>
    %177 = vector.multi_reduction <add>, %174, %cst_181 [0] : vector<64x128xf32> to vector<128xf32>
    %178 = vector.shape_cast %177 : vector<128xf32> to vector<1x128xf32>
    %179 = arith.mulf %174, %174 : vector<64x128xf32>
    %cst_182 = arith.constant dense<0.000000e+00> : vector<128xf32>
    %180 = vector.multi_reduction <add>, %179, %cst_182 [0] : vector<64x128xf32> to vector<128xf32>
    %181 = vector.shape_cast %180 : vector<128xf32> to vector<1x128xf32>
    %182 = tpu.concatenate %178, %181 in 0 : vector<1x128xf32>, vector<1x128xf32> -> vector<2x128xf32>
    %c0_183 = arith.constant 0 : index
    %c0_184 = arith.constant 0 : index
    %c0_185 = arith.constant 0 : index
    %c0_186 = arith.constant 0 : index
    %183 = vector.load %arg11[%c0_183, %c0_184, %c0_185, %c0_186] : memref<1x1x2x128xf32, #tpu.memory_space<vmem>>, vector<1x1x2x128xf32>
    %184 = vector.shape_cast %183 : vector<1x1x2x128xf32> to vector<2x128xf32>
    %185 = vector.shape_cast %182 : vector<2x128xf32> to vector<1x1x2x128xf32>
    tpu.vector_store %arg11[%c0_183, %c0_184, %c0_185, %c0_186], %185 {strides = array<i32>} : memref<1x1x2x128xf32, #tpu.memory_space<vmem>>, vector<1x1x2x128xf32>,
    return
  }
  func.func @transform_0(%arg0: i32, %arg1: i32) -> (i32, i32, i32, i32, i32) {
    %c0_i32 = arith.constant 0 : i32
    %0 = arith.addi %arg1, %c0_i32 : i32
    %c0_i32_0 = arith.constant 0 : i32
    %c0_i32_1 = arith.constant 0 : i32
    %c0_i32_2 = arith.constant 0 : i32
    %c0_i32_3 = arith.constant 0 : i32
    return %arg0, %0, %c0_i32_0, %c0_i32_1, %c0_i32_2 : i32, i32, i32, i32, i32
  }
  func.func @transform_1(%arg0: i32, %arg1: i32) -> (i32, i32, i32, i32, i32) {
    %c1_i32 = arith.constant 1 : i32
    %0 = arith.addi %arg1, %c1_i32 : i32
    %c0_i32 = arith.constant 0 : i32
    %c0_i32_0 = arith.constant 0 : i32
    %c0_i32_1 = arith.constant 0 : i32
    %c0_i32_2 = arith.constant 0 : i32
    return %arg0, %0, %c0_i32, %c0_i32_0, %c0_i32_1 : i32, i32, i32, i32, i32
  }
  func.func @transform_2(%arg0: i32, %arg1: i32) -> (i32, i32, i32, i32, i32) {
    %c2_i32 = arith.constant 2 : i32
    %0 = arith.addi %arg1, %c2_i32 : i32
    %c0_i32 = arith.constant 0 : i32
    %c0_i32_0 = arith.constant 0 : i32
    %c0_i32_1 = arith.constant 0 : i32
    %c0_i32_2 = arith.constant 0 : i32
    return %arg0, %0, %c0_i32, %c0_i32_0, %c0_i32_1 : i32, i32, i32, i32, i32
  }
  func.func @transform_3(%arg0: i32, %arg1: i32) -> (i32, i32, i32, i32, i32) {
    %c0_i32 = arith.constant 0 : i32
    %c0_i32_0 = arith.constant 0 : i32
    %c0_i32_1 = arith.constant 0 : i32
    %c0_i32_2 = arith.constant 0 : i32
    %c0_i32_3 = arith.constant 0 : i32
    %c0_i32_4 = arith.constant 0 : i32
    return %c0_i32, %c0_i32_0, %c0_i32_1, %c0_i32_2, %c0_i32_3 : i32, i32, i32, i32, i32
  }
  func.func @transform_4(%arg0: i32, %arg1: i32) -> (i32, i32) {
    %c0_i32 = arith.constant 0 : i32
    %c0_i32_0 = arith.constant 0 : i32
    %c0_i32_1 = arith.constant 0 : i32
    return %c0_i32, %c0_i32_0 : i32, i32
  }
  func.func @transform_5(%arg0: i32, %arg1: i32) -> (i32, i32) {
    %c0_i32 = arith.constant 0 : i32
    %c0_i32_0 = arith.constant 0 : i32
    %c0_i32_1 = arith.constant 0 : i32
    return %c0_i32, %c0_i32_0 : i32, i32
  }
  func.func @transform_6(%arg0: i32, %arg1: i32) -> (i32, i32) {
    %c0_i32 = arith.constant 0 : i32
    %c0_i32_0 = arith.constant 0 : i32
    %c0_i32_1 = arith.constant 0 : i32
    return %c0_i32, %c0_i32_0 : i32, i32
  }
  func.func @transform_7(%arg0: i32, %arg1: i32) -> (i32, i32, i32) {
    %c0_i32 = arith.constant 0 : i32
    %c0_i32_0 = arith.constant 0 : i32
    %c0_i32_1 = arith.constant 0 : i32
    %c0_i32_2 = arith.constant 0 : i32
    return %c0_i32, %c0_i32_0, %c0_i32_1 : i32, i32, i32
  }
  func.func @transform_8(%arg0: i32, %arg1: i32) -> (i32, i32, i32, i32, i32) {
    %c0_i32 = arith.constant 0 : i32
    %c0_i32_0 = arith.constant 0 : i32
    %c0_i32_1 = arith.constant 0 : i32
    %c0_i32_2 = arith.constant 0 : i32
    return %arg0, %arg1, %c0_i32, %c0_i32_0, %c0_i32_1 : i32, i32, i32, i32, i32
  }
  func.func @transform_9(%arg0: i32, %arg1: i32) -> (i32, i32, i32, i32) {
    %c0_i32 = arith.constant 0 : i32
    %c0_i32_0 = arith.constant 0 : i32
    %c0_i32_1 = arith.constant 0 : i32
    return %arg0, %arg1, %c0_i32, %c0_i32_0 : i32, i32, i32, i32
  }
}

module attributes {stable_mosaic.version = 11 : i64} {
  func.func @_affine_relu_kernel(%arg0: i32, %arg1: memref<512x128xf32, #tpu.memory_space<vmem>>, %arg2: memref<1x128xf32, #tpu.memory_space<vmem>>, %arg3: memref<1x128xf32, #tpu.memory_space<vmem>>, %arg4: memref<512x128xf32, #tpu.memory_space<vmem>>) attributes {dimension_semantics = [#tpu.dimension_semantics<parallel>], iteration_bounds = array<i64: 2>, scalar_prefetch = 0 : i64, scratch_operands = 0 : i64, tpu.core_type = #tpu.core_type<tc>, window_params = [{transform_indices = @transform_0, window_bounds = array<i64: 512, 128>}, {pipeline_mode = #tpu.pipeline_mode<synchronous>, transform_indices = @transform_1, window_bounds = array<i64: 1, 128>}, {pipeline_mode = #tpu.pipeline_mode<synchronous>, transform_indices = @transform_2, window_bounds = array<i64: 1, 128>}, {transform_indices = @transform_3, window_bounds = array<i64: 512, 128>}]} {
    %c0 = arith.constant 0 : index
    %c0_0 = arith.constant 0 : index
    %0 = vector.load %arg1[%c0, %c0_0] : memref<512x128xf32, #tpu.memory_space<vmem>>, vector<512x128xf32>
    %c0_1 = arith.constant 0 : index
    %c0_2 = arith.constant 0 : index
    %1 = vector.load %arg2[%c0_1, %c0_2] : memref<1x128xf32, #tpu.memory_space<vmem>>, vector<1x128xf32>
    %2 = vector.broadcast %1 : vector<1x128xf32> to vector<512x128xf32>
    %3 = arith.mulf %0, %2 : vector<512x128xf32>
    %c0_3 = arith.constant 0 : index
    %c0_4 = arith.constant 0 : index
    %4 = vector.load %arg3[%c0_3, %c0_4] : memref<1x128xf32, #tpu.memory_space<vmem>>, vector<1x128xf32>
    %5 = vector.broadcast %4 : vector<1x128xf32> to vector<512x128xf32>
    %6 = arith.addf %3, %5 : vector<512x128xf32>
    %cst = arith.constant 0.000000e+00 : f32
    %7 = vector.broadcast %cst : f32 to vector<512x128xf32>
    %8 = arith.maximumf %6, %7 : vector<512x128xf32>
    %c0_5 = arith.constant 0 : index
    %c0_6 = arith.constant 0 : index
    %9 = vector.load %arg4[%c0_5, %c0_6] : memref<512x128xf32, #tpu.memory_space<vmem>>, vector<512x128xf32>
    tpu.vector_store %arg4[%c0_5, %c0_6], %8 {strides = array<i32>} : memref<512x128xf32, #tpu.memory_space<vmem>>, vector<512x128xf32>,
    return
  }
  func.func @transform_0(%arg0: i32) -> (i32, i32) {
    %c0_i32 = arith.constant 0 : i32
    %c0_i32_0 = arith.constant 0 : i32
    return %arg0, %c0_i32 : i32, i32
  }
  func.func @transform_1(%arg0: i32) -> (i32, i32) {
    %c0_i32 = arith.constant 0 : i32
    %c0_i32_0 = arith.constant 0 : i32
    %c0_i32_1 = arith.constant 0 : i32
    return %c0_i32, %c0_i32_0 : i32, i32
  }
  func.func @transform_2(%arg0: i32) -> (i32, i32) {
    %c0_i32 = arith.constant 0 : i32
    %c0_i32_0 = arith.constant 0 : i32
    %c0_i32_1 = arith.constant 0 : i32
    return %c0_i32, %c0_i32_0 : i32, i32
  }
  func.func @transform_3(%arg0: i32) -> (i32, i32) {
    %c0_i32 = arith.constant 0 : i32
    %c0_i32_0 = arith.constant 0 : i32
    return %arg0, %c0_i32 : i32, i32
  }
}

module attributes {stable_mosaic.version = 11 : i64} {
  func.func @_conv_bn_kernel(%arg0: i32, %arg1: i32, %arg2: memref<1x1x10x10x128xf32, #tpu.memory_space<vmem>>, %arg3: memref<1x1x10x10x128xf32, #tpu.memory_space<vmem>>, %arg4: memref<1x1x10x10x128xf32, #tpu.memory_space<vmem>>, %arg5: memref<3x3x3x128x128xbf16, #tpu.memory_space<vmem>>, %arg6: memref<1x128xf32, #tpu.memory_space<vmem>>, %arg7: memref<1x128xf32, #tpu.memory_space<vmem>>, %arg8: memref<1x128xf32, #tpu.memory_space<vmem>>, %arg9: memref<10x10x1xf32, #tpu.memory_space<vmem>>, %arg10: memref<1x1x8x8x128xf32, #tpu.memory_space<vmem>>, %arg11: memref<1x1x2x128xf32, #tpu.memory_space<vmem>>) attributes {dimension_semantics = [#tpu.dimension_semantics<parallel>, #tpu.dimension_semantics<parallel>], iteration_bounds = array<i64: 2, 8>, scalar_prefetch = 0 : i64, scratch_operands = 0 : i64, tpu.core_type = #tpu.core_type<tc>, window_params = [{transform_indices = @transform_0, window_bounds = array<i64: 1, 1, 10, 10, 128>}, {transform_indices = @transform_1, window_bounds = array<i64: 1, 1, 10, 10, 128>}, {transform_indices = @transform_2, window_bounds = array<i64: 1, 1, 10, 10, 128>}, {pipeline_mode = #tpu.pipeline_mode<synchronous>, transform_indices = @transform_3, window_bounds = array<i64: 3, 3, 3, 128, 128>}, {pipeline_mode = #tpu.pipeline_mode<synchronous>, transform_indices = @transform_4, window_bounds = array<i64: 1, 128>}, {pipeline_mode = #tpu.pipeline_mode<synchronous>, transform_indices = @transform_5, window_bounds = array<i64: 1, 128>}, {pipeline_mode = #tpu.pipeline_mode<synchronous>, transform_indices = @transform_6, window_bounds = array<i64: 1, 128>}, {pipeline_mode = #tpu.pipeline_mode<synchronous>, transform_indices = @transform_7, window_bounds = array<i64: 10, 10, 1>}, {transform_indices = @transform_8, window_bounds = array<i64: 1, 1, 8, 8, 128>}, {transform_indices = @transform_9, window_bounds = array<i64: 1, 1, 2, 128>}]} {
    %cst = arith.constant 0.000000e+00 : f32
    %0 = vector.broadcast %cst : f32 to vector<64x128xf32>
    %c0 = arith.constant 0 : index
    %c0_0 = arith.constant 0 : index
    %c0_1 = arith.constant 0 : index
    %c0_2 = arith.constant 0 : index
    %c0_3 = arith.constant 0 : index
    %1 = vector.load %arg2[%c0, %c0_0, %c0_1, %c0_2, %c0_3] : memref<1x1x10x10x128xf32, #tpu.memory_space<vmem>>, vector<1x1x10x10x128xf32>
    %2 = vector.shape_cast %1 : vector<1x1x10x10x128xf32> to vector<10x10x128xf32>
    %c0_4 = arith.constant 0 : index
    %c0_5 = arith.constant 0 : index
    %3 = vector.load %arg7[%c0_4, %c0_5] : memref<1x128xf32, #tpu.memory_space<vmem>>, vector<1x128xf32>
    %4 = vector.shape_cast %3 : vector<1x128xf32> to vector<1x1x128xf32>
    %5 = vector.broadcast %4 : vector<1x1x128xf32> to vector<10x10x128xf32>
    %6 = arith.mulf %2, %5 : vector<10x10x128xf32>
    %c0_6 = arith.constant 0 : index
    %c0_7 = arith.constant 0 : index
    %7 = vector.load %arg8[%c0_6, %c0_7] : memref<1x128xf32, #tpu.memory_space<vmem>>, vector<1x128xf32>
    %8 = vector.shape_cast %7 : vector<1x128xf32> to vector<1x1x128xf32>
    %9 = vector.broadcast %8 : vector<1x1x128xf32> to vector<10x10x128xf32>
    %10 = arith.addf %6, %9 : vector<10x10x128xf32>
    %cst_8 = arith.constant 0.000000e+00 : f32
    %11 = vector.broadcast %cst_8 : f32 to vector<10x10x128xf32>
    %12 = arith.maximumf %10, %11 : vector<10x10x128xf32>
    %c0_9 = arith.constant 0 : index
    %c0_10 = arith.constant 0 : index
    %c0_11 = arith.constant 0 : index
    %13 = vector.load %arg9[%c0_9, %c0_10, %c0_11] : memref<10x10x1xf32, #tpu.memory_space<vmem>>, vector<10x10x1xf32>
    %14 = vector.broadcast %13 : vector<10x10x1xf32> to vector<10x10x128xf32>
    %15 = arith.mulf %12, %14 : vector<10x10x128xf32>
    %c0_i32 = arith.constant 0 : i32
    %16 = arith.addi %arg1, %c0_i32 : i32
    %c1_i32 = arith.constant 1 : i32
    %17 = arith.cmpi sge, %16, %c1_i32 : i32
    %c8_i32 = arith.constant 8 : i32
    %18 = arith.cmpi sle, %16, %c8_i32 : i32
    %19 = arith.andi %17, %18 : i1
    %cst_12 = arith.constant 1.000000e+00 : f32
    %cst_13 = arith.constant 0.000000e+00 : f32
    %20 = arith.select %19, %cst_12, %cst_13 : f32
    %21 = vector.broadcast %20 : f32 to vector<10x10x128xf32>
    %22 = arith.mulf %15, %21 : vector<10x10x128xf32>
    %23 = arith.truncf %22 : vector<10x10x128xf32> to vector<10x10x128xbf16>
    %24 = vector.extract_strided_slice %23 {offsets = [0, 0, 0], sizes = [8, 8, 128], strides = [1, 1, 1]} : vector<10x10x128xbf16> to vector<8x8x128xbf16>
    %25 = vector.shape_cast %24 : vector<8x8x128xbf16> to vector<64x128xbf16>
    %c0_14 = arith.constant 0 : index
    %c0_15 = arith.constant 0 : index
    %c0_16 = arith.constant 0 : index
    %c0_17 = arith.constant 0 : index
    %c0_18 = arith.constant 0 : index
    %26 = vector.load %arg5[%c0_14, %c0_15, %c0_16, %c0_17, %c0_18] : memref<3x3x3x128x128xbf16, #tpu.memory_space<vmem>>, vector<1x1x1x128x128xbf16>
    %27 = vector.shape_cast %26 : vector<1x1x1x128x128xbf16> to vector<128x128xbf16>
    %cst_19 = arith.constant dense<0.000000e+00> : vector<64x128xf32>
    %28 = tpu.matmul %25, %27, %cst_19 {dimension_numbers = #tpu.dot_dimension_numbers<[1], [0], [0], [1], [0, 0, 1, 1], [], []>} : vector<64x128xbf16>, vector<128x128xbf16>, vector<64x128xf32> -> vector<64x128xf32>
    %29 = arith.addf %0, %28 : vector<64x128xf32>
    %30 = vector.extract_strided_slice %23 {offsets = [0, 1, 0], sizes = [8, 8, 128], strides = [1, 1, 1]} : vector<10x10x128xbf16> to vector<8x8x128xbf16>
    %31 = vector.shape_cast %30 : vector<8x8x128xbf16> to vector<64x128xbf16>
    %c0_20 = arith.constant 0 : index
    %c0_21 = arith.constant 0 : index
    %c1 = arith.constant 1 : index
    %c0_22 = arith.constant 0 : index
    %c0_23 = arith.constant 0 : index
    %32 = vector.load %arg5[%c0_20, %c0_21, %c1, %c0_22, %c0_23] : memref<3x3x3x128x128xbf16, #tpu.memory_space<vmem>>, vector<1x1x1x128x128xbf16>
    %33 = vector.shape_cast %32 : vector<1x1x1x128x128xbf16> to vector<128x128xbf16>
    %cst_24 = arith.constant dense<0.000000e+00> : vector<64x128xf32>
    %34 = tpu.matmul %31, %33, %cst_24 {dimension_numbers = #tpu.dot_dimension_numbers<[1], [0], [0], [1], [0, 0, 1, 1], [], []>} : vector<64x128xbf16>, vector<128x128xbf16>, vector<64x128xf32> -> vector<64x128xf32>
    %35 = arith.addf %29, %34 : vector<64x128xf32>
    %36 = vector.extract_strided_slice %23 {offsets = [0, 2, 0], sizes = [8, 8, 128], strides = [1, 1, 1]} : vector<10x10x128xbf16> to vector<8x8x128xbf16>
    %37 = vector.shape_cast %36 : vector<8x8x128xbf16> to vector<64x128xbf16>
    %c0_25 = arith.constant 0 : index
    %c0_26 = arith.constant 0 : index
    %c2 = arith.constant 2 : index
    %c0_27 = arith.constant 0 : index
    %c0_28 = arith.constant 0 : index
    %38 = vector.load %arg5[%c0_25, %c0_26, %c2, %c0_27, %c0_28] : memref<3x3x3x128x128xbf16, #tpu.memory_space<vmem>>, vector<1x1x1x128x128xbf16>
    %39 = vector.shape_cast %38 : vector<1x1x1x128x128xbf16> to vector<128x128xbf16>
    %cst_29 = arith.constant dense<0.000000e+00> : vector<64x128xf32>
    %40 = tpu.matmul %37, %39, %cst_29 {dimension_numbers = #tpu.dot_dimension_numbers<[1], [0], [0], [1], [0, 0, 1, 1], [], []>} : vector<64x128xbf16>, vector<128x128xbf16>, vector<64x128xf32> -> vector<64x128xf32>
    %41 = arith.addf %35, %40 : vector<64x128xf32>
    %42 = vector.extract_strided_slice %23 {offsets = [1, 0, 0], sizes = [8, 8, 128], strides = [1, 1, 1]} : vector<10x10x128xbf16> to vector<8x8x128xbf16>
    %43 = vector.shape_cast %42 : vector<8x8x128xbf16> to vector<64x128xbf16>
    %c0_30 = arith.constant 0 : index
    %c1_31 = arith.constant 1 : index
    %c0_32 = arith.constant 0 : index
    %c0_33 = arith.constant 0 : index
    %c0_34 = arith.constant 0 : index
    %44 = vector.load %arg5[%c0_30, %c1_31, %c0_32, %c0_33, %c0_34] : memref<3x3x3x128x128xbf16, #tpu.memory_space<vmem>>, vector<1x1x1x128x128xbf16>
    %45 = vector.shape_cast %44 : vector<1x1x1x128x128xbf16> to vector<128x128xbf16>
    %cst_35 = arith.constant dense<0.000000e+00> : vector<64x128xf32>
    %46 = tpu.matmul %43, %45, %cst_35 {dimension_numbers = #tpu.dot_dimension_numbers<[1], [0], [0], [1], [0, 0, 1, 1], [], []>} : vector<64x128xbf16>, vector<128x128xbf16>, vector<64x128xf32> -> vector<64x128xf32>
    %47 = arith.addf %41, %46 : vector<64x128xf32>
    %48 = vector.extract_strided_slice %23 {offsets = [1, 1, 0], sizes = [8, 8, 128], strides = [1, 1, 1]} : vector<10x10x128xbf16> to vector<8x8x128xbf16>
    %49 = vector.shape_cast %48 : vector<8x8x128xbf16> to vector<64x128xbf16>
    %c0_36 = arith.constant 0 : index
    %c1_37 = arith.constant 1 : index
    %c1_38 = arith.constant 1 : index
    %c0_39 = arith.constant 0 : index
    %c0_40 = arith.constant 0 : index
    %50 = vector.load %arg5[%c0_36, %c1_37, %c1_38, %c0_39, %c0_40] : memref<3x3x3x128x128xbf16, #tpu.memory_space<vmem>>, vector<1x1x1x128x128xbf16>
    %51 = vector.shape_cast %50 : vector<1x1x1x128x128xbf16> to vector<128x128xbf16>
    %cst_41 = arith.constant dense<0.000000e+00> : vector<64x128xf32>
    %52 = tpu.matmul %49, %51, %cst_41 {dimension_numbers = #tpu.dot_dimension_numbers<[1], [0], [0], [1], [0, 0, 1, 1], [], []>} : vector<64x128xbf16>, vector<128x128xbf16>, vector<64x128xf32> -> vector<64x128xf32>
    %53 = arith.addf %47, %52 : vector<64x128xf32>
    %54 = vector.extract_strided_slice %23 {offsets = [1, 2, 0], sizes = [8, 8, 128], strides = [1, 1, 1]} : vector<10x10x128xbf16> to vector<8x8x128xbf16>
    %55 = vector.shape_cast %54 : vector<8x8x128xbf16> to vector<64x128xbf16>
    %c0_42 = arith.constant 0 : index
    %c1_43 = arith.constant 1 : index
    %c2_44 = arith.constant 2 : index
    %c0_45 = arith.constant 0 : index
    %c0_46 = arith.constant 0 : index
    %56 = vector.load %arg5[%c0_42, %c1_43, %c2_44, %c0_45, %c0_46] : memref<3x3x3x128x128xbf16, #tpu.memory_space<vmem>>, vector<1x1x1x128x128xbf16>
    %57 = vector.shape_cast %56 : vector<1x1x1x128x128xbf16> to vector<128x128xbf16>
    %cst_47 = arith.constant dense<0.000000e+00> : vector<64x128xf32>
    %58 = tpu.matmul %55, %57, %cst_47 {dimension_numbers = #tpu.dot_dimension_numbers<[1], [0], [0], [1], [0, 0, 1, 1], [], []>} : vector<64x128xbf16>, vector<128x128xbf16>, vector<64x128xf32> -> vector<64x128xf32>
    %59 = arith.addf %53, %58 : vector<64x128xf32>
    %60 = vector.extract_strided_slice %23 {offsets = [2, 0, 0], sizes = [8, 8, 128], strides = [1, 1, 1]} : vector<10x10x128xbf16> to vector<8x8x128xbf16>
    %61 = vector.shape_cast %60 : vector<8x8x128xbf16> to vector<64x128xbf16>
    %c0_48 = arith.constant 0 : index
    %c2_49 = arith.constant 2 : index
    %c0_50 = arith.constant 0 : index
    %c0_51 = arith.constant 0 : index
    %c0_52 = arith.constant 0 : index
    %62 = vector.load %arg5[%c0_48, %c2_49, %c0_50, %c0_51, %c0_52] : memref<3x3x3x128x128xbf16, #tpu.memory_space<vmem>>, vector<1x1x1x128x128xbf16>
    %63 = vector.shape_cast %62 : vector<1x1x1x128x128xbf16> to vector<128x128xbf16>
    %cst_53 = arith.constant dense<0.000000e+00> : vector<64x128xf32>
    %64 = tpu.matmul %61, %63, %cst_53 {dimension_numbers = #tpu.dot_dimension_numbers<[1], [0], [0], [1], [0, 0, 1, 1], [], []>} : vector<64x128xbf16>, vector<128x128xbf16>, vector<64x128xf32> -> vector<64x128xf32>
    %65 = arith.addf %59, %64 : vector<64x128xf32>
    %66 = vector.extract_strided_slice %23 {offsets = [2, 1, 0], sizes = [8, 8, 128], strides = [1, 1, 1]} : vector<10x10x128xbf16> to vector<8x8x128xbf16>
    %67 = vector.shape_cast %66 : vector<8x8x128xbf16> to vector<64x128xbf16>
    %c0_54 = arith.constant 0 : index
    %c2_55 = arith.constant 2 : index
    %c1_56 = arith.constant 1 : index
    %c0_57 = arith.constant 0 : index
    %c0_58 = arith.constant 0 : index
    %68 = vector.load %arg5[%c0_54, %c2_55, %c1_56, %c0_57, %c0_58] : memref<3x3x3x128x128xbf16, #tpu.memory_space<vmem>>, vector<1x1x1x128x128xbf16>
    %69 = vector.shape_cast %68 : vector<1x1x1x128x128xbf16> to vector<128x128xbf16>
    %cst_59 = arith.constant dense<0.000000e+00> : vector<64x128xf32>
    %70 = tpu.matmul %67, %69, %cst_59 {dimension_numbers = #tpu.dot_dimension_numbers<[1], [0], [0], [1], [0, 0, 1, 1], [], []>} : vector<64x128xbf16>, vector<128x128xbf16>, vector<64x128xf32> -> vector<64x128xf32>
    %71 = arith.addf %65, %70 : vector<64x128xf32>
    %72 = vector.extract_strided_slice %23 {offsets = [2, 2, 0], sizes = [8, 8, 128], strides = [1, 1, 1]} : vector<10x10x128xbf16> to vector<8x8x128xbf16>
    %73 = vector.shape_cast %72 : vector<8x8x128xbf16> to vector<64x128xbf16>
    %c0_60 = arith.constant 0 : index
    %c2_61 = arith.constant 2 : index
    %c2_62 = arith.constant 2 : index
    %c0_63 = arith.constant 0 : index
    %c0_64 = arith.constant 0 : index
    %74 = vector.load %arg5[%c0_60, %c2_61, %c2_62, %c0_63, %c0_64] : memref<3x3x3x128x128xbf16, #tpu.memory_space<vmem>>, vector<1x1x1x128x128xbf16>
    %75 = vector.shape_cast %74 : vector<1x1x1x128x128xbf16> to vector<128x128xbf16>
    %cst_65 = arith.constant dense<0.000000e+00> : vector<64x128xf32>
    %76 = tpu.matmul %73, %75, %cst_65 {dimension_numbers = #tpu.dot_dimension_numbers<[1], [0], [0], [1], [0, 0, 1, 1], [], []>} : vector<64x128xbf16>, vector<128x128xbf16>, vector<64x128xf32> -> vector<64x128xf32>
    %77 = arith.addf %71, %76 : vector<64x128xf32>
    %c0_66 = arith.constant 0 : index
    %c0_67 = arith.constant 0 : index
    %c0_68 = arith.constant 0 : index
    %c0_69 = arith.constant 0 : index
    %c0_70 = arith.constant 0 : index
    %78 = vector.load %arg3[%c0_66, %c0_67, %c0_68, %c0_69, %c0_70] : memref<1x1x10x10x128xf32, #tpu.memory_space<vmem>>, vector<1x1x10x10x128xf32>
    %79 = vector.shape_cast %78 : vector<1x1x10x10x128xf32> to vector<10x10x128xf32>
    %c0_71 = arith.constant 0 : index
    %c0_72 = arith.constant 0 : index
    %80 = vector.load %arg7[%c0_71, %c0_72] : memref<1x128xf32, #tpu.memory_space<vmem>>, vector<1x128xf32>
    %81 = vector.shape_cast %80 : vector<1x128xf32> to vector<1x1x128xf32>
    %82 = vector.broadcast %81 : vector<1x1x128xf32> to vector<10x10x128xf32>
    %83 = arith.mulf %79, %82 : vector<10x10x128xf32>
    %c0_73 = arith.constant 0 : index
    %c0_74 = arith.constant 0 : index
    %84 = vector.load %arg8[%c0_73, %c0_74] : memref<1x128xf32, #tpu.memory_space<vmem>>, vector<1x128xf32>
    %85 = vector.shape_cast %84 : vector<1x128xf32> to vector<1x1x128xf32>
    %86 = vector.broadcast %85 : vector<1x1x128xf32> to vector<10x10x128xf32>
    %87 = arith.addf %83, %86 : vector<10x10x128xf32>
    %cst_75 = arith.constant 0.000000e+00 : f32
    %88 = vector.broadcast %cst_75 : f32 to vector<10x10x128xf32>
    %89 = arith.maximumf %87, %88 : vector<10x10x128xf32>
    %c0_76 = arith.constant 0 : index
    %c0_77 = arith.constant 0 : index
    %c0_78 = arith.constant 0 : index
    %90 = vector.load %arg9[%c0_76, %c0_77, %c0_78] : memref<10x10x1xf32, #tpu.memory_space<vmem>>, vector<10x10x1xf32>
    %91 = vector.broadcast %90 : vector<10x10x1xf32> to vector<10x10x128xf32>
    %92 = arith.mulf %89, %91 : vector<10x10x128xf32>
    %c1_i32_79 = arith.constant 1 : i32
    %93 = arith.addi %arg1, %c1_i32_79 : i32
    %c1_i32_80 = arith.constant 1 : i32
    %94 = arith.cmpi sge, %93, %c1_i32_80 : i32
    %c8_i32_81 = arith.constant 8 : i32
    %95 = arith.cmpi sle, %93, %c8_i32_81 : i32
    %96 = arith.andi %94, %95 : i1
    %cst_82 = arith.constant 1.000000e+00 : f32
    %cst_83 = arith.constant 0.000000e+00 : f32
    %97 = arith.select %96, %cst_82, %cst_83 : f32
    %98 = vector.broadcast %97 : f32 to vector<10x10x128xf32>
    %99 = arith.mulf %92, %98 : vector<10x10x128xf32>
    %100 = arith.truncf %99 : vector<10x10x128xf32> to vector<10x10x128xbf16>
    %101 = vector.extract_strided_slice %100 {offsets = [0, 0, 0], sizes = [8, 8, 128], strides = [1, 1, 1]} : vector<10x10x128xbf16> to vector<8x8x128xbf16>
    %102 = vector.shape_cast %101 : vector<8x8x128xbf16> to vector<64x128xbf16>
    %c1_84 = arith.constant 1 : index
    %c0_85 = arith.constant 0 : index
    %c0_86 = arith.constant 0 : index
    %c0_87 = arith.constant 0 : index
    %c0_88 = arith.constant 0 : index
    %103 = vector.load %arg5[%c1_84, %c0_85, %c0_86, %c0_87, %c0_88] : memref<3x3x3x128x128xbf16, #tpu.memory_space<vmem>>, vector<1x1x1x128x128xbf16>
    %104 = vector.shape_cast %103 : vector<1x1x1x128x128xbf16> to vector<128x128xbf16>
    %cst_89 = arith.constant dense<0.000000e+00> : vector<64x128xf32>
    %105 = tpu.matmul %102, %104, %cst_89 {dimension_numbers = #tpu.dot_dimension_numbers<[1], [0], [0], [1], [0, 0, 1, 1], [], []>} : vector<64x128xbf16>, vector<128x128xbf16>, vector<64x128xf32> -> vector<64x128xf32>
    %106 = arith.addf %77, %105 : vector<64x128xf32>
    %107 = vector.extract_strided_slice %100 {offsets = [0, 1, 0], sizes = [8, 8, 128], strides = [1, 1, 1]} : vector<10x10x128xbf16> to vector<8x8x128xbf16>
    %108 = vector.shape_cast %107 : vector<8x8x128xbf16> to vector<64x128xbf16>
    %c1_90 = arith.constant 1 : index
    %c0_91 = arith.constant 0 : index
    %c1_92 = arith.constant 1 : index
    %c0_93 = arith.constant 0 : index
    %c0_94 = arith.constant 0 : index
    %109 = vector.load %arg5[%c1_90, %c0_91, %c1_92, %c0_93, %c0_94] : memref<3x3x3x128x128xbf16, #tpu.memory_space<vmem>>, vector<1x1x1x128x128xbf16>
    %110 = vector.shape_cast %109 : vector<1x1x1x128x128xbf16> to vector<128x128xbf16>
    %cst_95 = arith.constant dense<0.000000e+00> : vector<64x128xf32>
    %111 = tpu.matmul %108, %110, %cst_95 {dimension_numbers = #tpu.dot_dimension_numbers<[1], [0], [0], [1], [0, 0, 1, 1], [], []>} : vector<64x128xbf16>, vector<128x128xbf16>, vector<64x128xf32> -> vector<64x128xf32>
    %112 = arith.addf %106, %111 : vector<64x128xf32>
    %113 = vector.extract_strided_slice %100 {offsets = [0, 2, 0], sizes = [8, 8, 128], strides = [1, 1, 1]} : vector<10x10x128xbf16> to vector<8x8x128xbf16>
    %114 = vector.shape_cast %113 : vector<8x8x128xbf16> to vector<64x128xbf16>
    %c1_96 = arith.constant 1 : index
    %c0_97 = arith.constant 0 : index
    %c2_98 = arith.constant 2 : index
    %c0_99 = arith.constant 0 : index
    %c0_100 = arith.constant 0 : index
    %115 = vector.load %arg5[%c1_96, %c0_97, %c2_98, %c0_99, %c0_100] : memref<3x3x3x128x128xbf16, #tpu.memory_space<vmem>>, vector<1x1x1x128x128xbf16>
    %116 = vector.shape_cast %115 : vector<1x1x1x128x128xbf16> to vector<128x128xbf16>
    %cst_101 = arith.constant dense<0.000000e+00> : vector<64x128xf32>
    %117 = tpu.matmul %114, %116, %cst_101 {dimension_numbers = #tpu.dot_dimension_numbers<[1], [0], [0], [1], [0, 0, 1, 1], [], []>} : vector<64x128xbf16>, vector<128x128xbf16>, vector<64x128xf32> -> vector<64x128xf32>
    %118 = arith.addf %112, %117 : vector<64x128xf32>
    %119 = vector.extract_strided_slice %100 {offsets = [1, 0, 0], sizes = [8, 8, 128], strides = [1, 1, 1]} : vector<10x10x128xbf16> to vector<8x8x128xbf16>
    %120 = vector.shape_cast %119 : vector<8x8x128xbf16> to vector<64x128xbf16>
    %c1_102 = arith.constant 1 : index
    %c1_103 = arith.constant 1 : index
    %c0_104 = arith.constant 0 : index
    %c0_105 = arith.constant 0 : index
    %c0_106 = arith.constant 0 : index
    %121 = vector.load %arg5[%c1_102, %c1_103, %c0_104, %c0_105, %c0_106] : memref<3x3x3x128x128xbf16, #tpu.memory_space<vmem>>, vector<1x1x1x128x128xbf16>
    %122 = vector.shape_cast %121 : vector<1x1x1x128x128xbf16> to vector<128x128xbf16>
    %cst_107 = arith.constant dense<0.000000e+00> : vector<64x128xf32>
    %123 = tpu.matmul %120, %122, %cst_107 {dimension_numbers = #tpu.dot_dimension_numbers<[1], [0], [0], [1], [0, 0, 1, 1], [], []>} : vector<64x128xbf16>, vector<128x128xbf16>, vector<64x128xf32> -> vector<64x128xf32>
    %124 = arith.addf %118, %123 : vector<64x128xf32>
    %125 = vector.extract_strided_slice %100 {offsets = [1, 1, 0], sizes = [8, 8, 128], strides = [1, 1, 1]} : vector<10x10x128xbf16> to vector<8x8x128xbf16>
    %126 = vector.shape_cast %125 : vector<8x8x128xbf16> to vector<64x128xbf16>
    %c1_108 = arith.constant 1 : index
    %c1_109 = arith.constant 1 : index
    %c1_110 = arith.constant 1 : index
    %c0_111 = arith.constant 0 : index
    %c0_112 = arith.constant 0 : index
    %127 = vector.load %arg5[%c1_108, %c1_109, %c1_110, %c0_111, %c0_112] : memref<3x3x3x128x128xbf16, #tpu.memory_space<vmem>>, vector<1x1x1x128x128xbf16>
    %128 = vector.shape_cast %127 : vector<1x1x1x128x128xbf16> to vector<128x128xbf16>
    %cst_113 = arith.constant dense<0.000000e+00> : vector<64x128xf32>
    %129 = tpu.matmul %126, %128, %cst_113 {dimension_numbers = #tpu.dot_dimension_numbers<[1], [0], [0], [1], [0, 0, 1, 1], [], []>} : vector<64x128xbf16>, vector<128x128xbf16>, vector<64x128xf32> -> vector<64x128xf32>
    %130 = arith.addf %124, %129 : vector<64x128xf32>
    %131 = vector.extract_strided_slice %100 {offsets = [1, 2, 0], sizes = [8, 8, 128], strides = [1, 1, 1]} : vector<10x10x128xbf16> to vector<8x8x128xbf16>
    %132 = vector.shape_cast %131 : vector<8x8x128xbf16> to vector<64x128xbf16>
    %c1_114 = arith.constant 1 : index
    %c1_115 = arith.constant 1 : index
    %c2_116 = arith.constant 2 : index
    %c0_117 = arith.constant 0 : index
    %c0_118 = arith.constant 0 : index
    %133 = vector.load %arg5[%c1_114, %c1_115, %c2_116, %c0_117, %c0_118] : memref<3x3x3x128x128xbf16, #tpu.memory_space<vmem>>, vector<1x1x1x128x128xbf16>
    %134 = vector.shape_cast %133 : vector<1x1x1x128x128xbf16> to vector<128x128xbf16>
    %cst_119 = arith.constant dense<0.000000e+00> : vector<64x128xf32>
    %135 = tpu.matmul %132, %134, %cst_119 {dimension_numbers = #tpu.dot_dimension_numbers<[1], [0], [0], [1], [0, 0, 1, 1], [], []>} : vector<64x128xbf16>, vector<128x128xbf16>, vector<64x128xf32> -> vector<64x128xf32>
    %136 = arith.addf %130, %135 : vector<64x128xf32>
    %137 = vector.extract_strided_slice %100 {offsets = [2, 0, 0], sizes = [8, 8, 128], strides = [1, 1, 1]} : vector<10x10x128xbf16> to vector<8x8x128xbf16>
    %138 = vector.shape_cast %137 : vector<8x8x128xbf16> to vector<64x128xbf16>
    %c1_120 = arith.constant 1 : index
    %c2_121 = arith.constant 2 : index
    %c0_122 = arith.constant 0 : index
    %c0_123 = arith.constant 0 : index
    %c0_124 = arith.constant 0 : index
    %139 = vector.load %arg5[%c1_120, %c2_121, %c0_122, %c0_123, %c0_124] : memref<3x3x3x128x128xbf16, #tpu.memory_space<vmem>>, vector<1x1x1x128x128xbf16>
    %140 = vector.shape_cast %139 : vector<1x1x1x128x128xbf16> to vector<128x128xbf16>
    %cst_125 = arith.constant dense<0.000000e+00> : vector<64x128xf32>
    %141 = tpu.matmul %138, %140, %cst_125 {dimension_numbers = #tpu.dot_dimension_numbers<[1], [0], [0], [1], [0, 0, 1, 1], [], []>} : vector<64x128xbf16>, vector<128x128xbf16>, vector<64x128xf32> -> vector<64x128xf32>
    %142 = arith.addf %136, %141 : vector<64x128xf32>
    %143 = vector.extract_strided_slice %100 {offsets = [2, 1, 0], sizes = [8, 8, 128], strides = [1, 1, 1]} : vector<10x10x128xbf16> to vector<8x8x128xbf16>
    %144 = vector.shape_cast %143 : vector<8x8x128xbf16> to vector<64x128xbf16>
    %c1_126 = arith.constant 1 : index
    %c2_127 = arith.constant 2 : index
    %c1_128 = arith.constant 1 : index
    %c0_129 = arith.constant 0 : index
    %c0_130 = arith.constant 0 : index
    %145 = vector.load %arg5[%c1_126, %c2_127, %c1_128, %c0_129, %c0_130] : memref<3x3x3x128x128xbf16, #tpu.memory_space<vmem>>, vector<1x1x1x128x128xbf16>
    %146 = vector.shape_cast %145 : vector<1x1x1x128x128xbf16> to vector<128x128xbf16>
    %cst_131 = arith.constant dense<0.000000e+00> : vector<64x128xf32>
    %147 = tpu.matmul %144, %146, %cst_131 {dimension_numbers = #tpu.dot_dimension_numbers<[1], [0], [0], [1], [0, 0, 1, 1], [], []>} : vector<64x128xbf16>, vector<128x128xbf16>, vector<64x128xf32> -> vector<64x128xf32>
    %148 = arith.addf %142, %147 : vector<64x128xf32>
    %149 = vector.extract_strided_slice %100 {offsets = [2, 2, 0], sizes = [8, 8, 128], strides = [1, 1, 1]} : vector<10x10x128xbf16> to vector<8x8x128xbf16>
    %150 = vector.shape_cast %149 : vector<8x8x128xbf16> to vector<64x128xbf16>
    %c1_132 = arith.constant 1 : index
    %c2_133 = arith.constant 2 : index
    %c2_134 = arith.constant 2 : index
    %c0_135 = arith.constant 0 : index
    %c0_136 = arith.constant 0 : index
    %151 = vector.load %arg5[%c1_132, %c2_133, %c2_134, %c0_135, %c0_136] : memref<3x3x3x128x128xbf16, #tpu.memory_space<vmem>>, vector<1x1x1x128x128xbf16>
    %152 = vector.shape_cast %151 : vector<1x1x1x128x128xbf16> to vector<128x128xbf16>
    %cst_137 = arith.constant dense<0.000000e+00> : vector<64x128xf32>
    %153 = tpu.matmul %150, %152, %cst_137 {dimension_numbers = #tpu.dot_dimension_numbers<[1], [0], [0], [1], [0, 0, 1, 1], [], []>} : vector<64x128xbf16>, vector<128x128xbf16>, vector<64x128xf32> -> vector<64x128xf32>
    %154 = arith.addf %148, %153 : vector<64x128xf32>
    %c0_138 = arith.constant 0 : index
    %c0_139 = arith.constant 0 : index
    %c0_140 = arith.constant 0 : index
    %c0_141 = arith.constant 0 : index
    %c0_142 = arith.constant 0 : index
    %155 = vector.load %arg4[%c0_138, %c0_139, %c0_140, %c0_141, %c0_142] : memref<1x1x10x10x128xf32, #tpu.memory_space<vmem>>, vector<1x1x10x10x128xf32>
    %156 = vector.shape_cast %155 : vector<1x1x10x10x128xf32> to vector<10x10x128xf32>
    %c0_143 = arith.constant 0 : index
    %c0_144 = arith.constant 0 : index
    %157 = vector.load %arg7[%c0_143, %c0_144] : memref<1x128xf32, #tpu.memory_space<vmem>>, vector<1x128xf32>
    %158 = vector.shape_cast %157 : vector<1x128xf32> to vector<1x1x128xf32>
    %159 = vector.broadcast %158 : vector<1x1x128xf32> to vector<10x10x128xf32>
    %160 = arith.mulf %156, %159 : vector<10x10x128xf32>
    %c0_145 = arith.constant 0 : index
    %c0_146 = arith.constant 0 : index
    %161 = vector.load %arg8[%c0_145, %c0_146] : memref<1x128xf32, #tpu.memory_space<vmem>>, vector<1x128xf32>
    %162 = vector.shape_cast %161 : vector<1x128xf32> to vector<1x1x128xf32>
    %163 = vector.broadcast %162 : vector<1x1x128xf32> to vector<10x10x128xf32>
    %164 = arith.addf %160, %163 : vector<10x10x128xf32>
    %cst_147 = arith.constant 0.000000e+00 : f32
    %165 = vector.broadcast %cst_147 : f32 to vector<10x10x128xf32>
    %166 = arith.maximumf %164, %165 : vector<10x10x128xf32>
    %c0_148 = arith.constant 0 : index
    %c0_149 = arith.constant 0 : index
    %c0_150 = arith.constant 0 : index
    %167 = vector.load %arg9[%c0_148, %c0_149, %c0_150] : memref<10x10x1xf32, #tpu.memory_space<vmem>>, vector<10x10x1xf32>
    %168 = vector.broadcast %167 : vector<10x10x1xf32> to vector<10x10x128xf32>
    %169 = arith.mulf %166, %168 : vector<10x10x128xf32>
    %c2_i32 = arith.constant 2 : i32
    %170 = arith.addi %arg1, %c2_i32 : i32
    %c1_i32_151 = arith.constant 1 : i32
    %171 = arith.cmpi sge, %170, %c1_i32_151 : i32
    %c8_i32_152 = arith.constant 8 : i32
    %172 = arith.cmpi sle, %170, %c8_i32_152 : i32
    %173 = arith.andi %171, %172 : i1
    %cst_153 = arith.constant 1.000000e+00 : f32
    %cst_154 = arith.constant 0.000000e+00 : f32
    %174 = arith.select %173, %cst_153, %cst_154 : f32
    %175 = vector.broadcast %174 : f32 to vector<10x10x128xf32>
    %176 = arith.mulf %169, %175 : vector<10x10x128xf32>
    %177 = arith.truncf %176 : vector<10x10x128xf32> to vector<10x10x128xbf16>
    %178 = vector.extract_strided_slice %177 {offsets = [0, 0, 0], sizes = [8, 8, 128], strides = [1, 1, 1]} : vector<10x10x128xbf16> to vector<8x8x128xbf16>
    %179 = vector.shape_cast %178 : vector<8x8x128xbf16> to vector<64x128xbf16>
    %c2_155 = arith.constant 2 : index
    %c0_156 = arith.constant 0 : index
    %c0_157 = arith.constant 0 : index
    %c0_158 = arith.constant 0 : index
    %c0_159 = arith.constant 0 : index
    %180 = vector.load %arg5[%c2_155, %c0_156, %c0_157, %c0_158, %c0_159] : memref<3x3x3x128x128xbf16, #tpu.memory_space<vmem>>, vector<1x1x1x128x128xbf16>
    %181 = vector.shape_cast %180 : vector<1x1x1x128x128xbf16> to vector<128x128xbf16>
    %cst_160 = arith.constant dense<0.000000e+00> : vector<64x128xf32>
    %182 = tpu.matmul %179, %181, %cst_160 {dimension_numbers = #tpu.dot_dimension_numbers<[1], [0], [0], [1], [0, 0, 1, 1], [], []>} : vector<64x128xbf16>, vector<128x128xbf16>, vector<64x128xf32> -> vector<64x128xf32>
    %183 = arith.addf %154, %182 : vector<64x128xf32>
    %184 = vector.extract_strided_slice %177 {offsets = [0, 1, 0], sizes = [8, 8, 128], strides = [1, 1, 1]} : vector<10x10x128xbf16> to vector<8x8x128xbf16>
    %185 = vector.shape_cast %184 : vector<8x8x128xbf16> to vector<64x128xbf16>
    %c2_161 = arith.constant 2 : index
    %c0_162 = arith.constant 0 : index
    %c1_163 = arith.constant 1 : index
    %c0_164 = arith.constant 0 : index
    %c0_165 = arith.constant 0 : index
    %186 = vector.load %arg5[%c2_161, %c0_162, %c1_163, %c0_164, %c0_165] : memref<3x3x3x128x128xbf16, #tpu.memory_space<vmem>>, vector<1x1x1x128x128xbf16>
    %187 = vector.shape_cast %186 : vector<1x1x1x128x128xbf16> to vector<128x128xbf16>
    %cst_166 = arith.constant dense<0.000000e+00> : vector<64x128xf32>
    %188 = tpu.matmul %185, %187, %cst_166 {dimension_numbers = #tpu.dot_dimension_numbers<[1], [0], [0], [1], [0, 0, 1, 1], [], []>} : vector<64x128xbf16>, vector<128x128xbf16>, vector<64x128xf32> -> vector<64x128xf32>
    %189 = arith.addf %183, %188 : vector<64x128xf32>
    %190 = vector.extract_strided_slice %177 {offsets = [0, 2, 0], sizes = [8, 8, 128], strides = [1, 1, 1]} : vector<10x10x128xbf16> to vector<8x8x128xbf16>
    %191 = vector.shape_cast %190 : vector<8x8x128xbf16> to vector<64x128xbf16>
    %c2_167 = arith.constant 2 : index
    %c0_168 = arith.constant 0 : index
    %c2_169 = arith.constant 2 : index
    %c0_170 = arith.constant 0 : index
    %c0_171 = arith.constant 0 : index
    %192 = vector.load %arg5[%c2_167, %c0_168, %c2_169, %c0_170, %c0_171] : memref<3x3x3x128x128xbf16, #tpu.memory_space<vmem>>, vector<1x1x1x128x128xbf16>
    %193 = vector.shape_cast %192 : vector<1x1x1x128x128xbf16> to vector<128x128xbf16>
    %cst_172 = arith.constant dense<0.000000e+00> : vector<64x128xf32>
    %194 = tpu.matmul %191, %193, %cst_172 {dimension_numbers = #tpu.dot_dimension_numbers<[1], [0], [0], [1], [0, 0, 1, 1], [], []>} : vector<64x128xbf16>, vector<128x128xbf16>, vector<64x128xf32> -> vector<64x128xf32>
    %195 = arith.addf %189, %194 : vector<64x128xf32>
    %196 = vector.extract_strided_slice %177 {offsets = [1, 0, 0], sizes = [8, 8, 128], strides = [1, 1, 1]} : vector<10x10x128xbf16> to vector<8x8x128xbf16>
    %197 = vector.shape_cast %196 : vector<8x8x128xbf16> to vector<64x128xbf16>
    %c2_173 = arith.constant 2 : index
    %c1_174 = arith.constant 1 : index
    %c0_175 = arith.constant 0 : index
    %c0_176 = arith.constant 0 : index
    %c0_177 = arith.constant 0 : index
    %198 = vector.load %arg5[%c2_173, %c1_174, %c0_175, %c0_176, %c0_177] : memref<3x3x3x128x128xbf16, #tpu.memory_space<vmem>>, vector<1x1x1x128x128xbf16>
    %199 = vector.shape_cast %198 : vector<1x1x1x128x128xbf16> to vector<128x128xbf16>
    %cst_178 = arith.constant dense<0.000000e+00> : vector<64x128xf32>
    %200 = tpu.matmul %197, %199, %cst_178 {dimension_numbers = #tpu.dot_dimension_numbers<[1], [0], [0], [1], [0, 0, 1, 1], [], []>} : vector<64x128xbf16>, vector<128x128xbf16>, vector<64x128xf32> -> vector<64x128xf32>
    %201 = arith.addf %195, %200 : vector<64x128xf32>
    %202 = vector.extract_strided_slice %177 {offsets = [1, 1, 0], sizes = [8, 8, 128], strides = [1, 1, 1]} : vector<10x10x128xbf16> to vector<8x8x128xbf16>
    %203 = vector.shape_cast %202 : vector<8x8x128xbf16> to vector<64x128xbf16>
    %c2_179 = arith.constant 2 : index
    %c1_180 = arith.constant 1 : index
    %c1_181 = arith.constant 1 : index
    %c0_182 = arith.constant 0 : index
    %c0_183 = arith.constant 0 : index
    %204 = vector.load %arg5[%c2_179, %c1_180, %c1_181, %c0_182, %c0_183] : memref<3x3x3x128x128xbf16, #tpu.memory_space<vmem>>, vector<1x1x1x128x128xbf16>
    %205 = vector.shape_cast %204 : vector<1x1x1x128x128xbf16> to vector<128x128xbf16>
    %cst_184 = arith.constant dense<0.000000e+00> : vector<64x128xf32>
    %206 = tpu.matmul %203, %205, %cst_184 {dimension_numbers = #tpu.dot_dimension_numbers<[1], [0], [0], [1], [0, 0, 1, 1], [], []>} : vector<64x128xbf16>, vector<128x128xbf16>, vector<64x128xf32> -> vector<64x128xf32>
    %207 = arith.addf %201, %206 : vector<64x128xf32>
    %208 = vector.extract_strided_slice %177 {offsets = [1, 2, 0], sizes = [8, 8, 128], strides = [1, 1, 1]} : vector<10x10x128xbf16> to vector<8x8x128xbf16>
    %209 = vector.shape_cast %208 : vector<8x8x128xbf16> to vector<64x128xbf16>
    %c2_185 = arith.constant 2 : index
    %c1_186 = arith.constant 1 : index
    %c2_187 = arith.constant 2 : index
    %c0_188 = arith.constant 0 : index
    %c0_189 = arith.constant 0 : index
    %210 = vector.load %arg5[%c2_185, %c1_186, %c2_187, %c0_188, %c0_189] : memref<3x3x3x128x128xbf16, #tpu.memory_space<vmem>>, vector<1x1x1x128x128xbf16>
    %211 = vector.shape_cast %210 : vector<1x1x1x128x128xbf16> to vector<128x128xbf16>
    %cst_190 = arith.constant dense<0.000000e+00> : vector<64x128xf32>
    %212 = tpu.matmul %209, %211, %cst_190 {dimension_numbers = #tpu.dot_dimension_numbers<[1], [0], [0], [1], [0, 0, 1, 1], [], []>} : vector<64x128xbf16>, vector<128x128xbf16>, vector<64x128xf32> -> vector<64x128xf32>
    %213 = arith.addf %207, %212 : vector<64x128xf32>
    %214 = vector.extract_strided_slice %177 {offsets = [2, 0, 0], sizes = [8, 8, 128], strides = [1, 1, 1]} : vector<10x10x128xbf16> to vector<8x8x128xbf16>
    %215 = vector.shape_cast %214 : vector<8x8x128xbf16> to vector<64x128xbf16>
    %c2_191 = arith.constant 2 : index
    %c2_192 = arith.constant 2 : index
    %c0_193 = arith.constant 0 : index
    %c0_194 = arith.constant 0 : index
    %c0_195 = arith.constant 0 : index
    %216 = vector.load %arg5[%c2_191, %c2_192, %c0_193, %c0_194, %c0_195] : memref<3x3x3x128x128xbf16, #tpu.memory_space<vmem>>, vector<1x1x1x128x128xbf16>
    %217 = vector.shape_cast %216 : vector<1x1x1x128x128xbf16> to vector<128x128xbf16>
    %cst_196 = arith.constant dense<0.000000e+00> : vector<64x128xf32>
    %218 = tpu.matmul %215, %217, %cst_196 {dimension_numbers = #tpu.dot_dimension_numbers<[1], [0], [0], [1], [0, 0, 1, 1], [], []>} : vector<64x128xbf16>, vector<128x128xbf16>, vector<64x128xf32> -> vector<64x128xf32>
    %219 = arith.addf %213, %218 : vector<64x128xf32>
    %220 = vector.extract_strided_slice %177 {offsets = [2, 1, 0], sizes = [8, 8, 128], strides = [1, 1, 1]} : vector<10x10x128xbf16> to vector<8x8x128xbf16>
    %221 = vector.shape_cast %220 : vector<8x8x128xbf16> to vector<64x128xbf16>
    %c2_197 = arith.constant 2 : index
    %c2_198 = arith.constant 2 : index
    %c1_199 = arith.constant 1 : index
    %c0_200 = arith.constant 0 : index
    %c0_201 = arith.constant 0 : index
    %222 = vector.load %arg5[%c2_197, %c2_198, %c1_199, %c0_200, %c0_201] : memref<3x3x3x128x128xbf16, #tpu.memory_space<vmem>>, vector<1x1x1x128x128xbf16>
    %223 = vector.shape_cast %222 : vector<1x1x1x128x128xbf16> to vector<128x128xbf16>
    %cst_202 = arith.constant dense<0.000000e+00> : vector<64x128xf32>
    %224 = tpu.matmul %221, %223, %cst_202 {dimension_numbers = #tpu.dot_dimension_numbers<[1], [0], [0], [1], [0, 0, 1, 1], [], []>} : vector<64x128xbf16>, vector<128x128xbf16>, vector<64x128xf32> -> vector<64x128xf32>
    %225 = arith.addf %219, %224 : vector<64x128xf32>
    %226 = vector.extract_strided_slice %177 {offsets = [2, 2, 0], sizes = [8, 8, 128], strides = [1, 1, 1]} : vector<10x10x128xbf16> to vector<8x8x128xbf16>
    %227 = vector.shape_cast %226 : vector<8x8x128xbf16> to vector<64x128xbf16>
    %c2_203 = arith.constant 2 : index
    %c2_204 = arith.constant 2 : index
    %c2_205 = arith.constant 2 : index
    %c0_206 = arith.constant 0 : index
    %c0_207 = arith.constant 0 : index
    %228 = vector.load %arg5[%c2_203, %c2_204, %c2_205, %c0_206, %c0_207] : memref<3x3x3x128x128xbf16, #tpu.memory_space<vmem>>, vector<1x1x1x128x128xbf16>
    %229 = vector.shape_cast %228 : vector<1x1x1x128x128xbf16> to vector<128x128xbf16>
    %cst_208 = arith.constant dense<0.000000e+00> : vector<64x128xf32>
    %230 = tpu.matmul %227, %229, %cst_208 {dimension_numbers = #tpu.dot_dimension_numbers<[1], [0], [0], [1], [0, 0, 1, 1], [], []>} : vector<64x128xbf16>, vector<128x128xbf16>, vector<64x128xf32> -> vector<64x128xf32>
    %231 = arith.addf %225, %230 : vector<64x128xf32>
    %c0_209 = arith.constant 0 : index
    %c0_210 = arith.constant 0 : index
    %232 = vector.load %arg6[%c0_209, %c0_210] : memref<1x128xf32, #tpu.memory_space<vmem>>, vector<1x128xf32>
    %233 = vector.broadcast %232 : vector<1x128xf32> to vector<64x128xf32>
    %234 = arith.addf %231, %233 : vector<64x128xf32>
    %235 = vector.shape_cast %234 : vector<64x128xf32> to vector<1x1x8x8x128xf32>
    %c0_211 = arith.constant 0 : index
    %c0_212 = arith.constant 0 : index
    %c0_213 = arith.constant 0 : index
    %c0_214 = arith.constant 0 : index
    %c0_215 = arith.constant 0 : index
    %236 = vector.load %arg10[%c0_211, %c0_212, %c0_213, %c0_214, %c0_215] : memref<1x1x8x8x128xf32, #tpu.memory_space<vmem>>, vector<1x1x8x8x128xf32>
    tpu.vector_store %arg10[%c0_211, %c0_212, %c0_213, %c0_214, %c0_215], %235 {strides = array<i32>} : memref<1x1x8x8x128xf32, #tpu.memory_space<vmem>>, vector<1x1x8x8x128xf32>,
    %cst_216 = arith.constant dense<0.000000e+00> : vector<128xf32>
    %237 = vector.multi_reduction <add>, %234, %cst_216 [0] : vector<64x128xf32> to vector<128xf32>
    %238 = vector.shape_cast %237 : vector<128xf32> to vector<1x128xf32>
    %239 = arith.mulf %234, %234 : vector<64x128xf32>
    %cst_217 = arith.constant dense<0.000000e+00> : vector<128xf32>
    %240 = vector.multi_reduction <add>, %239, %cst_217 [0] : vector<64x128xf32> to vector<128xf32>
    %241 = vector.shape_cast %240 : vector<128xf32> to vector<1x128xf32>
    %242 = tpu.concatenate %238, %241 in 0 : vector<1x128xf32>, vector<1x128xf32> -> vector<2x128xf32>
    %c0_218 = arith.constant 0 : index
    %c0_219 = arith.constant 0 : index
    %c0_220 = arith.constant 0 : index
    %c0_221 = arith.constant 0 : index
    %243 = vector.load %arg11[%c0_218, %c0_219, %c0_220, %c0_221] : memref<1x1x2x128xf32, #tpu.memory_space<vmem>>, vector<1x1x2x128xf32>
    %244 = vector.shape_cast %243 : vector<1x1x2x128xf32> to vector<2x128xf32>
    %245 = vector.shape_cast %242 : vector<2x128xf32> to vector<1x1x2x128xf32>
    tpu.vector_store %arg11[%c0_218, %c0_219, %c0_220, %c0_221], %245 {strides = array<i32>} : memref<1x1x2x128xf32, #tpu.memory_space<vmem>>, vector<1x1x2x128xf32>,
    return
  }
  func.func @transform_0(%arg0: i32, %arg1: i32) -> (i32, i32, i32, i32, i32) {
    %c0_i32 = arith.constant 0 : i32
    %0 = arith.addi %arg1, %c0_i32 : i32
    %c0_i32_0 = arith.constant 0 : i32
    %c0_i32_1 = arith.constant 0 : i32
    %c0_i32_2 = arith.constant 0 : i32
    %c0_i32_3 = arith.constant 0 : i32
    return %arg0, %0, %c0_i32_0, %c0_i32_1, %c0_i32_2 : i32, i32, i32, i32, i32
  }
  func.func @transform_1(%arg0: i32, %arg1: i32) -> (i32, i32, i32, i32, i32) {
    %c1_i32 = arith.constant 1 : i32
    %0 = arith.addi %arg1, %c1_i32 : i32
    %c0_i32 = arith.constant 0 : i32
    %c0_i32_0 = arith.constant 0 : i32
    %c0_i32_1 = arith.constant 0 : i32
    %c0_i32_2 = arith.constant 0 : i32
    return %arg0, %0, %c0_i32, %c0_i32_0, %c0_i32_1 : i32, i32, i32, i32, i32
  }
  func.func @transform_2(%arg0: i32, %arg1: i32) -> (i32, i32, i32, i32, i32) {
    %c2_i32 = arith.constant 2 : i32
    %0 = arith.addi %arg1, %c2_i32 : i32
    %c0_i32 = arith.constant 0 : i32
    %c0_i32_0 = arith.constant 0 : i32
    %c0_i32_1 = arith.constant 0 : i32
    %c0_i32_2 = arith.constant 0 : i32
    return %arg0, %0, %c0_i32, %c0_i32_0, %c0_i32_1 : i32, i32, i32, i32, i32
  }
  func.func @transform_3(%arg0: i32, %arg1: i32) -> (i32, i32, i32, i32, i32) {
    %c0_i32 = arith.constant 0 : i32
    %c0_i32_0 = arith.constant 0 : i32
    %c0_i32_1 = arith.constant 0 : i32
    %c0_i32_2 = arith.constant 0 : i32
    %c0_i32_3 = arith.constant 0 : i32
    %c0_i32_4 = arith.constant 0 : i32
    return %c0_i32, %c0_i32_0, %c0_i32_1, %c0_i32_2, %c0_i32_3 : i32, i32, i32, i32, i32
  }
  func.func @transform_4(%arg0: i32, %arg1: i32) -> (i32, i32) {
    %c0_i32 = arith.constant 0 : i32
    %c0_i32_0 = arith.constant 0 : i32
    %c0_i32_1 = arith.constant 0 : i32
    return %c0_i32, %c0_i32_0 : i32, i32
  }
  func.func @transform_5(%arg0: i32, %arg1: i32) -> (i32, i32) {
    %c0_i32 = arith.constant 0 : i32
    %c0_i32_0 = arith.constant 0 : i32
    %c0_i32_1 = arith.constant 0 : i32
    return %c0_i32, %c0_i32_0 : i32, i32
  }
  func.func @transform_6(%arg0: i32, %arg1: i32) -> (i32, i32) {
    %c0_i32 = arith.constant 0 : i32
    %c0_i32_0 = arith.constant 0 : i32
    %c0_i32_1 = arith.constant 0 : i32
    return %c0_i32, %c0_i32_0 : i32, i32
  }
  func.func @transform_7(%arg0: i32, %arg1: i32) -> (i32, i32, i32) {
    %c0_i32 = arith.constant 0 : i32
    %c0_i32_0 = arith.constant 0 : i32
    %c0_i32_1 = arith.constant 0 : i32
    %c0_i32_2 = arith.constant 0 : i32
    return %c0_i32, %c0_i32_0, %c0_i32_1 : i32, i32, i32
  }
  func.func @transform_8(%arg0: i32, %arg1: i32) -> (i32, i32, i32, i32, i32) {
    %c0_i32 = arith.constant 0 : i32
    %c0_i32_0 = arith.constant 0 : i32
    %c0_i32_1 = arith.constant 0 : i32
    %c0_i32_2 = arith.constant 0 : i32
    return %arg0, %arg1, %c0_i32, %c0_i32_0, %c0_i32_1 : i32, i32, i32, i32, i32
  }
  func.func @transform_9(%arg0: i32, %arg1: i32) -> (i32, i32, i32, i32) {
    %c0_i32 = arith.constant 0 : i32
    %c0_i32_0 = arith.constant 0 : i32
    %c0_i32_1 = arith.constant 0 : i32
    return %arg0, %arg1, %c0_i32, %c0_i32_0 : i32, i32, i32, i32
  }
}

</mosaic_0001>

<llo_original>
// kernel: encoder_forward.4
$region0: #{encoder_forward.4}
  #allocation0 [shape = 'u32[]', space=smem, size = 0x4, offset = 0x4, fixed_abs, tag = 'smem constant byte address 0x4 - core index']
  #allocation1 [shape = 'u32[72,128]{1,0:T(1,128)}', space=vmem, size = 0x9000, scoped, tag = 'internal scratch']
  %s0 = inlined_call_operand.vmem [shape: f32[32,8,2,8,8], index: 0, kind: input, shape index: {}]
  %s1 = inlined_call_operand.vmem [shape: f32[16,8,8,4], index: 1, kind: output, shape index: {}]
  %s2 = sld [smem:[#allocation0]]
  $region37: #{encoder_forward.4} parent=0
    _
  %s4 = ssub.s32 1, %s2
  %s5 = scalar_select 0, %s4, %s2
  loop: start=0, step=1, limit=18
  $region2: #{encoder_forward.4} parent=0 // loop_pre_header
    _
  $region3: #{encoder_forward.4} parent=0 // loop_header
    %s7 = sphi 0, %s11
    %p8 = scmp.ge.s32.totalorder %s7, 18
    %s17 = sphi 0, %s19
    %s20 = sphi 0, %s17
    %s21 = sphi 0, %s20
    %s37 = sphi 0, %s21
    %s43 = sphi 0, %s45
    %s46 = sphi 0, %s43
    %s47 = sphi 0, %s46
    %s63 = sphi 0, %s47
  $region4: #{encoder_forward.4} parent=0 // loop_header_branch
    %10 = sbr.rel (%p8) target = $region8
  $region5: #{encoder_forward.4} parent=0 // loop_body
    %s12 = ssub.s32 %s7, 1
    %s13 = ssub.s32 %s7, 2
    %s14 = sadd.s32 %s7, 1
    %s15 = ssub.s32 %s7, %s14
    %p16 = scmp.eq.s32.totalorder %s15, 0
    %s18 = sadd.s32 %s17, 1
    %s19 = scalar_select %p16, %s17, %s18
    %p22 = pneg %p16
    %p23 = scmp.eq.s32.totalorder %s7, 15
    %p24 = por %p22, %p23
    %p25 = scmp.ne.s32.totalorder %s17, %s20
    %p26 = scmp.eq.s32.totalorder %s7, 0
    %p27 = por %p25, %p26
    %p28 = scmp.ne.s32.totalorder %s17, %s20
    %p29 = scmp.eq.s32.totalorder %s12, 15
    %p30 = por %p28, %p29
    %p31 = scmp.ne.s32.totalorder %s20, %s21
    %p32 = scmp.eq.s32.totalorder %s12, 0
    %p33 = por %p31, %p32
    %p34 = scmp.ne.s32.totalorder %s20, %s21
    %p35 = scmp.eq.s32.totalorder %s13, 15
    %p36 = por %p34, %p35
    %p38 = scmp.ne.s32.totalorder %s21, %s37
    %p39 = scmp.eq.s32.totalorder %s13, 0
    %p40 = por %p38, %p39
    %s41 = ssub.s32 %s7, %s14
    %p42 = scmp.eq.s32.totalorder %s41, 0
    %s44 = sadd.s32 %s43, 1
    %s45 = scalar_select %p42, %s43, %s44
    %p48 = pneg %p42
    %p49 = scmp.eq.s32.totalorder %s7, 15
    %p50 = por %p48, %p49
    %p51 = scmp.ne.s32.totalorder %s43, %s46
    %p52 = scmp.eq.s32.totalorder %s7, 0
    %p53 = por %p51, %p52
    %p54 = scmp.ne.s32.totalorder %s43, %s46
    %p55 = scmp.eq.s32.totalorder %s12, 15
    %p56 = por %p54, %p55
    %p57 = scmp.ne.s32.totalorder %s46, %s47
    %p58 = scmp.eq.s32.totalorder %s12, 0
    %p59 = por %p57, %p58
    %p60 = scmp.ne.s32.totalorder %s46, %s47
    %p61 = scmp.eq.s32.totalorder %s13, 15
    %p62 = por %p60, %p61
    %p64 = scmp.ne.s32.totalorder %s47, %s63
    %p65 = scmp.eq.s32.totalorder %s13, 0
    %p66 = por %p64, %p65
    %p67 = scmp.le.s32.totalorder 1, %s7
    %p68 = scmp.lt.s32.totalorder %s7, 17
    %p69 = pnand %p67, %p68
    %p70 = pneg %p69
    // Predicated region
    $region9: #{encoder_forward.4} parent=5 // pred_check
      _
    $region10: #{encoder_forward.4} parent=5 // pred_check_branch
      %72 = sbr.rel (%p69) target = $region12
    $region11: #{encoder_forward.4} parent=5 // pred_region
      %s73 = ssub.s32 %s7, 1
    $region12: #{encoder_forward.4} parent=5 // pred_fallthru
      _
    %p74 = scmp.lt.s32.totalorder %s7, 16
    // Predicated region
    $region13: #{encoder_forward.4} parent=5 // pred_check
      %p75 = pneg %p74
    $region14: #{encoder_forward.4} parent=5 // pred_check_branch
      %77 = sbr.rel (%p75) target = $region16
    $region15: #{encoder_forward.4} parent=5 // pred_region
      // Predicated region
      $region17: #{encoder_forward.4} parent=15 // pred_check
        %p78 = pneg %p27
      $region18: #{encoder_forward.4} parent=15 // pred_check_branch
        %80 = sbr.rel (%p78) target = $region20
      $region19: #{encoder_forward.4} parent=15 // pred_region
        %s81 = smul.u32 2, %s7
        %p82 = scmp.lt.s32.totalorder %s81, 31
        %s83 = scalar_select %p82, %s81, 31
        %s84 = smul.addr %s83, 16
        %s85 = smul.addr %s84, 8
        %s86 = scalar_lea.vmem %s0, %s85
        %s87 = smul.u32 2, %s7
      $region20: #{encoder_forward.4} parent=15 // pred_fallthru
        _
    $region16: #{encoder_forward.4} parent=5 // pred_fallthru
      _
    %p88 = scmp.le.s32.totalorder 1, %s7
    %p89 = scmp.lt.s32.totalorder %s7, 17
    %p90 = pnand %p88, %p89
    %p91 = pneg %p90
    // Predicated region
    $region21: #{encoder_forward.4} parent=5 // pred_check
      _
    $region22: #{encoder_forward.4} parent=5 // pred_check_branch
      %93 = sbr.rel (%p90) target = $region24
    $region23: #{encoder_forward.4} parent=5 // pred_region
      %s94 = ssub.s32 %s7, 1
      %s95 = smul.u32 2, %s12
      %p96 = scmp.lt.s32.totalorder %s95, 31
      %s97 = scalar_select %p96, %s95, 31
      %s98 = smul.addr %s97, 16
      %s99 = smul.addr %s98, 8
      %s100 = scalar_lea.vmem %s0, %s99
      %p101 = pneg %p33
      %p102 = pneg %p30
      %p103 = pneg %p59
      %p104 = pneg %p56
      %p105 = scmp.lt.s32.totalorder %s12, 15
      %s106 = scalar_select %p105, %s12, 15
      %s107 = smul.addr %s106, 8
      %s108 = smul.addr %s107, 8
      %s109 = scalar_lea.vmem %s1, %s108
      %s110 = smul.u32 2, %s12
      %p111 = scmp.lt.s32.totalorder %s110, 31
      %s112 = scalar_select %p111, %s110, 31
      %s113 = smul.addr %s112, 16
      %s114 = smul.addr %s113, 8
      %s115 = scalar_lea.vmem %s0, %s114
      %s116 = smul.u32 2, %s12
      %p117 = scmp.lt.s32.totalorder %s12, 15
      %s118 = scalar_select %p117, %s12, 15
      %s119 = smul.addr %s118, 8
      %s120 = smul.addr %s119, 8
      %s121 = scalar_lea.vmem %s1, %s120
      %v122 = vld [vmem:[%s115] sm:$0xff]
      %v123 = vld [vmem:[%s115 + $0x8] sm:$0xff]
      %v124 = vld [vmem:[%s115 + $0x10] sm:$0xff]
      %v125 = vld [vmem:[%s115 + $0x18] sm:$0xff]
      %v126 = vld [vmem:[%s115 + $0x20] sm:$0xff]
      %v127 = vld [vmem:[%s115 + $0x28] sm:$0xff]
      %v128 = vld [vmem:[%s115 + $0x30] sm:$0xff]
      %v129 = vld [vmem:[%s115 + $0x38] sm:$0xff]
      %v130 = vld [vmem:[%s115 + $0x40] sm:$0xff]
      %v131 = vld [vmem:[%s115 + $0x48] sm:$0xff]
      %v132 = vld [vmem:[%s115 + $0x50] sm:$0xff]
      %v133 = vld [vmem:[%s115 + $0x58] sm:$0xff]
      %v134 = vld [vmem:[%s115 + $0x60] sm:$0xff]
      %v135 = vld [vmem:[%s115 + $0x68] sm:$0xff]
      %v136 = vld [vmem:[%s115 + $0x70] sm:$0xff]
      %v137 = vld [vmem:[%s115 + $0x78] sm:$0xff]
      %s138 = scalar_lea.vmem %s115, 128
      %v139 = vld [vmem:[%s138] sm:$0xff]
      %v140 = vld [vmem:[%s138 + $0x8] sm:$0xff]
      %v141 = vld [vmem:[%s138 + $0x10] sm:$0xff]
      %v142 = vld [vmem:[%s138 + $0x18] sm:$0xff]
      %v143 = vld [vmem:[%s138 + $0x20] sm:$0xff]
      %v144 = vld [vmem:[%s138 + $0x28] sm:$0xff]
      %v145 = vld [vmem:[%s138 + $0x30] sm:$0xff]
      %v146 = vld [vmem:[%s138 + $0x38] sm:$0xff]
      %v147 = vld [vmem:[%s138 + $0x40] sm:$0xff]
      %v148 = vld [vmem:[%s138 + $0x48] sm:$0xff]
      %v149 = vld [vmem:[%s138 + $0x50] sm:$0xff]
      %v150 = vld [vmem:[%s138 + $0x58] sm:$0xff]
      %v151 = vld [vmem:[%s138 + $0x60] sm:$0xff]
      %v152 = vld [vmem:[%s138 + $0x68] sm:$0xff]
      %v153 = vld [vmem:[%s138 + $0x70] sm:$0xff]
      %v154 = vld [vmem:[%s138 + $0x78] sm:$0xff]
      %v155 = vmax.f32 %v122, %v139
      %v156 = vmax.f32 %v123, %v140
      %v157 = vmax.f32 %v124, %v141
      %v158 = vmax.f32 %v125, %v142
      %v159 = vmax.f32 %v126, %v143
      %v160 = vmax.f32 %v127, %v144
      %v161 = vmax.f32 %v128, %v145
      %v162 = vmax.f32 %v129, %v146
      %v163 = vmax.f32 %v130, %v147
      %v164 = vmax.f32 %v131, %v148
      %v165 = vmax.f32 %v132, %v149
      %v166 = vmax.f32 %v133, %v150
      %v167 = vmax.f32 %v134, %v151
      %v168 = vmax.f32 %v135, %v152
      %v169 = vmax.f32 %v136, %v153
      %v170 = vmax.f32 %v137, %v154
      %v171 = vmax.f32 %v155, %v156
      %v172 = vmax.f32 %v157, %v158
      %v173 = vmax.f32 %v159, %v160
      %v174 = vmax.f32 %v161, %v162
      %v175 = vmax.f32 %v163, %v164
      %v176 = vmax.f32 %v165, %v166
      %v177 = vmax.f32 %v167, %v168
      %v178 = vmax.f32 %v169, %v170
      %187 = vrot.lane.b32.xlu0 %v171, 124
      %v188 = vpop.permute.xlu0 %187
      %189 = vrot.lane.b32.xlu0 %v172, 124
      %v190 = vpop.permute.xlu0 %189
      %191 = vrot.lane.b32.xlu0 %v173, 124
      %v192 = vpop.permute.xlu0 %191
      %193 = vrot.lane.b32.xlu0 %v174, 124
      %v194 = vpop.permute.xlu0 %193
      %195 = vrot.lane.b32.xlu0 %v175, 124
      %v196 = vpop.permute.xlu0 %195
      %197 = vrot.lane.b32.xlu0 %v176, 124
      %v198 = vpop.permute.xlu0 %197
      %199 = vrot.lane.b32.xlu0 %v177, 124
      %v200 = vpop.permute.xlu0 %199
      %201 = vrot.lane.b32.xlu0 %v178, 124
      %v202 = vpop.permute.xlu0 %201
      %v211 = vmax.f32 %v171, %v188
      %v212 = vmax.f32 %v172, %v190
      %v213 = vmax.f32 %v173, %v192
      %v214 = vmax.f32 %v174, %v194
      %v215 = vmax.f32 %v175, %v196
      %v216 = vmax.f32 %v176, %v198
      %v217 = vmax.f32 %v177, %v200
      %v218 = vmax.f32 %v178, %v202
      %vm219 = vcmask 31744
      %220 = vst.msk [vmem:[%s121] sm:$0xff] %vm219, %v211
      %221 = vst.msk [vmem:[%s121 + $0x8] sm:$0xff] %vm219, %v212
      %222 = vst.msk [vmem:[%s121 + $0x10] sm:$0xff] %vm219, %v213
      %223 = vst.msk [vmem:[%s121 + $0x18] sm:$0xff] %vm219, %v214
      %224 = vst.msk [vmem:[%s121 + $0x20] sm:$0xff] %vm219, %v215
      %225 = vst.msk [vmem:[%s121 + $0x28] sm:$0xff] %vm219, %v216
      %226 = vst.msk [vmem:[%s121 + $0x30] sm:$0xff] %vm219, %v217
      %227 = vst.msk [vmem:[%s121 + $0x38] sm:$0xff] %vm219, %v218
      %p228 = scmp.lt.s32.totalorder %s12, 15
      %s229 = scalar_select %p228, %s12, 15
      %s230 = smul.addr %s229, 8
      %s231 = smul.addr %s230, 8
      %s232 = scalar_lea.vmem %s1, %s231
      // Predicated region
      $region25: #{encoder_forward.4} parent=23 // pred_check
        %p233 = pneg %p56
      $region26: #{encoder_forward.4} parent=23 // pred_check_branch
        %235 = sbr.rel (%p233) target = $region28
      $region27: #{encoder_forward.4} parent=23 // pred_region
        _
      $region28: #{encoder_forward.4} parent=23 // pred_fallthru
        _
    $region24: #{encoder_forward.4} parent=5 // pred_fallthru
      _
    %p236 = scmp.le.s32.totalorder 2, %s7
    // Predicated region
    $region29: #{encoder_forward.4} parent=5 // pred_check
      %p237 = pneg %p236
    $region30: #{encoder_forward.4} parent=5 // pred_check_branch
      %239 = sbr.rel (%p237) target = $region32
    $region31: #{encoder_forward.4} parent=5 // pred_region
      %s240 = ssub.s32 %s7, 2
      // Predicated region
      $region33: #{encoder_forward.4} parent=31 // pred_check
        %p241 = pneg %p62
      $region34: #{encoder_forward.4} parent=31 // pred_check_branch
        %243 = sbr.rel (%p241) target = $region36
      $region35: #{encoder_forward.4} parent=31 // pred_region
        %p244 = scmp.lt.s32.totalorder %s13, 15
        %s245 = scalar_select %p244, %s13, 15
        %s246 = smul.addr %s245, 8
        %s247 = smul.addr %s246, 8
        %s248 = scalar_lea.vmem %s1, %s247
      $region36: #{encoder_forward.4} parent=31 // pred_fallthru
        _
    $region32: #{encoder_forward.4} parent=5 // pred_fallthru
      _
  $region6: #{encoder_forward.4} parent=0 // loop_footer
    %s11 = sadd.s32 1, %s7
  $region7: #{encoder_forward.4} parent=0 // loop_footer_branch
    %6 = sbr.rel target = $region3
  $region8: #{encoder_forward.4} parent=0 // loop_exit
    _

// kernel: encoder_forward.7
$region0: #{encoder_forward.7}
  #allocation0 [shape = 'u32[]', space=smem, size = 0x4, offset = 0x4, fixed_abs, tag = 'smem constant byte address 0x4 - core index']
  #allocation1 [shape = 'u32[72,128]{1,0:T(1,128)}', space=vmem, size = 0x9000, scoped, tag = 'internal scratch']
  %s0 = inlined_call_operand.vmem [shape: f32[1024,128], index: 0, kind: input, shape index: {}]
  %s1 = inlined_call_operand.vmem [shape: f32[1,128], index: 1, kind: input, shape index: {}]
  %s2 = inlined_call_operand.vmem [shape: f32[1,128], index: 2, kind: input, shape index: {}]
  %s3 = inlined_call_operand.vmem [shape: f32[1024,128], index: 3, kind: output, shape index: {}]
  %s4 = sld [smem:[#allocation0]]
  $region45: #{encoder_forward.7} parent=0
    _
  %s6 = ssub.s32 1, %s4
  %s7 = scalar_select 0, %s6, %s4
  loop: start=0, step=1, limit=4
  $region2: #{encoder_forward.7} parent=0 // loop_pre_header
    _
  $region3: #{encoder_forward.7} parent=0 // loop_header
    %s9 = sphi 0, %s13
    %p10 = scmp.ge.s32.totalorder %s9, 4
    %s19 = sphi 0, %s21
    %s22 = sphi 0, %s19
    %s23 = sphi 0, %s22
    %s39 = sphi 0, %s23
    %s43 = sphi 0, %s43
    %s45 = sphi 0, %s43
    %s46 = sphi 0, %s45
    %s60 = sphi 0, %s46
    %s64 = sphi 0, %s64
    %s66 = sphi 0, %s64
    %s67 = sphi 0, %s66
    %s81 = sphi 0, %s67
    %s87 = sphi 0, %s89
    %s90 = sphi 0, %s87
    %s91 = sphi 0, %s90
    %s107 = sphi 0, %s91
  $region4: #{encoder_forward.7} parent=0 // loop_header_branch
    %12 = sbr.rel (%p10) target = $region8
  $region5: #{encoder_forward.7} parent=0 // loop_body
    %s14 = ssub.s32 %s9, 1
    %s15 = ssub.s32 %s9, 2
    %s16 = sadd.s32 %s9, 1
    %s17 = ssub.s32 %s9, %s16
    %p18 = scmp.eq.s32.totalorder %s17, 0
    %s20 = sadd.s32 %s19, 1
    %s21 = scalar_select %p18, %s19, %s20
    %p24 = pneg %p18
    %p25 = scmp.eq.s32.totalorder %s9, 1
    %p26 = por %p24, %p25
    %p27 = scmp.ne.s32.totalorder %s19, %s22
    %p28 = scmp.eq.s32.totalorder %s9, 0
    %p29 = por %p27, %p28
    %p30 = scmp.ne.s32.totalorder %s19, %s22
    %p31 = scmp.eq.s32.totalorder %s14, 1
    %p32 = por %p30, %p31
    %p33 = scmp.ne.s32.totalorder %s22, %s23
    %p34 = scmp.eq.s32.totalorder %s14, 0
    %p35 = por %p33, %p34
    %p36 = scmp.ne.s32.totalorder %s22, %s23
    %p37 = scmp.eq.s32.totalorder %s15, 1
    %p38 = por %p36, %p37
    %p40 = scmp.ne.s32.totalorder %s23, %s39
    %p41 = scmp.eq.s32.totalorder %s15, 0
    %p42 = por %p40, %p41
    %s44 = sadd.s32 %s43, 1
    %p47 = scmp.eq.s32.totalorder %s9, 1
    %p48 = scmp.ne.s32.totalorder %s43, %s45
    %p49 = scmp.eq.s32.totalorder %s9, 0
    %p50 = por %p48, %p49
    %p51 = scmp.ne.s32.totalorder %s43, %s45
    %p52 = scmp.eq.s32.totalorder %s14, 1
    %p53 = por %p51, %p52
    %p54 = scmp.ne.s32.totalorder %s45, %s46
    %p55 = scmp.eq.s32.totalorder %s14, 0
    %p56 = por %p54, %p55
    %p57 = scmp.ne.s32.totalorder %s45, %s46
    %p58 = scmp.eq.s32.totalorder %s15, 1
    %p59 = por %p57, %p58
    %p61 = scmp.ne.s32.totalorder %s46, %s60
    %p62 = scmp.eq.s32.totalorder %s15, 0
    %p63 = por %p61, %p62
    %s65 = sadd.s32 %s64, 1
    %p68 = scmp.eq.s32.totalorder %s9, 1
    %p69 = scmp.ne.s32.totalorder %s64, %s66
    %p70 = scmp.eq.s32.totalorder %s9, 0
    %p71 = por %p69, %p70
    %p72 = scmp.ne.s32.totalorder %s64, %s66
    %p73 = scmp.eq.s32.totalorder %s14, 1
    %p74 = por %p72, %p73
    %p75 = scmp.ne.s32.totalorder %s66, %s67
    %p76 = scmp.eq.s32.totalorder %s14, 0
    %p77 = por %p75, %p76
    %p78 = scmp.ne.s32.totalorder %s66, %s67
    %p79 = scmp.eq.s32.totalorder %s15, 1
    %p80 = por %p78, %p79
    %p82 = scmp.ne.s32.totalorder %s67, %s81
    %p83 = scmp.eq.s32.totalorder %s15, 0
    %p84 = por %p82, %p83
    %s85 = ssub.s32 %s9, %s16
    %p86 = scmp.eq.s32.totalorder %s85, 0
    %s88 = sadd.s32 %s87, 1
    %s89 = scalar_select %p86, %s87, %s88
    %p92 = pneg %p86
    %p93 = scmp.eq.s32.totalorder %s9, 1
    %p94 = por %p92, %p93
    %p95 = scmp.ne.s32.totalorder %s87, %s90
    %p96 = scmp.eq.s32.totalorder %s9, 0
    %p97 = por %p95, %p96
    %p98 = scmp.ne.s32.totalorder %s87, %s90
    %p99 = scmp.eq.s32.totalorder %s14, 1
    %p100 = por %p98, %p99
    %p101 = scmp.ne.s32.totalorder %s90, %s91
    %p102 = scmp.eq.s32.totalorder %s14, 0
    %p103 = por %p101, %p102
    %p104 = scmp.ne.s32.totalorder %s90, %s91
    %p105 = scmp.eq.s32.totalorder %s15, 1
    %p106 = por %p104, %p105
    %p108 = scmp.ne.s32.totalorder %s91, %s107
    %p109 = scmp.eq.s32.totalorder %s15, 0
    %p110 = por %p108, %p109
    %p111 = scmp.le.s32.totalorder 1, %s9
    %p112 = scmp.lt.s32.totalorder %s9, 3
    %p113 = pnand %p111, %p112
    %p114 = pneg %p113
    // Predicated region
    $region9: #{encoder_forward.7} parent=5 // pred_check
      _
    $region10: #{encoder_forward.7} parent=5 // pred_check_branch
      %116 = sbr.rel (%p113) target = $region12
    $region11: #{encoder_forward.7} parent=5 // pred_region
      %s117 = ssub.s32 %s9, 1
      // Predicated region
      $region13: #{encoder_forward.7} parent=11 // pred_check
        %p118 = pneg %p56
      $region14: #{encoder_forward.7} parent=11 // pred_check_branch
        %120 = sbr.rel (%p118) target = $region16
      $region15: #{encoder_forward.7} parent=11 // pred_region
        _
      $region16: #{encoder_forward.7} parent=11 // pred_fallthru
        _
      // Predicated region
      $region17: #{encoder_forward.7} parent=11 // pred_check
        %p121 = pneg %p77
      $region18: #{encoder_forward.7} parent=11 // pred_check_branch
        %123 = sbr.rel (%p121) target = $region20
      $region19: #{encoder_forward.7} parent=11 // pred_region
        _
      $region20: #{encoder_forward.7} parent=11 // pred_fallthru
        _
    $region12: #{encoder_forward.7} parent=5 // pred_fallthru
      _
    %p124 = scmp.lt.s32.totalorder %s9, 2
    // Predicated region
    $region21: #{encoder_forward.7} parent=5 // pred_check
      %p125 = pneg %p124
    $region22: #{encoder_forward.7} parent=5 // pred_check_branch
      %127 = sbr.rel (%p125) target = $region24
    $region23: #{encoder_forward.7} parent=5 // pred_region
      // Predicated region
      $region25: #{encoder_forward.7} parent=23 // pred_check
        %p128 = pneg %p29
      $region26: #{encoder_forward.7} parent=23 // pred_check_branch
        %130 = sbr.rel (%p128) target = $region28
      $region27: #{encoder_forward.7} parent=23 // pred_region
        %s131 = smul.u32 64, %s9
        %p132 = scmp.lt.s32.totalorder %s131, 127
        %s133 = scalar_select %p132, %s131, 127
        %s134 = smul.addr %s133, 8
        %s135 = scalar_lea.vmem %s0, %s134
        %s136 = smul.u32 64, %s9
      $region28: #{encoder_forward.7} parent=23 // pred_fallthru
        _
    $region24: #{encoder_forward.7} parent=5 // pred_fallthru
      _
    %p137 = scmp.le.s32.totalorder 1, %s9
    %p138 = scmp.lt.s32.totalorder %s9, 3
    %p139 = pnand %p137, %p138
    %p140 = pneg %p139
    // Predicated region
    $region29: #{encoder_forward.7} parent=5 // pred_check
      _
    $region30: #{encoder_forward.7} parent=5 // pred_check_branch
      %142 = sbr.rel (%p139) target = $region32
    $region31: #{encoder_forward.7} parent=5 // pred_region
      %s143 = ssub.s32 %s9, 1
      %s144 = smul.u32 64, %s14
      %p145 = scmp.lt.s32.totalorder %s144, 127
      %s146 = scalar_select %p145, %s144, 127
      %s147 = smul.addr %s146, 8
      %s148 = scalar_lea.vmem %s0, %s147
      %p149 = pneg %p35
      %p150 = pneg %p32
      %p151 = pneg %p56
      %p152 = pneg %p53
      %p153 = pneg %p77
      %p154 = pneg %p74
      %p155 = pneg %p103
      %p156 = pneg %p100
      %s157 = smul.u32 64, %s14
      %p158 = scmp.lt.s32.totalorder %s157, 127
      %s159 = scalar_select %p158, %s157, 127
      %s160 = smul.addr %s159, 8
      %s161 = scalar_lea.vmem %s3, %s160
      %s162 = smul.u32 64, %s14
      %p163 = scmp.lt.s32.totalorder %s162, 127
      %s164 = scalar_select %p163, %s162, 127
      %s165 = smul.addr %s164, 8
      %s166 = scalar_lea.vmem %s0, %s165
      %s167 = smul.u32 64, %s14
      %s168 = smul.u32 64, %s14
      %p169 = scmp.lt.s32.totalorder %s168, 127
      %s170 = scalar_select %p169, %s168, 127
      %s171 = smul.addr %s170, 8
      %s172 = scalar_lea.vmem %s3, %s171
      %s173 = smul.u32 64, %s14
      %v174 = vld [vmem:[%s166] sm:$0xff]
      %v175 = vld [vmem:[%s166 + $0x8] sm:$0xff]
      %v176 = vld [vmem:[%s166 + $0x10] sm:$0xff]
      %v177 = vld [vmem:[%s166 + $0x18] sm:$0xff]
      %v178 = vld [vmem:[%s166 + $0x20] sm:$0xff]
      %v179 = vld [vmem:[%s166 + $0x28] sm:$0xff]
      %v180 = vld [vmem:[%s166 + $0x30] sm:$0xff]
      %v181 = vld [vmem:[%s166 + $0x38] sm:$0xff]
      %v182 = vld [vmem:[%s166 + $0x40] sm:$0xff]
      %v183 = vld [vmem:[%s166 + $0x48] sm:$0xff]
      %v184 = vld [vmem:[%s166 + $0x50] sm:$0xff]
      %v185 = vld [vmem:[%s166 + $0x58] sm:$0xff]
      %v186 = vld [vmem:[%s166 + $0x60] sm:$0xff]
      %v187 = vld [vmem:[%s166 + $0x68] sm:$0xff]
      %v188 = vld [vmem:[%s166 + $0x70] sm:$0xff]
      %v189 = vld [vmem:[%s166 + $0x78] sm:$0xff]
      %v190 = vld [vmem:[%s166 + $0x80] sm:$0xff]
      %v191 = vld [vmem:[%s166 + $0x88] sm:$0xff]
      %v192 = vld [vmem:[%s166 + $0x90] sm:$0xff]
      %v193 = vld [vmem:[%s166 + $0x98] sm:$0xff]
      %v194 = vld [vmem:[%s166 + $0xa0] sm:$0xff]
      %v195 = vld [vmem:[%s166 + $0xa8] sm:$0xff]
      %v196 = vld [vmem:[%s166 + $0xb0] sm:$0xff]
      %v197 = vld [vmem:[%s166 + $0xb8] sm:$0xff]
      %v198 = vld [vmem:[%s166 + $0xc0] sm:$0xff]
      %v199 = vld [vmem:[%s166 + $0xc8] sm:$0xff]
      %v200 = vld [vmem:[%s166 + $0xd0] sm:$0xff]
      %v201 = vld [vmem:[%s166 + $0xd8] sm:$0xff]
      %v202 = vld [vmem:[%s166 + $0xe0] sm:$0xff]
      %v203 = vld [vmem:[%s166 + $0xe8] sm:$0xff]
      %v204 = vld [vmem:[%s166 + $0xf0] sm:$0xff]
      %v205 = vld [vmem:[%s166 + $0xf8] sm:$0xff]
      %v206 = vld [vmem:[%s166 + $0x100] sm:$0xff]
      %v207 = vld [vmem:[%s166 + $0x108] sm:$0xff]
      %v208 = vld [vmem:[%s166 + $0x110] sm:$0xff]
      %v209 = vld [vmem:[%s166 + $0x118] sm:$0xff]
      %v210 = vld [vmem:[%s166 + $0x120] sm:$0xff]
      %v211 = vld [vmem:[%s166 + $0x128] sm:$0xff]
      %v212 = vld [vmem:[%s166 + $0x130] sm:$0xff]
      %v213 = vld [vmem:[%s166 + $0x138] sm:$0xff]
      %v214 = vld [vmem:[%s166 + $0x140] sm:$0xff]
      %v215 = vld [vmem:[%s166 + $0x148] sm:$0xff]
      %v216 = vld [vmem:[%s166 + $0x150] sm:$0xff]
      %v217 = vld [vmem:[%s166 + $0x158] sm:$0xff]
      %v218 = vld [vmem:[%s166 + $0x160] sm:$0xff]
      %v219 = vld [vmem:[%s166 + $0x168] sm:$0xff]
      %v220 = vld [vmem:[%s166 + $0x170] sm:$0xff]
      %v221 = vld [vmem:[%s166 + $0x178] sm:$0xff]
      %v222 = vld [vmem:[%s166 + $0x180] sm:$0xff]
      %v223 = vld [vmem:[%s166 + $0x188] sm:$0xff]
      %v224 = vld [vmem:[%s166 + $0x190] sm:$0xff]
      %v225 = vld [vmem:[%s166 + $0x198] sm:$0xff]
      %v226 = vld [vmem:[%s166 + $0x1a0] sm:$0xff]
      %v227 = vld [vmem:[%s166 + $0x1a8] sm:$0xff]
      %v228 = vld [vmem:[%s166 + $0x1b0] sm:$0xff]
      %v229 = vld [vmem:[%s166 + $0x1b8] sm:$0xff]
      %v230 = vld [vmem:[%s166 + $0x1c0] sm:$0xff]
      %v231 = vld [vmem:[%s166 + $0x1c8] sm:$0xff]
      %v232 = vld [vmem:[%s166 + $0x1d0] sm:$0xff]
      %v233 = vld [vmem:[%s166 + $0x1d8] sm:$0xff]
      %v234 = vld [vmem:[%s166 + $0x1e0] sm:$0xff]
      %v235 = vld [vmem:[%s166 + $0x1e8] sm:$0xff]
      %v236 = vld [vmem:[%s166 + $0x1f0] sm:$0xff]
      %v237 = vld [vmem:[%s166 + $0x1f8] sm:$0xff]
      %v238 = vld [vmem:[%s1] sm:$0x1]
      %v240 = vperm.slane %v238, 0
      %v242 = vmul.f32 %v174, %v240
      %v243 = vmul.f32 %v175, %v240
      %v244 = vmul.f32 %v176, %v240
      %v245 = vmul.f32 %v177, %v240
      %v246 = vmul.f32 %v178, %v240
      %v247 = vmul.f32 %v179, %v240
      %v248 = vmul.f32 %v180, %v240
      %v249 = vmul.f32 %v181, %v240
      %v250 = vmul.f32 %v182, %v240
      %v251 = vmul.f32 %v183, %v240
      %v252 = vmul.f32 %v184, %v240
      %v253 = vmul.f32 %v185, %v240
      %v254 = vmul.f32 %v186, %v240
      %v255 = vmul.f32 %v187, %v240
      %v256 = vmul.f32 %v188, %v240
      %v257 = vmul.f32 %v189, %v240
      %v258 = vmul.f32 %v190, %v240
      %v259 = vmul.f32 %v191, %v240
      %v260 = vmul.f32 %v192, %v240
      %v261 = vmul.f32 %v193, %v240
      %v262 = vmul.f32 %v194, %v240
      %v263 = vmul.f32 %v195, %v240
      %v264 = vmul.f32 %v196, %v240
      %v265 = vmul.f32 %v197, %v240
      %v266 = vmul.f32 %v198, %v240
      %v267 = vmul.f32 %v199, %v240
      %v268 = vmul.f32 %v200, %v240
      %v269 = vmul.f32 %v201, %v240
      %v270 = vmul.f32 %v202, %v240
      %v271 = vmul.f32 %v203, %v240
      %v272 = vmul.f32 %v204, %v240
      %v273 = vmul.f32 %v205, %v240
      %v274 = vmul.f32 %v206, %v240
      %v275 = vmul.f32 %v207, %v240
      %v276 = vmul.f32 %v208, %v240
      %v277 = vmul.f32 %v209, %v240
      %v278 = vmul.f32 %v210, %v240
      %v279 = vmul.f32 %v211, %v240
      %v280 = vmul.f32 %v212, %v240
      %v281 = vmul.f32 %v213, %v240
      %v282 = vmul.f32 %v214, %v240
      %v283 = vmul.f32 %v215, %v240
      %v284 = vmul.f32 %v216, %v240
      %v285 = vmul.f32 %v217, %v240
      %v286 = vmul.f32 %v218, %v240
      %v287 = vmul.f32 %v219, %v240
      %v288 = vmul.f32 %v220, %v240
      %v289 = vmul.f32 %v221, %v240
      %v290 = vmul.f32 %v222, %v240
      %v291 = vmul.f32 %v223, %v240
      %v292 = vmul.f32 %v224, %v240
      %v293 = vmul.f32 %v225, %v240
      %v294 = vmul.f32 %v226, %v240
      %v295 = vmul.f32 %v227, %v240
      %v296 = vmul.f32 %v228, %v240
      %v297 = vmul.f32 %v229, %v240
      %v298 = vmul.f32 %v230, %v240
      %v299 = vmul.f32 %v231, %v240
      %v300 = vmul.f32 %v232, %v240
      %v301 = vmul.f32 %v233, %v240
      %v302 = vmul.f32 %v234, %v240
      %v303 = vmul.f32 %v235, %v240
      %v304 = vmul.f32 %v236, %v240
      %v305 = vmul.f32 %v237, %v240
      %v306 = vld [vmem:[%s2] sm:$0x1]
      %v308 = vperm.slane %v306, 0
      %v310 = vadd.f32 %v242, %v308
      %v311 = vadd.f32 %v243, %v308
      %v312 = vadd.f32 %v244, %v308
      %v313 = vadd.f32 %v245, %v308
      %v314 = vadd.f32 %v246, %v308
      %v315 = vadd.f32 %v247, %v308
      %v316 = vadd.f32 %v248, %v308
      %v317 = vadd.f32 %v249, %v308
      %v318 = vadd.f32 %v250, %v308
      %v319 = vadd.f32 %v251, %v308
      %v320 = vadd.f32 %v252, %v308
      %v321 = vadd.f32 %v253, %v308
      %v322 = vadd.f32 %v254, %v308
      %v323 = vadd.f32 %v255, %v308
      %v324 = vadd.f32 %v256, %v308
      %v325 = vadd.f32 %v257, %v308
      %v326 = vadd.f32 %v258, %v308
      %v327 = vadd.f32 %v259, %v308
      %v328 = vadd.f32 %v260, %v308
      %v329 = vadd.f32 %v261, %v308
      %v330 = vadd.f32 %v262, %v308
      %v331 = vadd.f32 %v263, %v308
      %v332 = vadd.f32 %v264, %v308
      %v333 = vadd.f32 %v265, %v308
      %v334 = vadd.f32 %v266, %v308
      %v335 = vadd.f32 %v267, %v308
      %v336 = vadd.f32 %v268, %v308
      %v337 = vadd.f32 %v269, %v308
      %v338 = vadd.f32 %v270, %v308
      %v339 = vadd.f32 %v271, %v308
      %v340 = vadd.f32 %v272, %v308
      %v341 = vadd.f32 %v273, %v308
      %v342 = vadd.f32 %v274, %v308
      %v343 = vadd.f32 %v275, %v308
      %v344 = vadd.f32 %v276, %v308
      %v345 = vadd.f32 %v277, %v308
      %v346 = vadd.f32 %v278, %v308
      %v347 = vadd.f32 %v279, %v308
      %v348 = vadd.f32 %v280, %v308
      %v349 = vadd.f32 %v281, %v308
      %v350 = vadd.f32 %v282, %v308
      %v351 = vadd.f32 %v283, %v308
      %v352 = vadd.f32 %v284, %v308
      %v353 = vadd.f32 %v285, %v308
      %v354 = vadd.f32 %v286, %v308
      %v355 = vadd.f32 %v287, %v308
      %v356 = vadd.f32 %v288, %v308
      %v357 = vadd.f32 %v289, %v308
      %v358 = vadd.f32 %v290, %v308
      %v359 = vadd.f32 %v291, %v308
      %v360 = vadd.f32 %v292, %v308
      %v361 = vadd.f32 %v293, %v308
      %v362 = vadd.f32 %v294, %v308
      %v363 = vadd.f32 %v295, %v308
      %v364 = vadd.f32 %v296, %v308
      %v365 = vadd.f32 %v297, %v308
      %v366 = vadd.f32 %v298, %v308
      %v367 = vadd.f32 %v299, %v308
      %v368 = vadd.f32 %v300, %v308
      %v369 = vadd.f32 %v301, %v308
      %v370 = vadd.f32 %v302, %v308
      %v371 = vadd.f32 %v303, %v308
      %v372 = vadd.f32 %v304, %v308
      %v373 = vadd.f32 %v305, %v308
      %v374 = vmax.f32 %v310, 0.0
      %v375 = vmax.f32 %v311, 0.0
      %v376 = vmax.f32 %v312, 0.0
      %v377 = vmax.f32 %v313, 0.0
      %v378 = vmax.f32 %v314, 0.0
      %v379 = vmax.f32 %v315, 0.0
      %v380 = vmax.f32 %v316, 0.0
      %v381 = vmax.f32 %v317, 0.0
      %v382 = vmax.f32 %v318, 0.0
      %v383 = vmax.f32 %v319, 0.0
      %v384 = vmax.f32 %v320, 0.0
      %v385 = vmax.f32 %v321, 0.0
      %v386 = vmax.f32 %v322, 0.0
      %v387 = vmax.f32 %v323, 0.0
      %v388 = vmax.f32 %v324, 0.0
      %v389 = vmax.f32 %v325, 0.0
      %v390 = vmax.f32 %v326, 0.0
      %v391 = vmax.f32 %v327, 0.0
      %v392 = vmax.f32 %v328, 0.0
      %v393 = vmax.f32 %v329, 0.0
      %v394 = vmax.f32 %v330, 0.0
      %v395 = vmax.f32 %v331, 0.0
      %v396 = vmax.f32 %v332, 0.0
      %v397 = vmax.f32 %v333, 0.0
      %v398 = vmax.f32 %v334, 0.0
      %v399 = vmax.f32 %v335, 0.0
      %v400 = vmax.f32 %v336, 0.0
      %v401 = vmax.f32 %v337, 0.0
      %v402 = vmax.f32 %v338, 0.0
      %v403 = vmax.f32 %v339, 0.0
      %v404 = vmax.f32 %v340, 0.0
      %v405 = vmax.f32 %v341, 0.0
      %v406 = vmax.f32 %v342, 0.0
      %v407 = vmax.f32 %v343, 0.0
      %v408 = vmax.f32 %v344, 0.0
      %v409 = vmax.f32 %v345, 0.0
      %v410 = vmax.f32 %v346, 0.0
      %v411 = vmax.f32 %v347, 0.0
      %v412 = vmax.f32 %v348, 0.0
      %v413 = vmax.f32 %v349, 0.0
      %v414 = vmax.f32 %v350, 0.0
      %v415 = vmax.f32 %v351, 0.0
      %v416 = vmax.f32 %v352, 0.0
      %v417 = vmax.f32 %v353, 0.0
      %v418 = vmax.f32 %v354, 0.0
      %v419 = vmax.f32 %v355, 0.0
      %v420 = vmax.f32 %v356, 0.0
      %v421 = vmax.f32 %v357, 0.0
      %v422 = vmax.f32 %v358, 0.0
      %v423 = vmax.f32 %v359, 0.0
      %v424 = vmax.f32 %v360, 0.0
      %v425 = vmax.f32 %v361, 0.0
      %v426 = vmax.f32 %v362, 0.0
      %v427 = vmax.f32 %v363, 0.0
      %v428 = vmax.f32 %v364, 0.0
      %v429 = vmax.f32 %v365, 0.0
      %v430 = vmax.f32 %v366, 0.0
      %v431 = vmax.f32 %v367, 0.0
      %v432 = vmax.f32 %v368, 0.0
      %v433 = vmax.f32 %v369, 0.0
      %v434 = vmax.f32 %v370, 0.0
      %v435 = vmax.f32 %v371, 0.0
      %v436 = vmax.f32 %v372, 0.0
      %v437 = vmax.f32 %v373, 0.0
      %438 = vst [vmem:[%s172] sm:$0xff] %v374
      %439 = vst [vmem:[%s172 + $0x8] sm:$0xff] %v375
      %440 = vst [vmem:[%s172 + $0x10] sm:$0xff] %v376
      %441 = vst [vmem:[%s172 + $0x18] sm:$0xff] %v377
      %442 = vst [vmem:[%s172 + $0x20] sm:$0xff] %v378
      %443 = vst [vmem:[%s172 + $0x28] sm:$0xff] %v379
      %444 = vst [vmem:[%s172 + $0x30] sm:$0xff] %v380
      %445 = vst [vmem:[%s172 + $0x38] sm:$0xff] %v381
      %446 = vst [vmem:[%s172 + $0x40] sm:$0xff] %v382
      %447 = vst [vmem:[%s172 + $0x48] sm:$0xff] %v383
      %448 = vst [vmem:[%s172 + $0x50] sm:$0xff] %v384
      %449 = vst [vmem:[%s172 + $0x58] sm:$0xff] %v385
      %450 = vst [vmem:[%s172 + $0x60] sm:$0xff] %v386
      %451 = vst [vmem:[%s172 + $0x68] sm:$0xff] %v387
      %452 = vst [vmem:[%s172 + $0x70] sm:$0xff] %v388
      %453 = vst [vmem:[%s172 + $0x78] sm:$0xff] %v389
      %454 = vst [vmem:[%s172 + $0x80] sm:$0xff] %v390
      %455 = vst [vmem:[%s172 + $0x88] sm:$0xff] %v391
      %456 = vst [vmem:[%s172 + $0x90] sm:$0xff] %v392
      %457 = vst [vmem:[%s172 + $0x98] sm:$0xff] %v393
      %458 = vst [vmem:[%s172 + $0xa0] sm:$0xff] %v394
      %459 = vst [vmem:[%s172 + $0xa8] sm:$0xff] %v395
      %460 = vst [vmem:[%s172 + $0xb0] sm:$0xff] %v396
      %461 = vst [vmem:[%s172 + $0xb8] sm:$0xff] %v397
      %462 = vst [vmem:[%s172 + $0xc0] sm:$0xff] %v398
      %463 = vst [vmem:[%s172 + $0xc8] sm:$0xff] %v399
      %464 = vst [vmem:[%s172 + $0xd0] sm:$0xff] %v400
      %465 = vst [vmem:[%s172 + $0xd8] sm:$0xff] %v401
      %466 = vst [vmem:[%s172 + $0xe0] sm:$0xff] %v402
      %467 = vst [vmem:[%s172 + $0xe8] sm:$0xff] %v403
      %468 = vst [vmem:[%s172 + $0xf0] sm:$0xff] %v404
      %469 = vst [vmem:[%s172 + $0xf8] sm:$0xff] %v405
      %470 = vst [vmem:[%s172 + $0x100] sm:$0xff] %v406
      %471 = vst [vmem:[%s172 + $0x108] sm:$0xff] %v407
      %472 = vst [vmem:[%s172 + $0x110] sm:$0xff] %v408
      %473 = vst [vmem:[%s172 + $0x118] sm:$0xff] %v409
      %474 = vst [vmem:[%s172 + $0x120] sm:$0xff] %v410
      %475 = vst [vmem:[%s172 + $0x128] sm:$0xff] %v411
      %476 = vst [vmem:[%s172 + $0x130] sm:$0xff] %v412
      %477 = vst [vmem:[%s172 + $0x138] sm:$0xff] %v413
      %478 = vst [vmem:[%s172 + $0x140] sm:$0xff] %v414
      %479 = vst [vmem:[%s172 + $0x148] sm:$0xff] %v415
      %480 = vst [vmem:[%s172 + $0x150] sm:$0xff] %v416
      %481 = vst [vmem:[%s172 + $0x158] sm:$0xff] %v417
      %482 = vst [vmem:[%s172 + $0x160] sm:$0xff] %v418
      %483 = vst [vmem:[%s172 + $0x168] sm:$0xff] %v419
      %484 = vst [vmem:[%s172 + $0x170] sm:$0xff] %v420
      %485 = vst [vmem:[%s172 + $0x178] sm:$0xff] %v421
      %486 = vst [vmem:[%s172 + $0x180] sm:$0xff] %v422
      %487 = vst [vmem:[%s172 + $0x188] sm:$0xff] %v423
      %488 = vst [vmem:[%s172 + $0x190] sm:$0xff] %v424
      %489 = vst [vmem:[%s172 + $0x198] sm:$0xff] %v425
      %490 = vst [vmem:[%s172 + $0x1a0] sm:$0xff] %v426
      %491 = vst [vmem:[%s172 + $0x1a8] sm:$0xff] %v427
      %492 = vst [vmem:[%s172 + $0x1b0] sm:$0xff] %v428
      %493 = vst [vmem:[%s172 + $0x1b8] sm:$0xff] %v429
      %494 = vst [vmem:[%s172 + $0x1c0] sm:$0xff] %v430
      %495 = vst [vmem:[%s172 + $0x1c8] sm:$0xff] %v431
      %496 = vst [vmem:[%s172 + $0x1d0] sm:$0xff] %v432
      %497 = vst [vmem:[%s172 + $0x1d8] sm:$0xff] %v433
      %498 = vst [vmem:[%s172 + $0x1e0] sm:$0xff] %v434
      %499 = vst [vmem:[%s172 + $0x1e8] sm:$0xff] %v435
      %500 = vst [vmem:[%s172 + $0x1f0] sm:$0xff] %v436
      %501 = vst [vmem:[%s172 + $0x1f8] sm:$0xff] %v437
      %s502 = smul.u32 64, %s14
      %p503 = scmp.lt.s32.totalorder %s502, 127
      %s504 = scalar_select %p503, %s502, 127
      %s505 = smul.addr %s504, 8
      %s506 = scalar_lea.vmem %s3, %s505
      // Predicated region
      $region33: #{encoder_forward.7} parent=31 // pred_check
        %p507 = pneg %p100
      $region34: #{encoder_forward.7} parent=31 // pred_check_branch
        %509 = sbr.rel (%p507) target = $region36
      $region35: #{encoder_forward.7} parent=31 // pred_region
        %s510 = smul.u32 64, %s14
      $region36: #{encoder_forward.7} parent=31 // pred_fallthru
        _
    $region32: #{encoder_forward.7} parent=5 // pred_fallthru
      _
    %p511 = scmp.le.s32.totalorder 2, %s9
    // Predicated region
    $region37: #{encoder_forward.7} parent=5 // pred_check
      %p512 = pneg %p511
    $region38: #{encoder_forward.7} parent=5 // pred_check_branch
      %514 = sbr.rel (%p512) target = $region40
    $region39: #{encoder_forward.7} parent=5 // pred_region
      %s515 = ssub.s32 %s9, 2
      // Predicated region
      $region41: #{encoder_forward.7} parent=39 // pred_check
        %p516 = pneg %p106
      $region42: #{encoder_forward.7} parent=39 // pred_check_branch
        %518 = sbr.rel (%p516) target = $region44
      $region43: #{encoder_forward.7} parent=39 // pred_region
        %s519 = smul.u32 64, %s15
        %p520 = scmp.lt.s32.totalorder %s519, 127
        %s521 = scalar_select %p520, %s519, 127
        %s522 = smul.addr %s521, 8
        %s523 = scalar_lea.vmem %s3, %s522
      $region44: #{encoder_forward.7} parent=39 // pred_fallthru
        _
    $region40: #{encoder_forward.7} parent=5 // pred_fallthru
      _
  $region6: #{encoder_forward.7} parent=0 // loop_footer
    %s13 = sadd.s32 1, %s9
  $region7: #{encoder_forward.7} parent=0 // loop_footer_branch
    %8 = sbr.rel target = $region3
  $region8: #{encoder_forward.7} parent=0 // loop_exit
    _

// kernel: encoder_forward.5
$region0: #{encoder_forward.5}
  #allocation0 [shape = 'u32[]', space=smem, size = 0x4, offset = 0x4, fixed_abs, tag = 'smem constant byte address 0x4 - core index']
  #allocation1 [shape = 'u32[72,128]{1,0:T(1,128)}', space=vmem, size = 0x9000, scoped, tag = 'internal scratch']
  %s0 = inlined_call_operand.vmem [shape: f32[2,10,10,10,4], index: 0, kind: input, shape index: {}, may-alias: {0,1,2}]
  %s1 = inlined_call_operand.vmem [shape: f32[2,10,10,10,4], index: 1, kind: input, shape index: {}, may-alias: {0,1,2}]
  %s2 = inlined_call_operand.vmem [shape: f32[2,10,10,10,4], index: 2, kind: input, shape index: {}, may-alias: {0,1,2}]
  %s3 = inlined_call_operand.vmem [shape: bf16[3,3,3,4,128], index: 3, kind: input, shape index: {}]
  %s4 = inlined_call_operand.vmem [shape: f32[1,128], index: 4, kind: input, shape index: {}]
  %s5 = inlined_call_operand.vmem [shape: f32[1,4], index: 5, kind: input, shape index: {}]
  %s6 = inlined_call_operand.vmem [shape: f32[1,4], index: 6, kind: input, shape index: {}]
  %s7 = inlined_call_operand.vmem [shape: f32[10,10,1], index: 7, kind: input, shape index: {}]
  %s8 = inlined_call_operand.vmem [shape: f32[2,8,8,8,128], index: 8, kind: output, shape index: {0}]
  %s9 = inlined_call_operand.vmem [shape: f32[2,8,2,128], index: 9, kind: output, shape index: {1}]
  %10 = xla_tuple %s8, %s9
  %s11 = sld [smem:[#allocation0]]
  $region73: #{encoder_forward.5} parent=0
    _
  %s13 = ssub.s32 1, %s11
  %s14 = scalar_select 0, %s13, %s11
  loop: start=0, step=1, limit=18
  $region2: #{encoder_forward.5} parent=0 // loop_pre_header
    _
  $region3: #{encoder_forward.5} parent=0 // loop_header
    %s16 = sphi 0, %s20
    %p17 = scmp.ge.s32.totalorder %s16, 18
    %s23 = sphi 0, %s35
    %s24 = sphi 0, %s31
    %s25 = sphi 0, %s23
    %s26 = sphi 0, %s24
    %s27 = sphi 0, %s25
    %s28 = sphi 0, %s26
    %s40 = sphi 0, %s42
    %s43 = sphi 0, %s40
    %s44 = sphi 0, %s43
    %s60 = sphi 0, %s44
    %s70 = sphi 0, %s72
    %s73 = sphi 0, %s70
    %s74 = sphi 0, %s73
    %s90 = sphi 0, %s74
    %s100 = sphi 0, %s102
    %s103 = sphi 0, %s100
    %s104 = sphi 0, %s103
    %s120 = sphi 0, %s104
    %s124 = sphi 0, %s124
    %s126 = sphi 0, %s124
    %s127 = sphi 0, %s126
    %s141 = sphi 0, %s127
    %s145 = sphi 0, %s145
    %s147 = sphi 0, %s145
    %s148 = sphi 0, %s147
    %s162 = sphi 0, %s148
    %s166 = sphi 0, %s166
    %s168 = sphi 0, %s166
    %s169 = sphi 0, %s168
    %s183 = sphi 0, %s169
    %s187 = sphi 0, %s187
    %s189 = sphi 0, %s187
    %s190 = sphi 0, %s189
    %s204 = sphi 0, %s190
    %s208 = sphi 0, %s208
    %s210 = sphi 0, %s208
    %s211 = sphi 0, %s210
    %s225 = sphi 0, %s211
    %s233 = sphi 0, %s235
    %s236 = sphi 0, %s233
    %s237 = sphi 0, %s236
    %s253 = sphi 0, %s237
    %s261 = sphi 0, %s263
    %s264 = sphi 0, %s261
    %s265 = sphi 0, %s264
    %s281 = sphi 0, %s265
  $region4: #{encoder_forward.5} parent=0 // loop_header_branch
    %19 = sbr.rel (%p17) target = $region8
  $region5: #{encoder_forward.5} parent=0 // loop_body
    %s21 = ssub.s32 %s16, 1
    %s22 = ssub.s32 %s16, 2
    %s29 = sadd.s32 1, %s24
    %p30 = scmp.ge.s32.totalorder %s29, 8
    %s31 = scalar_select %p30, 0, %s29
    %s32 = sadd.s32 1, %s23
    %s33 = scalar_select %p30, %s32, %s23
    %p34 = scmp.ge.s32.totalorder %s33, 2
    %s35 = scalar_select %p34, 0, %s33
    %s36 = ssub.s32 %s23, %s35
    %s37 = ssub.s32 %s24, %s31
    %s38 = sor.u32 %s36, %s37
    %p39 = scmp.eq.s32.totalorder %s38, 0
    %s41 = sadd.s32 %s40, 1
    %s42 = scalar_select %p39, %s40, %s41
    %p45 = pneg %p39
    %p46 = scmp.eq.s32.totalorder %s16, 15
    %p47 = por %p45, %p46
    %p48 = scmp.ne.s32.totalorder %s40, %s43
    %p49 = scmp.eq.s32.totalorder %s16, 0
    %p50 = por %p48, %p49
    %p51 = scmp.ne.s32.totalorder %s40, %s43
    %p52 = scmp.eq.s32.totalorder %s21, 15
    %p53 = por %p51, %p52
    %p54 = scmp.ne.s32.totalorder %s43, %s44
    %p55 = scmp.eq.s32.totalorder %s21, 0
    %p56 = por %p54, %p55
    %p57 = scmp.ne.s32.totalorder %s43, %s44
    %p58 = scmp.eq.s32.totalorder %s22, 15
    %p59 = por %p57, %p58
    %p61 = scmp.ne.s32.totalorder %s44, %s60
    %p62 = scmp.eq.s32.totalorder %s22, 0
    %p63 = por %p61, %p62
    %s64 = sadd.s32 %s24, 1
    %s65 = sadd.s32 %s31, 1
    %s66 = ssub.s32 %s23, %s35
    %s67 = ssub.s32 %s64, %s65
    %s68 = sor.u32 %s66, %s67
    %p69 = scmp.eq.s32.totalorder %s68, 0
    %s71 = sadd.s32 %s70, 1
    %s72 = scalar_select %p69, %s70, %s71
    %p75 = pneg %p69
    %p76 = scmp.eq.s32.totalorder %s16, 15
    %p77 = por %p75, %p76
    %p78 = scmp.ne.s32.totalorder %s70, %s73
    %p79 = scmp.eq.s32.totalorder %s16, 0
    %p80 = por %p78, %p79
    %p81 = scmp.ne.s32.totalorder %s70, %s73
    %p82 = scmp.eq.s32.totalorder %s21, 15
    %p83 = por %p81, %p82
    %p84 = scmp.ne.s32.totalorder %s73, %s74
    %p85 = scmp.eq.s32.totalorder %s21, 0
    %p86 = por %p84, %p85
    %p87 = scmp.ne.s32.totalorder %s73, %s74
    %p88 = scmp.eq.s32.totalorder %s22, 15
    %p89 = por %p87, %p88
    %p91 = scmp.ne.s32.totalorder %s74, %s90
    %p92 = scmp.eq.s32.totalorder %s22, 0
    %p93 = por %p91, %p92
    %s94 = sadd.s32 %s24, 2
    %s95 = sadd.s32 %s31, 2
    %s96 = ssub.s32 %s23, %s35
    %s97 = ssub.s32 %s94, %s95
    %s98 = sor.u32 %s96, %s97
    %p99 = scmp.eq.s32.totalorder %s98, 0
    %s101 = sadd.s32 %s100, 1
    %s102 = scalar_select %p99, %s100, %s101
    %p105 = pneg %p99
    %p106 = scmp.eq.s32.totalorder %s16, 15
    %p107 = por %p105, %p106
    %p108 = scmp.ne.s32.totalorder %s100, %s103
    %p109 = scmp.eq.s32.totalorder %s16, 0
    %p110 = por %p108, %p109
    %p111 = scmp.ne.s32.totalorder %s100, %s103
    %p112 = scmp.eq.s32.totalorder %s21, 15
    %p113 = por %p111, %p112
    %p114 = scmp.ne.s32.totalorder %s103, %s104
    %p115 = scmp.eq.s32.totalorder %s21, 0
    %p116 = por %p114, %p115
    %p117 = scmp.ne.s32.totalorder %s103, %s104
    %p118 = scmp.eq.s32.totalorder %s22, 15
    %p119 = por %p117, %p118
    %p121 = scmp.ne.s32.totalorder %s104, %s120
    %p122 = scmp.eq.s32.totalorder %s22, 0
    %p123 = por %p121, %p122
    %s125 = sadd.s32 %s124, 1
    %p128 = scmp.eq.s32.totalorder %s16, 15
    %p129 = scmp.ne.s32.totalorder %s124, %s126
    %p130 = scmp.eq.s32.totalorder %s16, 0
    %p131 = por %p129, %p130
    %p132 = scmp.ne.s32.totalorder %s124, %s126
    %p133 = scmp.eq.s32.totalorder %s21, 15
    %p134 = por %p132, %p133
    %p135 = scmp.ne.s32.totalorder %s126, %s127
    %p136 = scmp.eq.s32.totalorder %s21, 0
    %p137 = por %p135, %p136
    %p138 = scmp.ne.s32.totalorder %s126, %s127
    %p139 = scmp.eq.s32.totalorder %s22, 15
    %p140 = por %p138, %p139
    %p142 = scmp.ne.s32.totalorder %s127, %s141
    %p143 = scmp.eq.s32.totalorder %s22, 0
    %p144 = por %p142, %p143
    %s146 = sadd.s32 %s145, 1
    %p149 = scmp.eq.s32.totalorder %s16, 15
    %p150 = scmp.ne.s32.totalorder %s145, %s147
    %p151 = scmp.eq.s32.totalorder %s16, 0
    %p152 = por %p150, %p151
    %p153 = scmp.ne.s32.totalorder %s145, %s147
    %p154 = scmp.eq.s32.totalorder %s21, 15
    %p155 = por %p153, %p154
    %p156 = scmp.ne.s32.totalorder %s147, %s148
    %p157 = scmp.eq.s32.totalorder %s21, 0
    %p158 = por %p156, %p157
    %p159 = scmp.ne.s32.totalorder %s147, %s148
    %p160 = scmp.eq.s32.totalorder %s22, 15
    %p161 = por %p159, %p160
    %p163 = scmp.ne.s32.totalorder %s148, %s162
    %p164 = scmp.eq.s32.totalorder %s22, 0
    %p165 = por %p163, %p164
    %s167 = sadd.s32 %s166, 1
    %p170 = scmp.eq.s32.totalorder %s16, 15
    %p171 = scmp.ne.s32.totalorder %s166, %s168
    %p172 = scmp.eq.s32.totalorder %s16, 0
    %p173 = por %p171, %p172
    %p174 = scmp.ne.s32.totalorder %s166, %s168
    %p175 = scmp.eq.s32.totalorder %s21, 15
    %p176 = por %p174, %p175
    %p177 = scmp.ne.s32.totalorder %s168, %s169
    %p178 = scmp.eq.s32.totalorder %s21, 0
    %p179 = por %p177, %p178
    %p180 = scmp.ne.s32.totalorder %s168, %s169
    %p181 = scmp.eq.s32.totalorder %s22, 15
    %p182 = por %p180, %p181
    %p184 = scmp.ne.s32.totalorder %s169, %s183
    %p185 = scmp.eq.s32.totalorder %s22, 0
    %p186 = por %p184, %p185
    %s188 = sadd.s32 %s187, 1
    %p191 = scmp.eq.s32.totalorder %s16, 15
    %p192 = scmp.ne.s32.totalorder %s187, %s189
    %p193 = scmp.eq.s32.totalorder %s16, 0
    %p194 = por %p192, %p193
    %p195 = scmp.ne.s32.totalorder %s187, %s189
    %p196 = scmp.eq.s32.totalorder %s21, 15
    %p197 = por %p195, %p196
    %p198 = scmp.ne.s32.totalorder %s189, %s190
    %p199 = scmp.eq.s32.totalorder %s21, 0
    %p200 = por %p198, %p199
    %p201 = scmp.ne.s32.totalorder %s189, %s190
    %p202 = scmp.eq.s32.totalorder %s22, 15
    %p203 = por %p201, %p202
    %p205 = scmp.ne.s32.totalorder %s190, %s204
    %p206 = scmp.eq.s32.totalorder %s22, 0
    %p207 = por %p205, %p206
    %s209 = sadd.s32 %s208, 1
    %p212 = scmp.eq.s32.totalorder %s16, 15
    %p213 = scmp.ne.s32.totalorder %s208, %s210
    %p214 = scmp.eq.s32.totalorder %s16, 0
    %p215 = por %p213, %p214
    %p216 = scmp.ne.s32.totalorder %s208, %s210
    %p217 = scmp.eq.s32.totalorder %s21, 15
    %p218 = por %p216, %p217
    %p219 = scmp.ne.s32.totalorder %s210, %s211
    %p220 = scmp.eq.s32.totalorder %s21, 0
    %p221 = por %p219, %p220
    %p222 = scmp.ne.s32.totalorder %s210, %s211
    %p223 = scmp.eq.s32.totalorder %s22, 15
    %p224 = por %p222, %p223
    %p226 = scmp.ne.s32.totalorder %s211, %s225
    %p227 = scmp.eq.s32.totalorder %s22, 0
    %p228 = por %p226, %p227
    %s229 = ssub.s32 %s23, %s35
    %s230 = ssub.s32 %s24, %s31
    %s231 = sor.u32 %s229, %s230
    %p232 = scmp.eq.s32.totalorder %s231, 0
    %s234 = sadd.s32 %s233, 1
    %s235 = scalar_select %p232, %s233, %s234
    %p238 = pneg %p232
    %p239 = scmp.eq.s32.totalorder %s16, 15
    %p240 = por %p238, %p239
    %p241 = scmp.ne.s32.totalorder %s233, %s236
    %p242 = scmp.eq.s32.totalorder %s16, 0
    %p243 = por %p241, %p242
    %p244 = scmp.ne.s32.totalorder %s233, %s236
    %p245 = scmp.eq.s32.totalorder %s21, 15
    %p246 = por %p244, %p245
    %p247 = scmp.ne.s32.totalorder %s236, %s237
    %p248 = scmp.eq.s32.totalorder %s21, 0
    %p249 = por %p247, %p248
    %p250 = scmp.ne.s32.totalorder %s236, %s237
    %p251 = scmp.eq.s32.totalorder %s22, 15
    %p252 = por %p250, %p251
    %p254 = scmp.ne.s32.totalorder %s237, %s253
    %p255 = scmp.eq.s32.totalorder %s22, 0
    %p256 = por %p254, %p255
    %s257 = ssub.s32 %s23, %s35
    %s258 = ssub.s32 %s24, %s31
    %s259 = sor.u32 %s257, %s258
    %p260 = scmp.eq.s32.totalorder %s259, 0
    %s262 = sadd.s32 %s261, 1
    %s263 = scalar_select %p260, %s261, %s262
    %p266 = pneg %p260
    %p267 = scmp.eq.s32.totalorder %s16, 15
    %p268 = por %p266, %p267
    %p269 = scmp.ne.s32.totalorder %s261, %s264
    %p270 = scmp.eq.s32.totalorder %s16, 0
    %p271 = por %p269, %p270
    %p272 = scmp.ne.s32.totalorder %s261, %s264
    %p273 = scmp.eq.s32.totalorder %s21, 15
    %p274 = por %p272, %p273
    %p275 = scmp.ne.s32.totalorder %s264, %s265
    %p276 = scmp.eq.s32.totalorder %s21, 0
    %p277 = por %p275, %p276
    %p278 = scmp.ne.s32.totalorder %s264, %s265
    %p279 = scmp.eq.s32.totalorder %s22, 15
    %p280 = por %p278, %p279
    %p282 = scmp.ne.s32.totalorder %s265, %s281
    %p283 = scmp.eq.s32.totalorder %s22, 0
    %p284 = por %p282, %p283
    %p285 = scmp.le.s32.totalorder 1, %s16
    %p286 = scmp.lt.s32.totalorder %s16, 17
    %p287 = pnand %p285, %p286
    %p288 = pneg %p287
    // Predicated region
    $region9: #{encoder_forward.5} parent=5 // pred_check
      _
    $region10: #{encoder_forward.5} parent=5 // pred_check_branch
      %290 = sbr.rel (%p287) target = $region12
    $region11: #{encoder_forward.5} parent=5 // pred_region
      %s291 = ssub.s32 %s16, 1
      // Predicated region
      $region13: #{encoder_forward.5} parent=11 // pred_check
        %p292 = pneg %p137
      $region14: #{encoder_forward.5} parent=11 // pred_check_branch
        %294 = sbr.rel (%p292) target = $region16
      $region15: #{encoder_forward.5} parent=11 // pred_region
        _
      $region16: #{encoder_forward.5} parent=11 // pred_fallthru
        _
      // Predicated region
      $region17: #{encoder_forward.5} parent=11 // pred_check
        %p295 = pneg %p158
      $region18: #{encoder_forward.5} parent=11 // pred_check_branch
        %297 = sbr.rel (%p295) target = $region20
      $region19: #{encoder_forward.5} parent=11 // pred_region
        _
      $region20: #{encoder_forward.5} parent=11 // pred_fallthru
        _
      // Predicated region
      $region21: #{encoder_forward.5} parent=11 // pred_check
        %p298 = pneg %p179
      $region22: #{encoder_forward.5} parent=11 // pred_check_branch
        %300 = sbr.rel (%p298) target = $region24
      $region23: #{encoder_forward.5} parent=11 // pred_region
        _
      $region24: #{encoder_forward.5} parent=11 // pred_fallthru
        _
      // Predicated region
      $region25: #{encoder_forward.5} parent=11 // pred_check
        %p301 = pneg %p200
      $region26: #{encoder_forward.5} parent=11 // pred_check_branch
        %303 = sbr.rel (%p301) target = $region28
      $region27: #{encoder_forward.5} parent=11 // pred_region
        _
      $region28: #{encoder_forward.5} parent=11 // pred_fallthru
        _
      // Predicated region
      $region29: #{encoder_forward.5} parent=11 // pred_check
        %p304 = pneg %p221
      $region30: #{encoder_forward.5} parent=11 // pred_check_branch
        %306 = sbr.rel (%p304) target = $region32
      $region31: #{encoder_forward.5} parent=11 // pred_region
        _
      $region32: #{encoder_forward.5} parent=11 // pred_fallthru
        _
    $region12: #{encoder_forward.5} parent=5 // pred_fallthru
      _
    %p307 = scmp.lt.s32.totalorder %s16, 16
    // Predicated region
    $region33: #{encoder_forward.5} parent=5 // pred_check
      %p308 = pneg %p307
    $region34: #{encoder_forward.5} parent=5 // pred_check_branch
      %310 = sbr.rel (%p308) target = $region36
    $region35: #{encoder_forward.5} parent=5 // pred_region
      // Predicated region
      $region37: #{encoder_forward.5} parent=35 // pred_check
        %p311 = pneg %p50
      $region38: #{encoder_forward.5} parent=35 // pred_check_branch
        %313 = sbr.rel (%p311) target = $region40
      $region39: #{encoder_forward.5} parent=35 // pred_region
        %p314 = scmp.lt.s32.totalorder %s23, 1
        %s315 = scalar_select %p314, %s23, 1
        %p316 = scmp.lt.s32.totalorder %s24, 9
        %s317 = scalar_select %p316, %s24, 9
        %s318 = smul.addr %s317, 20
        %s319 = smul.addr %s315, 200
        %s320 = sadd.s32 %s318, %s319
        %s321 = smul.addr %s320, 8
        %s322 = scalar_lea.vmem %s0, %s321
      $region40: #{encoder_forward.5} parent=35 // pred_fallthru
        _
      // Predicated region
      $region41: #{encoder_forward.5} parent=35 // pred_check
        %p323 = pneg %p80
      $region42: #{encoder_forward.5} parent=35 // pred_check_branch
        %325 = sbr.rel (%p323) target = $region44
      $region43: #{encoder_forward.5} parent=35 // pred_region
        %s326 = sadd.s32 %s24, 1
        %p327 = scmp.lt.s32.totalorder %s23, 1
        %s328 = scalar_select %p327, %s23, 1
        %p329 = scmp.lt.s32.totalorder %s326, 9
        %s330 = scalar_select %p329, %s326, 9
        %s331 = smul.addr %s330, 20
        %s332 = smul.addr %s328, 200
        %s333 = sadd.s32 %s331, %s332
        %s334 = smul.addr %s333, 8
        %s335 = scalar_lea.vmem %s1, %s334
        %s336 = sadd.s32 %s24, 1
      $region44: #{encoder_forward.5} parent=35 // pred_fallthru
        _
      // Predicated region
      $region45: #{encoder_forward.5} parent=35 // pred_check
        %p337 = pneg %p110
      $region46: #{encoder_forward.5} parent=35 // pred_check_branch
        %339 = sbr.rel (%p337) target = $region48
      $region47: #{encoder_forward.5} parent=35 // pred_region
        %s340 = sadd.s32 %s24, 2
        %p341 = scmp.lt.s32.totalorder %s23, 1
        %s342 = scalar_select %p341, %s23, 1
        %p343 = scmp.lt.s32.totalorder %s340, 9
        %s344 = scalar_select %p343, %s340, 9
        %s345 = smul.addr %s344, 20
        %s346 = smul.addr %s342, 200
        %s347 = sadd.s32 %s345, %s346
        %s348 = smul.addr %s347, 8
        %s349 = scalar_lea.vmem %s2, %s348
        %s350 = sadd.s32 %s24, 2
      $region48: #{encoder_forward.5} parent=35 // pred_fallthru
        _
    $region36: #{encoder_forward.5} parent=5 // pred_fallthru
      _
    %p351 = scmp.le.s32.totalorder 1, %s16
    %p352 = scmp.lt.s32.totalorder %s16, 17
    %p353 = pnand %p351, %p352
    %p354 = pneg %p353
    // Predicated region
    $region49: #{encoder_forward.5} parent=5 // pred_check
      _
    $region50: #{encoder_forward.5} parent=5 // pred_check_branch
      %356 = sbr.rel (%p353) target = $region52
    $region51: #{encoder_forward.5} parent=5 // pred_region
      %s357 = ssub.s32 %s16, 1
      %p358 = scmp.lt.s32.totalorder %s25, 1
      %s359 = scalar_select %p358, %s25, 1
      %p360 = scmp.lt.s32.totalorder %s26, 9
      %s361 = scalar_select %p360, %s26, 9
      %s362 = smul.addr %s361, 20
      %s363 = smul.addr %s359, 200
      %s364 = sadd.s32 %s362, %s363
      %s365 = smul.addr %s364, 8
      %s366 = scalar_lea.vmem %s0, %s365
      %p367 = pneg %p56
      %p368 = pneg %p53
      %s369 = sadd.s32 %s26, 1
      %p370 = scmp.lt.s32.totalorder %s25, 1
      %s371 = scalar_select %p370, %s25, 1
      %p372 = scmp.lt.s32.totalorder %s369, 9
      %s373 = scalar_select %p372, %s369, 9
      %s374 = smul.addr %s373, 20
      %s375 = smul.addr %s371, 200
      %s376 = sadd.s32 %s374, %s375
      %s377 = smul.addr %s376, 8
      %s378 = scalar_lea.vmem %s1, %s377
      %p379 = pneg %p86
      %p380 = pneg %p83
      %s381 = sadd.s32 %s26, 2
      %p382 = scmp.lt.s32.totalorder %s25, 1
      %s383 = scalar_select %p382, %s25, 1
      %p384 = scmp.lt.s32.totalorder %s381, 9
      %s385 = scalar_select %p384, %s381, 9
      %s386 = smul.addr %s385, 20
      %s387 = smul.addr %s383, 200
      %s388 = sadd.s32 %s386, %s387
      %s389 = smul.addr %s388, 8
      %s390 = scalar_lea.vmem %s2, %s389
      %p391 = pneg %p116
      %p392 = pneg %p113
      %p393 = pneg %p137
      %p394 = pneg %p134
      %p395 = pneg %p158
      %p396 = pneg %p155
      %p397 = pneg %p179
      %p398 = pneg %p176
      %p399 = pneg %p200
      %p400 = pneg %p197
      %p401 = pneg %p221
      %p402 = pneg %p218
      %p403 = pneg %p249
      %p404 = pneg %p246
      %p405 = scmp.lt.s32.totalorder %s25, 1
      %s406 = scalar_select %p405, %s25, 1
      %p407 = scmp.lt.s32.totalorder %s26, 7
      %s408 = scalar_select %p407, %s26, 7
      %s409 = smul.addr %s408, 8
      %s410 = smul.addr %s406, 64
      %s411 = sadd.s32 %s409, %s410
      %s412 = smul.addr %s411, 8
      %s413 = scalar_lea.vmem %s8, %s412
      %p414 = pneg %p277
      %p415 = pneg %p274
      %p416 = scmp.lt.s32.totalorder %s25, 1
      %s417 = scalar_select %p416, %s25, 1
      %p418 = scmp.lt.s32.totalorder %s26, 7
      %s419 = scalar_select %p418, %s26, 7
      %s420 = smul.addr %s417, 8
      %s421 = sadd.s32 %s419, %s420
      %s422 = smul.addr %s421, 2
      %s423 = scalar_lea.vmem %s9, %s422
      %p424 = scmp.lt.s32.totalorder %s25, 1
      %s425 = scalar_select %p424, %s25, 1
      %p426 = scmp.lt.s32.totalorder %s26, 9
      %s427 = scalar_select %p426, %s26, 9
      %s428 = smul.addr %s427, 20
      %s429 = smul.addr %s425, 200
      %s430 = sadd.s32 %s428, %s429
      %s431 = smul.addr %s430, 8
      %s432 = scalar_lea.vmem %s0, %s431
      %s433 = sadd.s32 %s26, 1
      %p434 = scmp.lt.s32.totalorder %s25, 1
      %s435 = scalar_select %p434, %s25, 1
      %p436 = scmp.lt.s32.totalorder %s433, 9
      %s437 = scalar_select %p436, %s433, 9
      %s438 = smul.addr %s437, 20
      %s439 = smul.addr %s435, 200
      %s440 = sadd.s32 %s438, %s439
      %s441 = smul.addr %s440, 8
      %s442 = scalar_lea.vmem %s1, %s441
      %s443 = sadd.s32 %s26, 1
      %s444 = sadd.s32 %s26, 2
      %p445 = scmp.lt.s32.totalorder %s25, 1
      %s446 = scalar_select %p445, %s25, 1
      %p447 = scmp.lt.s32.totalorder %s444, 9
      %s448 = scalar_select %p447, %s444, 9
      %s449 = smul.addr %s448, 20
      %s450 = smul.addr %s446, 200
      %s451 = sadd.s32 %s449, %s450
      %s452 = smul.addr %s451, 8
      %s453 = scalar_lea.vmem %s2, %s452
      %s454 = sadd.s32 %s26, 2
      %p455 = scmp.lt.s32.totalorder %s25, 1
      %s456 = scalar_select %p455, %s25, 1
      %p457 = scmp.lt.s32.totalorder %s26, 7
      %s458 = scalar_select %p457, %s26, 7
      %s459 = smul.addr %s458, 8
      %s460 = smul.addr %s456, 64
      %s461 = sadd.s32 %s459, %s460
      %s462 = smul.addr %s461, 8
      %s463 = scalar_lea.vmem %s8, %s462
      %p464 = scmp.lt.s32.totalorder %s25, 1
      %s465 = scalar_select %p464, %s25, 1
      %p466 = scmp.lt.s32.totalorder %s26, 7
      %s467 = scalar_select %p466, %s26, 7
      %s468 = smul.addr %s465, 8
      %s469 = sadd.s32 %s467, %s468
      %s470 = smul.addr %s469, 2
      %s471 = scalar_lea.vmem %s9, %s470
      %v473 = vld [vmem:[%s432] sm:$0xff]
      %v474 = vld [vmem:[%s432 + $0x8] sm:$0x3]
      %v475 = vld [vmem:[%s432 + $0x10] sm:$0xff]
      %v476 = vld [vmem:[%s432 + $0x18] sm:$0x3]
      %v477 = vld [vmem:[%s432 + $0x20] sm:$0xff]
      %v478 = vld [vmem:[%s432 + $0x28] sm:$0x3]
      %v479 = vld [vmem:[%s432 + $0x30] sm:$0xff]
      %v480 = vld [vmem:[%s432 + $0x38] sm:$0x3]
      %v481 = vld [vmem:[%s432 + $0x40] sm:$0xff]
      %v482 = vld [vmem:[%s432 + $0x48] sm:$0x3]
      %v483 = vld [vmem:[%s432 + $0x50] sm:$0xff]
      %v484 = vld [vmem:[%s432 + $0x58] sm:$0x3]
      %v485 = vld [vmem:[%s432 + $0x60] sm:$0xff]
      %v486 = vld [vmem:[%s432 + $0x68] sm:$0x3]
      %v487 = vld [vmem:[%s432 + $0x70] sm:$0xff]
      %v488 = vld [vmem:[%s432 + $0x78] sm:$0x3]
      %v489 = vld [vmem:[%s432 + $0x80] sm:$0xff]
      %v490 = vld [vmem:[%s432 + $0x88] sm:$0x3]
      %v491 = vld [vmem:[%s432 + $0x90] sm:$0xff]
      %v492 = vld [vmem:[%s432 + $0x98] sm:$0x3]
      %v493 = vpack.c.bf16 %v473, %v473
      %v494 = vpack.c.bf16 %v474, %v474
      %v495 = vpack.c.bf16 %v475, %v475
      %v496 = vpack.c.bf16 %v476, %v476
      %v497 = vpack.c.bf16 %v477, %v477
      %v498 = vpack.c.bf16 %v478, %v478
      %v499 = vpack.c.bf16 %v479, %v479
      %v500 = vpack.c.bf16 %v480, %v480
      %v501 = vpack.c.bf16 %v481, %v481
      %v502 = vpack.c.bf16 %v482, %v482
      %v503 = vpack.c.bf16 %v483, %v483
      %v504 = vpack.c.bf16 %v484, %v484
      %v505 = vpack.c.bf16 %v485, %v485
      %v506 = vpack.c.bf16 %v486, %v486
      %v507 = vpack.c.bf16 %v487, %v487
      %v508 = vpack.c.bf16 %v488, %v488
      %v509 = vpack.c.bf16 %v489, %v489
      %v510 = vpack.c.bf16 %v490, %v490
      %v511 = vpack.c.bf16 %v491, %v491
      %v512 = vpack.c.bf16 %v492, %v492
      %v513 = vld [vmem:[%s3] sm:$0x3]
      %vm514 = vsmask.f32 3328
      %vm515 = vsmask.f32 7440
      %vm516 = vmor %vm514, %vm515
      %v518 = vshrl.u32 %v493, 16
      %v520 = vrot.slane %v518, 4
      %v521 = vshll.u32 %v493, 16
      %v523 = vrot.slane %v521, 5
      %v524 = vor.u32 %v520, %v523
      %v525 = vrot.slane %v524, 4
      %v527 = vshll.u32 %v494, 16
      %v529 = vrot.slane %v527, 5
      %v530 = vsel %vm516, %v525, %v529
      %v532 = vshrl.u32 %v495, 16
      %v534 = vrot.slane %v532, 4
      %v535 = vshll.u32 %v495, 16
      %v537 = vrot.slane %v535, 5
      %v538 = vor.u32 %v534, %v537
      %v539 = vrot.slane %v538, 4
      %v541 = vshll.u32 %v496, 16
      %v543 = vrot.slane %v541, 5
      %v544 = vsel %vm516, %v539, %v543
      %v546 = vshrl.u32 %v497, 16
      %v548 = vrot.slane %v546, 4
      %v549 = vshll.u32 %v497, 16
      %v551 = vrot.slane %v549, 5
      %v552 = vor.u32 %v548, %v551
      %v553 = vrot.slane %v552, 4
      %v555 = vshll.u32 %v498, 16
      %v557 = vrot.slane %v555, 5
      %v558 = vsel %vm516, %v553, %v557
      %v560 = vshrl.u32 %v499, 16
      %v562 = vrot.slane %v560, 4
      %v563 = vshll.u32 %v499, 16
      %v565 = vrot.slane %v563, 5
      %v566 = vor.u32 %v562, %v565
      %v567 = vrot.slane %v566, 4
      %v569 = vshll.u32 %v500, 16
      %v571 = vrot.slane %v569, 5
      %v572 = vsel %vm516, %v567, %v571
      %v574 = vshrl.u32 %v501, 16
      %v576 = vrot.slane %v574, 4
      %v577 = vshll.u32 %v501, 16
      %v579 = vrot.slane %v577, 5
      %v580 = vor.u32 %v576, %v579
      %v581 = vrot.slane %v580, 4
      %v583 = vshll.u32 %v502, 16
      %v585 = vrot.slane %v583, 5
      %v586 = vsel %vm516, %v581, %v585
      %v588 = vshrl.u32 %v503, 16
      %v590 = vrot.slane %v588, 4
      %v591 = vshll.u32 %v503, 16
      %v593 = vrot.slane %v591, 5
      %v594 = vor.u32 %v590, %v593
      %v595 = vrot.slane %v594, 4
      %v597 = vshll.u32 %v504, 16
      %v599 = vrot.slane %v597, 5
      %v600 = vsel %vm516, %v595, %v599
      %v602 = vshrl.u32 %v505, 16
      %v604 = vrot.slane %v602, 4
      %v605 = vshll.u32 %v505, 16
      %v607 = vrot.slane %v605, 5
      %v608 = vor.u32 %v604, %v607
      %v609 = vrot.slane %v608, 4
      %v611 = vshll.u32 %v506, 16
      %v613 = vrot.slane %v611, 5
      %v614 = vsel %vm516, %v609, %v613
      %v616 = vshrl.u32 %v507, 16
      %v618 = vrot.slane %v616, 4
      %v619 = vshll.u32 %v507, 16
      %v621 = vrot.slane %v619, 5
      %v622 = vor.u32 %v618, %v621
      %v623 = vrot.slane %v622, 4
      %v625 = vshll.u32 %v508, 16
      %v627 = vrot.slane %v625, 5
      %v628 = vsel %vm516, %v623, %v627
      %s629 = scalar_lea.vmem %s3, 2
      %v630 = vld [vmem:[%s629] sm:$0x3]
      %v631 = vunpack.c.l.b16 %v530
      %v632 = vunpack.c.l.b16 %v544
      %v633 = vunpack.c.l.b16 %v558
      %v634 = vunpack.c.l.b16 %v572
      %v635 = vunpack.c.l.b16 %v586
      %v636 = vunpack.c.l.b16 %v600
      %v637 = vunpack.c.l.b16 %v614
      %v638 = vunpack.c.l.b16 %v628
      %v639 = vpack.c.b16 %v632, %v631
      %v640 = vpack.c.b16 %v634, %v633
      %v641 = vpack.c.b16 %v636, %v635
      %v642 = vpack.c.b16 %v638, %v637
      %vm643 = vcmask 31744
      %v645 = vsel %vm643, %v639, 0
      %v648 = vsel %vm643, %v640, 0
      %v651 = vsel %vm643, %v641, 0
      %v654 = vsel %vm643, %v642, 0
      %vm656 = vcmask 1041408
      %v658 = vsel %vm656, %v630, 0
      %660 = vmatpush.bf16.msra.mxu0 0
      %661 = vmatpush.bf16.msra.mxu0 0
      %662 = vmatpush.bf16.msra.mxu0 0
      %663 = vmatpush.bf16.msra.mxu0 0
      %664 = vmatpush.bf16.msra.mxu0 0
      %665 = vmatpush.bf16.msra.mxu0 0
      %666 = vmatpush.bf16.msra.mxu0 0
      %667 = vmatpush.bf16.msra.mxu0 %v658
      %668 = vmatmul.bf16.gmra.mxu0 %v645
      %v669 = vpop.f32.mrf.mxu0
      %v670 = vadd.f32 0.0, %v669
      %v671 = vpop.f32.mrf.mxu0
      %v672 = vadd.f32 0.0, %v671
      %673 = vmatmul.bf16.gmra.mxu0 %v648
      %v674 = vpop.f32.mrf.mxu0
      %v675 = vadd.f32 0.0, %v674
      %v676 = vpop.f32.mrf.mxu0
      %v677 = vadd.f32 0.0, %v676
      %678 = vmatmul.bf16.gmra.mxu0 %v651
      %v679 = vpop.f32.mrf.mxu0
      %v680 = vadd.f32 0.0, %v679
      %v681 = vpop.f32.mrf.mxu0
      %v682 = vadd.f32 0.0, %v681
      %683 = vmatmul.bf16.gmra.mxu0 %v654
      %v684 = vpop.f32.mrf.mxu0
      %v685 = vadd.f32 0.0, %v684
      %v686 = vpop.f32.mrf.mxu0
      %v687 = vadd.f32 0.0, %v686
      %688 = vdwg.mxu0
      %v697 = vunpack.c.l.b16 %v493
      %v698 = vunpack.c.l.b16 %v495
      %v699 = vunpack.c.l.b16 %v497
      %v700 = vunpack.c.l.b16 %v499
      %v701 = vunpack.c.l.b16 %v501
      %v702 = vunpack.c.l.b16 %v503
      %v703 = vunpack.c.l.b16 %v505
      %v704 = vunpack.c.l.b16 %v507
      %v705 = vpack.c.b16 %v698, %v697
      %v706 = vpack.c.b16 %v700, %v699
      %v707 = vpack.c.b16 %v702, %v701
      %v708 = vpack.c.b16 %v704, %v703
      %v710 = vsel %vm643, %v705, 0
      %v713 = vsel %vm643, %v706, 0
      %v716 = vsel %vm643, %v707, 0
      %v719 = vsel %vm643, %v708, 0
      %v722 = vsel %vm656, %v513, 0
      %724 = vmatpush.bf16.msra.mxu0 0
      %725 = vmatpush.bf16.msra.mxu0 0
      %726 = vmatpush.bf16.msra.mxu0 0
      %727 = vmatpush.bf16.msra.mxu0 0
      %728 = vmatpush.bf16.msra.mxu0 0
      %729 = vmatpush.bf16.msra.mxu0 0
      %730 = vmatpush.bf16.msra.mxu0 0
      %731 = vmatpush.bf16.msra.mxu0 %v722
      %732 = vmatmul.bf16.gmra.mxu0 %v710
      %v733 = vpop.f32.mrf.mxu0
      %v734 = vadd.f32 %v670, %v733
      %v735 = vpop.f32.mrf.mxu0
      %v736 = vadd.f32 %v672, %v735
      %737 = vmatmul.bf16.gmra.mxu0 %v713
      %v738 = vpop.f32.mrf.mxu0
      %v739 = vadd.f32 %v675, %v738
      %v740 = vpop.f32.mrf.mxu0
      %v741 = vadd.f32 %v677, %v740
      %742 = vmatmul.bf16.gmra.mxu0 %v716
      %v743 = vpop.f32.mrf.mxu0
      %v744 = vadd.f32 %v680, %v743
      %v745 = vpop.f32.mrf.mxu0
      %v746 = vadd.f32 %v682, %v745
      %747 = vmatmul.bf16.gmra.mxu0 %v719
      %v748 = vpop.f32.mrf.mxu0
      %v749 = vadd.f32 %v685, %v748
      %v750 = vpop.f32.mrf.mxu0
      %v751 = vadd.f32 %v687, %v750
      %752 = vdwg.mxu0
      %vm761 = vcmask 1042432
      %vm762 = vcmask 1046532
      %vm763 = vmor %vm761, %vm762
      %v764 = vrot.slane %v493, 5
      %v765 = vrot.slane %v764, 4
      %v766 = vrot.slane %v494, 5
      %v767 = vsel %vm763, %v765, %v766
      %v768 = vrot.slane %v495, 5
      %v769 = vrot.slane %v768, 4
      %v770 = vrot.slane %v496, 5
      %v771 = vsel %vm763, %v769, %v770
      %v772 = vrot.slane %v497, 5
      %v773 = vrot.slane %v772, 4
      %v774 = vrot.slane %v498, 5
      %v775 = vsel %vm763, %v773, %v774
      %v776 = vrot.slane %v499, 5
      %v777 = vrot.slane %v776, 4
      %v778 = vrot.slane %v500, 5
      %v779 = vsel %vm763, %v777, %v778
      %v780 = vrot.slane %v501, 5
      %v781 = vrot.slane %v780, 4
      %v782 = vrot.slane %v502, 5
      %v783 = vsel %vm763, %v781, %v782
      %v784 = vrot.slane %v503, 5
      %v785 = vrot.slane %v784, 4
      %v786 = vrot.slane %v504, 5
      %v787 = vsel %vm763, %v785, %v786
      %v788 = vrot.slane %v505, 5
      %v789 = vrot.slane %v788, 4
      %v790 = vrot.slane %v506, 5
      %v791 = vsel %vm763, %v789, %v790
      %v792 = vrot.slane %v507, 5
      %v793 = vrot.slane %v792, 4
      %v794 = vrot.slane %v508, 5
      %v795 = vsel %vm763, %v793, %v794
      %s796 = scalar_lea.vmem %s3, 4
      %v797 = vld [vmem:[%s796] sm:$0x3]
      %v798 = vunpack.c.l.b16 %v767
      %v799 = vunpack.c.l.b16 %v771
      %v800 = vunpack.c.l.b16 %v775
      %v801 = vunpack.c.l.b16 %v779
      %v802 = vunpack.c.l.b16 %v783
      %v803 = vunpack.c.l.b16 %v787
      %v804 = vunpack.c.l.b16 %v791
      %v805 = vunpack.c.l.b16 %v795
      %v806 = vpack.c.b16 %v799, %v798
      %v807 = vpack.c.b16 %v801, %v800
      %v808 = vpack.c.b16 %v803, %v802
      %v809 = vpack.c.b16 %v805, %v804
      %v811 = vsel %vm643, %v806, 0
      %v814 = vsel %vm643, %v807, 0
      %v817 = vsel %vm643, %v808, 0
      %v820 = vsel %vm643, %v809, 0
      %v823 = vsel %vm656, %v797, 0
      %825 = vmatpush.bf16.msra.mxu0 0
      %826 = vmatpush.bf16.msra.mxu0 0
      %827 = vmatpush.bf16.msra.mxu0 0
      %828 = vmatpush.bf16.msra.mxu0 0
      %829 = vmatpush.bf16.msra.mxu0 0
      %830 = vmatpush.bf16.msra.mxu0 0
      %831 = vmatpush.bf16.msra.mxu0 0
      %832 = vmatpush.bf16.msra.mxu0 %v823
      %833 = vmatmul.bf16.gmra.mxu0 %v811
      %v834 = vpop.f32.mrf.mxu0
      %v835 = vadd.f32 0.0, %v834
      %v836 = vpop.f32.mrf.mxu0
      %v837 = vadd.f32 0.0, %v836
      %838 = vmatmul.bf16.gmra.mxu0 %v814
      %v839 = vpop.f32.mrf.mxu0
      %v840 = vadd.f32 0.0, %v839
      %v841 = vpop.f32.mrf.mxu0
      %v842 = vadd.f32 0.0, %v841
      %843 = vmatmul.bf16.gmra.mxu0 %v817
      %v844 = vpop.f32.mrf.mxu0
      %v845 = vadd.f32 0.0, %v844
      %v846 = vpop.f32.mrf.mxu0
      %v847 = vadd.f32 0.0, %v846
      %848 = vmatmul.bf16.gmra.mxu0 %v820
      %v849 = vpop.f32.mrf.mxu0
      %v850 = vadd.f32 0.0, %v849
      %v851 = vpop.f32.mrf.mxu0
      %v852 = vadd.f32 0.0, %v851
      %853 = vdwg.mxu0
      %v854 = vadd.f32 %v734, %v835
      %v855 = vadd.f32 %v736, %v837
      %v856 = vadd.f32 %v739, %v840
      %v857 = vadd.f32 %v741, %v842
      %v858 = vadd.f32 %v744, %v845
      %v859 = vadd.f32 %v746, %v847
      %v860 = vadd.f32 %v749, %v850
      %v861 = vadd.f32 %v751, %v852
      %s862 = scalar_lea.vmem %s3, 6
      %v863 = vld [vmem:[%s862] sm:$0x3]
      %v865 = vunpack.c.l.b16 %v509
      %v866 = vpack.c.b16 %v699, %v698
      %v867 = vpack.c.b16 %v701, %v700
      %v868 = vpack.c.b16 %v703, %v702
      %v869 = vpack.c.b16 %v865, %v704
      %v871 = vsel %vm643, %v866, 0
      %v874 = vsel %vm643, %v867, 0
      %v877 = vsel %vm643, %v868, 0
      %v880 = vsel %vm643, %v869, 0
      %v883 = vsel %vm656, %v863, 0
      %885 = vmatpush.bf16.msra.mxu0 0
      %886 = vmatpush.bf16.msra.mxu0 0
      %887 = vmatpush.bf16.msra.mxu0 0
      %888 = vmatpush.bf16.msra.mxu0 0
      %889 = vmatpush.bf16.msra.mxu0 0
      %890 = vmatpush.bf16.msra.mxu0 0
      %891 = vmatpush.bf16.msra.mxu0 0
      %892 = vmatpush.bf16.msra.mxu0 %v883
      %893 = vmatmul.bf16.gmra.mxu0 %v871
      %v894 = vpop.f32.mrf.mxu0
      %v895 = vadd.f32 0.0, %v894
      %v896 = vpop.f32.mrf.mxu0
      %v897 = vadd.f32 0.0, %v896
      %898 = vmatmul.bf16.gmra.mxu0 %v874
      %v899 = vpop.f32.mrf.mxu0
      %v900 = vadd.f32 0.0, %v899
      %v901 = vpop.f32.mrf.mxu0
      %v902 = vadd.f32 0.0, %v901
      %903 = vmatmul.bf16.gmra.mxu0 %v877
      %v904 = vpop.f32.mrf.mxu0
      %v905 = vadd.f32 0.0, %v904
      %v906 = vpop.f32.mrf.mxu0
      %v907 = vadd.f32 0.0, %v906
      %908 = vmatmul.bf16.gmra.mxu0 %v880
      %v909 = vpop.f32.mrf.mxu0
      %v910 = vadd.f32 0.0, %v909
      %v911 = vpop.f32.mrf.mxu0
      %v912 = vadd.f32 0.0, %v911
      %913 = vdwg.mxu0
      %v914 = vadd.f32 %v854, %v895
      %v915 = vadd.f32 %v855, %v897
      %v916 = vadd.f32 %v856, %v900
      %v917 = vadd.f32 %v857, %v902
      %v918 = vadd.f32 %v858, %v905
      %v919 = vadd.f32 %v859, %v907
      %v920 = vadd.f32 %v860, %v910
      %v921 = vadd.f32 %v861, %v912
      %v923 = vshrl.u32 %v509, 16
      %v925 = vrot.slane %v923, 4
      %v926 = vshll.u32 %v509, 16
      %v928 = vrot.slane %v926, 5
      %v929 = vor.u32 %v925, %v928
      %v930 = vrot.slane %v929, 4
      %v932 = vshll.u32 %v510, 16
      %v934 = vrot.slane %v932, 5
      %v935 = vsel %vm516, %v930, %v934
      %s936 = scalar_lea.vmem %s3, 8
      %v937 = vld [vmem:[%s936] sm:$0x3]
      %v938 = vunpack.c.l.b16 %v935
      %v939 = vpack.c.b16 %v633, %v632
      %v940 = vpack.c.b16 %v635, %v634
      %v941 = vpack.c.b16 %v637, %v636
      %v942 = vpack.c.b16 %v938, %v638
      %v944 = vsel %vm643, %v939, 0
      %v947 = vsel %vm643, %v940, 0
      %v950 = vsel %vm643, %v941, 0
      %v953 = vsel %vm643, %v942, 0
      %v956 = vsel %vm656, %v937, 0
      %958 = vmatpush.bf16.msra.mxu0 0
      %959 = vmatpush.bf16.msra.mxu0 0
      %960 = vmatpush.bf16.msra.mxu0 0
      %961 = vmatpush.bf16.msra.mxu0 0
      %962 = vmatpush.bf16.msra.mxu0 0
      %963 = vmatpush.bf16.msra.mxu0 0
      %964 = vmatpush.bf16.msra.mxu0 0
      %965 = vmatpush.bf16.msra.mxu0 %v956
      %966 = vmatmul.bf16.gmra.mxu0 %v944
      %v967 = vpop.f32.mrf.mxu0
      %v968 = vadd.f32 0.0, %v967
      %v969 = vpop.f32.mrf.mxu0
      %v970 = vadd.f32 0.0, %v969
      %971 = vmatmul.bf16.gmra.mxu0 %v947
      %v972 = vpop.f32.mrf.mxu0
      %v973 = vadd.f32 0.0, %v972
      %v974 = vpop.f32.mrf.mxu0
      %v975 = vadd.f32 0.0, %v974
      %976 = vmatmul.bf16.gmra.mxu0 %v950
      %v977 = vpop.f32.mrf.mxu0
      %v978 = vadd.f32 0.0, %v977
      %v979 = vpop.f32.mrf.mxu0
      %v980 = vadd.f32 0.0, %v979
      %981 = vmatmul.bf16.gmra.mxu0 %v953
      %v982 = vpop.f32.mrf.mxu0
      %v983 = vadd.f32 0.0, %v982
      %v984 = vpop.f32.mrf.mxu0
      %v985 = vadd.f32 0.0, %v984
      %986 = vdwg.mxu0
      %v987 = vadd.f32 %v914, %v968
      %v988 = vadd.f32 %v915, %v970
      %v989 = vadd.f32 %v916, %v973
      %v990 = vadd.f32 %v917, %v975
      %v991 = vadd.f32 %v918, %v978
      %v992 = vadd.f32 %v919, %v980
      %v993 = vadd.f32 %v920, %v983
      %v994 = vadd.f32 %v921, %v985
      %v996 = vrot.slane %v509, 5
      %v997 = vrot.slane %v996, 4
      %v998 = vrot.slane %v510, 5
      %v999 = vsel %vm763, %v997, %v998
      %s1000 = scalar_lea.vmem %s3, 10
      %v1001 = vld [vmem:[%s1000] sm:$0x3]
      %v1002 = vunpack.c.l.b16 %v999
      %v1003 = vpack.c.b16 %v800, %v799
      %v1004 = vpack.c.b16 %v802, %v801
      %v1005 = vpack.c.b16 %v804, %v803
      %v1006 = vpack.c.b16 %v1002, %v805
      %v1008 = vsel %vm643, %v1003, 0
      %v1011 = vsel %vm643, %v1004, 0
      %v1014 = vsel %vm643, %v1005, 0
      %v1017 = vsel %vm643, %v1006, 0
      %v1020 = vsel %vm656, %v1001, 0
      %1022 = vmatpush.bf16.msra.mxu0 0
      %1023 = vmatpush.bf16.msra.mxu0 0
      %1024 = vmatpush.bf16.msra.mxu0 0
      %1025 = vmatpush.bf16.msra.mxu0 0
      %1026 = vmatpush.bf16.msra.mxu0 0
      %1027 = vmatpush.bf16.msra.mxu0 0
      %1028 = vmatpush.bf16.msra.mxu0 0
      %1029 = vmatpush.bf16.msra.mxu0 %v1020
      %1030 = vmatmul.bf16.gmra.mxu0 %v1008
      %v1031 = vpop.f32.mrf.mxu0
      %v1032 = vadd.f32 0.0, %v1031
      %v1033 = vpop.f32.mrf.mxu0
      %v1034 = vadd.f32 0.0, %v1033
      %1035 = vmatmul.bf16.gmra.mxu0 %v1011
      %v1036 = vpop.f32.mrf.mxu0
      %v1037 = vadd.f32 0.0, %v1036
      %v1038 = vpop.f32.mrf.mxu0
      %v1039 = vadd.f32 0.0, %v1038
      %1040 = vmatmul.bf16.gmra.mxu0 %v1014
      %v1041 = vpop.f32.mrf.mxu0
      %v1042 = vadd.f32 0.0, %v1041
      %v1043 = vpop.f32.mrf.mxu0
      %v1044 = vadd.f32 0.0, %v1043
      %1045 = vmatmul.bf16.gmra.mxu0 %v1017
      %v1046 = vpop.f32.mrf.mxu0
      %v1047 = vadd.f32 0.0, %v1046
      %v1048 = vpop.f32.mrf.mxu0
      %v1049 = vadd.f32 0.0, %v1048
      %1050 = vdwg.mxu0
      %v1051 = vadd.f32 %v987, %v1032
      %v1052 = vadd.f32 %v988, %v1034
      %v1053 = vadd.f32 %v989, %v1037
      %v1054 = vadd.f32 %v990, %v1039
      %v1055 = vadd.f32 %v991, %v1042
      %v1056 = vadd.f32 %v992, %v1044
      %v1057 = vadd.f32 %v993, %v1047
      %v1058 = vadd.f32 %v994, %v1049
      %s1059 = scalar_lea.vmem %s3, 12
      %v1060 = vld [vmem:[%s1059] sm:$0x3]
      %v1062 = vunpack.c.l.b16 %v511
      %v1063 = vpack.c.b16 %v1062, %v865
      %v1065 = vsel %vm643, %v1063, 0
      %v1068 = vsel %vm656, %v1060, 0
      %1070 = vmatpush.bf16.msra.mxu0 0
      %1071 = vmatpush.bf16.msra.mxu0 0
      %1072 = vmatpush.bf16.msra.mxu0 0
      %1073 = vmatpush.bf16.msra.mxu0 0
      %1074 = vmatpush.bf16.msra.mxu0 0
      %1075 = vmatpush.bf16.msra.mxu0 0
      %1076 = vmatpush.bf16.msra.mxu0 0
      %1077 = vmatpush.bf16.msra.mxu0 %v1068
      %1078 = vmatmul.bf16.gmra.mxu0 %v713
      %v1079 = vpop.f32.mrf.mxu0
      %v1080 = vadd.f32 0.0, %v1079
      %v1081 = vpop.f32.mrf.mxu0
      %v1082 = vadd.f32 0.0, %v1081
      %1083 = vmatmul.bf16.gmra.mxu0 %v716
      %v1084 = vpop.f32.mrf.mxu0
      %v1085 = vadd.f32 0.0, %v1084
      %v1086 = vpop.f32.mrf.mxu0
      %v1087 = vadd.f32 0.0, %v1086
      %1088 = vmatmul.bf16.gmra.mxu0 %v719
      %v1089 = vpop.f32.mrf.mxu0
      %v1090 = vadd.f32 0.0, %v1089
      %v1091 = vpop.f32.mrf.mxu0
      %v1092 = vadd.f32 0.0, %v1091
      %1093 = vmatmul.bf16.gmra.mxu0 %v1065
      %v1094 = vpop.f32.mrf.mxu0
      %v1095 = vadd.f32 0.0, %v1094
      %v1096 = vpop.f32.mrf.mxu0
      %v1097 = vadd.f32 0.0, %v1096
      %1098 = vdwg.mxu0
      %v1099 = vadd.f32 %v1051, %v1080
      %v1100 = vadd.f32 %v1052, %v1082
      %v1101 = vadd.f32 %v1053, %v1085
      %v1102 = vadd.f32 %v1054, %v1087
      %v1103 = vadd.f32 %v1055, %v1090
      %v1104 = vadd.f32 %v1056, %v1092
      %v1105 = vadd.f32 %v1057, %v1095
      %v1106 = vadd.f32 %v1058, %v1097
      %v1108 = vshrl.u32 %v511, 16
      %v1110 = vrot.slane %v1108, 4
      %v1111 = vshll.u32 %v511, 16
      %v1113 = vrot.slane %v1111, 5
      %v1114 = vor.u32 %v1110, %v1113
      %v1115 = vrot.slane %v1114, 4
      %v1117 = vshll.u32 %v512, 16
      %v1119 = vrot.slane %v1117, 5
      %v1120 = vsel %vm516, %v1115, %v1119
      %s1121 = scalar_lea.vmem %s3, 14
      %v1122 = vld [vmem:[%s1121] sm:$0x3]
      %v1123 = vunpack.c.l.b16 %v1120
      %v1124 = vpack.c.b16 %v1123, %v938
      %v1126 = vsel %vm643, %v1124, 0
      %v1129 = vsel %vm656, %v1122, 0
      %1131 = vmatpush.bf16.msra.mxu0 0
      %1132 = vmatpush.bf16.msra.mxu0 0
      %1133 = vmatpush.bf16.msra.mxu0 0
      %1134 = vmatpush.bf16.msra.mxu0 0
      %1135 = vmatpush.bf16.msra.mxu0 0
      %1136 = vmatpush.bf16.msra.mxu0 0
      %1137 = vmatpush.bf16.msra.mxu0 0
      %1138 = vmatpush.bf16.msra.mxu0 %v1129
      %1139 = vmatmul.bf16.gmra.mxu0 %v648
      %v1140 = vpop.f32.mrf.mxu0
      %v1141 = vadd.f32 0.0, %v1140
      %v1142 = vpop.f32.mrf.mxu0
      %v1143 = vadd.f32 0.0, %v1142
      %1144 = vmatmul.bf16.gmra.mxu0 %v651
      %v1145 = vpop.f32.mrf.mxu0
      %v1146 = vadd.f32 0.0, %v1145
      %v1147 = vpop.f32.mrf.mxu0
      %v1148 = vadd.f32 0.0, %v1147
      %1149 = vmatmul.bf16.gmra.mxu0 %v654
      %v1150 = vpop.f32.mrf.mxu0
      %v1151 = vadd.f32 0.0, %v1150
      %v1152 = vpop.f32.mrf.mxu0
      %v1153 = vadd.f32 0.0, %v1152
      %1154 = vmatmul.bf16.gmra.mxu0 %v1126
      %v1155 = vpop.f32.mrf.mxu0
      %v1156 = vadd.f32 0.0, %v1155
      %v1157 = vpop.f32.mrf.mxu0
      %v1158 = vadd.f32 0.0, %v1157
      %1159 = vdwg.mxu0
      %v1160 = vadd.f32 %v1099, %v1141
      %v1161 = vadd.f32 %v1100, %v1143
      %v1162 = vadd.f32 %v1101, %v1146
      %v1163 = vadd.f32 %v1102, %v1148
      %v1164 = vadd.f32 %v1103, %v1151
      %v1165 = vadd.f32 %v1104, %v1153
      %v1166 = vadd.f32 %v1105, %v1156
      %v1167 = vadd.f32 %v1106, %v1158
      %v1169 = vrot.slane %v511, 5
      %v1170 = vrot.slane %v1169, 4
      %v1171 = vrot.slane %v512, 5
      %v1172 = vsel %vm763, %v1170, %v1171
      %s1173 = scalar_lea.vmem %s3, 16
      %v1174 = vld [vmem:[%s1173] sm:$0x3]
      %v1175 = vunpack.c.l.b16 %v1172
      %v1176 = vpack.c.b16 %v1175, %v1002
      %v1178 = vsel %vm643, %v1176, 0
      %v1181 = vsel %vm656, %v1174, 0
      %1183 = vmatpush.bf16.msra.mxu0 0
      %1184 = vmatpush.bf16.msra.mxu0 0
      %1185 = vmatpush.bf16.msra.mxu0 0
      %1186 = vmatpush.bf16.msra.mxu0 0
      %1187 = vmatpush.bf16.msra.mxu0 0
      %1188 = vmatpush.bf16.msra.mxu0 0
      %1189 = vmatpush.bf16.msra.mxu0 0
      %1190 = vmatpush.bf16.msra.mxu0 %v1181
      %1191 = vmatmul.bf16.gmra.mxu0 %v814
      %v1192 = vpop.f32.mrf.mxu0
      %v1193 = vadd.f32 0.0, %v1192
      %v1194 = vpop.f32.mrf.mxu0
      %v1195 = vadd.f32 0.0, %v1194
      %1196 = vmatmul.bf16.gmra.mxu0 %v817
      %v1197 = vpop.f32.mrf.mxu0
      %v1198 = vadd.f32 0.0, %v1197
      %v1199 = vpop.f32.mrf.mxu0
      %v1200 = vadd.f32 0.0, %v1199
      %1201 = vmatmul.bf16.gmra.mxu0 %v820
      %v1202 = vpop.f32.mrf.mxu0
      %v1203 = vadd.f32 0.0, %v1202
      %v1204 = vpop.f32.mrf.mxu0
      %v1205 = vadd.f32 0.0, %v1204
      %1206 = vmatmul.bf16.gmra.mxu0 %v1178
      %v1207 = vpop.f32.mrf.mxu0
      %v1208 = vadd.f32 0.0, %v1207
      %v1209 = vpop.f32.mrf.mxu0
      %v1210 = vadd.f32 0.0, %v1209
      %1211 = vdwg.mxu0
      %v1212 = vadd.f32 %v1160, %v1193
      %v1213 = vadd.f32 %v1161, %v1195
      %v1214 = vadd.f32 %v1162, %v1198
      %v1215 = vadd.f32 %v1163, %v1200
      %v1216 = vadd.f32 %v1164, %v1203
      %v1217 = vadd.f32 %v1165, %v1205
      %v1218 = vadd.f32 %v1166, %v1208
      %v1219 = vadd.f32 %v1167, %v1210
      %v1220 = vld [vmem:[%s442] sm:$0xff]
      %v1221 = vld [vmem:[%s442 + $0x8] sm:$0x3]
      %v1222 = vld [vmem:[%s442 + $0x10] sm:$0xff]
      %v1223 = vld [vmem:[%s442 + $0x18] sm:$0x3]
      %v1224 = vld [vmem:[%s442 + $0x20] sm:$0xff]
      %v1225 = vld [vmem:[%s442 + $0x28] sm:$0x3]
      %v1226 = vld [vmem:[%s442 + $0x30] sm:$0xff]
      %v1227 = vld [vmem:[%s442 + $0x38] sm:$0x3]
      %v1228 = vld [vmem:[%s442 + $0x40] sm:$0xff]
      %v1229 = vld [vmem:[%s442 + $0x48] sm:$0x3]
      %v1230 = vld [vmem:[%s442 + $0x50] sm:$0xff]
      %v1231 = vld [vmem:[%s442 + $0x58] sm:$0x3]
      %v1232 = vld [vmem:[%s442 + $0x60] sm:$0xff]
      %v1233 = vld [vmem:[%s442 + $0x68] sm:$0x3]
      %v1234 = vld [vmem:[%s442 + $0x70] sm:$0xff]
      %v1235 = vld [vmem:[%s442 + $0x78] sm:$0x3]
      %v1236 = vld [vmem:[%s442 + $0x80] sm:$0xff]
      %v1237 = vld [vmem:[%s442 + $0x88] sm:$0x3]
      %v1238 = vld [vmem:[%s442 + $0x90] sm:$0xff]
      %v1239 = vld [vmem:[%s442 + $0x98] sm:$0x3]
      %v1240 = vpack.c.bf16 %v1220, %v1220
      %v1241 = vpack.c.bf16 %v1221, %v1221
      %v1242 = vpack.c.bf16 %v1222, %v1222
      %v1243 = vpack.c.bf16 %v1223, %v1223
      %v1244 = vpack.c.bf16 %v1224, %v1224
      %v1245 = vpack.c.bf16 %v1225, %v1225
      %v1246 = vpack.c.bf16 %v1226, %v1226
      %v1247 = vpack.c.bf16 %v1227, %v1227
      %v1248 = vpack.c.bf16 %v1228, %v1228
      %v1249 = vpack.c.bf16 %v1229, %v1229
      %v1250 = vpack.c.bf16 %v1230, %v1230
      %v1251 = vpack.c.bf16 %v1231, %v1231
      %v1252 = vpack.c.bf16 %v1232, %v1232
      %v1253 = vpack.c.bf16 %v1233, %v1233
      %v1254 = vpack.c.bf16 %v1234, %v1234
      %v1255 = vpack.c.bf16 %v1235, %v1235
      %v1256 = vpack.c.bf16 %v1236, %v1236
      %v1257 = vpack.c.bf16 %v1237, %v1237
      %v1258 = vpack.c.bf16 %v1238, %v1238
      %v1259 = vpack.c.bf16 %v1239, %v1239
      %s1260 = scalar_lea.vmem %s3, 18
      %v1261 = vld [vmem:[%s1260] sm:$0x3]
      %v1270 = vunpack.c.l.b16 %v1240
      %v1271 = vunpack.c.l.b16 %v1242
      %v1272 = vunpack.c.l.b16 %v1244
      %v1273 = vunpack.c.l.b16 %v1246
      %v1274 = vunpack.c.l.b16 %v1248
      %v1275 = vunpack.c.l.b16 %v1250
      %v1276 = vunpack.c.l.b16 %v1252
      %v1277 = vunpack.c.l.b16 %v1254
      %v1278 = vpack.c.b16 %v1271, %v1270
      %v1279 = vpack.c.b16 %v1273, %v1272
      %v1280 = vpack.c.b16 %v1275, %v1274
      %v1281 = vpack.c.b16 %v1277, %v1276
      %v1283 = vsel %vm643, %v1278, 0
      %v1286 = vsel %vm643, %v1279, 0
      %v1289 = vsel %vm643, %v1280, 0
      %v1292 = vsel %vm643, %v1281, 0
      %v1295 = vsel %vm656, %v1261, 0
      %1297 = vmatpush.bf16.msra.mxu0 0
      %1298 = vmatpush.bf16.msra.mxu0 0
      %1299 = vmatpush.bf16.msra.mxu0 0
      %1300 = vmatpush.bf16.msra.mxu0 0
      %1301 = vmatpush.bf16.msra.mxu0 0
      %1302 = vmatpush.bf16.msra.mxu0 0
      %1303 = vmatpush.bf16.msra.mxu0 0
      %1304 = vmatpush.bf16.msra.mxu0 %v1295
      %1305 = vmatmul.bf16.gmra.mxu0 %v1283
      %v1306 = vpop.f32.mrf.mxu0
      %v1307 = vadd.f32 0.0, %v1306
      %v1308 = vpop.f32.mrf.mxu0
      %v1309 = vadd.f32 0.0, %v1308
      %1310 = vmatmul.bf16.gmra.mxu0 %v1286
      %v1311 = vpop.f32.mrf.mxu0
      %v1312 = vadd.f32 0.0, %v1311
      %v1313 = vpop.f32.mrf.mxu0
      %v1314 = vadd.f32 0.0, %v1313
      %1315 = vmatmul.bf16.gmra.mxu0 %v1289
      %v1316 = vpop.f32.mrf.mxu0
      %v1317 = vadd.f32 0.0, %v1316
      %v1318 = vpop.f32.mrf.mxu0
      %v1319 = vadd.f32 0.0, %v1318
      %1320 = vmatmul.bf16.gmra.mxu0 %v1292
      %v1321 = vpop.f32.mrf.mxu0
      %v1322 = vadd.f32 0.0, %v1321
      %v1323 = vpop.f32.mrf.mxu0
      %v1324 = vadd.f32 0.0, %v1323
      %1325 = vdwg.mxu0
      %v1326 = vadd.f32 %v1212, %v1307
      %v1327 = vadd.f32 %v1213, %v1309
      %v1328 = vadd.f32 %v1214, %v1312
      %v1329 = vadd.f32 %v1215, %v1314
      %v1330 = vadd.f32 %v1216, %v1317
      %v1331 = vadd.f32 %v1217, %v1319
      %v1332 = vadd.f32 %v1218, %v1322
      %v1333 = vadd.f32 %v1219, %v1324
      %v1335 = vshrl.u32 %v1240, 16
      %v1337 = vrot.slane %v1335, 4
      %v1338 = vshll.u32 %v1240, 16
      %v1340 = vrot.slane %v1338, 5
      %v1341 = vor.u32 %v1337, %v1340
      %v1342 = vrot.slane %v1341, 4
      %v1344 = vshll.u32 %v1241, 16
      %v1346 = vrot.slane %v1344, 5
      %v1347 = vsel %vm516, %v1342, %v1346
      %v1349 = vshrl.u32 %v1242, 16
      %v1351 = vrot.slane %v1349, 4
      %v1352 = vshll.u32 %v1242, 16
      %v1354 = vrot.slane %v1352, 5
      %v1355 = vor.u32 %v1351, %v1354
      %v1356 = vrot.slane %v1355, 4
      %v1358 = vshll.u32 %v1243, 16
      %v1360 = vrot.slane %v1358, 5
      %v1361 = vsel %vm516, %v1356, %v1360
      %v1363 = vshrl.u32 %v1244, 16
      %v1365 = vrot.slane %v1363, 4
      %v1366 = vshll.u32 %v1244, 16
      %v1368 = vrot.slane %v1366, 5
      %v1369 = vor.u32 %v1365, %v1368
      %v1370 = vrot.slane %v1369, 4
      %v1372 = vshll.u32 %v1245, 16
      %v1374 = vrot.slane %v1372, 5
      %v1375 = vsel %vm516, %v1370, %v1374
      %v1377 = vshrl.u32 %v1246, 16
      %v1379 = vrot.slane %v1377, 4
      %v1380 = vshll.u32 %v1246, 16
      %v1382 = vrot.slane %v1380, 5
      %v1383 = vor.u32 %v1379, %v1382
      %v1384 = vrot.slane %v1383, 4
      %v1386 = vshll.u32 %v1247, 16
      %v1388 = vrot.slane %v1386, 5
      %v1389 = vsel %vm516, %v1384, %v1388
      %v1391 = vshrl.u32 %v1248, 16
      %v1393 = vrot.slane %v1391, 4
      %v1394 = vshll.u32 %v1248, 16
      %v1396 = vrot.slane %v1394, 5
      %v1397 = vor.u32 %v1393, %v1396
      %v1398 = vrot.slane %v1397, 4
      %v1400 = vshll.u32 %v1249, 16
      %v1402 = vrot.slane %v1400, 5
      %v1403 = vsel %vm516, %v1398, %v1402
      %v1405 = vshrl.u32 %v1250, 16
      %v1407 = vrot.slane %v1405, 4
      %v1408 = vshll.u32 %v1250, 16
      %v1410 = vrot.slane %v1408, 5
      %v1411 = vor.u32 %v1407, %v1410
      %v1412 = vrot.slane %v1411, 4
      %v1414 = vshll.u32 %v1251, 16
      %v1416 = vrot.slane %v1414, 5
      %v1417 = vsel %vm516, %v1412, %v1416
      %v1419 = vshrl.u32 %v1252, 16
      %v1421 = vrot.slane %v1419, 4
      %v1422 = vshll.u32 %v1252, 16
      %v1424 = vrot.slane %v1422, 5
      %v1425 = vor.u32 %v1421, %v1424
      %v1426 = vrot.slane %v1425, 4
      %v1428 = vshll.u32 %v1253, 16
      %v1430 = vrot.slane %v1428, 5
      %v1431 = vsel %vm516, %v1426, %v1430
      %v1433 = vshrl.u32 %v1254, 16
      %v1435 = vrot.slane %v1433, 4
      %v1436 = vshll.u32 %v1254, 16
      %v1438 = vrot.slane %v1436, 5
      %v1439 = vor.u32 %v1435, %v1438
      %v1440 = vrot.slane %v1439, 4
      %v1442 = vshll.u32 %v1255, 16
      %v1444 = vrot.slane %v1442, 5
      %v1445 = vsel %vm516, %v1440, %v1444
      %s1446 = scalar_lea.vmem %s3, 20
      %v1447 = vld [vmem:[%s1446] sm:$0x3]
      %v1448 = vunpack.c.l.b16 %v1347
      %v1449 = vunpack.c.l.b16 %v1361
      %v1450 = vunpack.c.l.b16 %v1375
      %v1451 = vunpack.c.l.b16 %v1389
      %v1452 = vunpack.c.l.b16 %v1403
      %v1453 = vunpack.c.l.b16 %v1417
      %v1454 = vunpack.c.l.b16 %v1431
      %v1455 = vunpack.c.l.b16 %v1445
      %v1456 = vpack.c.b16 %v1449, %v1448
      %v1457 = vpack.c.b16 %v1451, %v1450
      %v1458 = vpack.c.b16 %v1453, %v1452
      %v1459 = vpack.c.b16 %v1455, %v1454
      %v1461 = vsel %vm643, %v1456, 0
      %v1464 = vsel %vm643, %v1457, 0
      %v1467 = vsel %vm643, %v1458, 0
      %v1470 = vsel %vm643, %v1459, 0
      %v1473 = vsel %vm656, %v1447, 0
      %1475 = vmatpush.bf16.msra.mxu0 0
      %1476 = vmatpush.bf16.msra.mxu0 0
      %1477 = vmatpush.bf16.msra.mxu0 0
      %1478 = vmatpush.bf16.msra.mxu0 0
      %1479 = vmatpush.bf16.msra.mxu0 0
      %1480 = vmatpush.bf16.msra.mxu0 0
      %1481 = vmatpush.bf16.msra.mxu0 0
      %1482 = vmatpush.bf16.msra.mxu0 %v1473
      %1483 = vmatmul.bf16.gmra.mxu0 %v1461
      %v1484 = vpop.f32.mrf.mxu0
      %v1485 = vadd.f32 0.0, %v1484
      %v1486 = vpop.f32.mrf.mxu0
      %v1487 = vadd.f32 0.0, %v1486
      %1488 = vmatmul.bf16.gmra.mxu0 %v1464
      %v1489 = vpop.f32.mrf.mxu0
      %v1490 = vadd.f32 0.0, %v1489
      %v1491 = vpop.f32.mrf.mxu0
      %v1492 = vadd.f32 0.0, %v1491
      %1493 = vmatmul.bf16.gmra.mxu0 %v1467
      %v1494 = vpop.f32.mrf.mxu0
      %v1495 = vadd.f32 0.0, %v1494
      %v1496 = vpop.f32.mrf.mxu0
      %v1497 = vadd.f32 0.0, %v1496
      %1498 = vmatmul.bf16.gmra.mxu0 %v1470
      %v1499 = vpop.f32.mrf.mxu0
      %v1500 = vadd.f32 0.0, %v1499
      %v1501 = vpop.f32.mrf.mxu0
      %v1502 = vadd.f32 0.0, %v1501
      %1503 = vdwg.mxu0
      %v1504 = vadd.f32 %v1326, %v1485
      %v1505 = vadd.f32 %v1327, %v1487
      %v1506 = vadd.f32 %v1328, %v1490
      %v1507 = vadd.f32 %v1329, %v1492
      %v1508 = vadd.f32 %v1330, %v1495
      %v1509 = vadd.f32 %v1331, %v1497
      %v1510 = vadd.f32 %v1332, %v1500
      %v1511 = vadd.f32 %v1333, %v1502
      %v1520 = vrot.slane %v1240, 5
      %v1521 = vrot.slane %v1520, 4
      %v1522 = vrot.slane %v1241, 5
      %v1523 = vsel %vm763, %v1521, %v1522
      %v1524 = vrot.slane %v1242, 5
      %v1525 = vrot.slane %v1524, 4
      %v1526 = vrot.slane %v1243, 5
      %v1527 = vsel %vm763, %v1525, %v1526
      %v1528 = vrot.slane %v1244, 5
      %v1529 = vrot.slane %v1528, 4
      %v1530 = vrot.slane %v1245, 5
      %v1531 = vsel %vm763, %v1529, %v1530
      %v1532 = vrot.slane %v1246, 5
      %v1533 = vrot.slane %v1532, 4
      %v1534 = vrot.slane %v1247, 5
      %v1535 = vsel %vm763, %v1533, %v1534
      %v1536 = vrot.slane %v1248, 5
      %v1537 = vrot.slane %v1536, 4
      %v1538 = vrot.slane %v1249, 5
      %v1539 = vsel %vm763, %v1537, %v1538
      %v1540 = vrot.slane %v1250, 5
      %v1541 = vrot.slane %v1540, 4
      %v1542 = vrot.slane %v1251, 5
      %v1543 = vsel %vm763, %v1541, %v1542
      %v1544 = vrot.slane %v1252, 5
      %v1545 = vrot.slane %v1544, 4
      %v1546 = vrot.slane %v1253, 5
      %v1547 = vsel %vm763, %v1545, %v1546
      %v1548 = vrot.slane %v1254, 5
      %v1549 = vrot.slane %v1548, 4
      %v1550 = vrot.slane %v1255, 5
      %v1551 = vsel %vm763, %v1549, %v1550
      %s1552 = scalar_lea.vmem %s3, 22
      %v1553 = vld [vmem:[%s1552] sm:$0x3]
      %v1554 = vunpack.c.l.b16 %v1523
      %v1555 = vunpack.c.l.b16 %v1527
      %v1556 = vunpack.c.l.b16 %v1531
      %v1557 = vunpack.c.l.b16 %v1535
      %v1558 = vunpack.c.l.b16 %v1539
      %v1559 = vunpack.c.l.b16 %v1543
      %v1560 = vunpack.c.l.b16 %v1547
      %v1561 = vunpack.c.l.b16 %v1551
      %v1562 = vpack.c.b16 %v1555, %v1554
      %v1563 = vpack.c.b16 %v1557, %v1556
      %v1564 = vpack.c.b16 %v1559, %v1558
      %v1565 = vpack.c.b16 %v1561, %v1560
      %v1567 = vsel %vm643, %v1562, 0
      %v1570 = vsel %vm643, %v1563, 0
      %v1573 = vsel %vm643, %v1564, 0
      %v1576 = vsel %vm643, %v1565, 0
      %v1579 = vsel %vm656, %v1553, 0
      %1581 = vmatpush.bf16.msra.mxu0 0
      %1582 = vmatpush.bf16.msra.mxu0 0
      %1583 = vmatpush.bf16.msra.mxu0 0
      %1584 = vmatpush.bf16.msra.mxu0 0
      %1585 = vmatpush.bf16.msra.mxu0 0
      %1586 = vmatpush.bf16.msra.mxu0 0
      %1587 = vmatpush.bf16.msra.mxu0 0
      %1588 = vmatpush.bf16.msra.mxu0 %v1579
      %1589 = vmatmul.bf16.gmra.mxu0 %v1567
      %v1590 = vpop.f32.mrf.mxu0
      %v1591 = vadd.f32 0.0, %v1590
      %v1592 = vpop.f32.mrf.mxu0
      %v1593 = vadd.f32 0.0, %v1592
      %1594 = vmatmul.bf16.gmra.mxu0 %v1570
      %v1595 = vpop.f32.mrf.mxu0
      %v1596 = vadd.f32 0.0, %v1595
      %v1597 = vpop.f32.mrf.mxu0
      %v1598 = vadd.f32 0.0, %v1597
      %1599 = vmatmul.bf16.gmra.mxu0 %v1573
      %v1600 = vpop.f32.mrf.mxu0
      %v1601 = vadd.f32 0.0, %v1600
      %v1602 = vpop.f32.mrf.mxu0
      %v1603 = vadd.f32 0.0, %v1602
      %1604 = vmatmul.bf16.gmra.mxu0 %v1576
      %v1605 = vpop.f32.mrf.mxu0
      %v1606 = vadd.f32 0.0, %v1605
      %v1607 = vpop.f32.mrf.mxu0
      %v1608 = vadd.f32 0.0, %v1607
      %1609 = vdwg.mxu0
      %v1610 = vadd.f32 %v1504, %v1591
      %v1611 = vadd.f32 %v1505, %v1593
      %v1612 = vadd.f32 %v1506, %v1596
      %v1613 = vadd.f32 %v1507, %v1598
      %v1614 = vadd.f32 %v1508, %v1601
      %v1615 = vadd.f32 %v1509, %v1603
      %v1616 = vadd.f32 %v1510, %v1606
      %v1617 = vadd.f32 %v1511, %v1608
      %s1618 = scalar_lea.vmem %s3, 24
      %v1619 = vld [vmem:[%s1618] sm:$0x3]
      %v1621 = vunpack.c.l.b16 %v1256
      %v1622 = vpack.c.b16 %v1272, %v1271
      %v1623 = vpack.c.b16 %v1274, %v1273
      %v1624 = vpack.c.b16 %v1276, %v1275
      %v1625 = vpack.c.b16 %v1621, %v1277
      %v1627 = vsel %vm643, %v1622, 0
      %v1630 = vsel %vm643, %v1623, 0
      %v1633 = vsel %vm643, %v1624, 0
      %v1636 = vsel %vm643, %v1625, 0
      %v1639 = vsel %vm656, %v1619, 0
      %1641 = vmatpush.bf16.msra.mxu0 0
      %1642 = vmatpush.bf16.msra.mxu0 0
      %1643 = vmatpush.bf16.msra.mxu0 0
      %1644 = vmatpush.bf16.msra.mxu0 0
      %1645 = vmatpush.bf16.msra.mxu0 0
      %1646 = vmatpush.bf16.msra.mxu0 0
      %1647 = vmatpush.bf16.msra.mxu0 0
      %1648 = vmatpush.bf16.msra.mxu0 %v1639
      %1649 = vmatmul.bf16.gmra.mxu0 %v1627
      %v1650 = vpop.f32.mrf.mxu0
      %v1651 = vadd.f32 0.0, %v1650
      %v1652 = vpop.f32.mrf.mxu0
      %v1653 = vadd.f32 0.0, %v1652
      %1654 = vmatmul.bf16.gmra.mxu0 %v1630
      %v1655 = vpop.f32.mrf.mxu0
      %v1656 = vadd.f32 0.0, %v1655
      %v1657 = vpop.f32.mrf.mxu0
      %v1658 = vadd.f32 0.0, %v1657
      %1659 = vmatmul.bf16.gmra.mxu0 %v1633
      %v1660 = vpop.f32.mrf.mxu0
      %v1661 = vadd.f32 0.0, %v1660
      %v1662 = vpop.f32.mrf.mxu0
      %v1663 = vadd.f32 0.0, %v1662
      %1664 = vmatmul.bf16.gmra.mxu0 %v1636
      %v1665 = vpop.f32.mrf.mxu0
      %v1666 = vadd.f32 0.0, %v1665
      %v1667 = vpop.f32.mrf.mxu0
      %v1668 = vadd.f32 0.0, %v1667
      %1669 = vdwg.mxu0
      %v1670 = vadd.f32 %v1610, %v1651
      %v1671 = vadd.f32 %v1611, %v1653
      %v1672 = vadd.f32 %v1612, %v1656
      %v1673 = vadd.f32 %v1613, %v1658
      %v1674 = vadd.f32 %v1614, %v1661
      %v1675 = vadd.f32 %v1615, %v1663
      %v1676 = vadd.f32 %v1616, %v1666
      %v1677 = vadd.f32 %v1617, %v1668
      %v1679 = vshrl.u32 %v1256, 16
      %v1681 = vrot.slane %v1679, 4
      %v1682 = vshll.u32 %v1256, 16
      %v1684 = vrot.slane %v1682, 5
      %v1685 = vor.u32 %v1681, %v1684
      %v1686 = vrot.slane %v1685, 4
      %v1688 = vshll.u32 %v1257, 16
      %v1690 = vrot.slane %v1688, 5
      %v1691 = vsel %vm516, %v1686, %v1690
      %s1692 = scalar_lea.vmem %s3, 26
      %v1693 = vld [vmem:[%s1692] sm:$0x3]
      %v1694 = vunpack.c.l.b16 %v1691
      %v1695 = vpack.c.b16 %v1450, %v1449
      %v1696 = vpack.c.b16 %v1452, %v1451
      %v1697 = vpack.c.b16 %v1454, %v1453
      %v1698 = vpack.c.b16 %v1694, %v1455
      %v1700 = vsel %vm643, %v1695, 0
      %v1703 = vsel %vm643, %v1696, 0
      %v1706 = vsel %vm643, %v1697, 0
      %v1709 = vsel %vm643, %v1698, 0
      %v1712 = vsel %vm656, %v1693, 0
      %1714 = vmatpush.bf16.msra.mxu0 0
      %1715 = vmatpush.bf16.msra.mxu0 0
      %1716 = vmatpush.bf16.msra.mxu0 0
      %1717 = vmatpush.bf16.msra.mxu0 0
      %1718 = vmatpush.bf16.msra.mxu0 0
      %1719 = vmatpush.bf16.msra.mxu0 0
      %1720 = vmatpush.bf16.msra.mxu0 0
      %1721 = vmatpush.bf16.msra.mxu0 %v1712
      %1722 = vmatmul.bf16.gmra.mxu0 %v1700
      %v1723 = vpop.f32.mrf.mxu0
      %v1724 = vadd.f32 0.0, %v1723
      %v1725 = vpop.f32.mrf.mxu0
      %v1726 = vadd.f32 0.0, %v1725
      %1727 = vmatmul.bf16.gmra.mxu0 %v1703
      %v1728 = vpop.f32.mrf.mxu0
      %v1729 = vadd.f32 0.0, %v1728
      %v1730 = vpop.f32.mrf.mxu0
      %v1731 = vadd.f32 0.0, %v1730
      %1732 = vmatmul.bf16.gmra.mxu0 %v1706
      %v1733 = vpop.f32.mrf.mxu0
      %v1734 = vadd.f32 0.0, %v1733
      %v1735 = vpop.f32.mrf.mxu0
      %v1736 = vadd.f32 0.0, %v1735
      %1737 = vmatmul.bf16.gmra.mxu0 %v1709
      %v1738 = vpop.f32.mrf.mxu0
      %v1739 = vadd.f32 0.0, %v1738
      %v1740 = vpop.f32.mrf.mxu0
      %v1741 = vadd.f32 0.0, %v1740
      %1742 = vdwg.mxu0
      %v1743 = vadd.f32 %v1670, %v1724
      %v1744 = vadd.f32 %v1671, %v1726
      %v1745 = vadd.f32 %v1672, %v1729
      %v1746 = vadd.f32 %v1673, %v1731
      %v1747 = vadd.f32 %v1674, %v1734
      %v1748 = vadd.f32 %v1675, %v1736
      %v1749 = vadd.f32 %v1676, %v1739
      %v1750 = vadd.f32 %v1677, %v1741
      %v1752 = vrot.slane %v1256, 5
      %v1753 = vrot.slane %v1752, 4
      %v1754 = vrot.slane %v1257, 5
      %v1755 = vsel %vm763, %v1753, %v1754
      %s1756 = scalar_lea.vmem %s3, 28
      %v1757 = vld [vmem:[%s1756] sm:$0x3]
      %v1758 = vunpack.c.l.b16 %v1755
      %v1759 = vpack.c.b16 %v1556, %v1555
      %v1760 = vpack.c.b16 %v1558, %v1557
      %v1761 = vpack.c.b16 %v1560, %v1559
      %v1762 = vpack.c.b16 %v1758, %v1561
      %v1764 = vsel %vm643, %v1759, 0
      %v1767 = vsel %vm643, %v1760, 0
      %v1770 = vsel %vm643, %v1761, 0
      %v1773 = vsel %vm643, %v1762, 0
      %v1776 = vsel %vm656, %v1757, 0
      %1778 = vmatpush.bf16.msra.mxu0 0
      %1779 = vmatpush.bf16.msra.mxu0 0
      %1780 = vmatpush.bf16.msra.mxu0 0
      %1781 = vmatpush.bf16.msra.mxu0 0
      %1782 = vmatpush.bf16.msra.mxu0 0
      %1783 = vmatpush.bf16.msra.mxu0 0
      %1784 = vmatpush.bf16.msra.mxu0 0
      %1785 = vmatpush.bf16.msra.mxu0 %v1776
      %1786 = vmatmul.bf16.gmra.mxu0 %v1764
      %v1787 = vpop.f32.mrf.mxu0
      %v1788 = vadd.f32 0.0, %v1787
      %v1789 = vpop.f32.mrf.mxu0
      %v1790 = vadd.f32 0.0, %v1789
      %1791 = vmatmul.bf16.gmra.mxu0 %v1767
      %v1792 = vpop.f32.mrf.mxu0
      %v1793 = vadd.f32 0.0, %v1792
      %v1794 = vpop.f32.mrf.mxu0
      %v1795 = vadd.f32 0.0, %v1794
      %1796 = vmatmul.bf16.gmra.mxu0 %v1770
      %v1797 = vpop.f32.mrf.mxu0
      %v1798 = vadd.f32 0.0, %v1797
      %v1799 = vpop.f32.mrf.mxu0
      %v1800 = vadd.f32 0.0, %v1799
      %1801 = vmatmul.bf16.gmra.mxu0 %v1773
      %v1802 = vpop.f32.mrf.mxu0
      %v1803 = vadd.f32 0.0, %v1802
      %v1804 = vpop.f32.mrf.mxu0
      %v1805 = vadd.f32 0.0, %v1804
      %1806 = vdwg.mxu0
      %v1807 = vadd.f32 %v1743, %v1788
      %v1808 = vadd.f32 %v1744, %v1790
      %v1809 = vadd.f32 %v1745, %v1793
      %v1810 = vadd.f32 %v1746, %v1795
      %v1811 = vadd.f32 %v1747, %v1798
      %v1812 = vadd.f32 %v1748, %v1800
      %v1813 = vadd.f32 %v1749, %v1803
      %v1814 = vadd.f32 %v1750, %v1805
      %s1815 = scalar_lea.vmem %s3, 30
      %v1816 = vld [vmem:[%s1815] sm:$0x3]
      %v1818 = vunpack.c.l.b16 %v1258
      %v1819 = vpack.c.b16 %v1818, %v1621
      %v1821 = vsel %vm643, %v1819, 0
      %v1824 = vsel %vm656, %v1816, 0
      %1826 = vmatpush.bf16.msra.mxu0 0
      %1827 = vmatpush.bf16.msra.mxu0 0
      %1828 = vmatpush.bf16.msra.mxu0 0
      %1829 = vmatpush.bf16.msra.mxu0 0
      %1830 = vmatpush.bf16.msra.mxu0 0
      %1831 = vmatpush.bf16.msra.mxu0 0
      %1832 = vmatpush.bf16.msra.mxu0 0
      %1833 = vmatpush.bf16.msra.mxu0 %v1824
      %1834 = vmatmul.bf16.gmra.mxu0 %v1286
      %v1835 = vpop.f32.mrf.mxu0
      %v1836 = vadd.f32 0.0, %v1835
      %v1837 = vpop.f32.mrf.mxu0
      %v1838 = vadd.f32 0.0, %v1837
      %1839 = vmatmul.bf16.gmra.mxu0 %v1289
      %v1840 = vpop.f32.mrf.mxu0
      %v1841 = vadd.f32 0.0, %v1840
      %v1842 = vpop.f32.mrf.mxu0
      %v1843 = vadd.f32 0.0, %v1842
      %1844 = vmatmul.bf16.gmra.mxu0 %v1292
      %v1845 = vpop.f32.mrf.mxu0
      %v1846 = vadd.f32 0.0, %v1845
      %v1847 = vpop.f32.mrf.mxu0
      %v1848 = vadd.f32 0.0, %v1847
      %1849 = vmatmul.bf16.gmra.mxu0 %v1821
      %v1850 = vpop.f32.mrf.mxu0
      %v1851 = vadd.f32 0.0, %v1850
      %v1852 = vpop.f32.mrf.mxu0
      %v1853 = vadd.f32 0.0, %v1852
      %1854 = vdwg.mxu0
      %v1855 = vadd.f32 %v1807, %v1836
      %v1856 = vadd.f32 %v1808, %v1838
      %v1857 = vadd.f32 %v1809, %v1841
      %v1858 = vadd.f32 %v1810, %v1843
      %v1859 = vadd.f32 %v1811, %v1846
      %v1860 = vadd.f32 %v1812, %v1848
      %v1861 = vadd.f32 %v1813, %v1851
      %v1862 = vadd.f32 %v1814, %v1853
      %v1864 = vshrl.u32 %v1258, 16
      %v1866 = vrot.slane %v1864, 4
      %v1867 = vshll.u32 %v1258, 16
      %v1869 = vrot.slane %v1867, 5
      %v1870 = vor.u32 %v1866, %v1869
      %v1871 = vrot.slane %v1870, 4
      %v1873 = vshll.u32 %v1259, 16
      %v1875 = vrot.slane %v1873, 5
      %v1876 = vsel %vm516, %v1871, %v1875
      %s1877 = scalar_lea.vmem %s3, 32
      %v1878 = vld [vmem:[%s1877] sm:$0x3]
      %v1879 = vunpack.c.l.b16 %v1876
      %v1880 = vpack.c.b16 %v1879, %v1694
      %v1882 = vsel %vm643, %v1880, 0
      %v1885 = vsel %vm656, %v1878, 0
      %1887 = vmatpush.bf16.msra.mxu0 0
      %1888 = vmatpush.bf16.msra.mxu0 0
      %1889 = vmatpush.bf16.msra.mxu0 0
      %1890 = vmatpush.bf16.msra.mxu0 0
      %1891 = vmatpush.bf16.msra.mxu0 0
      %1892 = vmatpush.bf16.msra.mxu0 0
      %1893 = vmatpush.bf16.msra.mxu0 0
      %1894 = vmatpush.bf16.msra.mxu0 %v1885
      %1895 = vmatmul.bf16.gmra.mxu0 %v1464
      %v1896 = vpop.f32.mrf.mxu0
      %v1897 = vadd.f32 0.0, %v1896
      %v1898 = vpop.f32.mrf.mxu0
      %v1899 = vadd.f32 0.0, %v1898
      %1900 = vmatmul.bf16.gmra.mxu0 %v1467
      %v1901 = vpop.f32.mrf.mxu0
      %v1902 = vadd.f32 0.0, %v1901
      %v1903 = vpop.f32.mrf.mxu0
      %v1904 = vadd.f32 0.0, %v1903
      %1905 = vmatmul.bf16.gmra.mxu0 %v1470
      %v1906 = vpop.f32.mrf.mxu0
      %v1907 = vadd.f32 0.0, %v1906
      %v1908 = vpop.f32.mrf.mxu0
      %v1909 = vadd.f32 0.0, %v1908
      %1910 = vmatmul.bf16.gmra.mxu0 %v1882
      %v1911 = vpop.f32.mrf.mxu0
      %v1912 = vadd.f32 0.0, %v1911
      %v1913 = vpop.f32.mrf.mxu0
      %v1914 = vadd.f32 0.0, %v1913
      %1915 = vdwg.mxu0
      %v1916 = vadd.f32 %v1855, %v1897
      %v1917 = vadd.f32 %v1856, %v1899
      %v1918 = vadd.f32 %v1857, %v1902
      %v1919 = vadd.f32 %v1858, %v1904
      %v1920 = vadd.f32 %v1859, %v1907
      %v1921 = vadd.f32 %v1860, %v1909
      %v1922 = vadd.f32 %v1861, %v1912
      %v1923 = vadd.f32 %v1862, %v1914
      %v1925 = vrot.slane %v1258, 5
      %v1926 = vrot.slane %v1925, 4
      %v1927 = vrot.slane %v1259, 5
      %v1928 = vsel %vm763, %v1926, %v1927
      %s1929 = scalar_lea.vmem %s3, 34
      %v1930 = vld [vmem:[%s1929] sm:$0x3]
      %v1931 = vunpack.c.l.b16 %v1928
      %v1932 = vpack.c.b16 %v1931, %v1758
      %v1934 = vsel %vm643, %v1932, 0
      %v1937 = vsel %vm656, %v1930, 0
      %1939 = vmatpush.bf16.msra.mxu0 0
      %1940 = vmatpush.bf16.msra.mxu0 0
      %1941 = vmatpush.bf16.msra.mxu0 0
      %1942 = vmatpush.bf16.msra.mxu0 0
      %1943 = vmatpush.bf16.msra.mxu0 0
      %1944 = vmatpush.bf16.msra.mxu0 0
      %1945 = vmatpush.bf16.msra.mxu0 0
      %1946 = vmatpush.bf16.msra.mxu0 %v1937
      %1947 = vmatmul.bf16.gmra.mxu0 %v1570
      %v1948 = vpop.f32.mrf.mxu0
      %v1949 = vadd.f32 0.0, %v1948
      %v1950 = vpop.f32.mrf.mxu0
      %v1951 = vadd.f32 0.0, %v1950
      %1952 = vmatmul.bf16.gmra.mxu0 %v1573
      %v1953 = vpop.f32.mrf.mxu0
      %v1954 = vadd.f32 0.0, %v1953
      %v1955 = vpop.f32.mrf.mxu0
      %v1956 = vadd.f32 0.0, %v1955
      %1957 = vmatmul.bf16.gmra.mxu0 %v1576
      %v1958 = vpop.f32.mrf.mxu0
      %v1959 = vadd.f32 0.0, %v1958
      %v1960 = vpop.f32.mrf.mxu0
      %v1961 = vadd.f32 0.0, %v1960
      %1962 = vmatmul.bf16.gmra.mxu0 %v1934
      %v1963 = vpop.f32.mrf.mxu0
      %v1964 = vadd.f32 0.0, %v1963
      %v1965 = vpop.f32.mrf.mxu0
      %v1966 = vadd.f32 0.0, %v1965
      %1967 = vdwg.mxu0
      %v1968 = vadd.f32 %v1916, %v1949
      %v1969 = vadd.f32 %v1917, %v1951
      %v1970 = vadd.f32 %v1918, %v1954
      %v1971 = vadd.f32 %v1919, %v1956
      %v1972 = vadd.f32 %v1920, %v1959
      %v1973 = vadd.f32 %v1921, %v1961
      %v1974 = vadd.f32 %v1922, %v1964
      %v1975 = vadd.f32 %v1923, %v1966
      %v1976 = vld [vmem:[%s453] sm:$0xff]
      %v1977 = vld [vmem:[%s453 + $0x8] sm:$0x3]
      %v1978 = vld [vmem:[%s453 + $0x10] sm:$0xff]
      %v1979 = vld [vmem:[%s453 + $0x18] sm:$0x3]
      %v1980 = vld [vmem:[%s453 + $0x20] sm:$0xff]
      %v1981 = vld [vmem:[%s453 + $0x28] sm:$0x3]
      %v1982 = vld [vmem:[%s453 + $0x30] sm:$0xff]
      %v1983 = vld [vmem:[%s453 + $0x38] sm:$0x3]
      %v1984 = vld [vmem:[%s453 + $0x40] sm:$0xff]
      %v1985 = vld [vmem:[%s453 + $0x48] sm:$0x3]
      %v1986 = vld [vmem:[%s453 + $0x50] sm:$0xff]
      %v1987 = vld [vmem:[%s453 + $0x58] sm:$0x3]
      %v1988 = vld [vmem:[%s453 + $0x60] sm:$0xff]
      %v1989 = vld [vmem:[%s453 + $0x68] sm:$0x3]
      %v1990 = vld [vmem:[%s453 + $0x70] sm:$0xff]
      %v1991 = vld [vmem:[%s453 + $0x78] sm:$0x3]
      %v1992 = vld [vmem:[%s453 + $0x80] sm:$0xff]
      %v1993 = vld [vmem:[%s453 + $0x88] sm:$0x3]
      %v1994 = vld [vmem:[%s453 + $0x90] sm:$0xff]
      %v1995 = vld [vmem:[%s453 + $0x98] sm:$0x3]
      %v1996 = vpack.c.bf16 %v1976, %v1976
      %v1997 = vpack.c.bf16 %v1977, %v1977
      %v1998 = vpack.c.bf16 %v1978, %v1978
      %v1999 = vpack.c.bf16 %v1979, %v1979
      %v2000 = vpack.c.bf16 %v1980, %v1980
      %v2001 = vpack.c.bf16 %v1981, %v1981
      %v2002 = vpack.c.bf16 %v1982, %v1982
      %v2003 = vpack.c.bf16 %v1983, %v1983
      %v2004 = vpack.c.bf16 %v1984, %v1984
      %v2005 = vpack.c.bf16 %v1985, %v1985
      %v2006 = vpack.c.bf16 %v1986, %v1986
      %v2007 = vpack.c.bf16 %v1987, %v1987
      %v2008 = vpack.c.bf16 %v1988, %v1988
      %v2009 = vpack.c.bf16 %v1989, %v1989
      %v2010 = vpack.c.bf16 %v1990, %v1990
      %v2011 = vpack.c.bf16 %v1991, %v1991
      %v2012 = vpack.c.bf16 %v1992, %v1992
      %v2013 = vpack.c.bf16 %v1993, %v1993
      %v2014 = vpack.c.bf16 %v1994, %v1994
      %v2015 = vpack.c.bf16 %v1995, %v1995
      %s2016 = scalar_lea.vmem %s3, 36
      %v2017 = vld [vmem:[%s2016] sm:$0x3]
      %v2026 = vunpack.c.l.b16 %v1996
      %v2027 = vunpack.c.l.b16 %v1998
      %v2028 = vunpack.c.l.b16 %v2000
      %v2029 = vunpack.c.l.b16 %v2002
      %v2030 = vunpack.c.l.b16 %v2004
      %v2031 = vunpack.c.l.b16 %v2006
      %v2032 = vunpack.c.l.b16 %v2008
      %v2033 = vunpack.c.l.b16 %v2010
      %v2034 = vpack.c.b16 %v2027, %v2026
      %v2035 = vpack.c.b16 %v2029, %v2028
      %v2036 = vpack.c.b16 %v2031, %v2030
      %v2037 = vpack.c.b16 %v2033, %v2032
      %v2039 = vsel %vm643, %v2034, 0
      %v2042 = vsel %vm643, %v2035, 0
      %v2045 = vsel %vm643, %v2036, 0
      %v2048 = vsel %vm643, %v2037, 0
      %v2051 = vsel %vm656, %v2017, 0
      %2053 = vmatpush.bf16.msra.mxu0 0
      %2054 = vmatpush.bf16.msra.mxu0 0
      %2055 = vmatpush.bf16.msra.mxu0 0
      %2056 = vmatpush.bf16.msra.mxu0 0
      %2057 = vmatpush.bf16.msra.mxu0 0
      %2058 = vmatpush.bf16.msra.mxu0 0
      %2059 = vmatpush.bf16.msra.mxu0 0
      %2060 = vmatpush.bf16.msra.mxu0 %v2051
      %2061 = vmatmul.bf16.gmra.mxu0 %v2039
      %v2062 = vpop.f32.mrf.mxu0
      %v2063 = vadd.f32 0.0, %v2062
      %v2064 = vpop.f32.mrf.mxu0
      %v2065 = vadd.f32 0.0, %v2064
      %2066 = vmatmul.bf16.gmra.mxu0 %v2042
      %v2067 = vpop.f32.mrf.mxu0
      %v2068 = vadd.f32 0.0, %v2067
      %v2069 = vpop.f32.mrf.mxu0
      %v2070 = vadd.f32 0.0, %v2069
      %2071 = vmatmul.bf16.gmra.mxu0 %v2045
      %v2072 = vpop.f32.mrf.mxu0
      %v2073 = vadd.f32 0.0, %v2072
      %v2074 = vpop.f32.mrf.mxu0
      %v2075 = vadd.f32 0.0, %v2074
      %2076 = vmatmul.bf16.gmra.mxu0 %v2048
      %v2077 = vpop.f32.mrf.mxu0
      %v2078 = vadd.f32 0.0, %v2077
      %v2079 = vpop.f32.mrf.mxu0
      %v2080 = vadd.f32 0.0, %v2079
      %2081 = vdwg.mxu0
      %v2082 = vadd.f32 %v1968, %v2063
      %v2083 = vadd.f32 %v1969, %v2065
      %v2084 = vadd.f32 %v1970, %v2068
      %v2085 = vadd.f32 %v1971, %v2070
      %v2086 = vadd.f32 %v1972, %v2073
      %v2087 = vadd.f32 %v1973, %v2075
      %v2088 = vadd.f32 %v1974, %v2078
      %v2089 = vadd.f32 %v1975, %v2080
      %v2091 = vshrl.u32 %v1996, 16
      %v2093 = vrot.slane %v2091, 4
      %v2094 = vshll.u32 %v1996, 16
      %v2096 = vrot.slane %v2094, 5
      %v2097 = vor.u32 %v2093, %v2096
      %v2098 = vrot.slane %v2097, 4
      %v2100 = vshll.u32 %v1997, 16
      %v2102 = vrot.slane %v2100, 5
      %v2103 = vsel %vm516, %v2098, %v2102
      %v2105 = vshrl.u32 %v1998, 16
      %v2107 = vrot.slane %v2105, 4
      %v2108 = vshll.u32 %v1998, 16
      %v2110 = vrot.slane %v2108, 5
      %v2111 = vor.u32 %v2107, %v2110
      %v2112 = vrot.slane %v2111, 4
      %v2114 = vshll.u32 %v1999, 16
      %v2116 = vrot.slane %v2114, 5
      %v2117 = vsel %vm516, %v2112, %v2116
      %v2119 = vshrl.u32 %v2000, 16
      %v2121 = vrot.slane %v2119, 4
      %v2122 = vshll.u32 %v2000, 16
      %v2124 = vrot.slane %v2122, 5
      %v2125 = vor.u32 %v2121, %v2124
      %v2126 = vrot.slane %v2125, 4
      %v2128 = vshll.u32 %v2001, 16
      %v2130 = vrot.slane %v2128, 5
      %v2131 = vsel %vm516, %v2126, %v2130
      %v2133 = vshrl.u32 %v2002, 16
      %v2135 = vrot.slane %v2133, 4
      %v2136 = vshll.u32 %v2002, 16
      %v2138 = vrot.slane %v2136, 5
      %v2139 = vor.u32 %v2135, %v2138
      %v2140 = vrot.slane %v2139, 4
      %v2142 = vshll.u32 %v2003, 16
      %v2144 = vrot.slane %v2142, 5
      %v2145 = vsel %vm516, %v2140, %v2144
      %v2147 = vshrl.u32 %v2004, 16
      %v2149 = vrot.slane %v2147, 4
      %v2150 = vshll.u32 %v2004, 16
      %v2152 = vrot.slane %v2150, 5
      %v2153 = vor.u32 %v2149, %v2152
      %v2154 = vrot.slane %v2153, 4
      %v2156 = vshll.u32 %v2005, 16
      %v2158 = vrot.slane %v2156, 5
      %v2159 = vsel %vm516, %v2154, %v2158
      %v2161 = vshrl.u32 %v2006, 16
      %v2163 = vrot.slane %v2161, 4
      %v2164 = vshll.u32 %v2006, 16
      %v2166 = vrot.slane %v2164, 5
      %v2167 = vor.u32 %v2163, %v2166
      %v2168 = vrot.slane %v2167, 4
      %v2170 = vshll.u32 %v2007, 16
      %v2172 = vrot.slane %v2170, 5
      %v2173 = vsel %vm516, %v2168, %v2172
      %v2175 = vshrl.u32 %v2008, 16
      %v2177 = vrot.slane %v2175, 4
      %v2178 = vshll.u32 %v2008, 16
      %v2180 = vrot.slane %v2178, 5
      %v2181 = vor.u32 %v2177, %v2180
      %v2182 = vrot.slane %v2181, 4
      %v2184 = vshll.u32 %v2009, 16
      %v2186 = vrot.slane %v2184, 5
      %v2187 = vsel %vm516, %v2182, %v2186
      %v2189 = vshrl.u32 %v2010, 16
      %v2191 = vrot.slane %v2189, 4
      %v2192 = vshll.u32 %v2010, 16
      %v2194 = vrot.slane %v2192, 5
      %v2195 = vor.u32 %v2191, %v2194
      %v2196 = vrot.slane %v2195, 4
      %v2198 = vshll.u32 %v2011, 16
      %v2200 = vrot.slane %v2198, 5
      %v2201 = vsel %vm516, %v2196, %v2200
      %s2202 = scalar_lea.vmem %s3, 38
      %v2203 = vld [vmem:[%s2202] sm:$0x3]
      %v2204 = vunpack.c.l.b16 %v2103
      %v2205 = vunpack.c.l.b16 %v2117
      %v2206 = vunpack.c.l.b16 %v2131
      %v2207 = vunpack.c.l.b16 %v2145
      %v2208 = vunpack.c.l.b16 %v2159
      %v2209 = vunpack.c.l.b16 %v2173
      %v2210 = vunpack.c.l.b16 %v2187
      %v2211 = vunpack.c.l.b16 %v2201
      %v2212 = vpack.c.b16 %v2205, %v2204
      %v2213 = vpack.c.b16 %v2207, %v2206
      %v2214 = vpack.c.b16 %v2209, %v2208
      %v2215 = vpack.c.b16 %v2211, %v2210
      %v2217 = vsel %vm643, %v2212, 0
      %v2220 = vsel %vm643, %v2213, 0
      %v2223 = vsel %vm643, %v2214, 0
      %v2226 = vsel %vm643, %v2215, 0
      %v2229 = vsel %vm656, %v2203, 0
      %2231 = vmatpush.bf16.msra.mxu0 0
      %2232 = vmatpush.bf16.msra.mxu0 0
      %2233 = vmatpush.bf16.msra.mxu0 0
      %2234 = vmatpush.bf16.msra.mxu0 0
      %2235 = vmatpush.bf16.msra.mxu0 0
      %2236 = vmatpush.bf16.msra.mxu0 0
      %2237 = vmatpush.bf16.msra.mxu0 0
      %2238 = vmatpush.bf16.msra.mxu0 %v2229
      %2239 = vmatmul.bf16.gmra.mxu0 %v2217
      %v2240 = vpop.f32.mrf.mxu0
      %v2241 = vadd.f32 0.0, %v2240
      %v2242 = vpop.f32.mrf.mxu0
      %v2243 = vadd.f32 0.0, %v2242
      %2244 = vmatmul.bf16.gmra.mxu0 %v2220
      %v2245 = vpop.f32.mrf.mxu0
      %v2246 = vadd.f32 0.0, %v2245
      %v2247 = vpop.f32.mrf.mxu0
      %v2248 = vadd.f32 0.0, %v2247
      %2249 = vmatmul.bf16.gmra.mxu0 %v2223
      %v2250 = vpop.f32.mrf.mxu0
      %v2251 = vadd.f32 0.0, %v2250
      %v2252 = vpop.f32.mrf.mxu0
      %v2253 = vadd.f32 0.0, %v2252
      %2254 = vmatmul.bf16.gmra.mxu0 %v2226
      %v2255 = vpop.f32.mrf.mxu0
      %v2256 = vadd.f32 0.0, %v2255
      %v2257 = vpop.f32.mrf.mxu0
      %v2258 = vadd.f32 0.0, %v2257
      %2259 = vdwg.mxu0
      %v2260 = vadd.f32 %v2082, %v2241
      %v2261 = vadd.f32 %v2083, %v2243
      %v2262 = vadd.f32 %v2084, %v2246
      %v2263 = vadd.f32 %v2085, %v2248
      %v2264 = vadd.f32 %v2086, %v2251
      %v2265 = vadd.f32 %v2087, %v2253
      %v2266 = vadd.f32 %v2088, %v2256
      %v2267 = vadd.f32 %v2089, %v2258
      %v2276 = vrot.slane %v1996, 5
      %v2277 = vrot.slane %v2276, 4
      %v2278 = vrot.slane %v1997, 5
      %v2279 = vsel %vm763, %v2277, %v2278
      %v2280 = vrot.slane %v1998, 5
      %v2281 = vrot.slane %v2280, 4
      %v2282 = vrot.slane %v1999, 5
      %v2283 = vsel %vm763, %v2281, %v2282
      %v2284 = vrot.slane %v2000, 5
      %v2285 = vrot.slane %v2284, 4
      %v2286 = vrot.slane %v2001, 5
      %v2287 = vsel %vm763, %v2285, %v2286
      %v2288 = vrot.slane %v2002, 5
      %v2289 = vrot.slane %v2288, 4
      %v2290 = vrot.slane %v2003, 5
      %v2291 = vsel %vm763, %v2289, %v2290
      %v2292 = vrot.slane %v2004, 5
      %v2293 = vrot.slane %v2292, 4
      %v2294 = vrot.slane %v2005, 5
      %v2295 = vsel %vm763, %v2293, %v2294
      %v2296 = vrot.slane %v2006, 5
      %v2297 = vrot.slane %v2296, 4
      %v2298 = vrot.slane %v2007, 5
      %v2299 = vsel %vm763, %v2297, %v2298
      %v2300 = vrot.slane %v2008, 5
      %v2301 = vrot.slane %v2300, 4
      %v2302 = vrot.slane %v2009, 5
      %v2303 = vsel %vm763, %v2301, %v2302
      %v2304 = vrot.slane %v2010, 5
      %v2305 = vrot.slane %v2304, 4
      %v2306 = vrot.slane %v2011, 5
      %v2307 = vsel %vm763, %v2305, %v2306
      %s2308 = scalar_lea.vmem %s3, 40
      %v2309 = vld [vmem:[%s2308] sm:$0x3]
      %v2310 = vunpack.c.l.b16 %v2279
      %v2311 = vunpack.c.l.b16 %v2283
      %v2312 = vunpack.c.l.b16 %v2287
      %v2313 = vunpack.c.l.b16 %v2291
      %v2314 = vunpack.c.l.b16 %v2295
      %v2315 = vunpack.c.l.b16 %v2299
      %v2316 = vunpack.c.l.b16 %v2303
      %v2317 = vunpack.c.l.b16 %v2307
      %v2318 = vpack.c.b16 %v2311, %v2310
      %v2319 = vpack.c.b16 %v2313, %v2312
      %v2320 = vpack.c.b16 %v2315, %v2314
      %v2321 = vpack.c.b16 %v2317, %v2316
      %v2323 = vsel %vm643, %v2318, 0
      %v2326 = vsel %vm643, %v2319, 0
      %v2329 = vsel %vm643, %v2320, 0
      %v2332 = vsel %vm643, %v2321, 0
      %v2335 = vsel %vm656, %v2309, 0
      %2337 = vmatpush.bf16.msra.mxu0 0
      %2338 = vmatpush.bf16.msra.mxu0 0
      %2339 = vmatpush.bf16.msra.mxu0 0
      %2340 = vmatpush.bf16.msra.mxu0 0
      %2341 = vmatpush.bf16.msra.mxu0 0
      %2342 = vmatpush.bf16.msra.mxu0 0
      %2343 = vmatpush.bf16.msra.mxu0 0
      %2344 = vmatpush.bf16.msra.mxu0 %v2335
      %2345 = vmatmul.bf16.gmra.mxu0 %v2323
      %v2346 = vpop.f32.mrf.mxu0
      %v2347 = vadd.f32 0.0, %v2346
      %v2348 = vpop.f32.mrf.mxu0
      %v2349 = vadd.f32 0.0, %v2348
      %2350 = vmatmul.bf16.gmra.mxu0 %v2326
      %v2351 = vpop.f32.mrf.mxu0
      %v2352 = vadd.f32 0.0, %v2351
      %v2353 = vpop.f32.mrf.mxu0
      %v2354 = vadd.f32 0.0, %v2353
      %2355 = vmatmul.bf16.gmra.mxu0 %v2329
      %v2356 = vpop.f32.mrf.mxu0
      %v2357 = vadd.f32 0.0, %v2356
      %v2358 = vpop.f32.mrf.mxu0
      %v2359 = vadd.f32 0.0, %v2358
      %2360 = vmatmul.bf16.gmra.mxu0 %v2332
      %v2361 = vpop.f32.mrf.mxu0
      %v2362 = vadd.f32 0.0, %v2361
      %v2363 = vpop.f32.mrf.mxu0
      %v2364 = vadd.f32 0.0, %v2363
      %2365 = vdwg.mxu0
      %v2366 = vadd.f32 %v2260, %v2347
      %v2367 = vadd.f32 %v2261, %v2349
      %v2368 = vadd.f32 %v2262, %v2352
      %v2369 = vadd.f32 %v2263, %v2354
      %v2370 = vadd.f32 %v2264, %v2357
      %v2371 = vadd.f32 %v2265, %v2359
      %v2372 = vadd.f32 %v2266, %v2362
      %v2373 = vadd.f32 %v2267, %v2364
      %s2374 = scalar_lea.vmem %s3, 42
      %v2375 = vld [vmem:[%s2374] sm:$0x3]
      %v2377 = vunpack.c.l.b16 %v2012
      %v2378 = vpack.c.b16 %v2028, %v2027
      %v2379 = vpack.c.b16 %v2030, %v2029
      %v2380 = vpack.c.b16 %v2032, %v2031
      %v2381 = vpack.c.b16 %v2377, %v2033
      %v2383 = vsel %vm643, %v2378, 0
      %v2386 = vsel %vm643, %v2379, 0
      %v2389 = vsel %vm643, %v2380, 0
      %v2392 = vsel %vm643, %v2381, 0
      %v2395 = vsel %vm656, %v2375, 0
      %2397 = vmatpush.bf16.msra.mxu0 0
      %2398 = vmatpush.bf16.msra.mxu0 0
      %2399 = vmatpush.bf16.msra.mxu0 0
      %2400 = vmatpush.bf16.msra.mxu0 0
      %2401 = vmatpush.bf16.msra.mxu0 0
      %2402 = vmatpush.bf16.msra.mxu0 0
      %2403 = vmatpush.bf16.msra.mxu0 0
      %2404 = vmatpush.bf16.msra.mxu0 %v2395
      %2405 = vmatmul.bf16.gmra.mxu0 %v2383
      %v2406 = vpop.f32.mrf.mxu0
      %v2407 = vadd.f32 0.0, %v2406
      %v2408 = vpop.f32.mrf.mxu0
      %v2409 = vadd.f32 0.0, %v2408
      %2410 = vmatmul.bf16.gmra.mxu0 %v2386
      %v2411 = vpop.f32.mrf.mxu0
      %v2412 = vadd.f32 0.0, %v2411
      %v2413 = vpop.f32.mrf.mxu0
      %v2414 = vadd.f32 0.0, %v2413
      %2415 = vmatmul.bf16.gmra.mxu0 %v2389
      %v2416 = vpop.f32.mrf.mxu0
      %v2417 = vadd.f32 0.0, %v2416
      %v2418 = vpop.f32.mrf.mxu0
      %v2419 = vadd.f32 0.0, %v2418
      %2420 = vmatmul.bf16.gmra.mxu0 %v2392
      %v2421 = vpop.f32.mrf.mxu0
      %v2422 = vadd.f32 0.0, %v2421
      %v2423 = vpop.f32.mrf.mxu0
      %v2424 = vadd.f32 0.0, %v2423
      %2425 = vdwg.mxu0
      %v2426 = vadd.f32 %v2366, %v2407
      %v2427 = vadd.f32 %v2367, %v2409
      %v2428 = vadd.f32 %v2368, %v2412
      %v2429 = vadd.f32 %v2369, %v2414
      %v2430 = vadd.f32 %v2370, %v2417
      %v2431 = vadd.f32 %v2371, %v2419
      %v2432 = vadd.f32 %v2372, %v2422
      %v2433 = vadd.f32 %v2373, %v2424
      %v2435 = vshrl.u32 %v2012, 16
      %v2437 = vrot.slane %v2435, 4
      %v2438 = vshll.u32 %v2012, 16
      %v2440 = vrot.slane %v2438, 5
      %v2441 = vor.u32 %v2437, %v2440
      %v2442 = vrot.slane %v2441, 4
      %v2444 = vshll.u32 %v2013, 16
      %v2446 = vrot.slane %v2444, 5
      %v2447 = vsel %vm516, %v2442, %v2446
      %s2448 = scalar_lea.vmem %s3, 44
      %v2449 = vld [vmem:[%s2448] sm:$0x3]
      %v2450 = vunpack.c.l.b16 %v2447
      %v2451 = vpack.c.b16 %v2206, %v2205
      %v2452 = vpack.c.b16 %v2208, %v2207
      %v2453 = vpack.c.b16 %v2210, %v2209
      %v2454 = vpack.c.b16 %v2450, %v2211
      %v2456 = vsel %vm643, %v2451, 0
      %v2459 = vsel %vm643, %v2452, 0
      %v2462 = vsel %vm643, %v2453, 0
      %v2465 = vsel %vm643, %v2454, 0
      %v2468 = vsel %vm656, %v2449, 0
      %2470 = vmatpush.bf16.msra.mxu0 0
      %2471 = vmatpush.bf16.msra.mxu0 0
      %2472 = vmatpush.bf16.msra.mxu0 0
      %2473 = vmatpush.bf16.msra.mxu0 0
      %2474 = vmatpush.bf16.msra.mxu0 0
      %2475 = vmatpush.bf16.msra.mxu0 0
      %2476 = vmatpush.bf16.msra.mxu0 0
      %2477 = vmatpush.bf16.msra.mxu0 %v2468
      %2478 = vmatmul.bf16.gmra.mxu0 %v2456
      %v2479 = vpop.f32.mrf.mxu0
      %v2480 = vadd.f32 0.0, %v2479
      %v2481 = vpop.f32.mrf.mxu0
      %v2482 = vadd.f32 0.0, %v2481
      %2483 = vmatmul.bf16.gmra.mxu0 %v2459
      %v2484 = vpop.f32.mrf.mxu0
      %v2485 = vadd.f32 0.0, %v2484
      %v2486 = vpop.f32.mrf.mxu0
      %v2487 = vadd.f32 0.0, %v2486
      %2488 = vmatmul.bf16.gmra.mxu0 %v2462
      %v2489 = vpop.f32.mrf.mxu0
      %v2490 = vadd.f32 0.0, %v2489
      %v2491 = vpop.f32.mrf.mxu0
      %v2492 = vadd.f32 0.0, %v2491
      %2493 = vmatmul.bf16.gmra.mxu0 %v2465
      %v2494 = vpop.f32.mrf.mxu0
      %v2495 = vadd.f32 0.0, %v2494
      %v2496 = vpop.f32.mrf.mxu0
      %v2497 = vadd.f32 0.0, %v2496
      %2498 = vdwg.mxu0
      %v2499 = vadd.f32 %v2426, %v2480
      %v2500 = vadd.f32 %v2427, %v2482
      %v2501 = vadd.f32 %v2428, %v2485
      %v2502 = vadd.f32 %v2429, %v2487
      %v2503 = vadd.f32 %v2430, %v2490
      %v2504 = vadd.f32 %v2431, %v2492
      %v2505 = vadd.f32 %v2432, %v2495
      %v2506 = vadd.f32 %v2433, %v2497
      %v2508 = vrot.slane %v2012, 5
      %v2509 = vrot.slane %v2508, 4
      %v2510 = vrot.slane %v2013, 5
      %v2511 = vsel %vm763, %v2509, %v2510
      %s2512 = scalar_lea.vmem %s3, 46
      %v2513 = vld [vmem:[%s2512] sm:$0x3]
      %v2514 = vunpack.c.l.b16 %v2511
      %v2515 = vpack.c.b16 %v2312, %v2311
      %v2516 = vpack.c.b16 %v2314, %v2313
      %v2517 = vpack.c.b16 %v2316, %v2315
      %v2518 = vpack.c.b16 %v2514, %v2317
      %v2520 = vsel %vm643, %v2515, 0
      %v2523 = vsel %vm643, %v2516, 0
      %v2526 = vsel %vm643, %v2517, 0
      %v2529 = vsel %vm643, %v2518, 0
      %v2532 = vsel %vm656, %v2513, 0
      %2534 = vmatpush.bf16.msra.mxu0 0
      %2535 = vmatpush.bf16.msra.mxu0 0
      %2536 = vmatpush.bf16.msra.mxu0 0
      %2537 = vmatpush.bf16.msra.mxu0 0
      %2538 = vmatpush.bf16.msra.mxu0 0
      %2539 = vmatpush.bf16.msra.mxu0 0
      %2540 = vmatpush.bf16.msra.mxu0 0
      %2541 = vmatpush.bf16.msra.mxu0 %v2532
      %2542 = vmatmul.bf16.gmra.mxu0 %v2520
      %v2543 = vpop.f32.mrf.mxu0
      %v2544 = vadd.f32 0.0, %v2543
      %v2545 = vpop.f32.mrf.mxu0
      %v2546 = vadd.f32 0.0, %v2545
      %2547 = vmatmul.bf16.gmra.mxu0 %v2523
      %v2548 = vpop.f32.mrf.mxu0
      %v2549 = vadd.f32 0.0, %v2548
      %v2550 = vpop.f32.mrf.mxu0
      %v2551 = vadd.f32 0.0, %v2550
      %2552 = vmatmul.bf16.gmra.mxu0 %v2526
      %v2553 = vpop.f32.mrf.mxu0
      %v2554 = vadd.f32 0.0, %v2553
      %v2555 = vpop.f32.mrf.mxu0
      %v2556 = vadd.f32 0.0, %v2555
      %2557 = vmatmul.bf16.gmra.mxu0 %v2529
      %v2558 = vpop.f32.mrf.mxu0
      %v2559 = vadd.f32 0.0, %v2558
      %v2560 = vpop.f32.mrf.mxu0
      %v2561 = vadd.f32 0.0, %v2560
      %2562 = vdwg.mxu0
      %v2563 = vadd.f32 %v2499, %v2544
      %v2564 = vadd.f32 %v2500, %v2546
      %v2565 = vadd.f32 %v2501, %v2549
      %v2566 = vadd.f32 %v2502, %v2551
      %v2567 = vadd.f32 %v2503, %v2554
      %v2568 = vadd.f32 %v2504, %v2556
      %v2569 = vadd.f32 %v2505, %v2559
      %v2570 = vadd.f32 %v2506, %v2561
      %s2571 = scalar_lea.vmem %s3, 48
      %v2572 = vld [vmem:[%s2571] sm:$0x3]
      %v2574 = vunpack.c.l.b16 %v2014
      %v2575 = vpack.c.b16 %v2574, %v2377
      %v2577 = vsel %vm643, %v2575, 0
      %v2580 = vsel %vm656, %v2572, 0
      %2582 = vmatpush.bf16.msra.mxu0 0
      %2583 = vmatpush.bf16.msra.mxu0 0
      %2584 = vmatpush.bf16.msra.mxu0 0
      %2585 = vmatpush.bf16.msra.mxu0 0
      %2586 = vmatpush.bf16.msra.mxu0 0
      %2587 = vmatpush.bf16.msra.mxu0 0
      %2588 = vmatpush.bf16.msra.mxu0 0
      %2589 = vmatpush.bf16.msra.mxu0 %v2580
      %2590 = vmatmul.bf16.gmra.mxu0 %v2042
      %v2591 = vpop.f32.mrf.mxu0
      %v2592 = vadd.f32 0.0, %v2591
      %v2593 = vpop.f32.mrf.mxu0
      %v2594 = vadd.f32 0.0, %v2593
      %2595 = vmatmul.bf16.gmra.mxu0 %v2045
      %v2596 = vpop.f32.mrf.mxu0
      %v2597 = vadd.f32 0.0, %v2596
      %v2598 = vpop.f32.mrf.mxu0
      %v2599 = vadd.f32 0.0, %v2598
      %2600 = vmatmul.bf16.gmra.mxu0 %v2048
      %v2601 = vpop.f32.mrf.mxu0
      %v2602 = vadd.f32 0.0, %v2601
      %v2603 = vpop.f32.mrf.mxu0
      %v2604 = vadd.f32 0.0, %v2603
      %2605 = vmatmul.bf16.gmra.mxu0 %v2577
      %v2606 = vpop.f32.mrf.mxu0
      %v2607 = vadd.f32 0.0, %v2606
      %v2608 = vpop.f32.mrf.mxu0
      %v2609 = vadd.f32 0.0, %v2608
      %2610 = vdwg.mxu0
      %v2611 = vadd.f32 %v2563, %v2592
      %v2612 = vadd.f32 %v2564, %v2594
      %v2613 = vadd.f32 %v2565, %v2597
      %v2614 = vadd.f32 %v2566, %v2599
      %v2615 = vadd.f32 %v2567, %v2602
      %v2616 = vadd.f32 %v2568, %v2604
      %v2617 = vadd.f32 %v2569, %v2607
      %v2618 = vadd.f32 %v2570, %v2609
      %v2620 = vshrl.u32 %v2014, 16
      %v2622 = vrot.slane %v2620, 4
      %v2623 = vshll.u32 %v2014, 16
      %v2625 = vrot.slane %v2623, 5
      %v2626 = vor.u32 %v2622, %v2625
      %v2627 = vrot.slane %v2626, 4
      %v2629 = vshll.u32 %v2015, 16
      %v2631 = vrot.slane %v2629, 5
      %v2632 = vsel %vm516, %v2627, %v2631
      %s2633 = scalar_lea.vmem %s3, 50
      %v2634 = vld [vmem:[%s2633] sm:$0x3]
      %v2635 = vunpack.c.l.b16 %v2632
      %v2636 = vpack.c.b16 %v2635, %v2450
      %v2638 = vsel %vm643, %v2636, 0
      %v2641 = vsel %vm656, %v2634, 0
      %2643 = vmatpush.bf16.msra.mxu0 0
      %2644 = vmatpush.bf16.msra.mxu0 0
      %2645 = vmatpush.bf16.msra.mxu0 0
      %2646 = vmatpush.bf16.msra.mxu0 0
      %2647 = vmatpush.bf16.msra.mxu0 0
      %2648 = vmatpush.bf16.msra.mxu0 0
      %2649 = vmatpush.bf16.msra.mxu0 0
      %2650 = vmatpush.bf16.msra.mxu0 %v2641
      %2651 = vmatmul.bf16.gmra.mxu0 %v2220
      %v2652 = vpop.f32.mrf.mxu0
      %v2653 = vadd.f32 0.0, %v2652
      %v2654 = vpop.f32.mrf.mxu0
      %v2655 = vadd.f32 0.0, %v2654
      %2656 = vmatmul.bf16.gmra.mxu0 %v2223
      %v2657 = vpop.f32.mrf.mxu0
      %v2658 = vadd.f32 0.0, %v2657
      %v2659 = vpop.f32.mrf.mxu0
      %v2660 = vadd.f32 0.0, %v2659
      %2661 = vmatmul.bf16.gmra.mxu0 %v2226
      %v2662 = vpop.f32.mrf.mxu0
      %v2663 = vadd.f32 0.0, %v2662
      %v2664 = vpop.f32.mrf.mxu0
      %v2665 = vadd.f32 0.0, %v2664
      %2666 = vmatmul.bf16.gmra.mxu0 %v2638
      %v2667 = vpop.f32.mrf.mxu0
      %v2668 = vadd.f32 0.0, %v2667
      %v2669 = vpop.f32.mrf.mxu0
      %v2670 = vadd.f32 0.0, %v2669
      %2671 = vdwg.mxu0
      %v2672 = vadd.f32 %v2611, %v2653
      %v2673 = vadd.f32 %v2612, %v2655
      %v2674 = vadd.f32 %v2613, %v2658
      %v2675 = vadd.f32 %v2614, %v2660
      %v2676 = vadd.f32 %v2615, %v2663
      %v2677 = vadd.f32 %v2616, %v2665
      %v2678 = vadd.f32 %v2617, %v2668
      %v2679 = vadd.f32 %v2618, %v2670
      %v2681 = vrot.slane %v2014, 5
      %v2682 = vrot.slane %v2681, 4
      %v2683 = vrot.slane %v2015, 5
      %v2684 = vsel %vm763, %v2682, %v2683
      %s2685 = scalar_lea.vmem %s3, 52
      %v2686 = vld [vmem:[%s2685] sm:$0x3]
      %v2687 = vunpack.c.l.b16 %v2684
      %v2688 = vpack.c.b16 %v2687, %v2514
      %v2690 = vsel %vm643, %v2688, 0
      %v2693 = vsel %vm656, %v2686, 0
      %2695 = vmatpush.bf16.msra.mxu0 0
      %2696 = vmatpush.bf16.msra.mxu0 0
      %2697 = vmatpush.bf16.msra.mxu0 0
      %2698 = vmatpush.bf16.msra.mxu0 0
      %2699 = vmatpush.bf16.msra.mxu0 0
      %2700 = vmatpush.bf16.msra.mxu0 0
      %2701 = vmatpush.bf16.msra.mxu0 0
      %2702 = vmatpush.bf16.msra.mxu0 %v2693
      %2703 = vmatmul.bf16.gmra.mxu0 %v2326
      %v2704 = vpop.f32.mrf.mxu0
      %v2705 = vadd.f32 0.0, %v2704
      %v2706 = vpop.f32.mrf.mxu0
      %v2707 = vadd.f32 0.0, %v2706
      %2708 = vmatmul.bf16.gmra.mxu0 %v2329
      %v2709 = vpop.f32.mrf.mxu0
      %v2710 = vadd.f32 0.0, %v2709
      %v2711 = vpop.f32.mrf.mxu0
      %v2712 = vadd.f32 0.0, %v2711
      %2713 = vmatmul.bf16.gmra.mxu0 %v2332
      %v2714 = vpop.f32.mrf.mxu0
      %v2715 = vadd.f32 0.0, %v2714
      %v2716 = vpop.f32.mrf.mxu0
      %v2717 = vadd.f32 0.0, %v2716
      %2718 = vmatmul.bf16.gmra.mxu0 %v2690
      %v2719 = vpop.f32.mrf.mxu0
      %v2720 = vadd.f32 0.0, %v2719
      %v2721 = vpop.f32.mrf.mxu0
      %v2722 = vadd.f32 0.0, %v2721
      %2723 = vdwg.mxu0
      %v2724 = vadd.f32 %v2672, %v2705
      %v2725 = vadd.f32 %v2673, %v2707
      %v2726 = vadd.f32 %v2674, %v2710
      %v2727 = vadd.f32 %v2675, %v2712
      %v2728 = vadd.f32 %v2676, %v2715
      %v2729 = vadd.f32 %v2677, %v2717
      %v2730 = vadd.f32 %v2678, %v2720
      %v2731 = vadd.f32 %v2679, %v2722
      %v2732 = vld [vmem:[%s4] sm:$0x1]
      %v2734 = vperm.slane %v2732, 0
      %v2736 = vadd.f32 %v2724, %v2734
      %v2737 = vadd.f32 %v2725, %v2734
      %v2738 = vadd.f32 %v2726, %v2734
      %v2739 = vadd.f32 %v2727, %v2734
      %v2740 = vadd.f32 %v2728, %v2734
      %v2741 = vadd.f32 %v2729, %v2734
      %v2742 = vadd.f32 %v2730, %v2734
      %v2743 = vadd.f32 %v2731, %v2734
      %2744 = vst [vmem:[%s463] sm:$0xff] %v2736
      %2745 = vst [vmem:[%s463 + $0x8] sm:$0xff] %v2737
      %2746 = vst [vmem:[%s463 + $0x10] sm:$0xff] %v2738
      %2747 = vst [vmem:[%s463 + $0x18] sm:$0xff] %v2739
      %2748 = vst [vmem:[%s463 + $0x20] sm:$0xff] %v2740
      %2749 = vst [vmem:[%s463 + $0x28] sm:$0xff] %v2741
      %2750 = vst [vmem:[%s463 + $0x30] sm:$0xff] %v2742
      %2751 = vst [vmem:[%s463 + $0x38] sm:$0xff] %v2743
      %v2752 = vadd.f32 %v2736, %v2737
      %v2753 = vadd.f32 %v2752, %v2738
      %v2754 = vadd.f32 %v2753, %v2739
      %v2755 = vadd.f32 %v2754, %v2740
      %v2756 = vadd.f32 %v2755, %v2741
      %v2757 = vadd.f32 %v2756, %v2742
      %v2758 = vadd.f32 %v2757, %v2743
      %v2759 = vrot.slane %v2758, 4
      %v2760 = vadd.f32 %v2758, %v2759
      %v2761 = vrot.slane %v2760, 2
      %v2762 = vadd.f32 %v2760, %v2761
      %v2763 = vrot.slane %v2762, 1
      %v2764 = vadd.f32 %v2762, %v2763
      %v2765 = vmul.f32 %v2736, %v2736
      %v2766 = vmul.f32 %v2737, %v2737
      %v2767 = vmul.f32 %v2738, %v2738
      %v2768 = vmul.f32 %v2739, %v2739
      %v2769 = vmul.f32 %v2740, %v2740
      %v2770 = vmul.f32 %v2741, %v2741
      %v2771 = vmul.f32 %v2742, %v2742
      %v2772 = vmul.f32 %v2743, %v2743
      %v2773 = vadd.f32 %v2765, %v2766
      %v2774 = vadd.f32 %v2773, %v2767
      %v2775 = vadd.f32 %v2774, %v2768
      %v2776 = vadd.f32 %v2775, %v2769
      %v2777 = vadd.f32 %v2776, %v2770
      %v2778 = vadd.f32 %v2777, %v2771
      %v2779 = vadd.f32 %v2778, %v2772
      %v2780 = vrot.slane %v2779, 4
      %v2781 = vadd.f32 %v2779, %v2780
      %v2782 = vrot.slane %v2781, 2
      %v2783 = vadd.f32 %v2781, %v2782
      %v2784 = vrot.slane %v2783, 1
      %v2785 = vadd.f32 %v2783, %v2784
      %vm2786 = vcmask 1040384
      %v2787 = vsel %vm2786, %v2764, %v2785
      %2788 = vst [vmem:[%s471] sm:$0x3] %v2787
      %p2789 = scmp.lt.s32.totalorder %s25, 1
      %s2790 = scalar_select %p2789, %s25, 1
      %p2791 = scmp.lt.s32.totalorder %s26, 7
      %s2792 = scalar_select %p2791, %s26, 7
      %s2793 = smul.addr %s2792, 8
      %s2794 = smul.addr %s2790, 64
      %s2795 = sadd.s32 %s2793, %s2794
      %s2796 = smul.addr %s2795, 8
      %s2797 = scalar_lea.vmem %s8, %s2796
      %p2798 = scmp.lt.s32.totalorder %s25, 1
      %s2799 = scalar_select %p2798, %s25, 1
      %p2800 = scmp.lt.s32.totalorder %s26, 7
      %s2801 = scalar_select %p2800, %s26, 7
      %s2802 = smul.addr %s2799, 8
      %s2803 = sadd.s32 %s2801, %s2802
      %s2804 = smul.addr %s2803, 2
      %s2805 = scalar_lea.vmem %s9, %s2804
      // Predicated region
      $region53: #{encoder_forward.5} parent=51 // pred_check
        %p2806 = pneg %p246
      $region54: #{encoder_forward.5} parent=51 // pred_check_branch
        %2808 = sbr.rel (%p2806) target = $region56
      $region55: #{encoder_forward.5} parent=51 // pred_region
        _
      $region56: #{encoder_forward.5} parent=51 // pred_fallthru
        _
      // Predicated region
      $region57: #{encoder_forward.5} parent=51 // pred_check
        %p2809 = pneg %p274
      $region58: #{encoder_forward.5} parent=51 // pred_check_branch
        %2811 = sbr.rel (%p2809) target = $region60
      $region59: #{encoder_forward.5} parent=51 // pred_region
        _
      $region60: #{encoder_forward.5} parent=51 // pred_fallthru
        _
    $region52: #{encoder_forward.5} parent=5 // pred_fallthru
      _
    %p2812 = scmp.le.s32.totalorder 2, %s16
    // Predicated region
    $region61: #{encoder_forward.5} parent=5 // pred_check
      %p2813 = pneg %p2812
    $region62: #{encoder_forward.5} parent=5 // pred_check_branch
      %2815 = sbr.rel (%p2813) target = $region64
    $region63: #{encoder_forward.5} parent=5 // pred_region
      %s2816 = ssub.s32 %s16, 2
      // Predicated region
      $region65: #{encoder_forward.5} parent=63 // pred_check
        %p2817 = pneg %p252
      $region66: #{encoder_forward.5} parent=63 // pred_check_branch
        %2819 = sbr.rel (%p2817) target = $region68
      $region67: #{encoder_forward.5} parent=63 // pred_region
        %p2820 = scmp.lt.s32.totalorder %s27, 1
        %s2821 = scalar_select %p2820, %s27, 1
        %p2822 = scmp.lt.s32.totalorder %s28, 7
        %s2823 = scalar_select %p2822, %s28, 7
        %s2824 = smul.addr %s2823, 8
        %s2825 = smul.addr %s2821, 64
        %s2826 = sadd.s32 %s2824, %s2825
        %s2827 = smul.addr %s2826, 8
        %s2828 = scalar_lea.vmem %s8, %s2827
      $region68: #{encoder_forward.5} parent=63 // pred_fallthru
        _
      // Predicated region
      $region69: #{encoder_forward.5} parent=63 // pred_check
        %p2829 = pneg %p280
      $region70: #{encoder_forward.5} parent=63 // pred_check_branch
        %2831 = sbr.rel (%p2829) target = $region72
      $region71: #{encoder_forward.5} parent=63 // pred_region
        %p2832 = scmp.lt.s32.totalorder %s27, 1
        %s2833 = scalar_select %p2832, %s27, 1
        %p2834 = scmp.lt.s32.totalorder %s28, 7
        %s2835 = scalar_select %p2834, %s28, 7
        %s2836 = smul.addr %s2833, 8
        %s2837 = sadd.s32 %s2835, %s2836
        %s2838 = smul.addr %s2837, 2
        %s2839 = scalar_lea.vmem %s9, %s2838
      $region72: #{encoder_forward.5} parent=63 // pred_fallthru
        _
    $region64: #{encoder_forward.5} parent=5 // pred_fallthru
      _
  $region6: #{encoder_forward.5} parent=0 // loop_footer
    %s20 = sadd.s32 1, %s16
  $region7: #{encoder_forward.5} parent=0 // loop_footer_branch
    %15 = sbr.rel target = $region3
  $region8: #{encoder_forward.5} parent=0 // loop_exit
    _

// kernel: encoder_forward.6
$region0: #{encoder_forward.6}
  #allocation0 [shape = 'u32[]', space=smem, size = 0x4, offset = 0x4, fixed_abs, tag = 'smem constant byte address 0x4 - core index']
  #allocation1 [shape = 'u32[72,128]{1,0:T(1,128)}', space=vmem, size = 0x9000, scoped, tag = 'internal scratch']
  %s0 = inlined_call_operand.vmem [shape: f32[2,10,10,10,128], index: 0, kind: input, shape index: {}, may-alias: {0,1,2}]
  %s1 = inlined_call_operand.vmem [shape: f32[2,10,10,10,128], index: 1, kind: input, shape index: {}, may-alias: {0,1,2}]
  %s2 = inlined_call_operand.vmem [shape: f32[2,10,10,10,128], index: 2, kind: input, shape index: {}, may-alias: {0,1,2}]
  %s3 = inlined_call_operand.vmem [shape: bf16[3,3,3,128,128], index: 3, kind: input, shape index: {}]
  %s4 = inlined_call_operand.vmem [shape: f32[1,128], index: 4, kind: input, shape index: {}]
  %s5 = inlined_call_operand.vmem [shape: f32[1,128], index: 5, kind: input, shape index: {}]
  %s6 = inlined_call_operand.vmem [shape: f32[1,128], index: 6, kind: input, shape index: {}]
  %s7 = inlined_call_operand.vmem [shape: f32[10,10,1], index: 7, kind: input, shape index: {}]
  %s8 = inlined_call_operand.vmem [shape: f32[2,8,8,8,128], index: 8, kind: output, shape index: {0}]
  %s9 = inlined_call_operand.vmem [shape: f32[2,8,2,128], index: 9, kind: output, shape index: {1}]
  %10 = xla_tuple %s8, %s9
  %s11 = sld [smem:[#allocation0]]
  $region73: #{encoder_forward.6} parent=0
    _
  %s13 = ssub.s32 1, %s11
  %s14 = scalar_select 0, %s13, %s11
  loop: start=0, step=1, limit=18
  $region2: #{encoder_forward.6} parent=0 // loop_pre_header
    _
  $region3: #{encoder_forward.6} parent=0 // loop_header
    %s16 = sphi 0, %s20
    %p17 = scmp.ge.s32.totalorder %s16, 18
    %s23 = sphi 0, %s35
    %s24 = sphi 0, %s31
    %s25 = sphi 0, %s23
    %s26 = sphi 0, %s24
    %s27 = sphi 0, %s25
    %s28 = sphi 0, %s26
    %s40 = sphi 0, %s42
    %s43 = sphi 0, %s40
    %s44 = sphi 0, %s43
    %s60 = sphi 0, %s44
    %s70 = sphi 0, %s72
    %s73 = sphi 0, %s70
    %s74 = sphi 0, %s73
    %s90 = sphi 0, %s74
    %s100 = sphi 0, %s102
    %s103 = sphi 0, %s100
    %s104 = sphi 0, %s103
    %s120 = sphi 0, %s104
    %s124 = sphi 0, %s124
    %s126 = sphi 0, %s124
    %s127 = sphi 0, %s126
    %s141 = sphi 0, %s127
    %s145 = sphi 0, %s145
    %s147 = sphi 0, %s145
    %s148 = sphi 0, %s147
    %s162 = sphi 0, %s148
    %s166 = sphi 0, %s166
    %s168 = sphi 0, %s166
    %s169 = sphi 0, %s168
    %s183 = sphi 0, %s169
    %s187 = sphi 0, %s187
    %s189 = sphi 0, %s187
    %s190 = sphi 0, %s189
    %s204 = sphi 0, %s190
    %s208 = sphi 0, %s208
    %s210 = sphi 0, %s208
    %s211 = sphi 0, %s210
    %s225 = sphi 0, %s211
    %s233 = sphi 0, %s235
    %s236 = sphi 0, %s233
    %s237 = sphi 0, %s236
    %s253 = sphi 0, %s237
    %s261 = sphi 0, %s263
    %s264 = sphi 0, %s261
    %s265 = sphi 0, %s264
    %s281 = sphi 0, %s265
  $region4: #{encoder_forward.6} parent=0 // loop_header_branch
    %19 = sbr.rel (%p17) target = $region8
  $region5: #{encoder_forward.6} parent=0 // loop_body
    %s21 = ssub.s32 %s16, 1
    %s22 = ssub.s32 %s16, 2
    %s29 = sadd.s32 1, %s24
    %p30 = scmp.ge.s32.totalorder %s29, 8
    %s31 = scalar_select %p30, 0, %s29
    %s32 = sadd.s32 1, %s23
    %s33 = scalar_select %p30, %s32, %s23
    %p34 = scmp.ge.s32.totalorder %s33, 2
    %s35 = scalar_select %p34, 0, %s33
    %s36 = ssub.s32 %s23, %s35
    %s37 = ssub.s32 %s24, %s31
    %s38 = sor.u32 %s36, %s37
    %p39 = scmp.eq.s32.totalorder %s38, 0
    %s41 = sadd.s32 %s40, 1
    %s42 = scalar_select %p39, %s40, %s41
    %p45 = pneg %p39
    %p46 = scmp.eq.s32.totalorder %s16, 15
    %p47 = por %p45, %p46
    %p48 = scmp.ne.s32.totalorder %s40, %s43
    %p49 = scmp.eq.s32.totalorder %s16, 0
    %p50 = por %p48, %p49
    %p51 = scmp.ne.s32.totalorder %s40, %s43
    %p52 = scmp.eq.s32.totalorder %s21, 15
    %p53 = por %p51, %p52
    %p54 = scmp.ne.s32.totalorder %s43, %s44
    %p55 = scmp.eq.s32.totalorder %s21, 0
    %p56 = por %p54, %p55
    %p57 = scmp.ne.s32.totalorder %s43, %s44
    %p58 = scmp.eq.s32.totalorder %s22, 15
    %p59 = por %p57, %p58
    %p61 = scmp.ne.s32.totalorder %s44, %s60
    %p62 = scmp.eq.s32.totalorder %s22, 0
    %p63 = por %p61, %p62
    %s64 = sadd.s32 %s24, 1
    %s65 = sadd.s32 %s31, 1
    %s66 = ssub.s32 %s23, %s35
    %s67 = ssub.s32 %s64, %s65
    %s68 = sor.u32 %s66, %s67
    %p69 = scmp.eq.s32.totalorder %s68, 0
    %s71 = sadd.s32 %s70, 1
    %s72 = scalar_select %p69, %s70, %s71
    %p75 = pneg %p69
    %p76 = scmp.eq.s32.totalorder %s16, 15
    %p77 = por %p75, %p76
    %p78 = scmp.ne.s32.totalorder %s70, %s73
    %p79 = scmp.eq.s32.totalorder %s16, 0
    %p80 = por %p78, %p79
    %p81 = scmp.ne.s32.totalorder %s70, %s73
    %p82 = scmp.eq.s32.totalorder %s21, 15
    %p83 = por %p81, %p82
    %p84 = scmp.ne.s32.totalorder %s73, %s74
    %p85 = scmp.eq.s32.totalorder %s21, 0
    %p86 = por %p84, %p85
    %p87 = scmp.ne.s32.totalorder %s73, %s74
    %p88 = scmp.eq.s32.totalorder %s22, 15
    %p89 = por %p87, %p88
    %p91 = scmp.ne.s32.totalorder %s74, %s90
    %p92 = scmp.eq.s32.totalorder %s22, 0
    %p93 = por %p91, %p92
    %s94 = sadd.s32 %s24, 2
    %s95 = sadd.s32 %s31, 2
    %s96 = ssub.s32 %s23, %s35
    %s97 = ssub.s32 %s94, %s95
    %s98 = sor.u32 %s96, %s97
    %p99 = scmp.eq.s32.totalorder %s98, 0
    %s101 = sadd.s32 %s100, 1
    %s102 = scalar_select %p99, %s100, %s101
    %p105 = pneg %p99
    %p106 = scmp.eq.s32.totalorder %s16, 15
    %p107 = por %p105, %p106
    %p108 = scmp.ne.s32.totalorder %s100, %s103
    %p109 = scmp.eq.s32.totalorder %s16, 0
    %p110 = por %p108, %p109
    %p111 = scmp.ne.s32.totalorder %s100, %s103
    %p112 = scmp.eq.s32.totalorder %s21, 15
    %p113 = por %p111, %p112
    %p114 = scmp.ne.s32.totalorder %s103, %s104
    %p115 = scmp.eq.s32.totalorder %s21, 0
    %p116 = por %p114, %p115
    %p117 = scmp.ne.s32.totalorder %s103, %s104
    %p118 = scmp.eq.s32.totalorder %s22, 15
    %p119 = por %p117, %p118
    %p121 = scmp.ne.s32.totalorder %s104, %s120
    %p122 = scmp.eq.s32.totalorder %s22, 0
    %p123 = por %p121, %p122
    %s125 = sadd.s32 %s124, 1
    %p128 = scmp.eq.s32.totalorder %s16, 15
    %p129 = scmp.ne.s32.totalorder %s124, %s126
    %p130 = scmp.eq.s32.totalorder %s16, 0
    %p131 = por %p129, %p130
    %p132 = scmp.ne.s32.totalorder %s124, %s126
    %p133 = scmp.eq.s32.totalorder %s21, 15
    %p134 = por %p132, %p133
    %p135 = scmp.ne.s32.totalorder %s126, %s127
    %p136 = scmp.eq.s32.totalorder %s21, 0
    %p137 = por %p135, %p136
    %p138 = scmp.ne.s32.totalorder %s126, %s127
    %p139 = scmp.eq.s32.totalorder %s22, 15
    %p140 = por %p138, %p139
    %p142 = scmp.ne.s32.totalorder %s127, %s141
    %p143 = scmp.eq.s32.totalorder %s22, 0
    %p144 = por %p142, %p143
    %s146 = sadd.s32 %s145, 1
    %p149 = scmp.eq.s32.totalorder %s16, 15
    %p150 = scmp.ne.s32.totalorder %s145, %s147
    %p151 = scmp.eq.s32.totalorder %s16, 0
    %p152 = por %p150, %p151
    %p153 = scmp.ne.s32.totalorder %s145, %s147
    %p154 = scmp.eq.s32.totalorder %s21, 15
    %p155 = por %p153, %p154
    %p156 = scmp.ne.s32.totalorder %s147, %s148
    %p157 = scmp.eq.s32.totalorder %s21, 0
    %p158 = por %p156, %p157
    %p159 = scmp.ne.s32.totalorder %s147, %s148
    %p160 = scmp.eq.s32.totalorder %s22, 15
    %p161 = por %p159, %p160
    %p163 = scmp.ne.s32.totalorder %s148, %s162
    %p164 = scmp.eq.s32.totalorder %s22, 0
    %p165 = por %p163, %p164
    %s167 = sadd.s32 %s166, 1
    %p170 = scmp.eq.s32.totalorder %s16, 15
    %p171 = scmp.ne.s32.totalorder %s166, %s168
    %p172 = scmp.eq.s32.totalorder %s16, 0
    %p173 = por %p171, %p172
    %p174 = scmp.ne.s32.totalorder %s166, %s168
    %p175 = scmp.eq.s32.totalorder %s21, 15
    %p176 = por %p174, %p175
    %p177 = scmp.ne.s32.totalorder %s168, %s169
    %p178 = scmp.eq.s32.totalorder %s21, 0
    %p179 = por %p177, %p178
    %p180 = scmp.ne.s32.totalorder %s168, %s169
    %p181 = scmp.eq.s32.totalorder %s22, 15
    %p182 = por %p180, %p181
    %p184 = scmp.ne.s32.totalorder %s169, %s183
    %p185 = scmp.eq.s32.totalorder %s22, 0
    %p186 = por %p184, %p185
    %s188 = sadd.s32 %s187, 1
    %p191 = scmp.eq.s32.totalorder %s16, 15
    %p192 = scmp.ne.s32.totalorder %s187, %s189
    %p193 = scmp.eq.s32.totalorder %s16, 0
    %p194 = por %p192, %p193
    %p195 = scmp.ne.s32.totalorder %s187, %s189
    %p196 = scmp.eq.s32.totalorder %s21, 15
    %p197 = por %p195, %p196
    %p198 = scmp.ne.s32.totalorder %s189, %s190
    %p199 = scmp.eq.s32.totalorder %s21, 0
    %p200 = por %p198, %p199
    %p201 = scmp.ne.s32.totalorder %s189, %s190
    %p202 = scmp.eq.s32.totalorder %s22, 15
    %p203 = por %p201, %p202
    %p205 = scmp.ne.s32.totalorder %s190, %s204
    %p206 = scmp.eq.s32.totalorder %s22, 0
    %p207 = por %p205, %p206
    %s209 = sadd.s32 %s208, 1
    %p212 = scmp.eq.s32.totalorder %s16, 15
    %p213 = scmp.ne.s32.totalorder %s208, %s210
    %p214 = scmp.eq.s32.totalorder %s16, 0
    %p215 = por %p213, %p214
    %p216 = scmp.ne.s32.totalorder %s208, %s210
    %p217 = scmp.eq.s32.totalorder %s21, 15
    %p218 = por %p216, %p217
    %p219 = scmp.ne.s32.totalorder %s210, %s211
    %p220 = scmp.eq.s32.totalorder %s21, 0
    %p221 = por %p219, %p220
    %p222 = scmp.ne.s32.totalorder %s210, %s211
    %p223 = scmp.eq.s32.totalorder %s22, 15
    %p224 = por %p222, %p223
    %p226 = scmp.ne.s32.totalorder %s211, %s225
    %p227 = scmp.eq.s32.totalorder %s22, 0
    %p228 = por %p226, %p227
    %s229 = ssub.s32 %s23, %s35
    %s230 = ssub.s32 %s24, %s31
    %s231 = sor.u32 %s229, %s230
    %p232 = scmp.eq.s32.totalorder %s231, 0
    %s234 = sadd.s32 %s233, 1
    %s235 = scalar_select %p232, %s233, %s234
    %p238 = pneg %p232
    %p239 = scmp.eq.s32.totalorder %s16, 15
    %p240 = por %p238, %p239
    %p241 = scmp.ne.s32.totalorder %s233, %s236
    %p242 = scmp.eq.s32.totalorder %s16, 0
    %p243 = por %p241, %p242
    %p244 = scmp.ne.s32.totalorder %s233, %s236
    %p245 = scmp.eq.s32.totalorder %s21, 15
    %p246 = por %p244, %p245
    %p247 = scmp.ne.s32.totalorder %s236, %s237
    %p248 = scmp.eq.s32.totalorder %s21, 0
    %p249 = por %p247, %p248
    %p250 = scmp.ne.s32.totalorder %s236, %s237
    %p251 = scmp.eq.s32.totalorder %s22, 15
    %p252 = por %p250, %p251
    %p254 = scmp.ne.s32.totalorder %s237, %s253
    %p255 = scmp.eq.s32.totalorder %s22, 0
    %p256 = por %p254, %p255
    %s257 = ssub.s32 %s23, %s35
    %s258 = ssub.s32 %s24, %s31
    %s259 = sor.u32 %s257, %s258
    %p260 = scmp.eq.s32.totalorder %s259, 0
    %s262 = sadd.s32 %s261, 1
    %s263 = scalar_select %p260, %s261, %s262
    %p266 = pneg %p260
    %p267 = scmp.eq.s32.totalorder %s16, 15
    %p268 = por %p266, %p267
    %p269 = scmp.ne.s32.totalorder %s261, %s264
    %p270 = scmp.eq.s32.totalorder %s16, 0
    %p271 = por %p269, %p270
    %p272 = scmp.ne.s32.totalorder %s261, %s264
    %p273 = scmp.eq.s32.totalorder %s21, 15
    %p274 = por %p272, %p273
    %p275 = scmp.ne.s32.totalorder %s264, %s265
    %p276 = scmp.eq.s32.totalorder %s21, 0
    %p277 = por %p275, %p276
    %p278 = scmp.ne.s32.totalorder %s264, %s265
    %p279 = scmp.eq.s32.totalorder %s22, 15
    %p280 = por %p278, %p279
    %p282 = scmp.ne.s32.totalorder %s265, %s281
    %p283 = scmp.eq.s32.totalorder %s22, 0
    %p284 = por %p282, %p283
    %p285 = scmp.le.s32.totalorder 1, %s16
    %p286 = scmp.lt.s32.totalorder %s16, 17
    %p287 = pnand %p285, %p286
    %p288 = pneg %p287
    // Predicated region
    $region9: #{encoder_forward.6} parent=5 // pred_check
      _
    $region10: #{encoder_forward.6} parent=5 // pred_check_branch
      %290 = sbr.rel (%p287) target = $region12
    $region11: #{encoder_forward.6} parent=5 // pred_region
      %s291 = ssub.s32 %s16, 1
      // Predicated region
      $region13: #{encoder_forward.6} parent=11 // pred_check
        %p292 = pneg %p137
      $region14: #{encoder_forward.6} parent=11 // pred_check_branch
        %294 = sbr.rel (%p292) target = $region16
      $region15: #{encoder_forward.6} parent=11 // pred_region
        _
      $region16: #{encoder_forward.6} parent=11 // pred_fallthru
        _
      // Predicated region
      $region17: #{encoder_forward.6} parent=11 // pred_check
        %p295 = pneg %p158
      $region18: #{encoder_forward.6} parent=11 // pred_check_branch
        %297 = sbr.rel (%p295) target = $region20
      $region19: #{encoder_forward.6} parent=11 // pred_region
        _
      $region20: #{encoder_forward.6} parent=11 // pred_fallthru
        _
      // Predicated region
      $region21: #{encoder_forward.6} parent=11 // pred_check
        %p298 = pneg %p179
      $region22: #{encoder_forward.6} parent=11 // pred_check_branch
        %300 = sbr.rel (%p298) target = $region24
      $region23: #{encoder_forward.6} parent=11 // pred_region
        _
      $region24: #{encoder_forward.6} parent=11 // pred_fallthru
        _
      // Predicated region
      $region25: #{encoder_forward.6} parent=11 // pred_check
        %p301 = pneg %p200
      $region26: #{encoder_forward.6} parent=11 // pred_check_branch
        %303 = sbr.rel (%p301) target = $region28
      $region27: #{encoder_forward.6} parent=11 // pred_region
        _
      $region28: #{encoder_forward.6} parent=11 // pred_fallthru
        _
      // Predicated region
      $region29: #{encoder_forward.6} parent=11 // pred_check
        %p304 = pneg %p221
      $region30: #{encoder_forward.6} parent=11 // pred_check_branch
        %306 = sbr.rel (%p304) target = $region32
      $region31: #{encoder_forward.6} parent=11 // pred_region
        _
      $region32: #{encoder_forward.6} parent=11 // pred_fallthru
        _
    $region12: #{encoder_forward.6} parent=5 // pred_fallthru
      _
    %p307 = scmp.lt.s32.totalorder %s16, 16
    // Predicated region
    $region33: #{encoder_forward.6} parent=5 // pred_check
      %p308 = pneg %p307
    $region34: #{encoder_forward.6} parent=5 // pred_check_branch
      %310 = sbr.rel (%p308) target = $region36
    $region35: #{encoder_forward.6} parent=5 // pred_region
      // Predicated region
      $region37: #{encoder_forward.6} parent=35 // pred_check
        %p311 = pneg %p50
      $region38: #{encoder_forward.6} parent=35 // pred_check_branch
        %313 = sbr.rel (%p311) target = $region40
      $region39: #{encoder_forward.6} parent=35 // pred_region
        %p314 = scmp.lt.s32.totalorder %s23, 1
        %s315 = scalar_select %p314, %s23, 1
        %p316 = scmp.lt.s32.totalorder %s24, 9
        %s317 = scalar_select %p316, %s24, 9
        %s318 = smul.addr %s317, 20
        %s319 = smul.addr %s315, 200
        %s320 = sadd.s32 %s318, %s319
        %s321 = smul.addr %s320, 8
        %s322 = scalar_lea.vmem %s0, %s321
      $region40: #{encoder_forward.6} parent=35 // pred_fallthru
        _
      // Predicated region
      $region41: #{encoder_forward.6} parent=35 // pred_check
        %p323 = pneg %p80
      $region42: #{encoder_forward.6} parent=35 // pred_check_branch
        %325 = sbr.rel (%p323) target = $region44
      $region43: #{encoder_forward.6} parent=35 // pred_region
        %s326 = sadd.s32 %s24, 1
        %p327 = scmp.lt.s32.totalorder %s23, 1
        %s328 = scalar_select %p327, %s23, 1
        %p329 = scmp.lt.s32.totalorder %s326, 9
        %s330 = scalar_select %p329, %s326, 9
        %s331 = smul.addr %s330, 20
        %s332 = smul.addr %s328, 200
        %s333 = sadd.s32 %s331, %s332
        %s334 = smul.addr %s333, 8
        %s335 = scalar_lea.vmem %s1, %s334
        %s336 = sadd.s32 %s24, 1
      $region44: #{encoder_forward.6} parent=35 // pred_fallthru
        _
      // Predicated region
      $region45: #{encoder_forward.6} parent=35 // pred_check
        %p337 = pneg %p110
      $region46: #{encoder_forward.6} parent=35 // pred_check_branch
        %339 = sbr.rel (%p337) target = $region48
      $region47: #{encoder_forward.6} parent=35 // pred_region
        %s340 = sadd.s32 %s24, 2
        %p341 = scmp.lt.s32.totalorder %s23, 1
        %s342 = scalar_select %p341, %s23, 1
        %p343 = scmp.lt.s32.totalorder %s340, 9
        %s344 = scalar_select %p343, %s340, 9
        %s345 = smul.addr %s344, 20
        %s346 = smul.addr %s342, 200
        %s347 = sadd.s32 %s345, %s346
        %s348 = smul.addr %s347, 8
        %s349 = scalar_lea.vmem %s2, %s348
        %s350 = sadd.s32 %s24, 2
      $region48: #{encoder_forward.6} parent=35 // pred_fallthru
        _
    $region36: #{encoder_forward.6} parent=5 // pred_fallthru
      _
    %p351 = scmp.le.s32.totalorder 1, %s16
    %p352 = scmp.lt.s32.totalorder %s16, 17
    %p353 = pnand %p351, %p352
    %p354 = pneg %p353
    // Predicated region
    $region49: #{encoder_forward.6} parent=5 // pred_check
      _
    $region50: #{encoder_forward.6} parent=5 // pred_check_branch
      %356 = sbr.rel (%p353) target = $region52
    $region51: #{encoder_forward.6} parent=5 // pred_region
      %s357 = ssub.s32 %s16, 1
      %p358 = scmp.lt.s32.totalorder %s25, 1
      %s359 = scalar_select %p358, %s25, 1
      %p360 = scmp.lt.s32.totalorder %s26, 9
      %s361 = scalar_select %p360, %s26, 9
      %s362 = smul.addr %s361, 20
      %s363 = smul.addr %s359, 200
      %s364 = sadd.s32 %s362, %s363
      %s365 = smul.addr %s364, 8
      %s366 = scalar_lea.vmem %s0, %s365
      %p367 = pneg %p56
      %p368 = pneg %p53
      %s369 = sadd.s32 %s26, 1
      %p370 = scmp.lt.s32.totalorder %s25, 1
      %s371 = scalar_select %p370, %s25, 1
      %p372 = scmp.lt.s32.totalorder %s369, 9
      %s373 = scalar_select %p372, %s369, 9
      %s374 = smul.addr %s373, 20
      %s375 = smul.addr %s371, 200
      %s376 = sadd.s32 %s374, %s375
      %s377 = smul.addr %s376, 8
      %s378 = scalar_lea.vmem %s1, %s377
      %p379 = pneg %p86
      %p380 = pneg %p83
      %s381 = sadd.s32 %s26, 2
      %p382 = scmp.lt.s32.totalorder %s25, 1
      %s383 = scalar_select %p382, %s25, 1
      %p384 = scmp.lt.s32.totalorder %s381, 9
      %s385 = scalar_select %p384, %s381, 9
      %s386 = smul.addr %s385, 20
      %s387 = smul.addr %s383, 200
      %s388 = sadd.s32 %s386, %s387
      %s389 = smul.addr %s388, 8
      %s390 = scalar_lea.vmem %s2, %s389
      %p391 = pneg %p116
      %p392 = pneg %p113
      %p393 = pneg %p137
      %p394 = pneg %p134
      %p395 = pneg %p158
      %p396 = pneg %p155
      %p397 = pneg %p179
      %p398 = pneg %p176
      %p399 = pneg %p200
      %p400 = pneg %p197
      %p401 = pneg %p221
      %p402 = pneg %p218
      %p403 = pneg %p249
      %p404 = pneg %p246
      %p405 = scmp.lt.s32.totalorder %s25, 1
      %s406 = scalar_select %p405, %s25, 1
      %p407 = scmp.lt.s32.totalorder %s26, 7
      %s408 = scalar_select %p407, %s26, 7
      %s409 = smul.addr %s408, 8
      %s410 = smul.addr %s406, 64
      %s411 = sadd.s32 %s409, %s410
      %s412 = smul.addr %s411, 8
      %s413 = scalar_lea.vmem %s8, %s412
      %p414 = pneg %p277
      %p415 = pneg %p274
      %p416 = scmp.lt.s32.totalorder %s25, 1
      %s417 = scalar_select %p416, %s25, 1
      %p418 = scmp.lt.s32.totalorder %s26, 7
      %s419 = scalar_select %p418, %s26, 7
      %s420 = smul.addr %s417, 8
      %s421 = sadd.s32 %s419, %s420
      %s422 = smul.addr %s421, 2
      %s423 = scalar_lea.vmem %s9, %s422
      %p424 = scmp.lt.s32.totalorder %s25, 1
      %s425 = scalar_select %p424, %s25, 1
      %p426 = scmp.lt.s32.totalorder %s26, 9
      %s427 = scalar_select %p426, %s26, 9
      %s428 = smul.addr %s427, 20
      %s429 = smul.addr %s425, 200
      %s430 = sadd.s32 %s428, %s429
      %s431 = smul.addr %s430, 8
      %s432 = scalar_lea.vmem %s0, %s431
      %s433 = sadd.s32 %s26, 1
      %p434 = scmp.lt.s32.totalorder %s25, 1
      %s435 = scalar_select %p434, %s25, 1
      %p436 = scmp.lt.s32.totalorder %s433, 9
      %s437 = scalar_select %p436, %s433, 9
      %s438 = smul.addr %s437, 20
      %s439 = smul.addr %s435, 200
      %s440 = sadd.s32 %s438, %s439
      %s441 = smul.addr %s440, 8
      %s442 = scalar_lea.vmem %s1, %s441
      %s443 = sadd.s32 %s26, 1
      %s444 = sadd.s32 %s26, 2
      %p445 = scmp.lt.s32.totalorder %s25, 1
      %s446 = scalar_select %p445, %s25, 1
      %p447 = scmp.lt.s32.totalorder %s444, 9
      %s448 = scalar_select %p447, %s444, 9
      %s449 = smul.addr %s448, 20
      %s450 = smul.addr %s446, 200
      %s451 = sadd.s32 %s449, %s450
      %s452 = smul.addr %s451, 8
      %s453 = scalar_lea.vmem %s2, %s452
      %s454 = sadd.s32 %s26, 2
      %p455 = scmp.lt.s32.totalorder %s25, 1
      %s456 = scalar_select %p455, %s25, 1
      %p457 = scmp.lt.s32.totalorder %s26, 7
      %s458 = scalar_select %p457, %s26, 7
      %s459 = smul.addr %s458, 8
      %s460 = smul.addr %s456, 64
      %s461 = sadd.s32 %s459, %s460
      %s462 = smul.addr %s461, 8
      %s463 = scalar_lea.vmem %s8, %s462
      %p464 = scmp.lt.s32.totalorder %s25, 1
      %s465 = scalar_select %p464, %s25, 1
      %p466 = scmp.lt.s32.totalorder %s26, 7
      %s467 = scalar_select %p466, %s26, 7
      %s468 = smul.addr %s465, 8
      %s469 = sadd.s32 %s467, %s468
      %s470 = smul.addr %s469, 2
      %s471 = scalar_lea.vmem %s9, %s470
      %v472 = vld [vmem:[%s432] sm:$0xff]
      %v473 = vld [vmem:[%s432 + $0x8] sm:$0x3]
      %v474 = vld [vmem:[%s432 + $0x10] sm:$0xff]
      %v475 = vld [vmem:[%s432 + $0x18] sm:$0x3]
      %v476 = vld [vmem:[%s432 + $0x20] sm:$0xff]
      %v477 = vld [vmem:[%s432 + $0x28] sm:$0x3]
      %v478 = vld [vmem:[%s432 + $0x30] sm:$0xff]
      %v479 = vld [vmem:[%s432 + $0x38] sm:$0x3]
      %v480 = vld [vmem:[%s432 + $0x40] sm:$0xff]
      %v481 = vld [vmem:[%s432 + $0x48] sm:$0x3]
      %v482 = vld [vmem:[%s432 + $0x50] sm:$0xff]
      %v483 = vld [vmem:[%s432 + $0x58] sm:$0x3]
      %v484 = vld [vmem:[%s432 + $0x60] sm:$0xff]
      %v485 = vld [vmem:[%s432 + $0x68] sm:$0x3]
      %v486 = vld [vmem:[%s432 + $0x70] sm:$0xff]
      %v487 = vld [vmem:[%s432 + $0x78] sm:$0x3]
      %v488 = vld [vmem:[%s432 + $0x80] sm:$0xff]
      %v489 = vld [vmem:[%s432 + $0x88] sm:$0x3]
      %v490 = vld [vmem:[%s432 + $0x90] sm:$0xff]
      %v491 = vld [vmem:[%s432 + $0x98] sm:$0x3]
      %v492 = vld [vmem:[%s5] sm:$0x1]
      %v494 = vperm.slane %v492, 0
      %v496 = vmul.f32 %v472, %v494
      %v497 = vmul.f32 %v473, %v494
      %v498 = vmul.f32 %v474, %v494
      %v499 = vmul.f32 %v475, %v494
      %v500 = vmul.f32 %v476, %v494
      %v501 = vmul.f32 %v477, %v494
      %v502 = vmul.f32 %v478, %v494
      %v503 = vmul.f32 %v479, %v494
      %v504 = vmul.f32 %v480, %v494
      %v505 = vmul.f32 %v481, %v494
      %v506 = vmul.f32 %v482, %v494
      %v507 = vmul.f32 %v483, %v494
      %v508 = vmul.f32 %v484, %v494
      %v509 = vmul.f32 %v485, %v494
      %v510 = vmul.f32 %v486, %v494
      %v511 = vmul.f32 %v487, %v494
      %v512 = vmul.f32 %v488, %v494
      %v513 = vmul.f32 %v489, %v494
      %v514 = vmul.f32 %v490, %v494
      %v515 = vmul.f32 %v491, %v494
      %v516 = vld [vmem:[%s6] sm:$0x1]
      %v518 = vperm.slane %v516, 0
      %v520 = vadd.f32 %v496, %v518
      %v521 = vadd.f32 %v497, %v518
      %v522 = vadd.f32 %v498, %v518
      %v523 = vadd.f32 %v499, %v518
      %v524 = vadd.f32 %v500, %v518
      %v525 = vadd.f32 %v501, %v518
      %v526 = vadd.f32 %v502, %v518
      %v527 = vadd.f32 %v503, %v518
      %v528 = vadd.f32 %v504, %v518
      %v529 = vadd.f32 %v505, %v518
      %v530 = vadd.f32 %v506, %v518
      %v531 = vadd.f32 %v507, %v518
      %v532 = vadd.f32 %v508, %v518
      %v533 = vadd.f32 %v509, %v518
      %v534 = vadd.f32 %v510, %v518
      %v535 = vadd.f32 %v511, %v518
      %v536 = vadd.f32 %v512, %v518
      %v537 = vadd.f32 %v513, %v518
      %v538 = vadd.f32 %v514, %v518
      %v539 = vadd.f32 %v515, %v518
      %v540 = vmax.f32 %v520, 0.0
      %v541 = vmax.f32 %v521, 0.0
      %v542 = vmax.f32 %v522, 0.0
      %v543 = vmax.f32 %v523, 0.0
      %v544 = vmax.f32 %v524, 0.0
      %v545 = vmax.f32 %v525, 0.0
      %v546 = vmax.f32 %v526, 0.0
      %v547 = vmax.f32 %v527, 0.0
      %v548 = vmax.f32 %v528, 0.0
      %v549 = vmax.f32 %v529, 0.0
      %v550 = vmax.f32 %v530, 0.0
      %v551 = vmax.f32 %v531, 0.0
      %v552 = vmax.f32 %v532, 0.0
      %v553 = vmax.f32 %v533, 0.0
      %v554 = vmax.f32 %v534, 0.0
      %v555 = vmax.f32 %v535, 0.0
      %v556 = vmax.f32 %v536, 0.0
      %v557 = vmax.f32 %v537, 0.0
      %v558 = vmax.f32 %v538, 0.0
      %v559 = vmax.f32 %v539, 0.0
      %v560 = vld [vmem:[%s7] sm:$0xff]
      %v561 = vld [vmem:[%s7 + $0x8] sm:$0x3]
      %v562 = vld [vmem:[%s7 + $0x10] sm:$0xff]
      %v563 = vld [vmem:[%s7 + $0x18] sm:$0x3]
      %v564 = vld [vmem:[%s7 + $0x20] sm:$0xff]
      %v565 = vld [vmem:[%s7 + $0x28] sm:$0x3]
      %v566 = vld [vmem:[%s7 + $0x30] sm:$0xff]
      %v567 = vld [vmem:[%s7 + $0x38] sm:$0x3]
      %v568 = vld [vmem:[%s7 + $0x40] sm:$0xff]
      %v569 = vld [vmem:[%s7 + $0x48] sm:$0x3]
      %v570 = vld [vmem:[%s7 + $0x50] sm:$0xff]
      %v571 = vld [vmem:[%s7 + $0x58] sm:$0x3]
      %v572 = vld [vmem:[%s7 + $0x60] sm:$0xff]
      %v573 = vld [vmem:[%s7 + $0x68] sm:$0x3]
      %v574 = vld [vmem:[%s7 + $0x70] sm:$0xff]
      %v575 = vld [vmem:[%s7 + $0x78] sm:$0x3]
      %v576 = vld [vmem:[%s7 + $0x80] sm:$0xff]
      %v577 = vld [vmem:[%s7 + $0x88] sm:$0x3]
      %v578 = vld [vmem:[%s7 + $0x90] sm:$0xff]
      %v579 = vld [vmem:[%s7 + $0x98] sm:$0x3]
      %581 = vset.pattern.permute.xlu0 0
      %582 = vperm.xlu0 %581, %v560
      %v583 = vpop.permute.xlu0 %582
      %586 = vset.pattern.permute.xlu0 0
      %587 = vperm.xlu0 %586, %v561
      %v588 = vpop.permute.xlu0 %587
      %591 = vset.pattern.permute.xlu0 0
      %592 = vperm.xlu0 %591, %v562
      %v593 = vpop.permute.xlu0 %592
      %596 = vset.pattern.permute.xlu0 0
      %597 = vperm.xlu0 %596, %v563
      %v598 = vpop.permute.xlu0 %597
      %601 = vset.pattern.permute.xlu0 0
      %602 = vperm.xlu0 %601, %v564
      %v603 = vpop.permute.xlu0 %602
      %606 = vset.pattern.permute.xlu0 0
      %607 = vperm.xlu0 %606, %v565
      %v608 = vpop.permute.xlu0 %607
      %611 = vset.pattern.permute.xlu0 0
      %612 = vperm.xlu0 %611, %v566
      %v613 = vpop.permute.xlu0 %612
      %616 = vset.pattern.permute.xlu0 0
      %617 = vperm.xlu0 %616, %v567
      %v618 = vpop.permute.xlu0 %617
      %621 = vset.pattern.permute.xlu0 0
      %622 = vperm.xlu0 %621, %v568
      %v623 = vpop.permute.xlu0 %622
      %626 = vset.pattern.permute.xlu0 0
      %627 = vperm.xlu0 %626, %v569
      %v628 = vpop.permute.xlu0 %627
      %631 = vset.pattern.permute.xlu0 0
      %632 = vperm.xlu0 %631, %v570
      %v633 = vpop.permute.xlu0 %632
      %636 = vset.pattern.permute.xlu0 0
      %637 = vperm.xlu0 %636, %v571
      %v638 = vpop.permute.xlu0 %637
      %641 = vset.pattern.permute.xlu0 0
      %642 = vperm.xlu0 %641, %v572
      %v643 = vpop.permute.xlu0 %642
      %646 = vset.pattern.permute.xlu0 0
      %647 = vperm.xlu0 %646, %v573
      %v648 = vpop.permute.xlu0 %647
      %651 = vset.pattern.permute.xlu0 0
      %652 = vperm.xlu0 %651, %v574
      %v653 = vpop.permute.xlu0 %652
      %656 = vset.pattern.permute.xlu0 0
      %657 = vperm.xlu0 %656, %v575
      %v658 = vpop.permute.xlu0 %657
      %661 = vset.pattern.permute.xlu0 0
      %662 = vperm.xlu0 %661, %v576
      %v663 = vpop.permute.xlu0 %662
      %666 = vset.pattern.permute.xlu0 0
      %667 = vperm.xlu0 %666, %v577
      %v668 = vpop.permute.xlu0 %667
      %671 = vset.pattern.permute.xlu0 0
      %672 = vperm.xlu0 %671, %v578
      %v673 = vpop.permute.xlu0 %672
      %676 = vset.pattern.permute.xlu0 0
      %677 = vperm.xlu0 %676, %v579
      %v678 = vpop.permute.xlu0 %677
      %v680 = vmul.f32 %v540, %v583
      %v681 = vmul.f32 %v541, %v588
      %v682 = vmul.f32 %v542, %v593
      %v683 = vmul.f32 %v543, %v598
      %v684 = vmul.f32 %v544, %v603
      %v685 = vmul.f32 %v545, %v608
      %v686 = vmul.f32 %v546, %v613
      %v687 = vmul.f32 %v547, %v618
      %v688 = vmul.f32 %v548, %v623
      %v689 = vmul.f32 %v549, %v628
      %v690 = vmul.f32 %v550, %v633
      %v691 = vmul.f32 %v551, %v638
      %v692 = vmul.f32 %v552, %v643
      %v693 = vmul.f32 %v553, %v648
      %v694 = vmul.f32 %v554, %v653
      %v695 = vmul.f32 %v555, %v658
      %v696 = vmul.f32 %v556, %v663
      %v697 = vmul.f32 %v557, %v668
      %v698 = vmul.f32 %v558, %v673
      %v699 = vmul.f32 %v559, %v678
      %p700 = scmp.ge.s32.totalorder %s26, 1
      %p701 = scmp.le.s32.totalorder %s26, 8
      %p702 = pnand %p700, %p701
      %p703 = pneg %p702
      %s704 = scalar_select %p703, 1.0, 0.0
      %v705 = vstv %s704
      %v706 = vmul.f32 %v680, %v705
      %v707 = vmul.f32 %v681, %v705
      %v708 = vmul.f32 %v682, %v705
      %v709 = vmul.f32 %v683, %v705
      %v710 = vmul.f32 %v684, %v705
      %v711 = vmul.f32 %v685, %v705
      %v712 = vmul.f32 %v686, %v705
      %v713 = vmul.f32 %v687, %v705
      %v714 = vmul.f32 %v688, %v705
      %v715 = vmul.f32 %v689, %v705
      %v716 = vmul.f32 %v690, %v705
      %v717 = vmul.f32 %v691, %v705
      %v718 = vmul.f32 %v692, %v705
      %v719 = vmul.f32 %v693, %v705
      %v720 = vmul.f32 %v694, %v705
      %v721 = vmul.f32 %v695, %v705
      %v722 = vmul.f32 %v696, %v705
      %v723 = vmul.f32 %v697, %v705
      %v724 = vmul.f32 %v698, %v705
      %v725 = vmul.f32 %v699, %v705
      %v726 = vpack.c.bf16 %v706, %v706
      %v727 = vpack.c.bf16 %v707, %v707
      %v728 = vpack.c.bf16 %v708, %v708
      %v729 = vpack.c.bf16 %v709, %v709
      %v730 = vpack.c.bf16 %v710, %v710
      %v731 = vpack.c.bf16 %v711, %v711
      %v732 = vpack.c.bf16 %v712, %v712
      %v733 = vpack.c.bf16 %v713, %v713
      %v734 = vpack.c.bf16 %v714, %v714
      %v735 = vpack.c.bf16 %v715, %v715
      %v736 = vpack.c.bf16 %v716, %v716
      %v737 = vpack.c.bf16 %v717, %v717
      %v738 = vpack.c.bf16 %v718, %v718
      %v739 = vpack.c.bf16 %v719, %v719
      %v740 = vpack.c.bf16 %v720, %v720
      %v741 = vpack.c.bf16 %v721, %v721
      %v742 = vpack.c.bf16 %v722, %v722
      %v743 = vpack.c.bf16 %v723, %v723
      %v744 = vpack.c.bf16 %v724, %v724
      %v745 = vpack.c.bf16 %v725, %v725
      %v746 = vld [vmem:[%s3] sm:$0xf]
      %v747 = vld [vmem:[%s3 + $0x4] sm:$0xf]
      %v748 = vld [vmem:[%s3 + $0x8] sm:$0xf]
      %v749 = vld [vmem:[%s3 + $0xc] sm:$0xf]
      %v750 = vld [vmem:[%s3 + $0x10] sm:$0xf]
      %v751 = vld [vmem:[%s3 + $0x14] sm:$0xf]
      %v752 = vld [vmem:[%s3 + $0x18] sm:$0xf]
      %v753 = vld [vmem:[%s3 + $0x1c] sm:$0xf]
      %v754 = vld [vmem:[%s3 + $0x20] sm:$0xf]
      %v755 = vld [vmem:[%s3 + $0x24] sm:$0xf]
      %v756 = vld [vmem:[%s3 + $0x28] sm:$0xf]
      %v757 = vld [vmem:[%s3 + $0x2c] sm:$0xf]
      %v758 = vld [vmem:[%s3 + $0x30] sm:$0xf]
      %v759 = vld [vmem:[%s3 + $0x34] sm:$0xf]
      %v760 = vld [vmem:[%s3 + $0x38] sm:$0xf]
      %v761 = vld [vmem:[%s3 + $0x3c] sm:$0xf]
      %vm762 = vsmask.f32 3328
      %vm763 = vsmask.f32 7440
      %vm764 = vmor %vm762, %vm763
      %v766 = vshrl.u32 %v726, 16
      %v768 = vrot.slane %v766, 4
      %v769 = vshll.u32 %v726, 16
      %v771 = vrot.slane %v769, 5
      %v772 = vor.u32 %v768, %v771
      %v773 = vrot.slane %v772, 4
      %v775 = vshll.u32 %v727, 16
      %v777 = vrot.slane %v775, 5
      %v778 = vsel %vm764, %v773, %v777
      %v780 = vshrl.u32 %v728, 16
      %v782 = vrot.slane %v780, 4
      %v783 = vshll.u32 %v728, 16
      %v785 = vrot.slane %v783, 5
      %v786 = vor.u32 %v782, %v785
      %v787 = vrot.slane %v786, 4
      %v789 = vshll.u32 %v729, 16
      %v791 = vrot.slane %v789, 5
      %v792 = vsel %vm764, %v787, %v791
      %v794 = vshrl.u32 %v730, 16
      %v796 = vrot.slane %v794, 4
      %v797 = vshll.u32 %v730, 16
      %v799 = vrot.slane %v797, 5
      %v800 = vor.u32 %v796, %v799
      %v801 = vrot.slane %v800, 4
      %v803 = vshll.u32 %v731, 16
      %v805 = vrot.slane %v803, 5
      %v806 = vsel %vm764, %v801, %v805
      %v808 = vshrl.u32 %v732, 16
      %v810 = vrot.slane %v808, 4
      %v811 = vshll.u32 %v732, 16
      %v813 = vrot.slane %v811, 5
      %v814 = vor.u32 %v810, %v813
      %v815 = vrot.slane %v814, 4
      %v817 = vshll.u32 %v733, 16
      %v819 = vrot.slane %v817, 5
      %v820 = vsel %vm764, %v815, %v819
      %v822 = vshrl.u32 %v734, 16
      %v824 = vrot.slane %v822, 4
      %v825 = vshll.u32 %v734, 16
      %v827 = vrot.slane %v825, 5
      %v828 = vor.u32 %v824, %v827
      %v829 = vrot.slane %v828, 4
      %v831 = vshll.u32 %v735, 16
      %v833 = vrot.slane %v831, 5
      %v834 = vsel %vm764, %v829, %v833
      %v836 = vshrl.u32 %v736, 16
      %v838 = vrot.slane %v836, 4
      %v839 = vshll.u32 %v736, 16
      %v841 = vrot.slane %v839, 5
      %v842 = vor.u32 %v838, %v841
      %v843 = vrot.slane %v842, 4
      %v845 = vshll.u32 %v737, 16
      %v847 = vrot.slane %v845, 5
      %v848 = vsel %vm764, %v843, %v847
      %v850 = vshrl.u32 %v738, 16
      %v852 = vrot.slane %v850, 4
      %v853 = vshll.u32 %v738, 16
      %v855 = vrot.slane %v853, 5
      %v856 = vor.u32 %v852, %v855
      %v857 = vrot.slane %v856, 4
      %v859 = vshll.u32 %v739, 16
      %v861 = vrot.slane %v859, 5
      %v862 = vsel %vm764, %v857, %v861
      %v864 = vshrl.u32 %v740, 16
      %v866 = vrot.slane %v864, 4
      %v867 = vshll.u32 %v740, 16
      %v869 = vrot.slane %v867, 5
      %v870 = vor.u32 %v866, %v869
      %v871 = vrot.slane %v870, 4
      %v873 = vshll.u32 %v741, 16
      %v875 = vrot.slane %v873, 5
      %v876 = vsel %vm764, %v871, %v875
      %s877 = scalar_lea.vmem %s3, 64
      %v878 = vld [vmem:[%s877] sm:$0xf]
      %v879 = vld [vmem:[%s877 + $0x4] sm:$0xf]
      %v880 = vld [vmem:[%s877 + $0x8] sm:$0xf]
      %v881 = vld [vmem:[%s877 + $0xc] sm:$0xf]
      %v882 = vld [vmem:[%s877 + $0x10] sm:$0xf]
      %v883 = vld [vmem:[%s877 + $0x14] sm:$0xf]
      %v884 = vld [vmem:[%s877 + $0x18] sm:$0xf]
      %v885 = vld [vmem:[%s877 + $0x1c] sm:$0xf]
      %v886 = vld [vmem:[%s877 + $0x20] sm:$0xf]
      %v887 = vld [vmem:[%s877 + $0x24] sm:$0xf]
      %v888 = vld [vmem:[%s877 + $0x28] sm:$0xf]
      %v889 = vld [vmem:[%s877 + $0x2c] sm:$0xf]
      %v890 = vld [vmem:[%s877 + $0x30] sm:$0xf]
      %v891 = vld [vmem:[%s877 + $0x34] sm:$0xf]
      %v892 = vld [vmem:[%s877 + $0x38] sm:$0xf]
      %v893 = vld [vmem:[%s877 + $0x3c] sm:$0xf]
      %v894 = vunpack.c.l.b16 %v778
      %v895 = vunpack.c.l.b16 %v792
      %v896 = vunpack.c.l.b16 %v806
      %v897 = vunpack.c.l.b16 %v820
      %v898 = vunpack.c.l.b16 %v834
      %v899 = vunpack.c.l.b16 %v848
      %v900 = vunpack.c.l.b16 %v862
      %v901 = vunpack.c.l.b16 %v876
      %v902 = vpack.c.b16 %v895, %v894
      %v903 = vpack.c.b16 %v897, %v896
      %v904 = vpack.c.b16 %v899, %v898
      %v905 = vpack.c.b16 %v901, %v900
      %v926 = vunpack.c.l.b16 %v878
      %v927 = vunpack.c.l.b16 %v879
      %v928 = vunpack.c.l.b16 %v880
      %v929 = vunpack.c.l.b16 %v881
      %v930 = vunpack.c.l.b16 %v882
      %v931 = vunpack.c.l.b16 %v883
      %v932 = vunpack.c.l.b16 %v884
      %v933 = vunpack.c.l.b16 %v885
      %v934 = vunpack.c.l.b16 %v886
      %v935 = vunpack.c.l.b16 %v887
      %v936 = vunpack.c.l.b16 %v888
      %v937 = vunpack.c.l.b16 %v889
      %v938 = vunpack.c.l.b16 %v890
      %v939 = vunpack.c.l.b16 %v891
      %v940 = vunpack.c.l.b16 %v892
      %v941 = vunpack.c.l.b16 %v893
      %v942 = vpack.c.b16 %v927, %v926
      %v943 = vpack.c.b16 %v929, %v928
      %v944 = vpack.c.b16 %v931, %v930
      %v945 = vpack.c.b16 %v933, %v932
      %v946 = vpack.c.b16 %v935, %v934
      %v947 = vpack.c.b16 %v937, %v936
      %v948 = vpack.c.b16 %v939, %v938
      %v949 = vpack.c.b16 %v941, %v940
      %958 = vmatpush.bf16.msra.mxu0 %v949
      %959 = vmatpush.bf16.msra.mxu0 %v948
      %960 = vmatpush.bf16.msra.mxu0 %v947
      %961 = vmatpush.bf16.msra.mxu0 %v946
      %962 = vmatpush.bf16.msra.mxu0 %v945
      %963 = vmatpush.bf16.msra.mxu0 %v944
      %964 = vmatpush.bf16.msra.mxu0 %v943
      %965 = vmatpush.bf16.msra.mxu0 %v942
      %966 = vmatmul.bf16.gmra.mxu0 %v902
      %v967 = vpop.f32.mrf.mxu0
      %v968 = vadd.f32 0.0, %v967
      %v969 = vpop.f32.mrf.mxu0
      %v970 = vadd.f32 0.0, %v969
      %971 = vmatmul.bf16.gmra.mxu0 %v903
      %v972 = vpop.f32.mrf.mxu0
      %v973 = vadd.f32 0.0, %v972
      %v974 = vpop.f32.mrf.mxu0
      %v975 = vadd.f32 0.0, %v974
      %976 = vmatmul.bf16.gmra.mxu0 %v904
      %v977 = vpop.f32.mrf.mxu0
      %v978 = vadd.f32 0.0, %v977
      %v979 = vpop.f32.mrf.mxu0
      %v980 = vadd.f32 0.0, %v979
      %981 = vmatmul.bf16.gmra.mxu0 %v905
      %v982 = vpop.f32.mrf.mxu0
      %v983 = vadd.f32 0.0, %v982
      %v984 = vpop.f32.mrf.mxu0
      %v985 = vadd.f32 0.0, %v984
      %986 = vdwg.mxu0
      %v995 = vunpack.c.l.b16 %v726
      %v996 = vunpack.c.l.b16 %v728
      %v997 = vunpack.c.l.b16 %v730
      %v998 = vunpack.c.l.b16 %v732
      %v999 = vunpack.c.l.b16 %v734
      %v1000 = vunpack.c.l.b16 %v736
      %v1001 = vunpack.c.l.b16 %v738
      %v1002 = vunpack.c.l.b16 %v740
      %v1003 = vpack.c.b16 %v996, %v995
      %v1004 = vpack.c.b16 %v998, %v997
      %v1005 = vpack.c.b16 %v1000, %v999
      %v1006 = vpack.c.b16 %v1002, %v1001
      %v1027 = vunpack.c.l.b16 %v746
      %v1028 = vunpack.c.l.b16 %v747
      %v1029 = vunpack.c.l.b16 %v748
      %v1030 = vunpack.c.l.b16 %v749
      %v1031 = vunpack.c.l.b16 %v750
      %v1032 = vunpack.c.l.b16 %v751
      %v1033 = vunpack.c.l.b16 %v752
      %v1034 = vunpack.c.l.b16 %v753
      %v1035 = vunpack.c.l.b16 %v754
      %v1036 = vunpack.c.l.b16 %v755
      %v1037 = vunpack.c.l.b16 %v756
      %v1038 = vunpack.c.l.b16 %v757
      %v1039 = vunpack.c.l.b16 %v758
      %v1040 = vunpack.c.l.b16 %v759
      %v1041 = vunpack.c.l.b16 %v760
      %v1042 = vunpack.c.l.b16 %v761
      %v1043 = vpack.c.b16 %v1028, %v1027
      %v1044 = vpack.c.b16 %v1030, %v1029
      %v1045 = vpack.c.b16 %v1032, %v1031
      %v1046 = vpack.c.b16 %v1034, %v1033
      %v1047 = vpack.c.b16 %v1036, %v1035
      %v1048 = vpack.c.b16 %v1038, %v1037
      %v1049 = vpack.c.b16 %v1040, %v1039
      %v1050 = vpack.c.b16 %v1042, %v1041
      %1059 = vmatpush.bf16.msra.mxu0 %v1050
      %1060 = vmatpush.bf16.msra.mxu0 %v1049
      %1061 = vmatpush.bf16.msra.mxu0 %v1048
      %1062 = vmatpush.bf16.msra.mxu0 %v1047
      %1063 = vmatpush.bf16.msra.mxu0 %v1046
      %1064 = vmatpush.bf16.msra.mxu0 %v1045
      %1065 = vmatpush.bf16.msra.mxu0 %v1044
      %1066 = vmatpush.bf16.msra.mxu0 %v1043
      %1067 = vmatmul.bf16.gmra.mxu0 %v1003
      %v1068 = vpop.f32.mrf.mxu0
      %v1069 = vadd.f32 %v968, %v1068
      %v1070 = vpop.f32.mrf.mxu0
      %v1071 = vadd.f32 %v970, %v1070
      %1072 = vmatmul.bf16.gmra.mxu0 %v1004
      %v1073 = vpop.f32.mrf.mxu0
      %v1074 = vadd.f32 %v973, %v1073
      %v1075 = vpop.f32.mrf.mxu0
      %v1076 = vadd.f32 %v975, %v1075
      %1077 = vmatmul.bf16.gmra.mxu0 %v1005
      %v1078 = vpop.f32.mrf.mxu0
      %v1079 = vadd.f32 %v978, %v1078
      %v1080 = vpop.f32.mrf.mxu0
      %v1081 = vadd.f32 %v980, %v1080
      %1082 = vmatmul.bf16.gmra.mxu0 %v1006
      %v1083 = vpop.f32.mrf.mxu0
      %v1084 = vadd.f32 %v983, %v1083
      %v1085 = vpop.f32.mrf.mxu0
      %v1086 = vadd.f32 %v985, %v1085
      %1087 = vdwg.mxu0
      %vm1096 = vcmask 1042432
      %vm1097 = vcmask 1046532
      %vm1098 = vmor %vm1096, %vm1097
      %v1099 = vrot.slane %v726, 5
      %v1100 = vrot.slane %v1099, 4
      %v1101 = vrot.slane %v727, 5
      %v1102 = vsel %vm1098, %v1100, %v1101
      %v1103 = vrot.slane %v728, 5
      %v1104 = vrot.slane %v1103, 4
      %v1105 = vrot.slane %v729, 5
      %v1106 = vsel %vm1098, %v1104, %v1105
      %v1107 = vrot.slane %v730, 5
      %v1108 = vrot.slane %v1107, 4
      %v1109 = vrot.slane %v731, 5
      %v1110 = vsel %vm1098, %v1108, %v1109
      %v1111 = vrot.slane %v732, 5
      %v1112 = vrot.slane %v1111, 4
      %v1113 = vrot.slane %v733, 5
      %v1114 = vsel %vm1098, %v1112, %v1113
      %v1115 = vrot.slane %v734, 5
      %v1116 = vrot.slane %v1115, 4
      %v1117 = vrot.slane %v735, 5
      %v1118 = vsel %vm1098, %v1116, %v1117
      %v1119 = vrot.slane %v736, 5
      %v1120 = vrot.slane %v1119, 4
      %v1121 = vrot.slane %v737, 5
      %v1122 = vsel %vm1098, %v1120, %v1121
      %v1123 = vrot.slane %v738, 5
      %v1124 = vrot.slane %v1123, 4
      %v1125 = vrot.slane %v739, 5
      %v1126 = vsel %vm1098, %v1124, %v1125
      %v1127 = vrot.slane %v740, 5
      %v1128 = vrot.slane %v1127, 4
      %v1129 = vrot.slane %v741, 5
      %v1130 = vsel %vm1098, %v1128, %v1129
      %s1131 = scalar_lea.vmem %s3, 128
      %v1132 = vld [vmem:[%s1131] sm:$0xf]
      %v1133 = vld [vmem:[%s1131 + $0x4] sm:$0xf]
      %v1134 = vld [vmem:[%s1131 + $0x8] sm:$0xf]
      %v1135 = vld [vmem:[%s1131 + $0xc] sm:$0xf]
      %v1136 = vld [vmem:[%s1131 + $0x10] sm:$0xf]
      %v1137 = vld [vmem:[%s1131 + $0x14] sm:$0xf]
      %v1138 = vld [vmem:[%s1131 + $0x18] sm:$0xf]
      %v1139 = vld [vmem:[%s1131 + $0x1c] sm:$0xf]
      %v1140 = vld [vmem:[%s1131 + $0x20] sm:$0xf]
      %v1141 = vld [vmem:[%s1131 + $0x24] sm:$0xf]
      %v1142 = vld [vmem:[%s1131 + $0x28] sm:$0xf]
      %v1143 = vld [vmem:[%s1131 + $0x2c] sm:$0xf]
      %v1144 = vld [vmem:[%s1131 + $0x30] sm:$0xf]
      %v1145 = vld [vmem:[%s1131 + $0x34] sm:$0xf]
      %v1146 = vld [vmem:[%s1131 + $0x38] sm:$0xf]
      %v1147 = vld [vmem:[%s1131 + $0x3c] sm:$0xf]
      %v1148 = vunpack.c.l.b16 %v1102
      %v1149 = vunpack.c.l.b16 %v1106
      %v1150 = vunpack.c.l.b16 %v1110
      %v1151 = vunpack.c.l.b16 %v1114
      %v1152 = vunpack.c.l.b16 %v1118
      %v1153 = vunpack.c.l.b16 %v1122
      %v1154 = vunpack.c.l.b16 %v1126
      %v1155 = vunpack.c.l.b16 %v1130
      %v1156 = vpack.c.b16 %v1149, %v1148
      %v1157 = vpack.c.b16 %v1151, %v1150
      %v1158 = vpack.c.b16 %v1153, %v1152
      %v1159 = vpack.c.b16 %v1155, %v1154
      %v1180 = vunpack.c.l.b16 %v1132
      %v1181 = vunpack.c.l.b16 %v1133
      %v1182 = vunpack.c.l.b16 %v1134
      %v1183 = vunpack.c.l.b16 %v1135
      %v1184 = vunpack.c.l.b16 %v1136
      %v1185 = vunpack.c.l.b16 %v1137
      %v1186 = vunpack.c.l.b16 %v1138
      %v1187 = vunpack.c.l.b16 %v1139
      %v1188 = vunpack.c.l.b16 %v1140
      %v1189 = vunpack.c.l.b16 %v1141
      %v1190 = vunpack.c.l.b16 %v1142
      %v1191 = vunpack.c.l.b16 %v1143
      %v1192 = vunpack.c.l.b16 %v1144
      %v1193 = vunpack.c.l.b16 %v1145
      %v1194 = vunpack.c.l.b16 %v1146
      %v1195 = vunpack.c.l.b16 %v1147
      %v1196 = vpack.c.b16 %v1181, %v1180
      %v1197 = vpack.c.b16 %v1183, %v1182
      %v1198 = vpack.c.b16 %v1185, %v1184
      %v1199 = vpack.c.b16 %v1187, %v1186
      %v1200 = vpack.c.b16 %v1189, %v1188
      %v1201 = vpack.c.b16 %v1191, %v1190
      %v1202 = vpack.c.b16 %v1193, %v1192
      %v1203 = vpack.c.b16 %v1195, %v1194
      %1212 = vmatpush.bf16.msra.mxu0 %v1203
      %1213 = vmatpush.bf16.msra.mxu0 %v1202
      %1214 = vmatpush.bf16.msra.mxu0 %v1201
      %1215 = vmatpush.bf16.msra.mxu0 %v1200
      %1216 = vmatpush.bf16.msra.mxu0 %v1199
      %1217 = vmatpush.bf16.msra.mxu0 %v1198
      %1218 = vmatpush.bf16.msra.mxu0 %v1197
      %1219 = vmatpush.bf16.msra.mxu0 %v1196
      %1220 = vmatmul.bf16.gmra.mxu0 %v1156
      %v1221 = vpop.f32.mrf.mxu0
      %v1222 = vadd.f32 0.0, %v1221
      %v1223 = vpop.f32.mrf.mxu0
      %v1224 = vadd.f32 0.0, %v1223
      %1225 = vmatmul.bf16.gmra.mxu0 %v1157
      %v1226 = vpop.f32.mrf.mxu0
      %v1227 = vadd.f32 0.0, %v1226
      %v1228 = vpop.f32.mrf.mxu0
      %v1229 = vadd.f32 0.0, %v1228
      %1230 = vmatmul.bf16.gmra.mxu0 %v1158
      %v1231 = vpop.f32.mrf.mxu0
      %v1232 = vadd.f32 0.0, %v1231
      %v1233 = vpop.f32.mrf.mxu0
      %v1234 = vadd.f32 0.0, %v1233
      %1235 = vmatmul.bf16.gmra.mxu0 %v1159
      %v1236 = vpop.f32.mrf.mxu0
      %v1237 = vadd.f32 0.0, %v1236
      %v1238 = vpop.f32.mrf.mxu0
      %v1239 = vadd.f32 0.0, %v1238
      %1240 = vdwg.mxu0
      %v1241 = vadd.f32 %v1069, %v1222
      %v1242 = vadd.f32 %v1071, %v1224
      %v1243 = vadd.f32 %v1074, %v1227
      %v1244 = vadd.f32 %v1076, %v1229
      %v1245 = vadd.f32 %v1079, %v1232
      %v1246 = vadd.f32 %v1081, %v1234
      %v1247 = vadd.f32 %v1084, %v1237
      %v1248 = vadd.f32 %v1086, %v1239
      %s1249 = scalar_lea.vmem %s3, 192
      %v1250 = vld [vmem:[%s1249] sm:$0xf]
      %v1251 = vld [vmem:[%s1249 + $0x4] sm:$0xf]
      %v1252 = vld [vmem:[%s1249 + $0x8] sm:$0xf]
      %v1253 = vld [vmem:[%s1249 + $0xc] sm:$0xf]
      %v1254 = vld [vmem:[%s1249 + $0x10] sm:$0xf]
      %v1255 = vld [vmem:[%s1249 + $0x14] sm:$0xf]
      %v1256 = vld [vmem:[%s1249 + $0x18] sm:$0xf]
      %v1257 = vld [vmem:[%s1249 + $0x1c] sm:$0xf]
      %v1258 = vld [vmem:[%s1249 + $0x20] sm:$0xf]
      %v1259 = vld [vmem:[%s1249 + $0x24] sm:$0xf]
      %v1260 = vld [vmem:[%s1249 + $0x28] sm:$0xf]
      %v1261 = vld [vmem:[%s1249 + $0x2c] sm:$0xf]
      %v1262 = vld [vmem:[%s1249 + $0x30] sm:$0xf]
      %v1263 = vld [vmem:[%s1249 + $0x34] sm:$0xf]
      %v1264 = vld [vmem:[%s1249 + $0x38] sm:$0xf]
      %v1265 = vld [vmem:[%s1249 + $0x3c] sm:$0xf]
      %v1267 = vunpack.c.l.b16 %v742
      %v1268 = vpack.c.b16 %v997, %v996
      %v1269 = vpack.c.b16 %v999, %v998
      %v1270 = vpack.c.b16 %v1001, %v1000
      %v1271 = vpack.c.b16 %v1267, %v1002
      %v1292 = vunpack.c.l.b16 %v1250
      %v1293 = vunpack.c.l.b16 %v1251
      %v1294 = vunpack.c.l.b16 %v1252
      %v1295 = vunpack.c.l.b16 %v1253
      %v1296 = vunpack.c.l.b16 %v1254
      %v1297 = vunpack.c.l.b16 %v1255
      %v1298 = vunpack.c.l.b16 %v1256
      %v1299 = vunpack.c.l.b16 %v1257
      %v1300 = vunpack.c.l.b16 %v1258
      %v1301 = vunpack.c.l.b16 %v1259
      %v1302 = vunpack.c.l.b16 %v1260
      %v1303 = vunpack.c.l.b16 %v1261
      %v1304 = vunpack.c.l.b16 %v1262
      %v1305 = vunpack.c.l.b16 %v1263
      %v1306 = vunpack.c.l.b16 %v1264
      %v1307 = vunpack.c.l.b16 %v1265
      %v1308 = vpack.c.b16 %v1293, %v1292
      %v1309 = vpack.c.b16 %v1295, %v1294
      %v1310 = vpack.c.b16 %v1297, %v1296
      %v1311 = vpack.c.b16 %v1299, %v1298
      %v1312 = vpack.c.b16 %v1301, %v1300
      %v1313 = vpack.c.b16 %v1303, %v1302
      %v1314 = vpack.c.b16 %v1305, %v1304
      %v1315 = vpack.c.b16 %v1307, %v1306
      %1324 = vmatpush.bf16.msra.mxu0 %v1315
      %1325 = vmatpush.bf16.msra.mxu0 %v1314
      %1326 = vmatpush.bf16.msra.mxu0 %v1313
      %1327 = vmatpush.bf16.msra.mxu0 %v1312
      %1328 = vmatpush.bf16.msra.mxu0 %v1311
      %1329 = vmatpush.bf16.msra.mxu0 %v1310
      %1330 = vmatpush.bf16.msra.mxu0 %v1309
      %1331 = vmatpush.bf16.msra.mxu0 %v1308
      %1332 = vmatmul.bf16.gmra.mxu0 %v1268
      %v1333 = vpop.f32.mrf.mxu0
      %v1334 = vadd.f32 0.0, %v1333
      %v1335 = vpop.f32.mrf.mxu0
      %v1336 = vadd.f32 0.0, %v1335
      %1337 = vmatmul.bf16.gmra.mxu0 %v1269
      %v1338 = vpop.f32.mrf.mxu0
      %v1339 = vadd.f32 0.0, %v1338
      %v1340 = vpop.f32.mrf.mxu0
      %v1341 = vadd.f32 0.0, %v1340
      %1342 = vmatmul.bf16.gmra.mxu0 %v1270
      %v1343 = vpop.f32.mrf.mxu0
      %v1344 = vadd.f32 0.0, %v1343
      %v1345 = vpop.f32.mrf.mxu0
      %v1346 = vadd.f32 0.0, %v1345
      %1347 = vmatmul.bf16.gmra.mxu0 %v1271
      %v1348 = vpop.f32.mrf.mxu0
      %v1349 = vadd.f32 0.0, %v1348
      %v1350 = vpop.f32.mrf.mxu0
      %v1351 = vadd.f32 0.0, %v1350
      %1352 = vdwg.mxu0
      %v1353 = vadd.f32 %v1241, %v1334
      %v1354 = vadd.f32 %v1242, %v1336
      %v1355 = vadd.f32 %v1243, %v1339
      %v1356 = vadd.f32 %v1244, %v1341
      %v1357 = vadd.f32 %v1245, %v1344
      %v1358 = vadd.f32 %v1246, %v1346
      %v1359 = vadd.f32 %v1247, %v1349
      %v1360 = vadd.f32 %v1248, %v1351
      %v1362 = vshrl.u32 %v742, 16
      %v1364 = vrot.slane %v1362, 4
      %v1365 = vshll.u32 %v742, 16
      %v1367 = vrot.slane %v1365, 5
      %v1368 = vor.u32 %v1364, %v1367
      %v1369 = vrot.slane %v1368, 4
      %v1371 = vshll.u32 %v743, 16
      %v1373 = vrot.slane %v1371, 5
      %v1374 = vsel %vm764, %v1369, %v1373
      %s1375 = scalar_lea.vmem %s3, 256
      %v1376 = vld [vmem:[%s1375] sm:$0xf]
      %v1377 = vld [vmem:[%s1375 + $0x4] sm:$0xf]
      %v1378 = vld [vmem:[%s1375 + $0x8] sm:$0xf]
      %v1379 = vld [vmem:[%s1375 + $0xc] sm:$0xf]
      %v1380 = vld [vmem:[%s1375 + $0x10] sm:$0xf]
      %v1381 = vld [vmem:[%s1375 + $0x14] sm:$0xf]
      %v1382 = vld [vmem:[%s1375 + $0x18] sm:$0xf]
      %v1383 = vld [vmem:[%s1375 + $0x1c] sm:$0xf]
      %v1384 = vld [vmem:[%s1375 + $0x20] sm:$0xf]
      %v1385 = vld [vmem:[%s1375 + $0x24] sm:$0xf]
      %v1386 = vld [vmem:[%s1375 + $0x28] sm:$0xf]
      %v1387 = vld [vmem:[%s1375 + $0x2c] sm:$0xf]
      %v1388 = vld [vmem:[%s1375 + $0x30] sm:$0xf]
      %v1389 = vld [vmem:[%s1375 + $0x34] sm:$0xf]
      %v1390 = vld [vmem:[%s1375 + $0x38] sm:$0xf]
      %v1391 = vld [vmem:[%s1375 + $0x3c] sm:$0xf]
      %v1392 = vunpack.c.l.b16 %v1374
      %v1393 = vpack.c.b16 %v896, %v895
      %v1394 = vpack.c.b16 %v898, %v897
      %v1395 = vpack.c.b16 %v900, %v899
      %v1396 = vpack.c.b16 %v1392, %v901
      %v1417 = vunpack.c.l.b16 %v1376
      %v1418 = vunpack.c.l.b16 %v1377
      %v1419 = vunpack.c.l.b16 %v1378
      %v1420 = vunpack.c.l.b16 %v1379
      %v1421 = vunpack.c.l.b16 %v1380
      %v1422 = vunpack.c.l.b16 %v1381
      %v1423 = vunpack.c.l.b16 %v1382
      %v1424 = vunpack.c.l.b16 %v1383
      %v1425 = vunpack.c.l.b16 %v1384
      %v1426 = vunpack.c.l.b16 %v1385
      %v1427 = vunpack.c.l.b16 %v1386
      %v1428 = vunpack.c.l.b16 %v1387
      %v1429 = vunpack.c.l.b16 %v1388
      %v1430 = vunpack.c.l.b16 %v1389
      %v1431 = vunpack.c.l.b16 %v1390
      %v1432 = vunpack.c.l.b16 %v1391
      %v1433 = vpack.c.b16 %v1418, %v1417
      %v1434 = vpack.c.b16 %v1420, %v1419
      %v1435 = vpack.c.b16 %v1422, %v1421
      %v1436 = vpack.c.b16 %v1424, %v1423
      %v1437 = vpack.c.b16 %v1426, %v1425
      %v1438 = vpack.c.b16 %v1428, %v1427
      %v1439 = vpack.c.b16 %v1430, %v1429
      %v1440 = vpack.c.b16 %v1432, %v1431
      %1449 = vmatpush.bf16.msra.mxu0 %v1440
      %1450 = vmatpush.bf16.msra.mxu0 %v1439
      %1451 = vmatpush.bf16.msra.mxu0 %v1438
      %1452 = vmatpush.bf16.msra.mxu0 %v1437
      %1453 = vmatpush.bf16.msra.mxu0 %v1436
      %1454 = vmatpush.bf16.msra.mxu0 %v1435
      %1455 = vmatpush.bf16.msra.mxu0 %v1434
      %1456 = vmatpush.bf16.msra.mxu0 %v1433
      %1457 = vmatmul.bf16.gmra.mxu0 %v1393
      %v1458 = vpop.f32.mrf.mxu0
      %v1459 = vadd.f32 0.0, %v1458
      %v1460 = vpop.f32.mrf.mxu0
      %v1461 = vadd.f32 0.0, %v1460
      %1462 = vmatmul.bf16.gmra.mxu0 %v1394
      %v1463 = vpop.f32.mrf.mxu0
      %v1464 = vadd.f32 0.0, %v1463
      %v1465 = vpop.f32.mrf.mxu0
      %v1466 = vadd.f32 0.0, %v1465
      %1467 = vmatmul.bf16.gmra.mxu0 %v1395
      %v1468 = vpop.f32.mrf.mxu0
      %v1469 = vadd.f32 0.0, %v1468
      %v1470 = vpop.f32.mrf.mxu0
      %v1471 = vadd.f32 0.0, %v1470
      %1472 = vmatmul.bf16.gmra.mxu0 %v1396
      %v1473 = vpop.f32.mrf.mxu0
      %v1474 = vadd.f32 0.0, %v1473
      %v1475 = vpop.f32.mrf.mxu0
      %v1476 = vadd.f32 0.0, %v1475
      %1477 = vdwg.mxu0
      %v1478 = vadd.f32 %v1353, %v1459
      %v1479 = vadd.f32 %v1354, %v1461
      %v1480 = vadd.f32 %v1355, %v1464
      %v1481 = vadd.f32 %v1356, %v1466
      %v1482 = vadd.f32 %v1357, %v1469
      %v1483 = vadd.f32 %v1358, %v1471
      %v1484 = vadd.f32 %v1359, %v1474
      %v1485 = vadd.f32 %v1360, %v1476
      %v1487 = vrot.slane %v742, 5
      %v1488 = vrot.slane %v1487, 4
      %v1489 = vrot.slane %v743, 5
      %v1490 = vsel %vm1098, %v1488, %v1489
      %s1491 = scalar_lea.vmem %s3, 320
      %v1492 = vld [vmem:[%s1491] sm:$0xf]
      %v1493 = vld [vmem:[%s1491 + $0x4] sm:$0xf]
      %v1494 = vld [vmem:[%s1491 + $0x8] sm:$0xf]
      %v1495 = vld [vmem:[%s1491 + $0xc] sm:$0xf]
      %v1496 = vld [vmem:[%s1491 + $0x10] sm:$0xf]
      %v1497 = vld [vmem:[%s1491 + $0x14] sm:$0xf]
      %v1498 = vld [vmem:[%s1491 + $0x18] sm:$0xf]
      %v1499 = vld [vmem:[%s1491 + $0x1c] sm:$0xf]
      %v1500 = vld [vmem:[%s1491 + $0x20] sm:$0xf]
      %v1501 = vld [vmem:[%s1491 + $0x24] sm:$0xf]
      %v1502 = vld [vmem:[%s1491 + $0x28] sm:$0xf]
      %v1503 = vld [vmem:[%s1491 + $0x2c] sm:$0xf]
      %v1504 = vld [vmem:[%s1491 + $0x30] sm:$0xf]
      %v1505 = vld [vmem:[%s1491 + $0x34] sm:$0xf]
      %v1506 = vld [vmem:[%s1491 + $0x38] sm:$0xf]
      %v1507 = vld [vmem:[%s1491 + $0x3c] sm:$0xf]
      %v1508 = vunpack.c.l.b16 %v1490
      %v1509 = vpack.c.b16 %v1150, %v1149
      %v1510 = vpack.c.b16 %v1152, %v1151
      %v1511 = vpack.c.b16 %v1154, %v1153
      %v1512 = vpack.c.b16 %v1508, %v1155
      %v1533 = vunpack.c.l.b16 %v1492
      %v1534 = vunpack.c.l.b16 %v1493
      %v1535 = vunpack.c.l.b16 %v1494
      %v1536 = vunpack.c.l.b16 %v1495
      %v1537 = vunpack.c.l.b16 %v1496
      %v1538 = vunpack.c.l.b16 %v1497
      %v1539 = vunpack.c.l.b16 %v1498
      %v1540 = vunpack.c.l.b16 %v1499
      %v1541 = vunpack.c.l.b16 %v1500
      %v1542 = vunpack.c.l.b16 %v1501
      %v1543 = vunpack.c.l.b16 %v1502
      %v1544 = vunpack.c.l.b16 %v1503
      %v1545 = vunpack.c.l.b16 %v1504
      %v1546 = vunpack.c.l.b16 %v1505
      %v1547 = vunpack.c.l.b16 %v1506
      %v1548 = vunpack.c.l.b16 %v1507
      %v1549 = vpack.c.b16 %v1534, %v1533
      %v1550 = vpack.c.b16 %v1536, %v1535
      %v1551 = vpack.c.b16 %v1538, %v1537
      %v1552 = vpack.c.b16 %v1540, %v1539
      %v1553 = vpack.c.b16 %v1542, %v1541
      %v1554 = vpack.c.b16 %v1544, %v1543
      %v1555 = vpack.c.b16 %v1546, %v1545
      %v1556 = vpack.c.b16 %v1548, %v1547
      %1565 = vmatpush.bf16.msra.mxu0 %v1556
      %1566 = vmatpush.bf16.msra.mxu0 %v1555
      %1567 = vmatpush.bf16.msra.mxu0 %v1554
      %1568 = vmatpush.bf16.msra.mxu0 %v1553
      %1569 = vmatpush.bf16.msra.mxu0 %v1552
      %1570 = vmatpush.bf16.msra.mxu0 %v1551
      %1571 = vmatpush.bf16.msra.mxu0 %v1550
      %1572 = vmatpush.bf16.msra.mxu0 %v1549
      %1573 = vmatmul.bf16.gmra.mxu0 %v1509
      %v1574 = vpop.f32.mrf.mxu0
      %v1575 = vadd.f32 0.0, %v1574
      %v1576 = vpop.f32.mrf.mxu0
      %v1577 = vadd.f32 0.0, %v1576
      %1578 = vmatmul.bf16.gmra.mxu0 %v1510
      %v1579 = vpop.f32.mrf.mxu0
      %v1580 = vadd.f32 0.0, %v1579
      %v1581 = vpop.f32.mrf.mxu0
      %v1582 = vadd.f32 0.0, %v1581
      %1583 = vmatmul.bf16.gmra.mxu0 %v1511
      %v1584 = vpop.f32.mrf.mxu0
      %v1585 = vadd.f32 0.0, %v1584
      %v1586 = vpop.f32.mrf.mxu0
      %v1587 = vadd.f32 0.0, %v1586
      %1588 = vmatmul.bf16.gmra.mxu0 %v1512
      %v1589 = vpop.f32.mrf.mxu0
      %v1590 = vadd.f32 0.0, %v1589
      %v1591 = vpop.f32.mrf.mxu0
      %v1592 = vadd.f32 0.0, %v1591
      %1593 = vdwg.mxu0
      %v1594 = vadd.f32 %v1478, %v1575
      %v1595 = vadd.f32 %v1479, %v1577
      %v1596 = vadd.f32 %v1480, %v1580
      %v1597 = vadd.f32 %v1481, %v1582
      %v1598 = vadd.f32 %v1482, %v1585
      %v1599 = vadd.f32 %v1483, %v1587
      %v1600 = vadd.f32 %v1484, %v1590
      %v1601 = vadd.f32 %v1485, %v1592
      %s1602 = scalar_lea.vmem %s3, 384
      %v1603 = vld [vmem:[%s1602] sm:$0xf]
      %v1604 = vld [vmem:[%s1602 + $0x4] sm:$0xf]
      %v1605 = vld [vmem:[%s1602 + $0x8] sm:$0xf]
      %v1606 = vld [vmem:[%s1602 + $0xc] sm:$0xf]
      %v1607 = vld [vmem:[%s1602 + $0x10] sm:$0xf]
      %v1608 = vld [vmem:[%s1602 + $0x14] sm:$0xf]
      %v1609 = vld [vmem:[%s1602 + $0x18] sm:$0xf]
      %v1610 = vld [vmem:[%s1602 + $0x1c] sm:$0xf]
      %v1611 = vld [vmem:[%s1602 + $0x20] sm:$0xf]
      %v1612 = vld [vmem:[%s1602 + $0x24] sm:$0xf]
      %v1613 = vld [vmem:[%s1602 + $0x28] sm:$0xf]
      %v1614 = vld [vmem:[%s1602 + $0x2c] sm:$0xf]
      %v1615 = vld [vmem:[%s1602 + $0x30] sm:$0xf]
      %v1616 = vld [vmem:[%s1602 + $0x34] sm:$0xf]
      %v1617 = vld [vmem:[%s1602 + $0x38] sm:$0xf]
      %v1618 = vld [vmem:[%s1602 + $0x3c] sm:$0xf]
      %v1620 = vunpack.c.l.b16 %v744
      %v1621 = vpack.c.b16 %v1620, %v1267
      %v1639 = vunpack.c.l.b16 %v1603
      %v1640 = vunpack.c.l.b16 %v1604
      %v1641 = vunpack.c.l.b16 %v1605
      %v1642 = vunpack.c.l.b16 %v1606
      %v1643 = vunpack.c.l.b16 %v1607
      %v1644 = vunpack.c.l.b16 %v1608
      %v1645 = vunpack.c.l.b16 %v1609
      %v1646 = vunpack.c.l.b16 %v1610
      %v1647 = vunpack.c.l.b16 %v1611
      %v1648 = vunpack.c.l.b16 %v1612
      %v1649 = vunpack.c.l.b16 %v1613
      %v1650 = vunpack.c.l.b16 %v1614
      %v1651 = vunpack.c.l.b16 %v1615
      %v1652 = vunpack.c.l.b16 %v1616
      %v1653 = vunpack.c.l.b16 %v1617
      %v1654 = vunpack.c.l.b16 %v1618
      %v1655 = vpack.c.b16 %v1640, %v1639
      %v1656 = vpack.c.b16 %v1642, %v1641
      %v1657 = vpack.c.b16 %v1644, %v1643
      %v1658 = vpack.c.b16 %v1646, %v1645
      %v1659 = vpack.c.b16 %v1648, %v1647
      %v1660 = vpack.c.b16 %v1650, %v1649
      %v1661 = vpack.c.b16 %v1652, %v1651
      %v1662 = vpack.c.b16 %v1654, %v1653
      %1671 = vmatpush.bf16.msra.mxu0 %v1662
      %1672 = vmatpush.bf16.msra.mxu0 %v1661
      %1673 = vmatpush.bf16.msra.mxu0 %v1660
      %1674 = vmatpush.bf16.msra.mxu0 %v1659
      %1675 = vmatpush.bf16.msra.mxu0 %v1658
      %1676 = vmatpush.bf16.msra.mxu0 %v1657
      %1677 = vmatpush.bf16.msra.mxu0 %v1656
      %1678 = vmatpush.bf16.msra.mxu0 %v1655
      %1679 = vmatmul.bf16.gmra.mxu0 %v1004
      %v1680 = vpop.f32.mrf.mxu0
      %v1681 = vadd.f32 0.0, %v1680
      %v1682 = vpop.f32.mrf.mxu0
      %v1683 = vadd.f32 0.0, %v1682
      %1684 = vmatmul.bf16.gmra.mxu0 %v1005
      %v1685 = vpop.f32.mrf.mxu0
      %v1686 = vadd.f32 0.0, %v1685
      %v1687 = vpop.f32.mrf.mxu0
      %v1688 = vadd.f32 0.0, %v1687
      %1689 = vmatmul.bf16.gmra.mxu0 %v1006
      %v1690 = vpop.f32.mrf.mxu0
      %v1691 = vadd.f32 0.0, %v1690
      %v1692 = vpop.f32.mrf.mxu0
      %v1693 = vadd.f32 0.0, %v1692
      %1694 = vmatmul.bf16.gmra.mxu0 %v1621
      %v1695 = vpop.f32.mrf.mxu0
      %v1696 = vadd.f32 0.0, %v1695
      %v1697 = vpop.f32.mrf.mxu0
      %v1698 = vadd.f32 0.0, %v1697
      %1699 = vdwg.mxu0
      %v1700 = vadd.f32 %v1594, %v1681
      %v1701 = vadd.f32 %v1595, %v1683
      %v1702 = vadd.f32 %v1596, %v1686
      %v1703 = vadd.f32 %v1597, %v1688
      %v1704 = vadd.f32 %v1598, %v1691
      %v1705 = vadd.f32 %v1599, %v1693
      %v1706 = vadd.f32 %v1600, %v1696
      %v1707 = vadd.f32 %v1601, %v1698
      %v1709 = vshrl.u32 %v744, 16
      %v1711 = vrot.slane %v1709, 4
      %v1712 = vshll.u32 %v744, 16
      %v1714 = vrot.slane %v1712, 5
      %v1715 = vor.u32 %v1711, %v1714
      %v1716 = vrot.slane %v1715, 4
      %v1718 = vshll.u32 %v745, 16
      %v1720 = vrot.slane %v1718, 5
      %v1721 = vsel %vm764, %v1716, %v1720
      %s1722 = scalar_lea.vmem %s3, 448
      %v1723 = vld [vmem:[%s1722] sm:$0xf]
      %v1724 = vld [vmem:[%s1722 + $0x4] sm:$0xf]
      %v1725 = vld [vmem:[%s1722 + $0x8] sm:$0xf]
      %v1726 = vld [vmem:[%s1722 + $0xc] sm:$0xf]
      %v1727 = vld [vmem:[%s1722 + $0x10] sm:$0xf]
      %v1728 = vld [vmem:[%s1722 + $0x14] sm:$0xf]
      %v1729 = vld [vmem:[%s1722 + $0x18] sm:$0xf]
      %v1730 = vld [vmem:[%s1722 + $0x1c] sm:$0xf]
      %v1731 = vld [vmem:[%s1722 + $0x20] sm:$0xf]
      %v1732 = vld [vmem:[%s1722 + $0x24] sm:$0xf]
      %v1733 = vld [vmem:[%s1722 + $0x28] sm:$0xf]
      %v1734 = vld [vmem:[%s1722 + $0x2c] sm:$0xf]
      %v1735 = vld [vmem:[%s1722 + $0x30] sm:$0xf]
      %v1736 = vld [vmem:[%s1722 + $0x34] sm:$0xf]
      %v1737 = vld [vmem:[%s1722 + $0x38] sm:$0xf]
      %v1738 = vld [vmem:[%s1722 + $0x3c] sm:$0xf]
      %v1739 = vunpack.c.l.b16 %v1721
      %v1740 = vpack.c.b16 %v1739, %v1392
      %v1758 = vunpack.c.l.b16 %v1723
      %v1759 = vunpack.c.l.b16 %v1724
      %v1760 = vunpack.c.l.b16 %v1725
      %v1761 = vunpack.c.l.b16 %v1726
      %v1762 = vunpack.c.l.b16 %v1727
      %v1763 = vunpack.c.l.b16 %v1728
      %v1764 = vunpack.c.l.b16 %v1729
      %v1765 = vunpack.c.l.b16 %v1730
      %v1766 = vunpack.c.l.b16 %v1731
      %v1767 = vunpack.c.l.b16 %v1732
      %v1768 = vunpack.c.l.b16 %v1733
      %v1769 = vunpack.c.l.b16 %v1734
      %v1770 = vunpack.c.l.b16 %v1735
      %v1771 = vunpack.c.l.b16 %v1736
      %v1772 = vunpack.c.l.b16 %v1737
      %v1773 = vunpack.c.l.b16 %v1738
      %v1774 = vpack.c.b16 %v1759, %v1758
      %v1775 = vpack.c.b16 %v1761, %v1760
      %v1776 = vpack.c.b16 %v1763, %v1762
      %v1777 = vpack.c.b16 %v1765, %v1764
      %v1778 = vpack.c.b16 %v1767, %v1766
      %v1779 = vpack.c.b16 %v1769, %v1768
      %v1780 = vpack.c.b16 %v1771, %v1770
      %v1781 = vpack.c.b16 %v1773, %v1772
      %1790 = vmatpush.bf16.msra.mxu0 %v1781
      %1791 = vmatpush.bf16.msra.mxu0 %v1780
      %1792 = vmatpush.bf16.msra.mxu0 %v1779
      %1793 = vmatpush.bf16.msra.mxu0 %v1778
      %1794 = vmatpush.bf16.msra.mxu0 %v1777
      %1795 = vmatpush.bf16.msra.mxu0 %v1776
      %1796 = vmatpush.bf16.msra.mxu0 %v1775
      %1797 = vmatpush.bf16.msra.mxu0 %v1774
      %1798 = vmatmul.bf16.gmra.mxu0 %v903
      %v1799 = vpop.f32.mrf.mxu0
      %v1800 = vadd.f32 0.0, %v1799
      %v1801 = vpop.f32.mrf.mxu0
      %v1802 = vadd.f32 0.0, %v1801
      %1803 = vmatmul.bf16.gmra.mxu0 %v904
      %v1804 = vpop.f32.mrf.mxu0
      %v1805 = vadd.f32 0.0, %v1804
      %v1806 = vpop.f32.mrf.mxu0
      %v1807 = vadd.f32 0.0, %v1806
      %1808 = vmatmul.bf16.gmra.mxu0 %v905
      %v1809 = vpop.f32.mrf.mxu0
      %v1810 = vadd.f32 0.0, %v1809
      %v1811 = vpop.f32.mrf.mxu0
      %v1812 = vadd.f32 0.0, %v1811
      %1813 = vmatmul.bf16.gmra.mxu0 %v1740
      %v1814 = vpop.f32.mrf.mxu0
      %v1815 = vadd.f32 0.0, %v1814
      %v1816 = vpop.f32.mrf.mxu0
      %v1817 = vadd.f32 0.0, %v1816
      %1818 = vdwg.mxu0
      %v1819 = vadd.f32 %v1700, %v1800
      %v1820 = vadd.f32 %v1701, %v1802
      %v1821 = vadd.f32 %v1702, %v1805
      %v1822 = vadd.f32 %v1703, %v1807
      %v1823 = vadd.f32 %v1704, %v1810
      %v1824 = vadd.f32 %v1705, %v1812
      %v1825 = vadd.f32 %v1706, %v1815
      %v1826 = vadd.f32 %v1707, %v1817
      %v1828 = vrot.slane %v744, 5
      %v1829 = vrot.slane %v1828, 4
      %v1830 = vrot.slane %v745, 5
      %v1831 = vsel %vm1098, %v1829, %v1830
      %s1832 = scalar_lea.vmem %s3, 512
      %v1833 = vld [vmem:[%s1832] sm:$0xf]
      %v1834 = vld [vmem:[%s1832 + $0x4] sm:$0xf]
      %v1835 = vld [vmem:[%s1832 + $0x8] sm:$0xf]
      %v1836 = vld [vmem:[%s1832 + $0xc] sm:$0xf]
      %v1837 = vld [vmem:[%s1832 + $0x10] sm:$0xf]
      %v1838 = vld [vmem:[%s1832 + $0x14] sm:$0xf]
      %v1839 = vld [vmem:[%s1832 + $0x18] sm:$0xf]
      %v1840 = vld [vmem:[%s1832 + $0x1c] sm:$0xf]
      %v1841 = vld [vmem:[%s1832 + $0x20] sm:$0xf]
      %v1842 = vld [vmem:[%s1832 + $0x24] sm:$0xf]
      %v1843 = vld [vmem:[%s1832 + $0x28] sm:$0xf]
      %v1844 = vld [vmem:[%s1832 + $0x2c] sm:$0xf]
      %v1845 = vld [vmem:[%s1832 + $0x30] sm:$0xf]
      %v1846 = vld [vmem:[%s1832 + $0x34] sm:$0xf]
      %v1847 = vld [vmem:[%s1832 + $0x38] sm:$0xf]
      %v1848 = vld [vmem:[%s1832 + $0x3c] sm:$0xf]
      %v1849 = vunpack.c.l.b16 %v1831
      %v1850 = vpack.c.b16 %v1849, %v1508
      %v1868 = vunpack.c.l.b16 %v1833
      %v1869 = vunpack.c.l.b16 %v1834
      %v1870 = vunpack.c.l.b16 %v1835
      %v1871 = vunpack.c.l.b16 %v1836
      %v1872 = vunpack.c.l.b16 %v1837
      %v1873 = vunpack.c.l.b16 %v1838
      %v1874 = vunpack.c.l.b16 %v1839
      %v1875 = vunpack.c.l.b16 %v1840
      %v1876 = vunpack.c.l.b16 %v1841
      %v1877 = vunpack.c.l.b16 %v1842
      %v1878 = vunpack.c.l.b16 %v1843
      %v1879 = vunpack.c.l.b16 %v1844
      %v1880 = vunpack.c.l.b16 %v1845
      %v1881 = vunpack.c.l.b16 %v1846
      %v1882 = vunpack.c.l.b16 %v1847
      %v1883 = vunpack.c.l.b16 %v1848
      %v1884 = vpack.c.b16 %v1869, %v1868
      %v1885 = vpack.c.b16 %v1871, %v1870
      %v1886 = vpack.c.b16 %v1873, %v1872
      %v1887 = vpack.c.b16 %v1875, %v1874
      %v1888 = vpack.c.b16 %v1877, %v1876
      %v1889 = vpack.c.b16 %v1879, %v1878
      %v1890 = vpack.c.b16 %v1881, %v1880
      %v1891 = vpack.c.b16 %v1883, %v1882
      %1900 = vmatpush.bf16.msra.mxu0 %v1891
      %1901 = vmatpush.bf16.msra.mxu0 %v1890
      %1902 = vmatpush.bf16.msra.mxu0 %v1889
      %1903 = vmatpush.bf16.msra.mxu0 %v1888
      %1904 = vmatpush.bf16.msra.mxu0 %v1887
      %1905 = vmatpush.bf16.msra.mxu0 %v1886
      %1906 = vmatpush.bf16.msra.mxu0 %v1885
      %1907 = vmatpush.bf16.msra.mxu0 %v1884
      %1908 = vmatmul.bf16.gmra.mxu0 %v1157
      %v1909 = vpop.f32.mrf.mxu0
      %v1910 = vadd.f32 0.0, %v1909
      %v1911 = vpop.f32.mrf.mxu0
      %v1912 = vadd.f32 0.0, %v1911
      %1913 = vmatmul.bf16.gmra.mxu0 %v1158
      %v1914 = vpop.f32.mrf.mxu0
      %v1915 = vadd.f32 0.0, %v1914
      %v1916 = vpop.f32.mrf.mxu0
      %v1917 = vadd.f32 0.0, %v1916
      %1918 = vmatmul.bf16.gmra.mxu0 %v1159
      %v1919 = vpop.f32.mrf.mxu0
      %v1920 = vadd.f32 0.0, %v1919
      %v1921 = vpop.f32.mrf.mxu0
      %v1922 = vadd.f32 0.0, %v1921
      %1923 = vmatmul.bf16.gmra.mxu0 %v1850
      %v1924 = vpop.f32.mrf.mxu0
      %v1925 = vadd.f32 0.0, %v1924
      %v1926 = vpop.f32.mrf.mxu0
      %v1927 = vadd.f32 0.0, %v1926
      %1928 = vdwg.mxu0
      %v1929 = vadd.f32 %v1819, %v1910
      %v1930 = vadd.f32 %v1820, %v1912
      %v1931 = vadd.f32 %v1821, %v1915
      %v1932 = vadd.f32 %v1822, %v1917
      %v1933 = vadd.f32 %v1823, %v1920
      %v1934 = vadd.f32 %v1824, %v1922
      %v1935 = vadd.f32 %v1825, %v1925
      %v1936 = vadd.f32 %v1826, %v1927
      %v1937 = vld [vmem:[%s442] sm:$0xff]
      %v1938 = vld [vmem:[%s442 + $0x8] sm:$0x3]
      %v1939 = vld [vmem:[%s442 + $0x10] sm:$0xff]
      %v1940 = vld [vmem:[%s442 + $0x18] sm:$0x3]
      %v1941 = vld [vmem:[%s442 + $0x20] sm:$0xff]
      %v1942 = vld [vmem:[%s442 + $0x28] sm:$0x3]
      %v1943 = vld [vmem:[%s442 + $0x30] sm:$0xff]
      %v1944 = vld [vmem:[%s442 + $0x38] sm:$0x3]
      %v1945 = vld [vmem:[%s442 + $0x40] sm:$0xff]
      %v1946 = vld [vmem:[%s442 + $0x48] sm:$0x3]
      %v1947 = vld [vmem:[%s442 + $0x50] sm:$0xff]
      %v1948 = vld [vmem:[%s442 + $0x58] sm:$0x3]
      %v1949 = vld [vmem:[%s442 + $0x60] sm:$0xff]
      %v1950 = vld [vmem:[%s442 + $0x68] sm:$0x3]
      %v1951 = vld [vmem:[%s442 + $0x70] sm:$0xff]
      %v1952 = vld [vmem:[%s442 + $0x78] sm:$0x3]
      %v1953 = vld [vmem:[%s442 + $0x80] sm:$0xff]
      %v1954 = vld [vmem:[%s442 + $0x88] sm:$0x3]
      %v1955 = vld [vmem:[%s442 + $0x90] sm:$0xff]
      %v1956 = vld [vmem:[%s442 + $0x98] sm:$0x3]
      %v1957 = vmul.f32 %v1937, %v494
      %v1958 = vmul.f32 %v1938, %v494
      %v1959 = vmul.f32 %v1939, %v494
      %v1960 = vmul.f32 %v1940, %v494
      %v1961 = vmul.f32 %v1941, %v494
      %v1962 = vmul.f32 %v1942, %v494
      %v1963 = vmul.f32 %v1943, %v494
      %v1964 = vmul.f32 %v1944, %v494
      %v1965 = vmul.f32 %v1945, %v494
      %v1966 = vmul.f32 %v1946, %v494
      %v1967 = vmul.f32 %v1947, %v494
      %v1968 = vmul.f32 %v1948, %v494
      %v1969 = vmul.f32 %v1949, %v494
      %v1970 = vmul.f32 %v1950, %v494
      %v1971 = vmul.f32 %v1951, %v494
      %v1972 = vmul.f32 %v1952, %v494
      %v1973 = vmul.f32 %v1953, %v494
      %v1974 = vmul.f32 %v1954, %v494
      %v1975 = vmul.f32 %v1955, %v494
      %v1976 = vmul.f32 %v1956, %v494
      %v1977 = vadd.f32 %v1957, %v518
      %v1978 = vadd.f32 %v1958, %v518
      %v1979 = vadd.f32 %v1959, %v518
      %v1980 = vadd.f32 %v1960, %v518
      %v1981 = vadd.f32 %v1961, %v518
      %v1982 = vadd.f32 %v1962, %v518
      %v1983 = vadd.f32 %v1963, %v518
      %v1984 = vadd.f32 %v1964, %v518
      %v1985 = vadd.f32 %v1965, %v518
      %v1986 = vadd.f32 %v1966, %v518
      %v1987 = vadd.f32 %v1967, %v518
      %v1988 = vadd.f32 %v1968, %v518
      %v1989 = vadd.f32 %v1969, %v518
      %v1990 = vadd.f32 %v1970, %v518
      %v1991 = vadd.f32 %v1971, %v518
      %v1992 = vadd.f32 %v1972, %v518
      %v1993 = vadd.f32 %v1973, %v518
      %v1994 = vadd.f32 %v1974, %v518
      %v1995 = vadd.f32 %v1975, %v518
      %v1996 = vadd.f32 %v1976, %v518
      %v1997 = vmax.f32 %v1977, 0.0
      %v1998 = vmax.f32 %v1978, 0.0
      %v1999 = vmax.f32 %v1979, 0.0
      %v2000 = vmax.f32 %v1980, 0.0
      %v2001 = vmax.f32 %v1981, 0.0
      %v2002 = vmax.f32 %v1982, 0.0
      %v2003 = vmax.f32 %v1983, 0.0
      %v2004 = vmax.f32 %v1984, 0.0
      %v2005 = vmax.f32 %v1985, 0.0
      %v2006 = vmax.f32 %v1986, 0.0
      %v2007 = vmax.f32 %v1987, 0.0
      %v2008 = vmax.f32 %v1988, 0.0
      %v2009 = vmax.f32 %v1989, 0.0
      %v2010 = vmax.f32 %v1990, 0.0
      %v2011 = vmax.f32 %v1991, 0.0
      %v2012 = vmax.f32 %v1992, 0.0
      %v2013 = vmax.f32 %v1993, 0.0
      %v2014 = vmax.f32 %v1994, 0.0
      %v2015 = vmax.f32 %v1995, 0.0
      %v2016 = vmax.f32 %v1996, 0.0
      %v2017 = vmul.f32 %v1997, %v583
      %v2018 = vmul.f32 %v1998, %v588
      %v2019 = vmul.f32 %v1999, %v593
      %v2020 = vmul.f32 %v2000, %v598
      %v2021 = vmul.f32 %v2001, %v603
      %v2022 = vmul.f32 %v2002, %v608
      %v2023 = vmul.f32 %v2003, %v613
      %v2024 = vmul.f32 %v2004, %v618
      %v2025 = vmul.f32 %v2005, %v623
      %v2026 = vmul.f32 %v2006, %v628
      %v2027 = vmul.f32 %v2007, %v633
      %v2028 = vmul.f32 %v2008, %v638
      %v2029 = vmul.f32 %v2009, %v643
      %v2030 = vmul.f32 %v2010, %v648
      %v2031 = vmul.f32 %v2011, %v653
      %v2032 = vmul.f32 %v2012, %v658
      %v2033 = vmul.f32 %v2013, %v663
      %v2034 = vmul.f32 %v2014, %v668
      %v2035 = vmul.f32 %v2015, %v673
      %v2036 = vmul.f32 %v2016, %v678
      %s2037 = sadd.s32 %s26, 1
      %p2038 = scmp.ge.s32.totalorder %s2037, 1
      %p2039 = scmp.le.s32.totalorder %s2037, 8
      %p2040 = pnand %p2038, %p2039
      %p2041 = pneg %p2040
      %s2042 = scalar_select %p2041, 1.0, 0.0
      %v2043 = vstv %s2042
      %v2044 = vmul.f32 %v2017, %v2043
      %v2045 = vmul.f32 %v2018, %v2043
      %v2046 = vmul.f32 %v2019, %v2043
      %v2047 = vmul.f32 %v2020, %v2043
      %v2048 = vmul.f32 %v2021, %v2043
      %v2049 = vmul.f32 %v2022, %v2043
      %v2050 = vmul.f32 %v2023, %v2043
      %v2051 = vmul.f32 %v2024, %v2043
      %v2052 = vmul.f32 %v2025, %v2043
      %v2053 = vmul.f32 %v2026, %v2043
      %v2054 = vmul.f32 %v2027, %v2043
      %v2055 = vmul.f32 %v2028, %v2043
      %v2056 = vmul.f32 %v2029, %v2043
      %v2057 = vmul.f32 %v2030, %v2043
      %v2058 = vmul.f32 %v2031, %v2043
      %v2059 = vmul.f32 %v2032, %v2043
      %v2060 = vmul.f32 %v2033, %v2043
      %v2061 = vmul.f32 %v2034, %v2043
      %v2062 = vmul.f32 %v2035, %v2043
      %v2063 = vmul.f32 %v2036, %v2043
      %v2064 = vpack.c.bf16 %v2044, %v2044
      %v2065 = vpack.c.bf16 %v2045, %v2045
      %v2066 = vpack.c.bf16 %v2046, %v2046
      %v2067 = vpack.c.bf16 %v2047, %v2047
      %v2068 = vpack.c.bf16 %v2048, %v2048
      %v2069 = vpack.c.bf16 %v2049, %v2049
      %v2070 = vpack.c.bf16 %v2050, %v2050
      %v2071 = vpack.c.bf16 %v2051, %v2051
      %v2072 = vpack.c.bf16 %v2052, %v2052
      %v2073 = vpack.c.bf16 %v2053, %v2053
      %v2074 = vpack.c.bf16 %v2054, %v2054
      %v2075 = vpack.c.bf16 %v2055, %v2055
      %v2076 = vpack.c.bf16 %v2056, %v2056
      %v2077 = vpack.c.bf16 %v2057, %v2057
      %v2078 = vpack.c.bf16 %v2058, %v2058
      %v2079 = vpack.c.bf16 %v2059, %v2059
      %v2080 = vpack.c.bf16 %v2060, %v2060
      %v2081 = vpack.c.bf16 %v2061, %v2061
      %v2082 = vpack.c.bf16 %v2062, %v2062
      %v2083 = vpack.c.bf16 %v2063, %v2063
      %s2084 = scalar_lea.vmem %s3, 576
      %v2085 = vld [vmem:[%s2084] sm:$0xf]
      %v2086 = vld [vmem:[%s2084 + $0x4] sm:$0xf]
      %v2087 = vld [vmem:[%s2084 + $0x8] sm:$0xf]
      %v2088 = vld [vmem:[%s2084 + $0xc] sm:$0xf]
      %v2089 = vld [vmem:[%s2084 + $0x10] sm:$0xf]
      %v2090 = vld [vmem:[%s2084 + $0x14] sm:$0xf]
      %v2091 = vld [vmem:[%s2084 + $0x18] sm:$0xf]
      %v2092 = vld [vmem:[%s2084 + $0x1c] sm:$0xf]
      %v2093 = vld [vmem:[%s2084 + $0x20] sm:$0xf]
      %v2094 = vld [vmem:[%s2084 + $0x24] sm:$0xf]
      %v2095 = vld [vmem:[%s2084 + $0x28] sm:$0xf]
      %v2096 = vld [vmem:[%s2084 + $0x2c] sm:$0xf]
      %v2097 = vld [vmem:[%s2084 + $0x30] sm:$0xf]
      %v2098 = vld [vmem:[%s2084 + $0x34] sm:$0xf]
      %v2099 = vld [vmem:[%s2084 + $0x38] sm:$0xf]
      %v2100 = vld [vmem:[%s2084 + $0x3c] sm:$0xf]
      %v2109 = vunpack.c.l.b16 %v2064
      %v2110 = vunpack.c.l.b16 %v2066
      %v2111 = vunpack.c.l.b16 %v2068
      %v2112 = vunpack.c.l.b16 %v2070
      %v2113 = vunpack.c.l.b16 %v2072
      %v2114 = vunpack.c.l.b16 %v2074
      %v2115 = vunpack.c.l.b16 %v2076
      %v2116 = vunpack.c.l.b16 %v2078
      %v2117 = vpack.c.b16 %v2110, %v2109
      %v2118 = vpack.c.b16 %v2112, %v2111
      %v2119 = vpack.c.b16 %v2114, %v2113
      %v2120 = vpack.c.b16 %v2116, %v2115
      %v2141 = vunpack.c.l.b16 %v2085
      %v2142 = vunpack.c.l.b16 %v2086
      %v2143 = vunpack.c.l.b16 %v2087
      %v2144 = vunpack.c.l.b16 %v2088
      %v2145 = vunpack.c.l.b16 %v2089
      %v2146 = vunpack.c.l.b16 %v2090
      %v2147 = vunpack.c.l.b16 %v2091
      %v2148 = vunpack.c.l.b16 %v2092
      %v2149 = vunpack.c.l.b16 %v2093
      %v2150 = vunpack.c.l.b16 %v2094
      %v2151 = vunpack.c.l.b16 %v2095
      %v2152 = vunpack.c.l.b16 %v2096
      %v2153 = vunpack.c.l.b16 %v2097
      %v2154 = vunpack.c.l.b16 %v2098
      %v2155 = vunpack.c.l.b16 %v2099
      %v2156 = vunpack.c.l.b16 %v2100
      %v2157 = vpack.c.b16 %v2142, %v2141
      %v2158 = vpack.c.b16 %v2144, %v2143
      %v2159 = vpack.c.b16 %v2146, %v2145
      %v2160 = vpack.c.b16 %v2148, %v2147
      %v2161 = vpack.c.b16 %v2150, %v2149
      %v2162 = vpack.c.b16 %v2152, %v2151
      %v2163 = vpack.c.b16 %v2154, %v2153
      %v2164 = vpack.c.b16 %v2156, %v2155
      %2173 = vmatpush.bf16.msra.mxu0 %v2164
      %2174 = vmatpush.bf16.msra.mxu0 %v2163
      %2175 = vmatpush.bf16.msra.mxu0 %v2162
      %2176 = vmatpush.bf16.msra.mxu0 %v2161
      %2177 = vmatpush.bf16.msra.mxu0 %v2160
      %2178 = vmatpush.bf16.msra.mxu0 %v2159
      %2179 = vmatpush.bf16.msra.mxu0 %v2158
      %2180 = vmatpush.bf16.msra.mxu0 %v2157
      %2181 = vmatmul.bf16.gmra.mxu0 %v2117
      %v2182 = vpop.f32.mrf.mxu0
      %v2183 = vadd.f32 0.0, %v2182
      %v2184 = vpop.f32.mrf.mxu0
      %v2185 = vadd.f32 0.0, %v2184
      %2186 = vmatmul.bf16.gmra.mxu0 %v2118
      %v2187 = vpop.f32.mrf.mxu0
      %v2188 = vadd.f32 0.0, %v2187
      %v2189 = vpop.f32.mrf.mxu0
      %v2190 = vadd.f32 0.0, %v2189
      %2191 = vmatmul.bf16.gmra.mxu0 %v2119
      %v2192 = vpop.f32.mrf.mxu0
      %v2193 = vadd.f32 0.0, %v2192
      %v2194 = vpop.f32.mrf.mxu0
      %v2195 = vadd.f32 0.0, %v2194
      %2196 = vmatmul.bf16.gmra.mxu0 %v2120
      %v2197 = vpop.f32.mrf.mxu0
      %v2198 = vadd.f32 0.0, %v2197
      %v2199 = vpop.f32.mrf.mxu0
      %v2200 = vadd.f32 0.0, %v2199
      %2201 = vdwg.mxu0
      %v2202 = vadd.f32 %v1929, %v2183
      %v2203 = vadd.f32 %v1930, %v2185
      %v2204 = vadd.f32 %v1931, %v2188
      %v2205 = vadd.f32 %v1932, %v2190
      %v2206 = vadd.f32 %v1933, %v2193
      %v2207 = vadd.f32 %v1934, %v2195
      %v2208 = vadd.f32 %v1935, %v2198
      %v2209 = vadd.f32 %v1936, %v2200
      %v2211 = vshrl.u32 %v2064, 16
      %v2213 = vrot.slane %v2211, 4
      %v2214 = vshll.u32 %v2064, 16
      %v2216 = vrot.slane %v2214, 5
      %v2217 = vor.u32 %v2213, %v2216
      %v2218 = vrot.slane %v2217, 4
      %v2220 = vshll.u32 %v2065, 16
      %v2222 = vrot.slane %v2220, 5
      %v2223 = vsel %vm764, %v2218, %v2222
      %v2225 = vshrl.u32 %v2066, 16
      %v2227 = vrot.slane %v2225, 4
      %v2228 = vshll.u32 %v2066, 16
      %v2230 = vrot.slane %v2228, 5
      %v2231 = vor.u32 %v2227, %v2230
      %v2232 = vrot.slane %v2231, 4
      %v2234 = vshll.u32 %v2067, 16
      %v2236 = vrot.slane %v2234, 5
      %v2237 = vsel %vm764, %v2232, %v2236
      %v2239 = vshrl.u32 %v2068, 16
      %v2241 = vrot.slane %v2239, 4
      %v2242 = vshll.u32 %v2068, 16
      %v2244 = vrot.slane %v2242, 5
      %v2245 = vor.u32 %v2241, %v2244
      %v2246 = vrot.slane %v2245, 4
      %v2248 = vshll.u32 %v2069, 16
      %v2250 = vrot.slane %v2248, 5
      %v2251 = vsel %vm764, %v2246, %v2250
      %v2253 = vshrl.u32 %v2070, 16
      %v2255 = vrot.slane %v2253, 4
      %v2256 = vshll.u32 %v2070, 16
      %v2258 = vrot.slane %v2256, 5
      %v2259 = vor.u32 %v2255, %v2258
      %v2260 = vrot.slane %v2259, 4
      %v2262 = vshll.u32 %v2071, 16
      %v2264 = vrot.slane %v2262, 5
      %v2265 = vsel %vm764, %v2260, %v2264
      %v2267 = vshrl.u32 %v2072, 16
      %v2269 = vrot.slane %v2267, 4
      %v2270 = vshll.u32 %v2072, 16
      %v2272 = vrot.slane %v2270, 5
      %v2273 = vor.u32 %v2269, %v2272
      %v2274 = vrot.slane %v2273, 4
      %v2276 = vshll.u32 %v2073, 16
      %v2278 = vrot.slane %v2276, 5
      %v2279 = vsel %vm764, %v2274, %v2278
      %v2281 = vshrl.u32 %v2074, 16
      %v2283 = vrot.slane %v2281, 4
      %v2284 = vshll.u32 %v2074, 16
      %v2286 = vrot.slane %v2284, 5
      %v2287 = vor.u32 %v2283, %v2286
      %v2288 = vrot.slane %v2287, 4
      %v2290 = vshll.u32 %v2075, 16
      %v2292 = vrot.slane %v2290, 5
      %v2293 = vsel %vm764, %v2288, %v2292
      %v2295 = vshrl.u32 %v2076, 16
      %v2297 = vrot.slane %v2295, 4
      %v2298 = vshll.u32 %v2076, 16
      %v2300 = vrot.slane %v2298, 5
      %v2301 = vor.u32 %v2297, %v2300
      %v2302 = vrot.slane %v2301, 4
      %v2304 = vshll.u32 %v2077, 16
      %v2306 = vrot.slane %v2304, 5
      %v2307 = vsel %vm764, %v2302, %v2306
      %v2309 = vshrl.u32 %v2078, 16
      %v2311 = vrot.slane %v2309, 4
      %v2312 = vshll.u32 %v2078, 16
      %v2314 = vrot.slane %v2312, 5
      %v2315 = vor.u32 %v2311, %v2314
      %v2316 = vrot.slane %v2315, 4
      %v2318 = vshll.u32 %v2079, 16
      %v2320 = vrot.slane %v2318, 5
      %v2321 = vsel %vm764, %v2316, %v2320
      %s2322 = scalar_lea.vmem %s3, 640
      %v2323 = vld [vmem:[%s2322] sm:$0xf]
      %v2324 = vld [vmem:[%s2322 + $0x4] sm:$0xf]
      %v2325 = vld [vmem:[%s2322 + $0x8] sm:$0xf]
      %v2326 = vld [vmem:[%s2322 + $0xc] sm:$0xf]
      %v2327 = vld [vmem:[%s2322 + $0x10] sm:$0xf]
      %v2328 = vld [vmem:[%s2322 + $0x14] sm:$0xf]
      %v2329 = vld [vmem:[%s2322 + $0x18] sm:$0xf]
      %v2330 = vld [vmem:[%s2322 + $0x1c] sm:$0xf]
      %v2331 = vld [vmem:[%s2322 + $0x20] sm:$0xf]
      %v2332 = vld [vmem:[%s2322 + $0x24] sm:$0xf]
      %v2333 = vld [vmem:[%s2322 + $0x28] sm:$0xf]
      %v2334 = vld [vmem:[%s2322 + $0x2c] sm:$0xf]
      %v2335 = vld [vmem:[%s2322 + $0x30] sm:$0xf]
      %v2336 = vld [vmem:[%s2322 + $0x34] sm:$0xf]
      %v2337 = vld [vmem:[%s2322 + $0x38] sm:$0xf]
      %v2338 = vld [vmem:[%s2322 + $0x3c] sm:$0xf]
      %v2339 = vunpack.c.l.b16 %v2223
      %v2340 = vunpack.c.l.b16 %v2237
      %v2341 = vunpack.c.l.b16 %v2251
      %v2342 = vunpack.c.l.b16 %v2265
      %v2343 = vunpack.c.l.b16 %v2279
      %v2344 = vunpack.c.l.b16 %v2293
      %v2345 = vunpack.c.l.b16 %v2307
      %v2346 = vunpack.c.l.b16 %v2321
      %v2347 = vpack.c.b16 %v2340, %v2339
      %v2348 = vpack.c.b16 %v2342, %v2341
      %v2349 = vpack.c.b16 %v2344, %v2343
      %v2350 = vpack.c.b16 %v2346, %v2345
      %v2371 = vunpack.c.l.b16 %v2323
      %v2372 = vunpack.c.l.b16 %v2324
      %v2373 = vunpack.c.l.b16 %v2325
      %v2374 = vunpack.c.l.b16 %v2326
      %v2375 = vunpack.c.l.b16 %v2327
      %v2376 = vunpack.c.l.b16 %v2328
      %v2377 = vunpack.c.l.b16 %v2329
      %v2378 = vunpack.c.l.b16 %v2330
      %v2379 = vunpack.c.l.b16 %v2331
      %v2380 = vunpack.c.l.b16 %v2332
      %v2381 = vunpack.c.l.b16 %v2333
      %v2382 = vunpack.c.l.b16 %v2334
      %v2383 = vunpack.c.l.b16 %v2335
      %v2384 = vunpack.c.l.b16 %v2336
      %v2385 = vunpack.c.l.b16 %v2337
      %v2386 = vunpack.c.l.b16 %v2338
      %v2387 = vpack.c.b16 %v2372, %v2371
      %v2388 = vpack.c.b16 %v2374, %v2373
      %v2389 = vpack.c.b16 %v2376, %v2375
      %v2390 = vpack.c.b16 %v2378, %v2377
      %v2391 = vpack.c.b16 %v2380, %v2379
      %v2392 = vpack.c.b16 %v2382, %v2381
      %v2393 = vpack.c.b16 %v2384, %v2383
      %v2394 = vpack.c.b16 %v2386, %v2385
      %2403 = vmatpush.bf16.msra.mxu0 %v2394
      %2404 = vmatpush.bf16.msra.mxu0 %v2393
      %2405 = vmatpush.bf16.msra.mxu0 %v2392
      %2406 = vmatpush.bf16.msra.mxu0 %v2391
      %2407 = vmatpush.bf16.msra.mxu0 %v2390
      %2408 = vmatpush.bf16.msra.mxu0 %v2389
      %2409 = vmatpush.bf16.msra.mxu0 %v2388
      %2410 = vmatpush.bf16.msra.mxu0 %v2387
      %2411 = vmatmul.bf16.gmra.mxu0 %v2347
      %v2412 = vpop.f32.mrf.mxu0
      %v2413 = vadd.f32 0.0, %v2412
      %v2414 = vpop.f32.mrf.mxu0
      %v2415 = vadd.f32 0.0, %v2414
      %2416 = vmatmul.bf16.gmra.mxu0 %v2348
      %v2417 = vpop.f32.mrf.mxu0
      %v2418 = vadd.f32 0.0, %v2417
      %v2419 = vpop.f32.mrf.mxu0
      %v2420 = vadd.f32 0.0, %v2419
      %2421 = vmatmul.bf16.gmra.mxu0 %v2349
      %v2422 = vpop.f32.mrf.mxu0
      %v2423 = vadd.f32 0.0, %v2422
      %v2424 = vpop.f32.mrf.mxu0
      %v2425 = vadd.f32 0.0, %v2424
      %2426 = vmatmul.bf16.gmra.mxu0 %v2350
      %v2427 = vpop.f32.mrf.mxu0
      %v2428 = vadd.f32 0.0, %v2427
      %v2429 = vpop.f32.mrf.mxu0
      %v2430 = vadd.f32 0.0, %v2429
      %2431 = vdwg.mxu0
      %v2432 = vadd.f32 %v2202, %v2413
      %v2433 = vadd.f32 %v2203, %v2415
      %v2434 = vadd.f32 %v2204, %v2418
      %v2435 = vadd.f32 %v2205, %v2420
      %v2436 = vadd.f32 %v2206, %v2423
      %v2437 = vadd.f32 %v2207, %v2425
      %v2438 = vadd.f32 %v2208, %v2428
      %v2439 = vadd.f32 %v2209, %v2430
      %v2448 = vrot.slane %v2064, 5
      %v2449 = vrot.slane %v2448, 4
      %v2450 = vrot.slane %v2065, 5
      %v2451 = vsel %vm1098, %v2449, %v2450
      %v2452 = vrot.slane %v2066, 5
      %v2453 = vrot.slane %v2452, 4
      %v2454 = vrot.slane %v2067, 5
      %v2455 = vsel %vm1098, %v2453, %v2454
      %v2456 = vrot.slane %v2068, 5
      %v2457 = vrot.slane %v2456, 4
      %v2458 = vrot.slane %v2069, 5
      %v2459 = vsel %vm1098, %v2457, %v2458
      %v2460 = vrot.slane %v2070, 5
      %v2461 = vrot.slane %v2460, 4
      %v2462 = vrot.slane %v2071, 5
      %v2463 = vsel %vm1098, %v2461, %v2462
      %v2464 = vrot.slane %v2072, 5
      %v2465 = vrot.slane %v2464, 4
      %v2466 = vrot.slane %v2073, 5
      %v2467 = vsel %vm1098, %v2465, %v2466
      %v2468 = vrot.slane %v2074, 5
      %v2469 = vrot.slane %v2468, 4
      %v2470 = vrot.slane %v2075, 5
      %v2471 = vsel %vm1098, %v2469, %v2470
      %v2472 = vrot.slane %v2076, 5
      %v2473 = vrot.slane %v2472, 4
      %v2474 = vrot.slane %v2077, 5
      %v2475 = vsel %vm1098, %v2473, %v2474
      %v2476 = vrot.slane %v2078, 5
      %v2477 = vrot.slane %v2476, 4
      %v2478 = vrot.slane %v2079, 5
      %v2479 = vsel %vm1098, %v2477, %v2478
      %s2480 = scalar_lea.vmem %s3, 704
      %v2481 = vld [vmem:[%s2480] sm:$0xf]
      %v2482 = vld [vmem:[%s2480 + $0x4] sm:$0xf]
      %v2483 = vld [vmem:[%s2480 + $0x8] sm:$0xf]
      %v2484 = vld [vmem:[%s2480 + $0xc] sm:$0xf]
      %v2485 = vld [vmem:[%s2480 + $0x10] sm:$0xf]
      %v2486 = vld [vmem:[%s2480 + $0x14] sm:$0xf]
      %v2487 = vld [vmem:[%s2480 + $0x18] sm:$0xf]
      %v2488 = vld [vmem:[%s2480 + $0x1c] sm:$0xf]
      %v2489 = vld [vmem:[%s2480 + $0x20] sm:$0xf]
      %v2490 = vld [vmem:[%s2480 + $0x24] sm:$0xf]
      %v2491 = vld [vmem:[%s2480 + $0x28] sm:$0xf]
      %v2492 = vld [vmem:[%s2480 + $0x2c] sm:$0xf]
      %v2493 = vld [vmem:[%s2480 + $0x30] sm:$0xf]
      %v2494 = vld [vmem:[%s2480 + $0x34] sm:$0xf]
      %v2495 = vld [vmem:[%s2480 + $0x38] sm:$0xf]
      %v2496 = vld [vmem:[%s2480 + $0x3c] sm:$0xf]
      %v2497 = vunpack.c.l.b16 %v2451
      %v2498 = vunpack.c.l.b16 %v2455
      %v2499 = vunpack.c.l.b16 %v2459
      %v2500 = vunpack.c.l.b16 %v2463
      %v2501 = vunpack.c.l.b16 %v2467
      %v2502 = vunpack.c.l.b16 %v2471
      %v2503 = vunpack.c.l.b16 %v2475
      %v2504 = vunpack.c.l.b16 %v2479
      %v2505 = vpack.c.b16 %v2498, %v2497
      %v2506 = vpack.c.b16 %v2500, %v2499
      %v2507 = vpack.c.b16 %v2502, %v2501
      %v2508 = vpack.c.b16 %v2504, %v2503
      %v2529 = vunpack.c.l.b16 %v2481
      %v2530 = vunpack.c.l.b16 %v2482
      %v2531 = vunpack.c.l.b16 %v2483
      %v2532 = vunpack.c.l.b16 %v2484
      %v2533 = vunpack.c.l.b16 %v2485
      %v2534 = vunpack.c.l.b16 %v2486
      %v2535 = vunpack.c.l.b16 %v2487
      %v2536 = vunpack.c.l.b16 %v2488
      %v2537 = vunpack.c.l.b16 %v2489
      %v2538 = vunpack.c.l.b16 %v2490
      %v2539 = vunpack.c.l.b16 %v2491
      %v2540 = vunpack.c.l.b16 %v2492
      %v2541 = vunpack.c.l.b16 %v2493
      %v2542 = vunpack.c.l.b16 %v2494
      %v2543 = vunpack.c.l.b16 %v2495
      %v2544 = vunpack.c.l.b16 %v2496
      %v2545 = vpack.c.b16 %v2530, %v2529
      %v2546 = vpack.c.b16 %v2532, %v2531
      %v2547 = vpack.c.b16 %v2534, %v2533
      %v2548 = vpack.c.b16 %v2536, %v2535
      %v2549 = vpack.c.b16 %v2538, %v2537
      %v2550 = vpack.c.b16 %v2540, %v2539
      %v2551 = vpack.c.b16 %v2542, %v2541
      %v2552 = vpack.c.b16 %v2544, %v2543
      %2561 = vmatpush.bf16.msra.mxu0 %v2552
      %2562 = vmatpush.bf16.msra.mxu0 %v2551
      %2563 = vmatpush.bf16.msra.mxu0 %v2550
      %2564 = vmatpush.bf16.msra.mxu0 %v2549
      %2565 = vmatpush.bf16.msra.mxu0 %v2548
      %2566 = vmatpush.bf16.msra.mxu0 %v2547
      %2567 = vmatpush.bf16.msra.mxu0 %v2546
      %2568 = vmatpush.bf16.msra.mxu0 %v2545
      %2569 = vmatmul.bf16.gmra.mxu0 %v2505
      %v2570 = vpop.f32.mrf.mxu0
      %v2571 = vadd.f32 0.0, %v2570
      %v2572 = vpop.f32.mrf.mxu0
      %v2573 = vadd.f32 0.0, %v2572
      %2574 = vmatmul.bf16.gmra.mxu0 %v2506
      %v2575 = vpop.f32.mrf.mxu0
      %v2576 = vadd.f32 0.0, %v2575
      %v2577 = vpop.f32.mrf.mxu0
      %v2578 = vadd.f32 0.0, %v2577
      %2579 = vmatmul.bf16.gmra.mxu0 %v2507
      %v2580 = vpop.f32.mrf.mxu0
      %v2581 = vadd.f32 0.0, %v2580
      %v2582 = vpop.f32.mrf.mxu0
      %v2583 = vadd.f32 0.0, %v2582
      %2584 = vmatmul.bf16.gmra.mxu0 %v2508
      %v2585 = vpop.f32.mrf.mxu0
      %v2586 = vadd.f32 0.0, %v2585
      %v2587 = vpop.f32.mrf.mxu0
      %v2588 = vadd.f32 0.0, %v2587
      %2589 = vdwg.mxu0
      %v2590 = vadd.f32 %v2432, %v2571
      %v2591 = vadd.f32 %v2433, %v2573
      %v2592 = vadd.f32 %v2434, %v2576
      %v2593 = vadd.f32 %v2435, %v2578
      %v2594 = vadd.f32 %v2436, %v2581
      %v2595 = vadd.f32 %v2437, %v2583
      %v2596 = vadd.f32 %v2438, %v2586
      %v2597 = vadd.f32 %v2439, %v2588
      %s2598 = scalar_lea.vmem %s3, 768
      %v2599 = vld [vmem:[%s2598] sm:$0xf]
      %v2600 = vld [vmem:[%s2598 + $0x4] sm:$0xf]
      %v2601 = vld [vmem:[%s2598 + $0x8] sm:$0xf]
      %v2602 = vld [vmem:[%s2598 + $0xc] sm:$0xf]
      %v2603 = vld [vmem:[%s2598 + $0x10] sm:$0xf]
      %v2604 = vld [vmem:[%s2598 + $0x14] sm:$0xf]
      %v2605 = vld [vmem:[%s2598 + $0x18] sm:$0xf]
      %v2606 = vld [vmem:[%s2598 + $0x1c] sm:$0xf]
      %v2607 = vld [vmem:[%s2598 + $0x20] sm:$0xf]
      %v2608 = vld [vmem:[%s2598 + $0x24] sm:$0xf]
      %v2609 = vld [vmem:[%s2598 + $0x28] sm:$0xf]
      %v2610 = vld [vmem:[%s2598 + $0x2c] sm:$0xf]
      %v2611 = vld [vmem:[%s2598 + $0x30] sm:$0xf]
      %v2612 = vld [vmem:[%s2598 + $0x34] sm:$0xf]
      %v2613 = vld [vmem:[%s2598 + $0x38] sm:$0xf]
      %v2614 = vld [vmem:[%s2598 + $0x3c] sm:$0xf]
      %v2616 = vunpack.c.l.b16 %v2080
      %v2617 = vpack.c.b16 %v2111, %v2110
      %v2618 = vpack.c.b16 %v2113, %v2112
      %v2619 = vpack.c.b16 %v2115, %v2114
      %v2620 = vpack.c.b16 %v2616, %v2116
      %v2641 = vunpack.c.l.b16 %v2599
      %v2642 = vunpack.c.l.b16 %v2600
      %v2643 = vunpack.c.l.b16 %v2601
      %v2644 = vunpack.c.l.b16 %v2602
      %v2645 = vunpack.c.l.b16 %v2603
      %v2646 = vunpack.c.l.b16 %v2604
      %v2647 = vunpack.c.l.b16 %v2605
      %v2648 = vunpack.c.l.b16 %v2606
      %v2649 = vunpack.c.l.b16 %v2607
      %v2650 = vunpack.c.l.b16 %v2608
      %v2651 = vunpack.c.l.b16 %v2609
      %v2652 = vunpack.c.l.b16 %v2610
      %v2653 = vunpack.c.l.b16 %v2611
      %v2654 = vunpack.c.l.b16 %v2612
      %v2655 = vunpack.c.l.b16 %v2613
      %v2656 = vunpack.c.l.b16 %v2614
      %v2657 = vpack.c.b16 %v2642, %v2641
      %v2658 = vpack.c.b16 %v2644, %v2643
      %v2659 = vpack.c.b16 %v2646, %v2645
      %v2660 = vpack.c.b16 %v2648, %v2647
      %v2661 = vpack.c.b16 %v2650, %v2649
      %v2662 = vpack.c.b16 %v2652, %v2651
      %v2663 = vpack.c.b16 %v2654, %v2653
      %v2664 = vpack.c.b16 %v2656, %v2655
      %2673 = vmatpush.bf16.msra.mxu0 %v2664
      %2674 = vmatpush.bf16.msra.mxu0 %v2663
      %2675 = vmatpush.bf16.msra.mxu0 %v2662
      %2676 = vmatpush.bf16.msra.mxu0 %v2661
      %2677 = vmatpush.bf16.msra.mxu0 %v2660
      %2678 = vmatpush.bf16.msra.mxu0 %v2659
      %2679 = vmatpush.bf16.msra.mxu0 %v2658
      %2680 = vmatpush.bf16.msra.mxu0 %v2657
      %2681 = vmatmul.bf16.gmra.mxu0 %v2617
      %v2682 = vpop.f32.mrf.mxu0
      %v2683 = vadd.f32 0.0, %v2682
      %v2684 = vpop.f32.mrf.mxu0
      %v2685 = vadd.f32 0.0, %v2684
      %2686 = vmatmul.bf16.gmra.mxu0 %v2618
      %v2687 = vpop.f32.mrf.mxu0
      %v2688 = vadd.f32 0.0, %v2687
      %v2689 = vpop.f32.mrf.mxu0
      %v2690 = vadd.f32 0.0, %v2689
      %2691 = vmatmul.bf16.gmra.mxu0 %v2619
      %v2692 = vpop.f32.mrf.mxu0
      %v2693 = vadd.f32 0.0, %v2692
      %v2694 = vpop.f32.mrf.mxu0
      %v2695 = vadd.f32 0.0, %v2694
      %2696 = vmatmul.bf16.gmra.mxu0 %v2620
      %v2697 = vpop.f32.mrf.mxu0
      %v2698 = vadd.f32 0.0, %v2697
      %v2699 = vpop.f32.mrf.mxu0
      %v2700 = vadd.f32 0.0, %v2699
      %2701 = vdwg.mxu0
      %v2702 = vadd.f32 %v2590, %v2683
      %v2703 = vadd.f32 %v2591, %v2685
      %v2704 = vadd.f32 %v2592, %v2688
      %v2705 = vadd.f32 %v2593, %v2690
      %v2706 = vadd.f32 %v2594, %v2693
      %v2707 = vadd.f32 %v2595, %v2695
      %v2708 = vadd.f32 %v2596, %v2698
      %v2709 = vadd.f32 %v2597, %v2700
      %v2711 = vshrl.u32 %v2080, 16
      %v2713 = vrot.slane %v2711, 4
      %v2714 = vshll.u32 %v2080, 16
      %v2716 = vrot.slane %v2714, 5
      %v2717 = vor.u32 %v2713, %v2716
      %v2718 = vrot.slane %v2717, 4
      %v2720 = vshll.u32 %v2081, 16
      %v2722 = vrot.slane %v2720, 5
      %v2723 = vsel %vm764, %v2718, %v2722
      %s2724 = scalar_lea.vmem %s3, 832
      %v2725 = vld [vmem:[%s2724] sm:$0xf]
      %v2726 = vld [vmem:[%s2724 + $0x4] sm:$0xf]
      %v2727 = vld [vmem:[%s2724 + $0x8] sm:$0xf]
      %v2728 = vld [vmem:[%s2724 + $0xc] sm:$0xf]
      %v2729 = vld [vmem:[%s2724 + $0x10] sm:$0xf]
      %v2730 = vld [vmem:[%s2724 + $0x14] sm:$0xf]
      %v2731 = vld [vmem:[%s2724 + $0x18] sm:$0xf]
      %v2732 = vld [vmem:[%s2724 + $0x1c] sm:$0xf]
      %v2733 = vld [vmem:[%s2724 + $0x20] sm:$0xf]
      %v2734 = vld [vmem:[%s2724 + $0x24] sm:$0xf]
      %v2735 = vld [vmem:[%s2724 + $0x28] sm:$0xf]
      %v2736 = vld [vmem:[%s2724 + $0x2c] sm:$0xf]
      %v2737 = vld [vmem:[%s2724 + $0x30] sm:$0xf]
      %v2738 = vld [vmem:[%s2724 + $0x34] sm:$0xf]
      %v2739 = vld [vmem:[%s2724 + $0x38] sm:$0xf]
      %v2740 = vld [vmem:[%s2724 + $0x3c] sm:$0xf]
      %v2741 = vunpack.c.l.b16 %v2723
      %v2742 = vpack.c.b16 %v2341, %v2340
      %v2743 = vpack.c.b16 %v2343, %v2342
      %v2744 = vpack.c.b16 %v2345, %v2344
      %v2745 = vpack.c.b16 %v2741, %v2346
      %v2766 = vunpack.c.l.b16 %v2725
      %v2767 = vunpack.c.l.b16 %v2726
      %v2768 = vunpack.c.l.b16 %v2727
      %v2769 = vunpack.c.l.b16 %v2728
      %v2770 = vunpack.c.l.b16 %v2729
      %v2771 = vunpack.c.l.b16 %v2730
      %v2772 = vunpack.c.l.b16 %v2731
      %v2773 = vunpack.c.l.b16 %v2732
      %v2774 = vunpack.c.l.b16 %v2733
      %v2775 = vunpack.c.l.b16 %v2734
      %v2776 = vunpack.c.l.b16 %v2735
      %v2777 = vunpack.c.l.b16 %v2736
      %v2778 = vunpack.c.l.b16 %v2737
      %v2779 = vunpack.c.l.b16 %v2738
      %v2780 = vunpack.c.l.b16 %v2739
      %v2781 = vunpack.c.l.b16 %v2740
      %v2782 = vpack.c.b16 %v2767, %v2766
      %v2783 = vpack.c.b16 %v2769, %v2768
      %v2784 = vpack.c.b16 %v2771, %v2770
      %v2785 = vpack.c.b16 %v2773, %v2772
      %v2786 = vpack.c.b16 %v2775, %v2774
      %v2787 = vpack.c.b16 %v2777, %v2776
      %v2788 = vpack.c.b16 %v2779, %v2778
      %v2789 = vpack.c.b16 %v2781, %v2780
      %2798 = vmatpush.bf16.msra.mxu0 %v2789
      %2799 = vmatpush.bf16.msra.mxu0 %v2788
      %2800 = vmatpush.bf16.msra.mxu0 %v2787
      %2801 = vmatpush.bf16.msra.mxu0 %v2786
      %2802 = vmatpush.bf16.msra.mxu0 %v2785
      %2803 = vmatpush.bf16.msra.mxu0 %v2784
      %2804 = vmatpush.bf16.msra.mxu0 %v2783
      %2805 = vmatpush.bf16.msra.mxu0 %v2782
      %2806 = vmatmul.bf16.gmra.mxu0 %v2742
      %v2807 = vpop.f32.mrf.mxu0
      %v2808 = vadd.f32 0.0, %v2807
      %v2809 = vpop.f32.mrf.mxu0
      %v2810 = vadd.f32 0.0, %v2809
      %2811 = vmatmul.bf16.gmra.mxu0 %v2743
      %v2812 = vpop.f32.mrf.mxu0
      %v2813 = vadd.f32 0.0, %v2812
      %v2814 = vpop.f32.mrf.mxu0
      %v2815 = vadd.f32 0.0, %v2814
      %2816 = vmatmul.bf16.gmra.mxu0 %v2744
      %v2817 = vpop.f32.mrf.mxu0
      %v2818 = vadd.f32 0.0, %v2817
      %v2819 = vpop.f32.mrf.mxu0
      %v2820 = vadd.f32 0.0, %v2819
      %2821 = vmatmul.bf16.gmra.mxu0 %v2745
      %v2822 = vpop.f32.mrf.mxu0
      %v2823 = vadd.f32 0.0, %v2822
      %v2824 = vpop.f32.mrf.mxu0
      %v2825 = vadd.f32 0.0, %v2824
      %2826 = vdwg.mxu0
      %v2827 = vadd.f32 %v2702, %v2808
      %v2828 = vadd.f32 %v2703, %v2810
      %v2829 = vadd.f32 %v2704, %v2813
      %v2830 = vadd.f32 %v2705, %v2815
      %v2831 = vadd.f32 %v2706, %v2818
      %v2832 = vadd.f32 %v2707, %v2820
      %v2833 = vadd.f32 %v2708, %v2823
      %v2834 = vadd.f32 %v2709, %v2825
      %v2836 = vrot.slane %v2080, 5
      %v2837 = vrot.slane %v2836, 4
      %v2838 = vrot.slane %v2081, 5
      %v2839 = vsel %vm1098, %v2837, %v2838
      %s2840 = scalar_lea.vmem %s3, 896
      %v2841 = vld [vmem:[%s2840] sm:$0xf]
      %v2842 = vld [vmem:[%s2840 + $0x4] sm:$0xf]
      %v2843 = vld [vmem:[%s2840 + $0x8] sm:$0xf]
      %v2844 = vld [vmem:[%s2840 + $0xc] sm:$0xf]
      %v2845 = vld [vmem:[%s2840 + $0x10] sm:$0xf]
      %v2846 = vld [vmem:[%s2840 + $0x14] sm:$0xf]
      %v2847 = vld [vmem:[%s2840 + $0x18] sm:$0xf]
      %v2848 = vld [vmem:[%s2840 + $0x1c] sm:$0xf]
      %v2849 = vld [vmem:[%s2840 + $0x20] sm:$0xf]
      %v2850 = vld [vmem:[%s2840 + $0x24] sm:$0xf]
      %v2851 = vld [vmem:[%s2840 + $0x28] sm:$0xf]
      %v2852 = vld [vmem:[%s2840 + $0x2c] sm:$0xf]
      %v2853 = vld [vmem:[%s2840 + $0x30] sm:$0xf]
      %v2854 = vld [vmem:[%s2840 + $0x34] sm:$0xf]
      %v2855 = vld [vmem:[%s2840 + $0x38] sm:$0xf]
      %v2856 = vld [vmem:[%s2840 + $0x3c] sm:$0xf]
      %v2857 = vunpack.c.l.b16 %v2839
      %v2858 = vpack.c.b16 %v2499, %v2498
      %v2859 = vpack.c.b16 %v2501, %v2500
      %v2860 = vpack.c.b16 %v2503, %v2502
      %v2861 = vpack.c.b16 %v2857, %v2504
      %v2882 = vunpack.c.l.b16 %v2841
      %v2883 = vunpack.c.l.b16 %v2842
      %v2884 = vunpack.c.l.b16 %v2843
      %v2885 = vunpack.c.l.b16 %v2844
      %v2886 = vunpack.c.l.b16 %v2845
      %v2887 = vunpack.c.l.b16 %v2846
      %v2888 = vunpack.c.l.b16 %v2847
      %v2889 = vunpack.c.l.b16 %v2848
      %v2890 = vunpack.c.l.b16 %v2849
      %v2891 = vunpack.c.l.b16 %v2850
      %v2892 = vunpack.c.l.b16 %v2851
      %v2893 = vunpack.c.l.b16 %v2852
      %v2894 = vunpack.c.l.b16 %v2853
      %v2895 = vunpack.c.l.b16 %v2854
      %v2896 = vunpack.c.l.b16 %v2855
      %v2897 = vunpack.c.l.b16 %v2856
      %v2898 = vpack.c.b16 %v2883, %v2882
      %v2899 = vpack.c.b16 %v2885, %v2884
      %v2900 = vpack.c.b16 %v2887, %v2886
      %v2901 = vpack.c.b16 %v2889, %v2888
      %v2902 = vpack.c.b16 %v2891, %v2890
      %v2903 = vpack.c.b16 %v2893, %v2892
      %v2904 = vpack.c.b16 %v2895, %v2894
      %v2905 = vpack.c.b16 %v2897, %v2896
      %2914 = vmatpush.bf16.msra.mxu0 %v2905
      %2915 = vmatpush.bf16.msra.mxu0 %v2904
      %2916 = vmatpush.bf16.msra.mxu0 %v2903
      %2917 = vmatpush.bf16.msra.mxu0 %v2902
      %2918 = vmatpush.bf16.msra.mxu0 %v2901
      %2919 = vmatpush.bf16.msra.mxu0 %v2900
      %2920 = vmatpush.bf16.msra.mxu0 %v2899
      %2921 = vmatpush.bf16.msra.mxu0 %v2898
      %2922 = vmatmul.bf16.gmra.mxu0 %v2858
      %v2923 = vpop.f32.mrf.mxu0
      %v2924 = vadd.f32 0.0, %v2923
      %v2925 = vpop.f32.mrf.mxu0
      %v2926 = vadd.f32 0.0, %v2925
      %2927 = vmatmul.bf16.gmra.mxu0 %v2859
      %v2928 = vpop.f32.mrf.mxu0
      %v2929 = vadd.f32 0.0, %v2928
      %v2930 = vpop.f32.mrf.mxu0
      %v2931 = vadd.f32 0.0, %v2930
      %2932 = vmatmul.bf16.gmra.mxu0 %v2860
      %v2933 = vpop.f32.mrf.mxu0
      %v2934 = vadd.f32 0.0, %v2933
      %v2935 = vpop.f32.mrf.mxu0
      %v2936 = vadd.f32 0.0, %v2935
      %2937 = vmatmul.bf16.gmra.mxu0 %v2861
      %v2938 = vpop.f32.mrf.mxu0
      %v2939 = vadd.f32 0.0, %v2938
      %v2940 = vpop.f32.mrf.mxu0
      %v2941 = vadd.f32 0.0, %v2940
      %2942 = vdwg.mxu0
      %v2943 = vadd.f32 %v2827, %v2924
      %v2944 = vadd.f32 %v2828, %v2926
      %v2945 = vadd.f32 %v2829, %v2929
      %v2946 = vadd.f32 %v2830, %v2931
      %v2947 = vadd.f32 %v2831, %v2934
      %v2948 = vadd.f32 %v2832, %v2936
      %v2949 = vadd.f32 %v2833, %v2939
      %v2950 = vadd.f32 %v2834, %v2941
      %s2951 = scalar_lea.vmem %s3, 960
      %v2952 = vld [vmem:[%s2951] sm:$0xf]
      %v2953 = vld [vmem:[%s2951 + $0x4] sm:$0xf]
      %v2954 = vld [vmem:[%s2951 + $0x8] sm:$0xf]
      %v2955 = vld [vmem:[%s2951 + $0xc] sm:$0xf]
      %v2956 = vld [vmem:[%s2951 + $0x10] sm:$0xf]
      %v2957 = vld [vmem:[%s2951 + $0x14] sm:$0xf]
      %v2958 = vld [vmem:[%s2951 + $0x18] sm:$0xf]
      %v2959 = vld [vmem:[%s2951 + $0x1c] sm:$0xf]
      %v2960 = vld [vmem:[%s2951 + $0x20] sm:$0xf]
      %v2961 = vld [vmem:[%s2951 + $0x24] sm:$0xf]
      %v2962 = vld [vmem:[%s2951 + $0x28] sm:$0xf]
      %v2963 = vld [vmem:[%s2951 + $0x2c] sm:$0xf]
      %v2964 = vld [vmem:[%s2951 + $0x30] sm:$0xf]
      %v2965 = vld [vmem:[%s2951 + $0x34] sm:$0xf]
      %v2966 = vld [vmem:[%s2951 + $0x38] sm:$0xf]
      %v2967 = vld [vmem:[%s2951 + $0x3c] sm:$0xf]
      %v2969 = vunpack.c.l.b16 %v2082
      %v2970 = vpack.c.b16 %v2969, %v2616
      %v2988 = vunpack.c.l.b16 %v2952
      %v2989 = vunpack.c.l.b16 %v2953
      %v2990 = vunpack.c.l.b16 %v2954
      %v2991 = vunpack.c.l.b16 %v2955
      %v2992 = vunpack.c.l.b16 %v2956
      %v2993 = vunpack.c.l.b16 %v2957
      %v2994 = vunpack.c.l.b16 %v2958
      %v2995 = vunpack.c.l.b16 %v2959
      %v2996 = vunpack.c.l.b16 %v2960
      %v2997 = vunpack.c.l.b16 %v2961
      %v2998 = vunpack.c.l.b16 %v2962
      %v2999 = vunpack.c.l.b16 %v2963
      %v3000 = vunpack.c.l.b16 %v2964
      %v3001 = vunpack.c.l.b16 %v2965
      %v3002 = vunpack.c.l.b16 %v2966
      %v3003 = vunpack.c.l.b16 %v2967
      %v3004 = vpack.c.b16 %v2989, %v2988
      %v3005 = vpack.c.b16 %v2991, %v2990
      %v3006 = vpack.c.b16 %v2993, %v2992
      %v3007 = vpack.c.b16 %v2995, %v2994
      %v3008 = vpack.c.b16 %v2997, %v2996
      %v3009 = vpack.c.b16 %v2999, %v2998
      %v3010 = vpack.c.b16 %v3001, %v3000
      %v3011 = vpack.c.b16 %v3003, %v3002
      %3020 = vmatpush.bf16.msra.mxu0 %v3011
      %3021 = vmatpush.bf16.msra.mxu0 %v3010
      %3022 = vmatpush.bf16.msra.mxu0 %v3009
      %3023 = vmatpush.bf16.msra.mxu0 %v3008
      %3024 = vmatpush.bf16.msra.mxu0 %v3007
      %3025 = vmatpush.bf16.msra.mxu0 %v3006
      %3026 = vmatpush.bf16.msra.mxu0 %v3005
      %3027 = vmatpush.bf16.msra.mxu0 %v3004
      %3028 = vmatmul.bf16.gmra.mxu0 %v2118
      %v3029 = vpop.f32.mrf.mxu0
      %v3030 = vadd.f32 0.0, %v3029
      %v3031 = vpop.f32.mrf.mxu0
      %v3032 = vadd.f32 0.0, %v3031
      %3033 = vmatmul.bf16.gmra.mxu0 %v2119
      %v3034 = vpop.f32.mrf.mxu0
      %v3035 = vadd.f32 0.0, %v3034
      %v3036 = vpop.f32.mrf.mxu0
      %v3037 = vadd.f32 0.0, %v3036
      %3038 = vmatmul.bf16.gmra.mxu0 %v2120
      %v3039 = vpop.f32.mrf.mxu0
      %v3040 = vadd.f32 0.0, %v3039
      %v3041 = vpop.f32.mrf.mxu0
      %v3042 = vadd.f32 0.0, %v3041
      %3043 = vmatmul.bf16.gmra.mxu0 %v2970
      %v3044 = vpop.f32.mrf.mxu0
      %v3045 = vadd.f32 0.0, %v3044
      %v3046 = vpop.f32.mrf.mxu0
      %v3047 = vadd.f32 0.0, %v3046
      %3048 = vdwg.mxu0
      %v3049 = vadd.f32 %v2943, %v3030
      %v3050 = vadd.f32 %v2944, %v3032
      %v3051 = vadd.f32 %v2945, %v3035
      %v3052 = vadd.f32 %v2946, %v3037
      %v3053 = vadd.f32 %v2947, %v3040
      %v3054 = vadd.f32 %v2948, %v3042
      %v3055 = vadd.f32 %v2949, %v3045
      %v3056 = vadd.f32 %v2950, %v3047
      %v3058 = vshrl.u32 %v2082, 16
      %v3060 = vrot.slane %v3058, 4
      %v3061 = vshll.u32 %v2082, 16
      %v3063 = vrot.slane %v3061, 5
      %v3064 = vor.u32 %v3060, %v3063
      %v3065 = vrot.slane %v3064, 4
      %v3067 = vshll.u32 %v2083, 16
      %v3069 = vrot.slane %v3067, 5
      %v3070 = vsel %vm764, %v3065, %v3069
      %s3071 = scalar_lea.vmem %s3, 1024
      %v3072 = vld [vmem:[%s3071] sm:$0xf]
      %v3073 = vld [vmem:[%s3071 + $0x4] sm:$0xf]
      %v3074 = vld [vmem:[%s3071 + $0x8] sm:$0xf]
      %v3075 = vld [vmem:[%s3071 + $0xc] sm:$0xf]
      %v3076 = vld [vmem:[%s3071 + $0x10] sm:$0xf]
      %v3077 = vld [vmem:[%s3071 + $0x14] sm:$0xf]
      %v3078 = vld [vmem:[%s3071 + $0x18] sm:$0xf]
      %v3079 = vld [vmem:[%s3071 + $0x1c] sm:$0xf]
      %v3080 = vld [vmem:[%s3071 + $0x20] sm:$0xf]
      %v3081 = vld [vmem:[%s3071 + $0x24] sm:$0xf]
      %v3082 = vld [vmem:[%s3071 + $0x28] sm:$0xf]
      %v3083 = vld [vmem:[%s3071 + $0x2c] sm:$0xf]
      %v3084 = vld [vmem:[%s3071 + $0x30] sm:$0xf]
      %v3085 = vld [vmem:[%s3071 + $0x34] sm:$0xf]
      %v3086 = vld [vmem:[%s3071 + $0x38] sm:$0xf]
      %v3087 = vld [vmem:[%s3071 + $0x3c] sm:$0xf]
      %v3088 = vunpack.c.l.b16 %v3070
      %v3089 = vpack.c.b16 %v3088, %v2741
      %v3107 = vunpack.c.l.b16 %v3072
      %v3108 = vunpack.c.l.b16 %v3073
      %v3109 = vunpack.c.l.b16 %v3074
      %v3110 = vunpack.c.l.b16 %v3075
      %v3111 = vunpack.c.l.b16 %v3076
      %v3112 = vunpack.c.l.b16 %v3077
      %v3113 = vunpack.c.l.b16 %v3078
      %v3114 = vunpack.c.l.b16 %v3079
      %v3115 = vunpack.c.l.b16 %v3080
      %v3116 = vunpack.c.l.b16 %v3081
      %v3117 = vunpack.c.l.b16 %v3082
      %v3118 = vunpack.c.l.b16 %v3083
      %v3119 = vunpack.c.l.b16 %v3084
      %v3120 = vunpack.c.l.b16 %v3085
      %v3121 = vunpack.c.l.b16 %v3086
      %v3122 = vunpack.c.l.b16 %v3087
      %v3123 = vpack.c.b16 %v3108, %v3107
      %v3124 = vpack.c.b16 %v3110, %v3109
      %v3125 = vpack.c.b16 %v3112, %v3111
      %v3126 = vpack.c.b16 %v3114, %v3113
      %v3127 = vpack.c.b16 %v3116, %v3115
      %v3128 = vpack.c.b16 %v3118, %v3117
      %v3129 = vpack.c.b16 %v3120, %v3119
      %v3130 = vpack.c.b16 %v3122, %v3121
      %3139 = vmatpush.bf16.msra.mxu0 %v3130
      %3140 = vmatpush.bf16.msra.mxu0 %v3129
      %3141 = vmatpush.bf16.msra.mxu0 %v3128
      %3142 = vmatpush.bf16.msra.mxu0 %v3127
      %3143 = vmatpush.bf16.msra.mxu0 %v3126
      %3144 = vmatpush.bf16.msra.mxu0 %v3125
      %3145 = vmatpush.bf16.msra.mxu0 %v3124
      %3146 = vmatpush.bf16.msra.mxu0 %v3123
      %3147 = vmatmul.bf16.gmra.mxu0 %v2348
      %v3148 = vpop.f32.mrf.mxu0
      %v3149 = vadd.f32 0.0, %v3148
      %v3150 = vpop.f32.mrf.mxu0
      %v3151 = vadd.f32 0.0, %v3150
      %3152 = vmatmul.bf16.gmra.mxu0 %v2349
      %v3153 = vpop.f32.mrf.mxu0
      %v3154 = vadd.f32 0.0, %v3153
      %v3155 = vpop.f32.mrf.mxu0
      %v3156 = vadd.f32 0.0, %v3155
      %3157 = vmatmul.bf16.gmra.mxu0 %v2350
      %v3158 = vpop.f32.mrf.mxu0
      %v3159 = vadd.f32 0.0, %v3158
      %v3160 = vpop.f32.mrf.mxu0
      %v3161 = vadd.f32 0.0, %v3160
      %3162 = vmatmul.bf16.gmra.mxu0 %v3089
      %v3163 = vpop.f32.mrf.mxu0
      %v3164 = vadd.f32 0.0, %v3163
      %v3165 = vpop.f32.mrf.mxu0
      %v3166 = vadd.f32 0.0, %v3165
      %3167 = vdwg.mxu0
      %v3168 = vadd.f32 %v3049, %v3149
      %v3169 = vadd.f32 %v3050, %v3151
      %v3170 = vadd.f32 %v3051, %v3154
      %v3171 = vadd.f32 %v3052, %v3156
      %v3172 = vadd.f32 %v3053, %v3159
      %v3173 = vadd.f32 %v3054, %v3161
      %v3174 = vadd.f32 %v3055, %v3164
      %v3175 = vadd.f32 %v3056, %v3166
      %v3177 = vrot.slane %v2082, 5
      %v3178 = vrot.slane %v3177, 4
      %v3179 = vrot.slane %v2083, 5
      %v3180 = vsel %vm1098, %v3178, %v3179
      %s3181 = scalar_lea.vmem %s3, 1088
      %v3182 = vld [vmem:[%s3181] sm:$0xf]
      %v3183 = vld [vmem:[%s3181 + $0x4] sm:$0xf]
      %v3184 = vld [vmem:[%s3181 + $0x8] sm:$0xf]
      %v3185 = vld [vmem:[%s3181 + $0xc] sm:$0xf]
      %v3186 = vld [vmem:[%s3181 + $0x10] sm:$0xf]
      %v3187 = vld [vmem:[%s3181 + $0x14] sm:$0xf]
      %v3188 = vld [vmem:[%s3181 + $0x18] sm:$0xf]
      %v3189 = vld [vmem:[%s3181 + $0x1c] sm:$0xf]
      %v3190 = vld [vmem:[%s3181 + $0x20] sm:$0xf]
      %v3191 = vld [vmem:[%s3181 + $0x24] sm:$0xf]
      %v3192 = vld [vmem:[%s3181 + $0x28] sm:$0xf]
      %v3193 = vld [vmem:[%s3181 + $0x2c] sm:$0xf]
      %v3194 = vld [vmem:[%s3181 + $0x30] sm:$0xf]
      %v3195 = vld [vmem:[%s3181 + $0x34] sm:$0xf]
      %v3196 = vld [vmem:[%s3181 + $0x38] sm:$0xf]
      %v3197 = vld [vmem:[%s3181 + $0x3c] sm:$0xf]
      %v3198 = vunpack.c.l.b16 %v3180
      %v3199 = vpack.c.b16 %v3198, %v2857
      %v3217 = vunpack.c.l.b16 %v3182
      %v3218 = vunpack.c.l.b16 %v3183
      %v3219 = vunpack.c.l.b16 %v3184
      %v3220 = vunpack.c.l.b16 %v3185
      %v3221 = vunpack.c.l.b16 %v3186
      %v3222 = vunpack.c.l.b16 %v3187
      %v3223 = vunpack.c.l.b16 %v3188
      %v3224 = vunpack.c.l.b16 %v3189
      %v3225 = vunpack.c.l.b16 %v3190
      %v3226 = vunpack.c.l.b16 %v3191
      %v3227 = vunpack.c.l.b16 %v3192
      %v3228 = vunpack.c.l.b16 %v3193
      %v3229 = vunpack.c.l.b16 %v3194
      %v3230 = vunpack.c.l.b16 %v3195
      %v3231 = vunpack.c.l.b16 %v3196
      %v3232 = vunpack.c.l.b16 %v3197
      %v3233 = vpack.c.b16 %v3218, %v3217
      %v3234 = vpack.c.b16 %v3220, %v3219
      %v3235 = vpack.c.b16 %v3222, %v3221
      %v3236 = vpack.c.b16 %v3224, %v3223
      %v3237 = vpack.c.b16 %v3226, %v3225
      %v3238 = vpack.c.b16 %v3228, %v3227
      %v3239 = vpack.c.b16 %v3230, %v3229
      %v3240 = vpack.c.b16 %v3232, %v3231
      %3249 = vmatpush.bf16.msra.mxu0 %v3240
      %3250 = vmatpush.bf16.msra.mxu0 %v3239
      %3251 = vmatpush.bf16.msra.mxu0 %v3238
      %3252 = vmatpush.bf16.msra.mxu0 %v3237
      %3253 = vmatpush.bf16.msra.mxu0 %v3236
      %3254 = vmatpush.bf16.msra.mxu0 %v3235
      %3255 = vmatpush.bf16.msra.mxu0 %v3234
      %3256 = vmatpush.bf16.msra.mxu0 %v3233
      %3257 = vmatmul.bf16.gmra.mxu0 %v2506
      %v3258 = vpop.f32.mrf.mxu0
      %v3259 = vadd.f32 0.0, %v3258
      %v3260 = vpop.f32.mrf.mxu0
      %v3261 = vadd.f32 0.0, %v3260
      %3262 = vmatmul.bf16.gmra.mxu0 %v2507
      %v3263 = vpop.f32.mrf.mxu0
      %v3264 = vadd.f32 0.0, %v3263
      %v3265 = vpop.f32.mrf.mxu0
      %v3266 = vadd.f32 0.0, %v3265
      %3267 = vmatmul.bf16.gmra.mxu0 %v2508
      %v3268 = vpop.f32.mrf.mxu0
      %v3269 = vadd.f32 0.0, %v3268
      %v3270 = vpop.f32.mrf.mxu0
      %v3271 = vadd.f32 0.0, %v3270
      %3272 = vmatmul.bf16.gmra.mxu0 %v3199
      %v3273 = vpop.f32.mrf.mxu0
      %v3274 = vadd.f32 0.0, %v3273
      %v3275 = vpop.f32.mrf.mxu0
      %v3276 = vadd.f32 0.0, %v3275
      %3277 = vdwg.mxu0
      %v3278 = vadd.f32 %v3168, %v3259
      %v3279 = vadd.f32 %v3169, %v3261
      %v3280 = vadd.f32 %v3170, %v3264
      %v3281 = vadd.f32 %v3171, %v3266
      %v3282 = vadd.f32 %v3172, %v3269
      %v3283 = vadd.f32 %v3173, %v3271
      %v3284 = vadd.f32 %v3174, %v3274
      %v3285 = vadd.f32 %v3175, %v3276
      %v3286 = vld [vmem:[%s453] sm:$0xff]
      %v3287 = vld [vmem:[%s453 + $0x8] sm:$0x3]
      %v3288 = vld [vmem:[%s453 + $0x10] sm:$0xff]
      %v3289 = vld [vmem:[%s453 + $0x18] sm:$0x3]
      %v3290 = vld [vmem:[%s453 + $0x20] sm:$0xff]
      %v3291 = vld [vmem:[%s453 + $0x28] sm:$0x3]
      %v3292 = vld [vmem:[%s453 + $0x30] sm:$0xff]
      %v3293 = vld [vmem:[%s453 + $0x38] sm:$0x3]
      %v3294 = vld [vmem:[%s453 + $0x40] sm:$0xff]
      %v3295 = vld [vmem:[%s453 + $0x48] sm:$0x3]
      %v3296 = vld [vmem:[%s453 + $0x50] sm:$0xff]
      %v3297 = vld [vmem:[%s453 + $0x58] sm:$0x3]
      %v3298 = vld [vmem:[%s453 + $0x60] sm:$0xff]
      %v3299 = vld [vmem:[%s453 + $0x68] sm:$0x3]
      %v3300 = vld [vmem:[%s453 + $0x70] sm:$0xff]
      %v3301 = vld [vmem:[%s453 + $0x78] sm:$0x3]
      %v3302 = vld [vmem:[%s453 + $0x80] sm:$0xff]
      %v3303 = vld [vmem:[%s453 + $0x88] sm:$0x3]
      %v3304 = vld [vmem:[%s453 + $0x90] sm:$0xff]
      %v3305 = vld [vmem:[%s453 + $0x98] sm:$0x3]
      %v3306 = vmul.f32 %v3286, %v494
      %v3307 = vmul.f32 %v3287, %v494
      %v3308 = vmul.f32 %v3288, %v494
      %v3309 = vmul.f32 %v3289, %v494
      %v3310 = vmul.f32 %v3290, %v494
      %v3311 = vmul.f32 %v3291, %v494
      %v3312 = vmul.f32 %v3292, %v494
      %v3313 = vmul.f32 %v3293, %v494
      %v3314 = vmul.f32 %v3294, %v494
      %v3315 = vmul.f32 %v3295, %v494
      %v3316 = vmul.f32 %v3296, %v494
      %v3317 = vmul.f32 %v3297, %v494
      %v3318 = vmul.f32 %v3298, %v494
      %v3319 = vmul.f32 %v3299, %v494
      %v3320 = vmul.f32 %v3300, %v494
      %v3321 = vmul.f32 %v3301, %v494
      %v3322 = vmul.f32 %v3302, %v494
      %v3323 = vmul.f32 %v3303, %v494
      %v3324 = vmul.f32 %v3304, %v494
      %v3325 = vmul.f32 %v3305, %v494
      %v3326 = vadd.f32 %v3306, %v518
      %v3327 = vadd.f32 %v3307, %v518
      %v3328 = vadd.f32 %v3308, %v518
      %v3329 = vadd.f32 %v3309, %v518
      %v3330 = vadd.f32 %v3310, %v518
      %v3331 = vadd.f32 %v3311, %v518
      %v3332 = vadd.f32 %v3312, %v518
      %v3333 = vadd.f32 %v3313, %v518
      %v3334 = vadd.f32 %v3314, %v518
      %v3335 = vadd.f32 %v3315, %v518
      %v3336 = vadd.f32 %v3316, %v518
      %v3337 = vadd.f32 %v3317, %v518
      %v3338 = vadd.f32 %v3318, %v518
      %v3339 = vadd.f32 %v3319, %v518
      %v3340 = vadd.f32 %v3320, %v518
      %v3341 = vadd.f32 %v3321, %v518
      %v3342 = vadd.f32 %v3322, %v518
      %v3343 = vadd.f32 %v3323, %v518
      %v3344 = vadd.f32 %v3324, %v518
      %v3345 = vadd.f32 %v3325, %v518
      %v3346 = vmax.f32 %v3326, 0.0
      %v3347 = vmax.f32 %v3327, 0.0
      %v3348 = vmax.f32 %v3328, 0.0
      %v3349 = vmax.f32 %v3329, 0.0
      %v3350 = vmax.f32 %v3330, 0.0
      %v3351 = vmax.f32 %v3331, 0.0
      %v3352 = vmax.f32 %v3332, 0.0
      %v3353 = vmax.f32 %v3333, 0.0
      %v3354 = vmax.f32 %v3334, 0.0
      %v3355 = vmax.f32 %v3335, 0.0
      %v3356 = vmax.f32 %v3336, 0.0
      %v3357 = vmax.f32 %v3337, 0.0
      %v3358 = vmax.f32 %v3338, 0.0
      %v3359 = vmax.f32 %v3339, 0.0
      %v3360 = vmax.f32 %v3340, 0.0
      %v3361 = vmax.f32 %v3341, 0.0
      %v3362 = vmax.f32 %v3342, 0.0
      %v3363 = vmax.f32 %v3343, 0.0
      %v3364 = vmax.f32 %v3344, 0.0
      %v3365 = vmax.f32 %v3345, 0.0
      %v3366 = vmul.f32 %v3346, %v583
      %v3367 = vmul.f32 %v3347, %v588
      %v3368 = vmul.f32 %v3348, %v593
      %v3369 = vmul.f32 %v3349, %v598
      %v3370 = vmul.f32 %v3350, %v603
      %v3371 = vmul.f32 %v3351, %v608
      %v3372 = vmul.f32 %v3352, %v613
      %v3373 = vmul.f32 %v3353, %v618
      %v3374 = vmul.f32 %v3354, %v623
      %v3375 = vmul.f32 %v3355, %v628
      %v3376 = vmul.f32 %v3356, %v633
      %v3377 = vmul.f32 %v3357, %v638
      %v3378 = vmul.f32 %v3358, %v643
      %v3379 = vmul.f32 %v3359, %v648
      %v3380 = vmul.f32 %v3360, %v653
      %v3381 = vmul.f32 %v3361, %v658
      %v3382 = vmul.f32 %v3362, %v663
      %v3383 = vmul.f32 %v3363, %v668
      %v3384 = vmul.f32 %v3364, %v673
      %v3385 = vmul.f32 %v3365, %v678
      %s3386 = sadd.s32 %s26, 2
      %p3387 = scmp.ge.s32.totalorder %s3386, 1
      %p3388 = scmp.le.s32.totalorder %s3386, 8
      %p3389 = pnand %p3387, %p3388
      %p3390 = pneg %p3389
      %s3391 = scalar_select %p3390, 1.0, 0.0
      %v3392 = vstv %s3391
      %v3393 = vmul.f32 %v3366, %v3392
      %v3394 = vmul.f32 %v3367, %v3392
      %v3395 = vmul.f32 %v3368, %v3392
      %v3396 = vmul.f32 %v3369, %v3392
      %v3397 = vmul.f32 %v3370, %v3392
      %v3398 = vmul.f32 %v3371, %v3392
      %v3399 = vmul.f32 %v3372, %v3392
      %v3400 = vmul.f32 %v3373, %v3392
      %v3401 = vmul.f32 %v3374, %v3392
      %v3402 = vmul.f32 %v3375, %v3392
      %v3403 = vmul.f32 %v3376, %v3392
      %v3404 = vmul.f32 %v3377, %v3392
      %v3405 = vmul.f32 %v3378, %v3392
      %v3406 = vmul.f32 %v3379, %v3392
      %v3407 = vmul.f32 %v3380, %v3392
      %v3408 = vmul.f32 %v3381, %v3392
      %v3409 = vmul.f32 %v3382, %v3392
      %v3410 = vmul.f32 %v3383, %v3392
      %v3411 = vmul.f32 %v3384, %v3392
      %v3412 = vmul.f32 %v3385, %v3392
      %v3413 = vpack.c.bf16 %v3393, %v3393
      %v3414 = vpack.c.bf16 %v3394, %v3394
      %v3415 = vpack.c.bf16 %v3395, %v3395
      %v3416 = vpack.c.bf16 %v3396, %v3396
      %v3417 = vpack.c.bf16 %v3397, %v3397
      %v3418 = vpack.c.bf16 %v3398, %v3398
      %v3419 = vpack.c.bf16 %v3399, %v3399
      %v3420 = vpack.c.bf16 %v3400, %v3400
      %v3421 = vpack.c.bf16 %v3401, %v3401
      %v3422 = vpack.c.bf16 %v3402, %v3402
      %v3423 = vpack.c.bf16 %v3403, %v3403
      %v3424 = vpack.c.bf16 %v3404, %v3404
      %v3425 = vpack.c.bf16 %v3405, %v3405
      %v3426 = vpack.c.bf16 %v3406, %v3406
      %v3427 = vpack.c.bf16 %v3407, %v3407
      %v3428 = vpack.c.bf16 %v3408, %v3408
      %v3429 = vpack.c.bf16 %v3409, %v3409
      %v3430 = vpack.c.bf16 %v3410, %v3410
      %v3431 = vpack.c.bf16 %v3411, %v3411
      %v3432 = vpack.c.bf16 %v3412, %v3412
      %s3433 = scalar_lea.vmem %s3, 1152
      %v3434 = vld [vmem:[%s3433] sm:$0xf]
      %v3435 = vld [vmem:[%s3433 + $0x4] sm:$0xf]
      %v3436 = vld [vmem:[%s3433 + $0x8] sm:$0xf]
      %v3437 = vld [vmem:[%s3433 + $0xc] sm:$0xf]
      %v3438 = vld [vmem:[%s3433 + $0x10] sm:$0xf]
      %v3439 = vld [vmem:[%s3433 + $0x14] sm:$0xf]
      %v3440 = vld [vmem:[%s3433 + $0x18] sm:$0xf]
      %v3441 = vld [vmem:[%s3433 + $0x1c] sm:$0xf]
      %v3442 = vld [vmem:[%s3433 + $0x20] sm:$0xf]
      %v3443 = vld [vmem:[%s3433 + $0x24] sm:$0xf]
      %v3444 = vld [vmem:[%s3433 + $0x28] sm:$0xf]
      %v3445 = vld [vmem:[%s3433 + $0x2c] sm:$0xf]
      %v3446 = vld [vmem:[%s3433 + $0x30] sm:$0xf]
      %v3447 = vld [vmem:[%s3433 + $0x34] sm:$0xf]
      %v3448 = vld [vmem:[%s3433 + $0x38] sm:$0xf]
      %v3449 = vld [vmem:[%s3433 + $0x3c] sm:$0xf]
      %v3458 = vunpack.c.l.b16 %v3413
      %v3459 = vunpack.c.l.b16 %v3415
      %v3460 = vunpack.c.l.b16 %v3417
      %v3461 = vunpack.c.l.b16 %v3419
      %v3462 = vunpack.c.l.b16 %v3421
      %v3463 = vunpack.c.l.b16 %v3423
      %v3464 = vunpack.c.l.b16 %v3425
      %v3465 = vunpack.c.l.b16 %v3427
      %v3466 = vpack.c.b16 %v3459, %v3458
      %v3467 = vpack.c.b16 %v3461, %v3460
      %v3468 = vpack.c.b16 %v3463, %v3462
      %v3469 = vpack.c.b16 %v3465, %v3464
      %v3490 = vunpack.c.l.b16 %v3434
      %v3491 = vunpack.c.l.b16 %v3435
      %v3492 = vunpack.c.l.b16 %v3436
      %v3493 = vunpack.c.l.b16 %v3437
      %v3494 = vunpack.c.l.b16 %v3438
      %v3495 = vunpack.c.l.b16 %v3439
      %v3496 = vunpack.c.l.b16 %v3440
      %v3497 = vunpack.c.l.b16 %v3441
      %v3498 = vunpack.c.l.b16 %v3442
      %v3499 = vunpack.c.l.b16 %v3443
      %v3500 = vunpack.c.l.b16 %v3444
      %v3501 = vunpack.c.l.b16 %v3445
      %v3502 = vunpack.c.l.b16 %v3446
      %v3503 = vunpack.c.l.b16 %v3447
      %v3504 = vunpack.c.l.b16 %v3448
      %v3505 = vunpack.c.l.b16 %v3449
      %v3506 = vpack.c.b16 %v3491, %v3490
      %v3507 = vpack.c.b16 %v3493, %v3492
      %v3508 = vpack.c.b16 %v3495, %v3494
      %v3509 = vpack.c.b16 %v3497, %v3496
      %v3510 = vpack.c.b16 %v3499, %v3498
      %v3511 = vpack.c.b16 %v3501, %v3500
      %v3512 = vpack.c.b16 %v3503, %v3502
      %v3513 = vpack.c.b16 %v3505, %v3504
      %3522 = vmatpush.bf16.msra.mxu0 %v3513
      %3523 = vmatpush.bf16.msra.mxu0 %v3512
      %3524 = vmatpush.bf16.msra.mxu0 %v3511
      %3525 = vmatpush.bf16.msra.mxu0 %v3510
      %3526 = vmatpush.bf16.msra.mxu0 %v3509
      %3527 = vmatpush.bf16.msra.mxu0 %v3508
      %3528 = vmatpush.bf16.msra.mxu0 %v3507
      %3529 = vmatpush.bf16.msra.mxu0 %v3506
      %3530 = vmatmul.bf16.gmra.mxu0 %v3466
      %v3531 = vpop.f32.mrf.mxu0
      %v3532 = vadd.f32 0.0, %v3531
      %v3533 = vpop.f32.mrf.mxu0
      %v3534 = vadd.f32 0.0, %v3533
      %3535 = vmatmul.bf16.gmra.mxu0 %v3467
      %v3536 = vpop.f32.mrf.mxu0
      %v3537 = vadd.f32 0.0, %v3536
      %v3538 = vpop.f32.mrf.mxu0
      %v3539 = vadd.f32 0.0, %v3538
      %3540 = vmatmul.bf16.gmra.mxu0 %v3468
      %v3541 = vpop.f32.mrf.mxu0
      %v3542 = vadd.f32 0.0, %v3541
      %v3543 = vpop.f32.mrf.mxu0
      %v3544 = vadd.f32 0.0, %v3543
      %3545 = vmatmul.bf16.gmra.mxu0 %v3469
      %v3546 = vpop.f32.mrf.mxu0
      %v3547 = vadd.f32 0.0, %v3546
      %v3548 = vpop.f32.mrf.mxu0
      %v3549 = vadd.f32 0.0, %v3548
      %3550 = vdwg.mxu0
      %v3551 = vadd.f32 %v3278, %v3532
      %v3552 = vadd.f32 %v3279, %v3534
      %v3553 = vadd.f32 %v3280, %v3537
      %v3554 = vadd.f32 %v3281, %v3539
      %v3555 = vadd.f32 %v3282, %v3542
      %v3556 = vadd.f32 %v3283, %v3544
      %v3557 = vadd.f32 %v3284, %v3547
      %v3558 = vadd.f32 %v3285, %v3549
      %v3560 = vshrl.u32 %v3413, 16
      %v3562 = vrot.slane %v3560, 4
      %v3563 = vshll.u32 %v3413, 16
      %v3565 = vrot.slane %v3563, 5
      %v3566 = vor.u32 %v3562, %v3565
      %v3567 = vrot.slane %v3566, 4
      %v3569 = vshll.u32 %v3414, 16
      %v3571 = vrot.slane %v3569, 5
      %v3572 = vsel %vm764, %v3567, %v3571
      %v3574 = vshrl.u32 %v3415, 16
      %v3576 = vrot.slane %v3574, 4
      %v3577 = vshll.u32 %v3415, 16
      %v3579 = vrot.slane %v3577, 5
      %v3580 = vor.u32 %v3576, %v3579
      %v3581 = vrot.slane %v3580, 4
      %v3583 = vshll.u32 %v3416, 16
      %v3585 = vrot.slane %v3583, 5
      %v3586 = vsel %vm764, %v3581, %v3585
      %v3588 = vshrl.u32 %v3417, 16
      %v3590 = vrot.slane %v3588, 4
      %v3591 = vshll.u32 %v3417, 16
      %v3593 = vrot.slane %v3591, 5
      %v3594 = vor.u32 %v3590, %v3593
      %v3595 = vrot.slane %v3594, 4
      %v3597 = vshll.u32 %v3418, 16
      %v3599 = vrot.slane %v3597, 5
      %v3600 = vsel %vm764, %v3595, %v3599
      %v3602 = vshrl.u32 %v3419, 16
      %v3604 = vrot.slane %v3602, 4
      %v3605 = vshll.u32 %v3419, 16
      %v3607 = vrot.slane %v3605, 5
      %v3608 = vor.u32 %v3604, %v3607
      %v3609 = vrot.slane %v3608, 4
      %v3611 = vshll.u32 %v3420, 16
      %v3613 = vrot.slane %v3611, 5
      %v3614 = vsel %vm764, %v3609, %v3613
      %v3616 = vshrl.u32 %v3421, 16
      %v3618 = vrot.slane %v3616, 4
      %v3619 = vshll.u32 %v3421, 16
      %v3621 = vrot.slane %v3619, 5
      %v3622 = vor.u32 %v3618, %v3621
      %v3623 = vrot.slane %v3622, 4
      %v3625 = vshll.u32 %v3422, 16
      %v3627 = vrot.slane %v3625, 5
      %v3628 = vsel %vm764, %v3623, %v3627
      %v3630 = vshrl.u32 %v3423, 16
      %v3632 = vrot.slane %v3630, 4
      %v3633 = vshll.u32 %v3423, 16
      %v3635 = vrot.slane %v3633, 5
      %v3636 = vor.u32 %v3632, %v3635
      %v3637 = vrot.slane %v3636, 4
      %v3639 = vshll.u32 %v3424, 16
      %v3641 = vrot.slane %v3639, 5
      %v3642 = vsel %vm764, %v3637, %v3641
      %v3644 = vshrl.u32 %v3425, 16
      %v3646 = vrot.slane %v3644, 4
      %v3647 = vshll.u32 %v3425, 16
      %v3649 = vrot.slane %v3647, 5
      %v3650 = vor.u32 %v3646, %v3649
      %v3651 = vrot.slane %v3650, 4
      %v3653 = vshll.u32 %v3426, 16
      %v3655 = vrot.slane %v3653, 5
      %v3656 = vsel %vm764, %v3651, %v3655
      %v3658 = vshrl.u32 %v3427, 16
      %v3660 = vrot.slane %v3658, 4
      %v3661 = vshll.u32 %v3427, 16
      %v3663 = vrot.slane %v3661, 5
      %v3664 = vor.u32 %v3660, %v3663
      %v3665 = vrot.slane %v3664, 4
      %v3667 = vshll.u32 %v3428, 16
      %v3669 = vrot.slane %v3667, 5
      %v3670 = vsel %vm764, %v3665, %v3669
      %s3671 = scalar_lea.vmem %s3, 1216
      %v3672 = vld [vmem:[%s3671] sm:$0xf]
      %v3673 = vld [vmem:[%s3671 + $0x4] sm:$0xf]
      %v3674 = vld [vmem:[%s3671 + $0x8] sm:$0xf]
      %v3675 = vld [vmem:[%s3671 + $0xc] sm:$0xf]
      %v3676 = vld [vmem:[%s3671 + $0x10] sm:$0xf]
      %v3677 = vld [vmem:[%s3671 + $0x14] sm:$0xf]
      %v3678 = vld [vmem:[%s3671 + $0x18] sm:$0xf]
      %v3679 = vld [vmem:[%s3671 + $0x1c] sm:$0xf]
      %v3680 = vld [vmem:[%s3671 + $0x20] sm:$0xf]
      %v3681 = vld [vmem:[%s3671 + $0x24] sm:$0xf]
      %v3682 = vld [vmem:[%s3671 + $0x28] sm:$0xf]
      %v3683 = vld [vmem:[%s3671 + $0x2c] sm:$0xf]
      %v3684 = vld [vmem:[%s3671 + $0x30] sm:$0xf]
      %v3685 = vld [vmem:[%s3671 + $0x34] sm:$0xf]
      %v3686 = vld [vmem:[%s3671 + $0x38] sm:$0xf]
      %v3687 = vld [vmem:[%s3671 + $0x3c] sm:$0xf]
      %v3688 = vunpack.c.l.b16 %v3572
      %v3689 = vunpack.c.l.b16 %v3586
      %v3690 = vunpack.c.l.b16 %v3600
      %v3691 = vunpack.c.l.b16 %v3614
      %v3692 = vunpack.c.l.b16 %v3628
      %v3693 = vunpack.c.l.b16 %v3642
      %v3694 = vunpack.c.l.b16 %v3656
      %v3695 = vunpack.c.l.b16 %v3670
      %v3696 = vpack.c.b16 %v3689, %v3688
      %v3697 = vpack.c.b16 %v3691, %v3690
      %v3698 = vpack.c.b16 %v3693, %v3692
      %v3699 = vpack.c.b16 %v3695, %v3694
      %v3720 = vunpack.c.l.b16 %v3672
      %v3721 = vunpack.c.l.b16 %v3673
      %v3722 = vunpack.c.l.b16 %v3674
      %v3723 = vunpack.c.l.b16 %v3675
      %v3724 = vunpack.c.l.b16 %v3676
      %v3725 = vunpack.c.l.b16 %v3677
      %v3726 = vunpack.c.l.b16 %v3678
      %v3727 = vunpack.c.l.b16 %v3679
      %v3728 = vunpack.c.l.b16 %v3680
      %v3729 = vunpack.c.l.b16 %v3681
      %v3730 = vunpack.c.l.b16 %v3682
      %v3731 = vunpack.c.l.b16 %v3683
      %v3732 = vunpack.c.l.b16 %v3684
      %v3733 = vunpack.c.l.b16 %v3685
      %v3734 = vunpack.c.l.b16 %v3686
      %v3735 = vunpack.c.l.b16 %v3687
      %v3736 = vpack.c.b16 %v3721, %v3720
      %v3737 = vpack.c.b16 %v3723, %v3722
      %v3738 = vpack.c.b16 %v3725, %v3724
      %v3739 = vpack.c.b16 %v3727, %v3726
      %v3740 = vpack.c.b16 %v3729, %v3728
      %v3741 = vpack.c.b16 %v3731, %v3730
      %v3742 = vpack.c.b16 %v3733, %v3732
      %v3743 = vpack.c.b16 %v3735, %v3734
      %3752 = vmatpush.bf16.msra.mxu0 %v3743
      %3753 = vmatpush.bf16.msra.mxu0 %v3742
      %3754 = vmatpush.bf16.msra.mxu0 %v3741
      %3755 = vmatpush.bf16.msra.mxu0 %v3740
      %3756 = vmatpush.bf16.msra.mxu0 %v3739
      %3757 = vmatpush.bf16.msra.mxu0 %v3738
      %3758 = vmatpush.bf16.msra.mxu0 %v3737
      %3759 = vmatpush.bf16.msra.mxu0 %v3736
      %3760 = vmatmul.bf16.gmra.mxu0 %v3696
      %v3761 = vpop.f32.mrf.mxu0
      %v3762 = vadd.f32 0.0, %v3761
      %v3763 = vpop.f32.mrf.mxu0
      %v3764 = vadd.f32 0.0, %v3763
      %3765 = vmatmul.bf16.gmra.mxu0 %v3697
      %v3766 = vpop.f32.mrf.mxu0
      %v3767 = vadd.f32 0.0, %v3766
      %v3768 = vpop.f32.mrf.mxu0
      %v3769 = vadd.f32 0.0, %v3768
      %3770 = vmatmul.bf16.gmra.mxu0 %v3698
      %v3771 = vpop.f32.mrf.mxu0
      %v3772 = vadd.f32 0.0, %v3771
      %v3773 = vpop.f32.mrf.mxu0
      %v3774 = vadd.f32 0.0, %v3773
      %3775 = vmatmul.bf16.gmra.mxu0 %v3699
      %v3776 = vpop.f32.mrf.mxu0
      %v3777 = vadd.f32 0.0, %v3776
      %v3778 = vpop.f32.mrf.mxu0
      %v3779 = vadd.f32 0.0, %v3778
      %3780 = vdwg.mxu0
      %v3781 = vadd.f32 %v3551, %v3762
      %v3782 = vadd.f32 %v3552, %v3764
      %v3783 = vadd.f32 %v3553, %v3767
      %v3784 = vadd.f32 %v3554, %v3769
      %v3785 = vadd.f32 %v3555, %v3772
      %v3786 = vadd.f32 %v3556, %v3774
      %v3787 = vadd.f32 %v3557, %v3777
      %v3788 = vadd.f32 %v3558, %v3779
      %v3797 = vrot.slane %v3413, 5
      %v3798 = vrot.slane %v3797, 4
      %v3799 = vrot.slane %v3414, 5
      %v3800 = vsel %vm1098, %v3798, %v3799
      %v3801 = vrot.slane %v3415, 5
      %v3802 = vrot.slane %v3801, 4
      %v3803 = vrot.slane %v3416, 5
      %v3804 = vsel %vm1098, %v3802, %v3803
      %v3805 = vrot.slane %v3417, 5
      %v3806 = vrot.slane %v3805, 4
      %v3807 = vrot.slane %v3418, 5
      %v3808 = vsel %vm1098, %v3806, %v3807
      %v3809 = vrot.slane %v3419, 5
      %v3810 = vrot.slane %v3809, 4
      %v3811 = vrot.slane %v3420, 5
      %v3812 = vsel %vm1098, %v3810, %v3811
      %v3813 = vrot.slane %v3421, 5
      %v3814 = vrot.slane %v3813, 4
      %v3815 = vrot.slane %v3422, 5
      %v3816 = vsel %vm1098, %v3814, %v3815
      %v3817 = vrot.slane %v3423, 5
      %v3818 = vrot.slane %v3817, 4
      %v3819 = vrot.slane %v3424, 5
      %v3820 = vsel %vm1098, %v3818, %v3819
      %v3821 = vrot.slane %v3425, 5
      %v3822 = vrot.slane %v3821, 4
      %v3823 = vrot.slane %v3426, 5
      %v3824 = vsel %vm1098, %v3822, %v3823
      %v3825 = vrot.slane %v3427, 5
      %v3826 = vrot.slane %v3825, 4
      %v3827 = vrot.slane %v3428, 5
      %v3828 = vsel %vm1098, %v3826, %v3827
      %s3829 = scalar_lea.vmem %s3, 1280
      %v3830 = vld [vmem:[%s3829] sm:$0xf]
      %v3831 = vld [vmem:[%s3829 + $0x4] sm:$0xf]
      %v3832 = vld [vmem:[%s3829 + $0x8] sm:$0xf]
      %v3833 = vld [vmem:[%s3829 + $0xc] sm:$0xf]
      %v3834 = vld [vmem:[%s3829 + $0x10] sm:$0xf]
      %v3835 = vld [vmem:[%s3829 + $0x14] sm:$0xf]
      %v3836 = vld [vmem:[%s3829 + $0x18] sm:$0xf]
      %v3837 = vld [vmem:[%s3829 + $0x1c] sm:$0xf]
      %v3838 = vld [vmem:[%s3829 + $0x20] sm:$0xf]
      %v3839 = vld [vmem:[%s3829 + $0x24] sm:$0xf]
      %v3840 = vld [vmem:[%s3829 + $0x28] sm:$0xf]
      %v3841 = vld [vmem:[%s3829 + $0x2c] sm:$0xf]
      %v3842 = vld [vmem:[%s3829 + $0x30] sm:$0xf]
      %v3843 = vld [vmem:[%s3829 + $0x34] sm:$0xf]
      %v3844 = vld [vmem:[%s3829 + $0x38] sm:$0xf]
      %v3845 = vld [vmem:[%s3829 + $0x3c] sm:$0xf]
      %v3846 = vunpack.c.l.b16 %v3800
      %v3847 = vunpack.c.l.b16 %v3804
      %v3848 = vunpack.c.l.b16 %v3808
      %v3849 = vunpack.c.l.b16 %v3812
      %v3850 = vunpack.c.l.b16 %v3816
      %v3851 = vunpack.c.l.b16 %v3820
      %v3852 = vunpack.c.l.b16 %v3824
      %v3853 = vunpack.c.l.b16 %v3828
      %v3854 = vpack.c.b16 %v3847, %v3846
      %v3855 = vpack.c.b16 %v3849, %v3848
      %v3856 = vpack.c.b16 %v3851, %v3850
      %v3857 = vpack.c.b16 %v3853, %v3852
      %v3878 = vunpack.c.l.b16 %v3830
      %v3879 = vunpack.c.l.b16 %v3831
      %v3880 = vunpack.c.l.b16 %v3832
      %v3881 = vunpack.c.l.b16 %v3833
      %v3882 = vunpack.c.l.b16 %v3834
      %v3883 = vunpack.c.l.b16 %v3835
      %v3884 = vunpack.c.l.b16 %v3836
      %v3885 = vunpack.c.l.b16 %v3837
      %v3886 = vunpack.c.l.b16 %v3838
      %v3887 = vunpack.c.l.b16 %v3839
      %v3888 = vunpack.c.l.b16 %v3840
      %v3889 = vunpack.c.l.b16 %v3841
      %v3890 = vunpack.c.l.b16 %v3842
      %v3891 = vunpack.c.l.b16 %v3843
      %v3892 = vunpack.c.l.b16 %v3844
      %v3893 = vunpack.c.l.b16 %v3845
      %v3894 = vpack.c.b16 %v3879, %v3878
      %v3895 = vpack.c.b16 %v3881, %v3880
      %v3896 = vpack.c.b16 %v3883, %v3882
      %v3897 = vpack.c.b16 %v3885, %v3884
      %v3898 = vpack.c.b16 %v3887, %v3886
      %v3899 = vpack.c.b16 %v3889, %v3888
      %v3900 = vpack.c.b16 %v3891, %v3890
      %v3901 = vpack.c.b16 %v3893, %v3892
      %3910 = vmatpush.bf16.msra.mxu0 %v3901
      %3911 = vmatpush.bf16.msra.mxu0 %v3900
      %3912 = vmatpush.bf16.msra.mxu0 %v3899
      %3913 = vmatpush.bf16.msra.mxu0 %v3898
      %3914 = vmatpush.bf16.msra.mxu0 %v3897
      %3915 = vmatpush.bf16.msra.mxu0 %v3896
      %3916 = vmatpush.bf16.msra.mxu0 %v3895
      %3917 = vmatpush.bf16.msra.mxu0 %v3894
      %3918 = vmatmul.bf16.gmra.mxu0 %v3854
      %v3919 = vpop.f32.mrf.mxu0
      %v3920 = vadd.f32 0.0, %v3919
      %v3921 = vpop.f32.mrf.mxu0
      %v3922 = vadd.f32 0.0, %v3921
      %3923 = vmatmul.bf16.gmra.mxu0 %v3855
      %v3924 = vpop.f32.mrf.mxu0
      %v3925 = vadd.f32 0.0, %v3924
      %v3926 = vpop.f32.mrf.mxu0
      %v3927 = vadd.f32 0.0, %v3926
      %3928 = vmatmul.bf16.gmra.mxu0 %v3856
      %v3929 = vpop.f32.mrf.mxu0
      %v3930 = vadd.f32 0.0, %v3929
      %v3931 = vpop.f32.mrf.mxu0
      %v3932 = vadd.f32 0.0, %v3931
      %3933 = vmatmul.bf16.gmra.mxu0 %v3857
      %v3934 = vpop.f32.mrf.mxu0
      %v3935 = vadd.f32 0.0, %v3934
      %v3936 = vpop.f32.mrf.mxu0
      %v3937 = vadd.f32 0.0, %v3936
      %3938 = vdwg.mxu0
      %v3939 = vadd.f32 %v3781, %v3920
      %v3940 = vadd.f32 %v3782, %v3922
      %v3941 = vadd.f32 %v3783, %v3925
      %v3942 = vadd.f32 %v3784, %v3927
      %v3943 = vadd.f32 %v3785, %v3930
      %v3944 = vadd.f32 %v3786, %v3932
      %v3945 = vadd.f32 %v3787, %v3935
      %v3946 = vadd.f32 %v3788, %v3937
      %s3947 = scalar_lea.vmem %s3, 1344
      %v3948 = vld [vmem:[%s3947] sm:$0xf]
      %v3949 = vld [vmem:[%s3947 + $0x4] sm:$0xf]
      %v3950 = vld [vmem:[%s3947 + $0x8] sm:$0xf]
      %v3951 = vld [vmem:[%s3947 + $0xc] sm:$0xf]
      %v3952 = vld [vmem:[%s3947 + $0x10] sm:$0xf]
      %v3953 = vld [vmem:[%s3947 + $0x14] sm:$0xf]
      %v3954 = vld [vmem:[%s3947 + $0x18] sm:$0xf]
      %v3955 = vld [vmem:[%s3947 + $0x1c] sm:$0xf]
      %v3956 = vld [vmem:[%s3947 + $0x20] sm:$0xf]
      %v3957 = vld [vmem:[%s3947 + $0x24] sm:$0xf]
      %v3958 = vld [vmem:[%s3947 + $0x28] sm:$0xf]
      %v3959 = vld [vmem:[%s3947 + $0x2c] sm:$0xf]
      %v3960 = vld [vmem:[%s3947 + $0x30] sm:$0xf]
      %v3961 = vld [vmem:[%s3947 + $0x34] sm:$0xf]
      %v3962 = vld [vmem:[%s3947 + $0x38] sm:$0xf]
      %v3963 = vld [vmem:[%s3947 + $0x3c] sm:$0xf]
      %v3965 = vunpack.c.l.b16 %v3429
      %v3966 = vpack.c.b16 %v3460, %v3459
      %v3967 = vpack.c.b16 %v3462, %v3461
      %v3968 = vpack.c.b16 %v3464, %v3463
      %v3969 = vpack.c.b16 %v3965, %v3465
      %v3990 = vunpack.c.l.b16 %v3948
      %v3991 = vunpack.c.l.b16 %v3949
      %v3992 = vunpack.c.l.b16 %v3950
      %v3993 = vunpack.c.l.b16 %v3951
      %v3994 = vunpack.c.l.b16 %v3952
      %v3995 = vunpack.c.l.b16 %v3953
      %v3996 = vunpack.c.l.b16 %v3954
      %v3997 = vunpack.c.l.b16 %v3955
      %v3998 = vunpack.c.l.b16 %v3956
      %v3999 = vunpack.c.l.b16 %v3957
      %v4000 = vunpack.c.l.b16 %v3958
      %v4001 = vunpack.c.l.b16 %v3959
      %v4002 = vunpack.c.l.b16 %v3960
      %v4003 = vunpack.c.l.b16 %v3961
      %v4004 = vunpack.c.l.b16 %v3962
      %v4005 = vunpack.c.l.b16 %v3963
      %v4006 = vpack.c.b16 %v3991, %v3990
      %v4007 = vpack.c.b16 %v3993, %v3992
      %v4008 = vpack.c.b16 %v3995, %v3994
      %v4009 = vpack.c.b16 %v3997, %v3996
      %v4010 = vpack.c.b16 %v3999, %v3998
      %v4011 = vpack.c.b16 %v4001, %v4000
      %v4012 = vpack.c.b16 %v4003, %v4002
      %v4013 = vpack.c.b16 %v4005, %v4004
      %4022 = vmatpush.bf16.msra.mxu0 %v4013
      %4023 = vmatpush.bf16.msra.mxu0 %v4012
      %4024 = vmatpush.bf16.msra.mxu0 %v4011
      %4025 = vmatpush.bf16.msra.mxu0 %v4010
      %4026 = vmatpush.bf16.msra.mxu0 %v4009
      %4027 = vmatpush.bf16.msra.mxu0 %v4008
      %4028 = vmatpush.bf16.msra.mxu0 %v4007
      %4029 = vmatpush.bf16.msra.mxu0 %v4006
      %4030 = vmatmul.bf16.gmra.mxu0 %v3966
      %v4031 = vpop.f32.mrf.mxu0
      %v4032 = vadd.f32 0.0, %v4031
      %v4033 = vpop.f32.mrf.mxu0
      %v4034 = vadd.f32 0.0, %v4033
      %4035 = vmatmul.bf16.gmra.mxu0 %v3967
      %v4036 = vpop.f32.mrf.mxu0
      %v4037 = vadd.f32 0.0, %v4036
      %v4038 = vpop.f32.mrf.mxu0
      %v4039 = vadd.f32 0.0, %v4038
      %4040 = vmatmul.bf16.gmra.mxu0 %v3968
      %v4041 = vpop.f32.mrf.mxu0
      %v4042 = vadd.f32 0.0, %v4041
      %v4043 = vpop.f32.mrf.mxu0
      %v4044 = vadd.f32 0.0, %v4043
      %4045 = vmatmul.bf16.gmra.mxu0 %v3969
      %v4046 = vpop.f32.mrf.mxu0
      %v4047 = vadd.f32 0.0, %v4046
      %v4048 = vpop.f32.mrf.mxu0
      %v4049 = vadd.f32 0.0, %v4048
      %4050 = vdwg.mxu0
      %v4051 = vadd.f32 %v3939, %v4032
      %v4052 = vadd.f32 %v3940, %v4034
      %v4053 = vadd.f32 %v3941, %v4037
      %v4054 = vadd.f32 %v3942, %v4039
      %v4055 = vadd.f32 %v3943, %v4042
      %v4056 = vadd.f32 %v3944, %v4044
      %v4057 = vadd.f32 %v3945, %v4047
      %v4058 = vadd.f32 %v3946, %v4049
      %v4060 = vshrl.u32 %v3429, 16
      %v4062 = vrot.slane %v4060, 4
      %v4063 = vshll.u32 %v3429, 16
      %v4065 = vrot.slane %v4063, 5
      %v4066 = vor.u32 %v4062, %v4065
      %v4067 = vrot.slane %v4066, 4
      %v4069 = vshll.u32 %v3430, 16
      %v4071 = vrot.slane %v4069, 5
      %v4072 = vsel %vm764, %v4067, %v4071
      %s4073 = scalar_lea.vmem %s3, 1408
      %v4074 = vld [vmem:[%s4073] sm:$0xf]
      %v4075 = vld [vmem:[%s4073 + $0x4] sm:$0xf]
      %v4076 = vld [vmem:[%s4073 + $0x8] sm:$0xf]
      %v4077 = vld [vmem:[%s4073 + $0xc] sm:$0xf]
      %v4078 = vld [vmem:[%s4073 + $0x10] sm:$0xf]
      %v4079 = vld [vmem:[%s4073 + $0x14] sm:$0xf]
      %v4080 = vld [vmem:[%s4073 + $0x18] sm:$0xf]
      %v4081 = vld [vmem:[%s4073 + $0x1c] sm:$0xf]
      %v4082 = vld [vmem:[%s4073 + $0x20] sm:$0xf]
      %v4083 = vld [vmem:[%s4073 + $0x24] sm:$0xf]
      %v4084 = vld [vmem:[%s4073 + $0x28] sm:$0xf]
      %v4085 = vld [vmem:[%s4073 + $0x2c] sm:$0xf]
      %v4086 = vld [vmem:[%s4073 + $0x30] sm:$0xf]
      %v4087 = vld [vmem:[%s4073 + $0x34] sm:$0xf]
      %v4088 = vld [vmem:[%s4073 + $0x38] sm:$0xf]
      %v4089 = vld [vmem:[%s4073 + $0x3c] sm:$0xf]
      %v4090 = vunpack.c.l.b16 %v4072
      %v4091 = vpack.c.b16 %v3690, %v3689
      %v4092 = vpack.c.b16 %v3692, %v3691
      %v4093 = vpack.c.b16 %v3694, %v3693
      %v4094 = vpack.c.b16 %v4090, %v3695
      %v4115 = vunpack.c.l.b16 %v4074
      %v4116 = vunpack.c.l.b16 %v4075
      %v4117 = vunpack.c.l.b16 %v4076
      %v4118 = vunpack.c.l.b16 %v4077
      %v4119 = vunpack.c.l.b16 %v4078
      %v4120 = vunpack.c.l.b16 %v4079
      %v4121 = vunpack.c.l.b16 %v4080
      %v4122 = vunpack.c.l.b16 %v4081
      %v4123 = vunpack.c.l.b16 %v4082
      %v4124 = vunpack.c.l.b16 %v4083
      %v4125 = vunpack.c.l.b16 %v4084
      %v4126 = vunpack.c.l.b16 %v4085
      %v4127 = vunpack.c.l.b16 %v4086
      %v4128 = vunpack.c.l.b16 %v4087
      %v4129 = vunpack.c.l.b16 %v4088
      %v4130 = vunpack.c.l.b16 %v4089
      %v4131 = vpack.c.b16 %v4116, %v4115
      %v4132 = vpack.c.b16 %v4118, %v4117
      %v4133 = vpack.c.b16 %v4120, %v4119
      %v4134 = vpack.c.b16 %v4122, %v4121
      %v4135 = vpack.c.b16 %v4124, %v4123
      %v4136 = vpack.c.b16 %v4126, %v4125
      %v4137 = vpack.c.b16 %v4128, %v4127
      %v4138 = vpack.c.b16 %v4130, %v4129
      %4147 = vmatpush.bf16.msra.mxu0 %v4138
      %4148 = vmatpush.bf16.msra.mxu0 %v4137
      %4149 = vmatpush.bf16.msra.mxu0 %v4136
      %4150 = vmatpush.bf16.msra.mxu0 %v4135
      %4151 = vmatpush.bf16.msra.mxu0 %v4134
      %4152 = vmatpush.bf16.msra.mxu0 %v4133
      %4153 = vmatpush.bf16.msra.mxu0 %v4132
      %4154 = vmatpush.bf16.msra.mxu0 %v4131
      %4155 = vmatmul.bf16.gmra.mxu0 %v4091
      %v4156 = vpop.f32.mrf.mxu0
      %v4157 = vadd.f32 0.0, %v4156
      %v4158 = vpop.f32.mrf.mxu0
      %v4159 = vadd.f32 0.0, %v4158
      %4160 = vmatmul.bf16.gmra.mxu0 %v4092
      %v4161 = vpop.f32.mrf.mxu0
      %v4162 = vadd.f32 0.0, %v4161
      %v4163 = vpop.f32.mrf.mxu0
      %v4164 = vadd.f32 0.0, %v4163
      %4165 = vmatmul.bf16.gmra.mxu0 %v4093
      %v4166 = vpop.f32.mrf.mxu0
      %v4167 = vadd.f32 0.0, %v4166
      %v4168 = vpop.f32.mrf.mxu0
      %v4169 = vadd.f32 0.0, %v4168
      %4170 = vmatmul.bf16.gmra.mxu0 %v4094
      %v4171 = vpop.f32.mrf.mxu0
      %v4172 = vadd.f32 0.0, %v4171
      %v4173 = vpop.f32.mrf.mxu0
      %v4174 = vadd.f32 0.0, %v4173
      %4175 = vdwg.mxu0
      %v4176 = vadd.f32 %v4051, %v4157
      %v4177 = vadd.f32 %v4052, %v4159
      %v4178 = vadd.f32 %v4053, %v4162
      %v4179 = vadd.f32 %v4054, %v4164
      %v4180 = vadd.f32 %v4055, %v4167
      %v4181 = vadd.f32 %v4056, %v4169
      %v4182 = vadd.f32 %v4057, %v4172
      %v4183 = vadd.f32 %v4058, %v4174
      %v4185 = vrot.slane %v3429, 5
      %v4186 = vrot.slane %v4185, 4
      %v4187 = vrot.slane %v3430, 5
      %v4188 = vsel %vm1098, %v4186, %v4187
      %s4189 = scalar_lea.vmem %s3, 1472
      %v4190 = vld [vmem:[%s4189] sm:$0xf]
      %v4191 = vld [vmem:[%s4189 + $0x4] sm:$0xf]
      %v4192 = vld [vmem:[%s4189 + $0x8] sm:$0xf]
      %v4193 = vld [vmem:[%s4189 + $0xc] sm:$0xf]
      %v4194 = vld [vmem:[%s4189 + $0x10] sm:$0xf]
      %v4195 = vld [vmem:[%s4189 + $0x14] sm:$0xf]
      %v4196 = vld [vmem:[%s4189 + $0x18] sm:$0xf]
      %v4197 = vld [vmem:[%s4189 + $0x1c] sm:$0xf]
      %v4198 = vld [vmem:[%s4189 + $0x20] sm:$0xf]
      %v4199 = vld [vmem:[%s4189 + $0x24] sm:$0xf]
      %v4200 = vld [vmem:[%s4189 + $0x28] sm:$0xf]
      %v4201 = vld [vmem:[%s4189 + $0x2c] sm:$0xf]
      %v4202 = vld [vmem:[%s4189 + $0x30] sm:$0xf]
      %v4203 = vld [vmem:[%s4189 + $0x34] sm:$0xf]
      %v4204 = vld [vmem:[%s4189 + $0x38] sm:$0xf]
      %v4205 = vld [vmem:[%s4189 + $0x3c] sm:$0xf]
      %v4206 = vunpack.c.l.b16 %v4188
      %v4207 = vpack.c.b16 %v3848, %v3847
      %v4208 = vpack.c.b16 %v3850, %v3849
      %v4209 = vpack.c.b16 %v3852, %v3851
      %v4210 = vpack.c.b16 %v4206, %v3853
      %v4231 = vunpack.c.l.b16 %v4190
      %v4232 = vunpack.c.l.b16 %v4191
      %v4233 = vunpack.c.l.b16 %v4192
      %v4234 = vunpack.c.l.b16 %v4193
      %v4235 = vunpack.c.l.b16 %v4194
      %v4236 = vunpack.c.l.b16 %v4195
      %v4237 = vunpack.c.l.b16 %v4196
      %v4238 = vunpack.c.l.b16 %v4197
      %v4239 = vunpack.c.l.b16 %v4198
      %v4240 = vunpack.c.l.b16 %v4199
      %v4241 = vunpack.c.l.b16 %v4200
      %v4242 = vunpack.c.l.b16 %v4201
      %v4243 = vunpack.c.l.b16 %v4202
      %v4244 = vunpack.c.l.b16 %v4203
      %v4245 = vunpack.c.l.b16 %v4204
      %v4246 = vunpack.c.l.b16 %v4205
      %v4247 = vpack.c.b16 %v4232, %v4231
      %v4248 = vpack.c.b16 %v4234, %v4233
      %v4249 = vpack.c.b16 %v4236, %v4235
      %v4250 = vpack.c.b16 %v4238, %v4237
      %v4251 = vpack.c.b16 %v4240, %v4239
      %v4252 = vpack.c.b16 %v4242, %v4241
      %v4253 = vpack.c.b16 %v4244, %v4243
      %v4254 = vpack.c.b16 %v4246, %v4245
      %4263 = vmatpush.bf16.msra.mxu0 %v4254
      %4264 = vmatpush.bf16.msra.mxu0 %v4253
      %4265 = vmatpush.bf16.msra.mxu0 %v4252
      %4266 = vmatpush.bf16.msra.mxu0 %v4251
      %4267 = vmatpush.bf16.msra.mxu0 %v4250
      %4268 = vmatpush.bf16.msra.mxu0 %v4249
      %4269 = vmatpush.bf16.msra.mxu0 %v4248
      %4270 = vmatpush.bf16.msra.mxu0 %v4247
      %4271 = vmatmul.bf16.gmra.mxu0 %v4207
      %v4272 = vpop.f32.mrf.mxu0
      %v4273 = vadd.f32 0.0, %v4272
      %v4274 = vpop.f32.mrf.mxu0
      %v4275 = vadd.f32 0.0, %v4274
      %4276 = vmatmul.bf16.gmra.mxu0 %v4208
      %v4277 = vpop.f32.mrf.mxu0
      %v4278 = vadd.f32 0.0, %v4277
      %v4279 = vpop.f32.mrf.mxu0
      %v4280 = vadd.f32 0.0, %v4279
      %4281 = vmatmul.bf16.gmra.mxu0 %v4209
      %v4282 = vpop.f32.mrf.mxu0
      %v4283 = vadd.f32 0.0, %v4282
      %v4284 = vpop.f32.mrf.mxu0
      %v4285 = vadd.f32 0.0, %v4284
      %4286 = vmatmul.bf16.gmra.mxu0 %v4210
      %v4287 = vpop.f32.mrf.mxu0
      %v4288 = vadd.f32 0.0, %v4287
      %v4289 = vpop.f32.mrf.mxu0
      %v4290 = vadd.f32 0.0, %v4289
      %4291 = vdwg.mxu0
      %v4292 = vadd.f32 %v4176, %v4273
      %v4293 = vadd.f32 %v4177, %v4275
      %v4294 = vadd.f32 %v4178, %v4278
      %v4295 = vadd.f32 %v4179, %v4280
      %v4296 = vadd.f32 %v4180, %v4283
      %v4297 = vadd.f32 %v4181, %v4285
      %v4298 = vadd.f32 %v4182, %v4288
      %v4299 = vadd.f32 %v4183, %v4290
      %s4300 = scalar_lea.vmem %s3, 1536
      %v4301 = vld [vmem:[%s4300] sm:$0xf]
      %v4302 = vld [vmem:[%s4300 + $0x4] sm:$0xf]
      %v4303 = vld [vmem:[%s4300 + $0x8] sm:$0xf]
      %v4304 = vld [vmem:[%s4300 + $0xc] sm:$0xf]
      %v4305 = vld [vmem:[%s4300 + $0x10] sm:$0xf]
      %v4306 = vld [vmem:[%s4300 + $0x14] sm:$0xf]
      %v4307 = vld [vmem:[%s4300 + $0x18] sm:$0xf]
      %v4308 = vld [vmem:[%s4300 + $0x1c] sm:$0xf]
      %v4309 = vld [vmem:[%s4300 + $0x20] sm:$0xf]
      %v4310 = vld [vmem:[%s4300 + $0x24] sm:$0xf]
      %v4311 = vld [vmem:[%s4300 + $0x28] sm:$0xf]
      %v4312 = vld [vmem:[%s4300 + $0x2c] sm:$0xf]
      %v4313 = vld [vmem:[%s4300 + $0x30] sm:$0xf]
      %v4314 = vld [vmem:[%s4300 + $0x34] sm:$0xf]
      %v4315 = vld [vmem:[%s4300 + $0x38] sm:$0xf]
      %v4316 = vld [vmem:[%s4300 + $0x3c] sm:$0xf]
      %v4318 = vunpack.c.l.b16 %v3431
      %v4319 = vpack.c.b16 %v4318, %v3965
      %v4337 = vunpack.c.l.b16 %v4301
      %v4338 = vunpack.c.l.b16 %v4302
      %v4339 = vunpack.c.l.b16 %v4303
      %v4340 = vunpack.c.l.b16 %v4304
      %v4341 = vunpack.c.l.b16 %v4305
      %v4342 = vunpack.c.l.b16 %v4306
      %v4343 = vunpack.c.l.b16 %v4307
      %v4344 = vunpack.c.l.b16 %v4308
      %v4345 = vunpack.c.l.b16 %v4309
      %v4346 = vunpack.c.l.b16 %v4310
      %v4347 = vunpack.c.l.b16 %v4311
      %v4348 = vunpack.c.l.b16 %v4312
      %v4349 = vunpack.c.l.b16 %v4313
      %v4350 = vunpack.c.l.b16 %v4314
      %v4351 = vunpack.c.l.b16 %v4315
      %v4352 = vunpack.c.l.b16 %v4316
      %v4353 = vpack.c.b16 %v4338, %v4337
      %v4354 = vpack.c.b16 %v4340, %v4339
      %v4355 = vpack.c.b16 %v4342, %v4341
      %v4356 = vpack.c.b16 %v4344, %v4343
      %v4357 = vpack.c.b16 %v4346, %v4345
      %v4358 = vpack.c.b16 %v4348, %v4347
      %v4359 = vpack.c.b16 %v4350, %v4349
      %v4360 = vpack.c.b16 %v4352, %v4351
      %4369 = vmatpush.bf16.msra.mxu0 %v4360
      %4370 = vmatpush.bf16.msra.mxu0 %v4359
      %4371 = vmatpush.bf16.msra.mxu0 %v4358
      %4372 = vmatpush.bf16.msra.mxu0 %v4357
      %4373 = vmatpush.bf16.msra.mxu0 %v4356
      %4374 = vmatpush.bf16.msra.mxu0 %v4355
      %4375 = vmatpush.bf16.msra.mxu0 %v4354
      %4376 = vmatpush.bf16.msra.mxu0 %v4353
      %4377 = vmatmul.bf16.gmra.mxu0 %v3467
      %v4378 = vpop.f32.mrf.mxu0
      %v4379 = vadd.f32 0.0, %v4378
      %v4380 = vpop.f32.mrf.mxu0
      %v4381 = vadd.f32 0.0, %v4380
      %4382 = vmatmul.bf16.gmra.mxu0 %v3468
      %v4383 = vpop.f32.mrf.mxu0
      %v4384 = vadd.f32 0.0, %v4383
      %v4385 = vpop.f32.mrf.mxu0
      %v4386 = vadd.f32 0.0, %v4385
      %4387 = vmatmul.bf16.gmra.mxu0 %v3469
      %v4388 = vpop.f32.mrf.mxu0
      %v4389 = vadd.f32 0.0, %v4388
      %v4390 = vpop.f32.mrf.mxu0
      %v4391 = vadd.f32 0.0, %v4390
      %4392 = vmatmul.bf16.gmra.mxu0 %v4319
      %v4393 = vpop.f32.mrf.mxu0
      %v4394 = vadd.f32 0.0, %v4393
      %v4395 = vpop.f32.mrf.mxu0
      %v4396 = vadd.f32 0.0, %v4395
      %4397 = vdwg.mxu0
      %v4398 = vadd.f32 %v4292, %v4379
      %v4399 = vadd.f32 %v4293, %v4381
      %v4400 = vadd.f32 %v4294, %v4384
      %v4401 = vadd.f32 %v4295, %v4386
      %v4402 = vadd.f32 %v4296, %v4389
      %v4403 = vadd.f32 %v4297, %v4391
      %v4404 = vadd.f32 %v4298, %v4394
      %v4405 = vadd.f32 %v4299, %v4396
      %v4407 = vshrl.u32 %v3431, 16
      %v4409 = vrot.slane %v4407, 4
      %v4410 = vshll.u32 %v3431, 16
      %v4412 = vrot.slane %v4410, 5
      %v4413 = vor.u32 %v4409, %v4412
      %v4414 = vrot.slane %v4413, 4
      %v4416 = vshll.u32 %v3432, 16
      %v4418 = vrot.slane %v4416, 5
      %v4419 = vsel %vm764, %v4414, %v4418
      %s4420 = scalar_lea.vmem %s3, 1600
      %v4421 = vld [vmem:[%s4420] sm:$0xf]
      %v4422 = vld [vmem:[%s4420 + $0x4] sm:$0xf]
      %v4423 = vld [vmem:[%s4420 + $0x8] sm:$0xf]
      %v4424 = vld [vmem:[%s4420 + $0xc] sm:$0xf]
      %v4425 = vld [vmem:[%s4420 + $0x10] sm:$0xf]
      %v4426 = vld [vmem:[%s4420 + $0x14] sm:$0xf]
      %v4427 = vld [vmem:[%s4420 + $0x18] sm:$0xf]
      %v4428 = vld [vmem:[%s4420 + $0x1c] sm:$0xf]
      %v4429 = vld [vmem:[%s4420 + $0x20] sm:$0xf]
      %v4430 = vld [vmem:[%s4420 + $0x24] sm:$0xf]
      %v4431 = vld [vmem:[%s4420 + $0x28] sm:$0xf]
      %v4432 = vld [vmem:[%s4420 + $0x2c] sm:$0xf]
      %v4433 = vld [vmem:[%s4420 + $0x30] sm:$0xf]
      %v4434 = vld [vmem:[%s4420 + $0x34] sm:$0xf]
      %v4435 = vld [vmem:[%s4420 + $0x38] sm:$0xf]
      %v4436 = vld [vmem:[%s4420 + $0x3c] sm:$0xf]
      %v4437 = vunpack.c.l.b16 %v4419
      %v4438 = vpack.c.b16 %v4437, %v4090
      %v4456 = vunpack.c.l.b16 %v4421
      %v4457 = vunpack.c.l.b16 %v4422
      %v4458 = vunpack.c.l.b16 %v4423
      %v4459 = vunpack.c.l.b16 %v4424
      %v4460 = vunpack.c.l.b16 %v4425
      %v4461 = vunpack.c.l.b16 %v4426
      %v4462 = vunpack.c.l.b16 %v4427
      %v4463 = vunpack.c.l.b16 %v4428
      %v4464 = vunpack.c.l.b16 %v4429
      %v4465 = vunpack.c.l.b16 %v4430
      %v4466 = vunpack.c.l.b16 %v4431
      %v4467 = vunpack.c.l.b16 %v4432
      %v4468 = vunpack.c.l.b16 %v4433
      %v4469 = vunpack.c.l.b16 %v4434
      %v4470 = vunpack.c.l.b16 %v4435
      %v4471 = vunpack.c.l.b16 %v4436
      %v4472 = vpack.c.b16 %v4457, %v4456
      %v4473 = vpack.c.b16 %v4459, %v4458
      %v4474 = vpack.c.b16 %v4461, %v4460
      %v4475 = vpack.c.b16 %v4463, %v4462
      %v4476 = vpack.c.b16 %v4465, %v4464
      %v4477 = vpack.c.b16 %v4467, %v4466
      %v4478 = vpack.c.b16 %v4469, %v4468
      %v4479 = vpack.c.b16 %v4471, %v4470
      %4488 = vmatpush.bf16.msra.mxu0 %v4479
      %4489 = vmatpush.bf16.msra.mxu0 %v4478
      %4490 = vmatpush.bf16.msra.mxu0 %v4477
      %4491 = vmatpush.bf16.msra.mxu0 %v4476
      %4492 = vmatpush.bf16.msra.mxu0 %v4475
      %4493 = vmatpush.bf16.msra.mxu0 %v4474
      %4494 = vmatpush.bf16.msra.mxu0 %v4473
      %4495 = vmatpush.bf16.msra.mxu0 %v4472
      %4496 = vmatmul.bf16.gmra.mxu0 %v3697
      %v4497 = vpop.f32.mrf.mxu0
      %v4498 = vadd.f32 0.0, %v4497
      %v4499 = vpop.f32.mrf.mxu0
      %v4500 = vadd.f32 0.0, %v4499
      %4501 = vmatmul.bf16.gmra.mxu0 %v3698
      %v4502 = vpop.f32.mrf.mxu0
      %v4503 = vadd.f32 0.0, %v4502
      %v4504 = vpop.f32.mrf.mxu0
      %v4505 = vadd.f32 0.0, %v4504
      %4506 = vmatmul.bf16.gmra.mxu0 %v3699
      %v4507 = vpop.f32.mrf.mxu0
      %v4508 = vadd.f32 0.0, %v4507
      %v4509 = vpop.f32.mrf.mxu0
      %v4510 = vadd.f32 0.0, %v4509
      %4511 = vmatmul.bf16.gmra.mxu0 %v4438
      %v4512 = vpop.f32.mrf.mxu0
      %v4513 = vadd.f32 0.0, %v4512
      %v4514 = vpop.f32.mrf.mxu0
      %v4515 = vadd.f32 0.0, %v4514
      %4516 = vdwg.mxu0
      %v4517 = vadd.f32 %v4398, %v4498
      %v4518 = vadd.f32 %v4399, %v4500
      %v4519 = vadd.f32 %v4400, %v4503
      %v4520 = vadd.f32 %v4401, %v4505
      %v4521 = vadd.f32 %v4402, %v4508
      %v4522 = vadd.f32 %v4403, %v4510
      %v4523 = vadd.f32 %v4404, %v4513
      %v4524 = vadd.f32 %v4405, %v4515
      %v4526 = vrot.slane %v3431, 5
      %v4527 = vrot.slane %v4526, 4
      %v4528 = vrot.slane %v3432, 5
      %v4529 = vsel %vm1098, %v4527, %v4528
      %s4530 = scalar_lea.vmem %s3, 1664
      %v4531 = vld [vmem:[%s4530] sm:$0xf]
      %v4532 = vld [vmem:[%s4530 + $0x4] sm:$0xf]
      %v4533 = vld [vmem:[%s4530 + $0x8] sm:$0xf]
      %v4534 = vld [vmem:[%s4530 + $0xc] sm:$0xf]
      %v4535 = vld [vmem:[%s4530 + $0x10] sm:$0xf]
      %v4536 = vld [vmem:[%s4530 + $0x14] sm:$0xf]
      %v4537 = vld [vmem:[%s4530 + $0x18] sm:$0xf]
      %v4538 = vld [vmem:[%s4530 + $0x1c] sm:$0xf]
      %v4539 = vld [vmem:[%s4530 + $0x20] sm:$0xf]
      %v4540 = vld [vmem:[%s4530 + $0x24] sm:$0xf]
      %v4541 = vld [vmem:[%s4530 + $0x28] sm:$0xf]
      %v4542 = vld [vmem:[%s4530 + $0x2c] sm:$0xf]
      %v4543 = vld [vmem:[%s4530 + $0x30] sm:$0xf]
      %v4544 = vld [vmem:[%s4530 + $0x34] sm:$0xf]
      %v4545 = vld [vmem:[%s4530 + $0x38] sm:$0xf]
      %v4546 = vld [vmem:[%s4530 + $0x3c] sm:$0xf]
      %v4547 = vunpack.c.l.b16 %v4529
      %v4548 = vpack.c.b16 %v4547, %v4206
      %v4566 = vunpack.c.l.b16 %v4531
      %v4567 = vunpack.c.l.b16 %v4532
      %v4568 = vunpack.c.l.b16 %v4533
      %v4569 = vunpack.c.l.b16 %v4534
      %v4570 = vunpack.c.l.b16 %v4535
      %v4571 = vunpack.c.l.b16 %v4536
      %v4572 = vunpack.c.l.b16 %v4537
      %v4573 = vunpack.c.l.b16 %v4538
      %v4574 = vunpack.c.l.b16 %v4539
      %v4575 = vunpack.c.l.b16 %v4540
      %v4576 = vunpack.c.l.b16 %v4541
      %v4577 = vunpack.c.l.b16 %v4542
      %v4578 = vunpack.c.l.b16 %v4543
      %v4579 = vunpack.c.l.b16 %v4544
      %v4580 = vunpack.c.l.b16 %v4545
      %v4581 = vunpack.c.l.b16 %v4546
      %v4582 = vpack.c.b16 %v4567, %v4566
      %v4583 = vpack.c.b16 %v4569, %v4568
      %v4584 = vpack.c.b16 %v4571, %v4570
      %v4585 = vpack.c.b16 %v4573, %v4572
      %v4586 = vpack.c.b16 %v4575, %v4574
      %v4587 = vpack.c.b16 %v4577, %v4576
      %v4588 = vpack.c.b16 %v4579, %v4578
      %v4589 = vpack.c.b16 %v4581, %v4580
      %4598 = vmatpush.bf16.msra.mxu0 %v4589
      %4599 = vmatpush.bf16.msra.mxu0 %v4588
      %4600 = vmatpush.bf16.msra.mxu0 %v4587
      %4601 = vmatpush.bf16.msra.mxu0 %v4586
      %4602 = vmatpush.bf16.msra.mxu0 %v4585
      %4603 = vmatpush.bf16.msra.mxu0 %v4584
      %4604 = vmatpush.bf16.msra.mxu0 %v4583
      %4605 = vmatpush.bf16.msra.mxu0 %v4582
      %4606 = vmatmul.bf16.gmra.mxu0 %v3855
      %v4607 = vpop.f32.mrf.mxu0
      %v4608 = vadd.f32 0.0, %v4607
      %v4609 = vpop.f32.mrf.mxu0
      %v4610 = vadd.f32 0.0, %v4609
      %4611 = vmatmul.bf16.gmra.mxu0 %v3856
      %v4612 = vpop.f32.mrf.mxu0
      %v4613 = vadd.f32 0.0, %v4612
      %v4614 = vpop.f32.mrf.mxu0
      %v4615 = vadd.f32 0.0, %v4614
      %4616 = vmatmul.bf16.gmra.mxu0 %v3857
      %v4617 = vpop.f32.mrf.mxu0
      %v4618 = vadd.f32 0.0, %v4617
      %v4619 = vpop.f32.mrf.mxu0
      %v4620 = vadd.f32 0.0, %v4619
      %4621 = vmatmul.bf16.gmra.mxu0 %v4548
      %v4622 = vpop.f32.mrf.mxu0
      %v4623 = vadd.f32 0.0, %v4622
      %v4624 = vpop.f32.mrf.mxu0
      %v4625 = vadd.f32 0.0, %v4624
      %4626 = vdwg.mxu0
      %v4627 = vadd.f32 %v4517, %v4608
      %v4628 = vadd.f32 %v4518, %v4610
      %v4629 = vadd.f32 %v4519, %v4613
      %v4630 = vadd.f32 %v4520, %v4615
      %v4631 = vadd.f32 %v4521, %v4618
      %v4632 = vadd.f32 %v4522, %v4620
      %v4633 = vadd.f32 %v4523, %v4623
      %v4634 = vadd.f32 %v4524, %v4625
      %v4635 = vld [vmem:[%s4] sm:$0x1]
      %v4637 = vperm.slane %v4635, 0
      %v4639 = vadd.f32 %v4627, %v4637
      %v4640 = vadd.f32 %v4628, %v4637
      %v4641 = vadd.f32 %v4629, %v4637
      %v4642 = vadd.f32 %v4630, %v4637
      %v4643 = vadd.f32 %v4631, %v4637
      %v4644 = vadd.f32 %v4632, %v4637
      %v4645 = vadd.f32 %v4633, %v4637
      %v4646 = vadd.f32 %v4634, %v4637
      %4647 = vst [vmem:[%s463] sm:$0xff] %v4639
      %4648 = vst [vmem:[%s463 + $0x8] sm:$0xff] %v4640
      %4649 = vst [vmem:[%s463 + $0x10] sm:$0xff] %v4641
      %4650 = vst [vmem:[%s463 + $0x18] sm:$0xff] %v4642
      %4651 = vst [vmem:[%s463 + $0x20] sm:$0xff] %v4643
      %4652 = vst [vmem:[%s463 + $0x28] sm:$0xff] %v4644
      %4653 = vst [vmem:[%s463 + $0x30] sm:$0xff] %v4645
      %4654 = vst [vmem:[%s463 + $0x38] sm:$0xff] %v4646
      %v4655 = vadd.f32 %v4639, %v4640
      %v4656 = vadd.f32 %v4655, %v4641
      %v4657 = vadd.f32 %v4656, %v4642
      %v4658 = vadd.f32 %v4657, %v4643
      %v4659 = vadd.f32 %v4658, %v4644
      %v4660 = vadd.f32 %v4659, %v4645
      %v4661 = vadd.f32 %v4660, %v4646
      %v4662 = vrot.slane %v4661, 4
      %v4663 = vadd.f32 %v4661, %v4662
      %v4664 = vrot.slane %v4663, 2
      %v4665 = vadd.f32 %v4663, %v4664
      %v4666 = vrot.slane %v4665, 1
      %v4667 = vadd.f32 %v4665, %v4666
      %v4668 = vmul.f32 %v4639, %v4639
      %v4669 = vmul.f32 %v4640, %v4640
      %v4670 = vmul.f32 %v4641, %v4641
      %v4671 = vmul.f32 %v4642, %v4642
      %v4672 = vmul.f32 %v4643, %v4643
      %v4673 = vmul.f32 %v4644, %v4644
      %v4674 = vmul.f32 %v4645, %v4645
      %v4675 = vmul.f32 %v4646, %v4646
      %v4676 = vadd.f32 %v4668, %v4669
      %v4677 = vadd.f32 %v4676, %v4670
      %v4678 = vadd.f32 %v4677, %v4671
      %v4679 = vadd.f32 %v4678, %v4672
      %v4680 = vadd.f32 %v4679, %v4673
      %v4681 = vadd.f32 %v4680, %v4674
      %v4682 = vadd.f32 %v4681, %v4675
      %v4683 = vrot.slane %v4682, 4
      %v4684 = vadd.f32 %v4682, %v4683
      %v4685 = vrot.slane %v4684, 2
      %v4686 = vadd.f32 %v4684, %v4685
      %v4687 = vrot.slane %v4686, 1
      %v4688 = vadd.f32 %v4686, %v4687
      %vm4689 = vcmask 1040384
      %v4690 = vsel %vm4689, %v4667, %v4688
      %4691 = vst [vmem:[%s471] sm:$0x3] %v4690
      %p4692 = scmp.lt.s32.totalorder %s25, 1
      %s4693 = scalar_select %p4692, %s25, 1
      %p4694 = scmp.lt.s32.totalorder %s26, 7
      %s4695 = scalar_select %p4694, %s26, 7
      %s4696 = smul.addr %s4695, 8
      %s4697 = smul.addr %s4693, 64
      %s4698 = sadd.s32 %s4696, %s4697
      %s4699 = smul.addr %s4698, 8
      %s4700 = scalar_lea.vmem %s8, %s4699
      %p4701 = scmp.lt.s32.totalorder %s25, 1
      %s4702 = scalar_select %p4701, %s25, 1
      %p4703 = scmp.lt.s32.totalorder %s26, 7
      %s4704 = scalar_select %p4703, %s26, 7
      %s4705 = smul.addr %s4702, 8
      %s4706 = sadd.s32 %s4704, %s4705
      %s4707 = smul.addr %s4706, 2
      %s4708 = scalar_lea.vmem %s9, %s4707
      // Predicated region
      $region53: #{encoder_forward.6} parent=51 // pred_check
        %p4709 = pneg %p246
      $region54: #{encoder_forward.6} parent=51 // pred_check_branch
        %4711 = sbr.rel (%p4709) target = $region56
      $region55: #{encoder_forward.6} parent=51 // pred_region
        _
      $region56: #{encoder_forward.6} parent=51 // pred_fallthru
        _
      // Predicated region
      $region57: #{encoder_forward.6} parent=51 // pred_check
        %p4712 = pneg %p274
      $region58: #{encoder_forward.6} parent=51 // pred_check_branch
        %4714 = sbr.rel (%p4712) target = $region60
      $region59: #{encoder_forward.6} parent=51 // pred_region
        _
      $region60: #{encoder_forward.6} parent=51 // pred_fallthru
        _
    $region52: #{encoder_forward.6} parent=5 // pred_fallthru
      _
    %p4715 = scmp.le.s32.totalorder 2, %s16
    // Predicated region
    $region61: #{encoder_forward.6} parent=5 // pred_check
      %p4716 = pneg %p4715
    $region62: #{encoder_forward.6} parent=5 // pred_check_branch
      %4718 = sbr.rel (%p4716) target = $region64
    $region63: #{encoder_forward.6} parent=5 // pred_region
      %s4719 = ssub.s32 %s16, 2
      // Predicated region
      $region65: #{encoder_forward.6} parent=63 // pred_check
        %p4720 = pneg %p252
      $region66: #{encoder_forward.6} parent=63 // pred_check_branch
        %4722 = sbr.rel (%p4720) target = $region68
      $region67: #{encoder_forward.6} parent=63 // pred_region
        %p4723 = scmp.lt.s32.totalorder %s27, 1
        %s4724 = scalar_select %p4723, %s27, 1
        %p4725 = scmp.lt.s32.totalorder %s28, 7
        %s4726 = scalar_select %p4725, %s28, 7
        %s4727 = smul.addr %s4726, 8
        %s4728 = smul.addr %s4724, 64
        %s4729 = sadd.s32 %s4727, %s4728
        %s4730 = smul.addr %s4729, 8
        %s4731 = scalar_lea.vmem %s8, %s4730
      $region68: #{encoder_forward.6} parent=63 // pred_fallthru
        _
      // Predicated region
      $region69: #{encoder_forward.6} parent=63 // pred_check
        %p4732 = pneg %p280
      $region70: #{encoder_forward.6} parent=63 // pred_check_branch
        %4734 = sbr.rel (%p4732) target = $region72
      $region71: #{encoder_forward.6} parent=63 // pred_region
        %p4735 = scmp.lt.s32.totalorder %s27, 1
        %s4736 = scalar_select %p4735, %s27, 1
        %p4737 = scmp.lt.s32.totalorder %s28, 7
        %s4738 = scalar_select %p4737, %s28, 7
        %s4739 = smul.addr %s4736, 8
        %s4740 = sadd.s32 %s4738, %s4739
        %s4741 = smul.addr %s4740, 2
        %s4742 = scalar_lea.vmem %s9, %s4741
      $region72: #{encoder_forward.6} parent=63 // pred_fallthru
        _
    $region64: #{encoder_forward.6} parent=5 // pred_fallthru
      _
  $region6: #{encoder_forward.6} parent=0 // loop_footer
    %s20 = sadd.s32 1, %s16
  $region7: #{encoder_forward.6} parent=0 // loop_footer_branch
    %15 = sbr.rel target = $region3
  $region8: #{encoder_forward.6} parent=0 // loop_exit
    _

</llo_original>
